<compile_context>
chip_gen: v7x
topology: tpu7x:2x2x1
jax: 0.10.0
libtpu: 0.0.40
codegen_flags: <defaults>
</compile_context>

<pallas_src>
import functools

import jax
import jax.numpy as jnp
from jax import lax
from jax.experimental import pallas as pl
from jax.experimental.pallas import tpu as pltpu

_EPS = 1e-5  # PyTorch BatchNorm2d default


# --------------------------------------------------------------------------
# Kernel 1/2: 3x3 conv (optionally preceded by folded-BN + ReLU) + per-image
#             partial BatchNorm statistics of the raw conv output.
# --------------------------------------------------------------------------
def _conv3x3_kernel(x_ref, w_ref, s_ref, b_ref, y_ref, stats_ref,
                    pad_ref, col_ref, *, apply_bn_relu: bool):
    """One grid step processes one image.

    x_ref     : (H, W, Cin)       f32  input tile
    w_ref     : (9*Cin, Cout)     bf16 im2col weight matrix (tap-major)
    s_ref     : (1, Cin)          f32  folded BN scale (unused if not apply_bn_relu)
    b_ref     : (1, Cin)          f32  folded BN bias  (unused if not apply_bn_relu)
    y_ref     : (H, W, Cout)      f32  raw conv output tile
    stats_ref : (2, Cout)         f32  per-image [sum, sum-of-squares] of conv out
    pad_ref   : (H+2, W+2, Cin)   bf16 scratch: zero halo + bf16 MXU operand
    col_ref   : (H*W, 9*Cin)      bf16 scratch: im2col patch matrix
    """
    H, W, Cin = x_ref.shape
    Cout = y_ref.shape[-1]
    Hp, Wp = H + 2, W + 2

    xin = x_ref[...]
    if apply_bn_relu:
        # Folded BatchNorm (scale/bias precomputed from batch stats) + ReLU,
        # all in f32 (keep bf16 confined to the MXU operands).
        xin = jnp.maximum(xin * s_ref[...] + b_ref[...], 0.0)

    # Zero only the 1-pixel halo of the padded scratch (not the whole buffer);
    # rewritten every step so it is safe under megacore grid partitioning.
    zrow = jnp.zeros((1, Wp, Cin), pad_ref.dtype)
    pad_ref[0:1, :, :] = zrow
    pad_ref[Hp - 1:Hp, :, :] = zrow
    zcol = jnp.zeros((Hp, 1, Cin), pad_ref.dtype)
    pad_ref[:, 0:1, :] = zcol
    pad_ref[:, Wp - 1:Wp, :] = zcol
    pad_ref[1:1 + H, 1:1 + W, :] = xin.astype(pad_ref.dtype)

    # im2col: gather the 9 shifted taps straight from the scratch ref into the
    # (H*W, 9*Cin) patch matrix, then a single fat-K MXU matmul with f32 acc.
    for ky in range(3):
        for kx in range(3):
            t = ky * 3 + kx
            col_ref[:, t * Cin:(t + 1) * Cin] = (
                pad_ref[ky:ky + H, kx:kx + W, :].reshape(H * W, Cin))
    acc = jnp.dot(col_ref[...], w_ref[...],
                  preferred_element_type=jnp.float32)        # (H*W, Cout) f32

    y_ref[...] = acc.reshape(H, W, Cout)

    # Per-image partial BN statistics (reduced across the batch in the wrapper
    # as sum * 1/NHW; avoids per-element divides and whole-tensor residency).
    stats_ref[0:1, :] = jnp.sum(acc, axis=0, keepdims=True)
    stats_ref[1:2, :] = jnp.sum(acc * acc, axis=0, keepdims=True)


def _conv3x3_call(x_nhwc, w_mat, scale, bias, *, apply_bn_relu):
    N, H, W, Cin = x_nhwc.shape
    Cout = w_mat.shape[-1]
    kernel = functools.partial(_conv3x3_kernel, apply_bn_relu=apply_bn_relu)
    y, stats = pl.pallas_call(
        kernel,
        grid=(N,),
        in_specs=[
            pl.BlockSpec((None, H, W, Cin), lambda i: (i, 0, 0, 0)),
            pl.BlockSpec((9 * Cin, Cout), lambda i: (0, 0)),   # resident weights
            pl.BlockSpec((1, Cin), lambda i: (0, 0)),
            pl.BlockSpec((1, Cin), lambda i: (0, 0)),
        ],
        out_specs=(
            pl.BlockSpec((None, H, W, Cout), lambda i: (i, 0, 0, 0)),
            pl.BlockSpec((None, 2, Cout), lambda i: (i, 0, 0)),
        ),
        out_shape=(
            jax.ShapeDtypeStruct((N, H, W, Cout), jnp.float32),
            jax.ShapeDtypeStruct((N, 2, Cout), jnp.float32),
        ),
        scratch_shapes=[
            pltpu.VMEM((H + 2, W + 2, Cin), jnp.bfloat16),
            pltpu.VMEM((H * W, 9 * Cin), jnp.bfloat16),
        ],
        compiler_params=pltpu.CompilerParams(
            dimension_semantics=("parallel",),
            vmem_limit_bytes=32 * 1024 * 1024,
        ),
    )(x_nhwc, w_mat, scale, bias)
    return y, stats


# --------------------------------------------------------------------------
# Kernel 3: folded bn2 + residual add + ReLU (elementwise, tiled over N).
# --------------------------------------------------------------------------
def _bn_add_relu_kernel(z_ref, xid_ref, s_ref, b_ref, o_ref):
    o_ref[...] = jnp.maximum(
        z_ref[...] * s_ref[...] + b_ref[...] + xid_ref[...], 0.0)


def _bn_add_relu_call(z, x_id, scale, bias):
    N, H, W, C = z.shape
    return pl.pallas_call(
        _bn_add_relu_kernel,
        grid=(N,),
        in_specs=[
            pl.BlockSpec((None, H, W, C), lambda i: (i, 0, 0, 0)),
            pl.BlockSpec((None, H, W, C), lambda i: (i, 0, 0, 0)),
            pl.BlockSpec((1, C), lambda i: (0, 0)),
            pl.BlockSpec((1, C), lambda i: (0, 0)),
        ],
        out_specs=pl.BlockSpec((None, H, W, C), lambda i: (i, 0, 0, 0)),
        out_shape=jax.ShapeDtypeStruct((N, H, W, C), jnp.float32),
        compiler_params=pltpu.CompilerParams(
            dimension_semantics=("parallel",),
            vmem_limit_bytes=32 * 1024 * 1024,
        ),
    )(z, x_id, scale, bias)


# --------------------------------------------------------------------------
# Host-facing forward (NCHW in / NCHW out, PyTorch convention).
# --------------------------------------------------------------------------
@jax.jit
def basic_block_forward(x_nchw, w1_oihw, g1, b1, w2_oihw, g2, b2):
    N, Cin, H, W = x_nchw.shape
    Cout = w1_oihw.shape[0]
    assert Cin == Cout, "identity path requires inplanes == planes (stride=1)"

    x_nhwc = jnp.transpose(x_nchw, (0, 2, 3, 1)).astype(jnp.float32)

    # OIHW -> HWIO -> (9*Cin, Cout) im2col weight matrix; cast once to bf16
    # (the only bf16 operands; accumulation and all elementwise math stay f32).
    w1_mat = jnp.transpose(w1_oihw, (2, 3, 1, 0)).reshape(9 * Cin, Cout)
    w1_mat = w1_mat.astype(jnp.bfloat16)
    w2_mat = jnp.transpose(w2_oihw, (2, 3, 1, 0)).reshape(9 * Cout, Cout)
    w2_mat = w2_mat.astype(jnp.bfloat16)

    inv_cnt = 1.0 / float(N * H * W)

    def fold_bn(stats, gamma, beta):
        # stats: (N, 2, C) per-image [sum, sumsq]; train-mode biased variance.
        total = jnp.sum(stats, axis=0)                      # (2, C), tiny
        mean = total[0] * inv_cnt
        var = total[1] * inv_cnt - mean * mean
        scale = gamma * lax.rsqrt(var + _EPS)
        bias = beta - mean * scale
        return (scale.reshape(1, Cout).astype(jnp.float32),
                bias.reshape(1, Cout).astype(jnp.float32))

    ones = jnp.ones((1, Cin), jnp.float32)    # dummies (unused in pass 1)
    zeros = jnp.zeros((1, Cin), jnp.float32)

    # pass 1: conv1 + per-image stats of the raw conv1 output
    y1, st1 = _conv3x3_call(x_nhwc, w1_mat, ones, zeros, apply_bn_relu=False)
    s1, t1 = fold_bn(st1, g1, b1)

    # pass 2: bn1 + relu + conv2 + per-image stats of the raw conv2 output
    z2, st2 = _conv3x3_call(y1, w2_mat, s1, t1, apply_bn_relu=True)
    s2, t2 = fold_bn(st2, g2, b2)

    # pass 3: bn2 + residual add + relu (identity passed unpadded, un-sliced)
    out_nhwc = _bn_add_relu_call(z2, x_nhwc, s2, t2)

    return jnp.transpose(out_nhwc, (0, 3, 1, 2))


# --------------------------------------------------------------------------
# Pure-JAX reference with identical semantics and matching MXU operand
# precision (conv operands cast to bf16, f32 accumulation).
# --------------------------------------------------------------------------
def basic_block_reference(x_nchw, w1_oihw, g1, b1, w2_oihw, g2, b2):
    dn = ("NCHW", "OIHW", "NCHW")

    def conv(x, w):
        return lax.conv_general_dilated(
            x.astype(jnp.bfloat16), w.astype(jnp.bfloat16), (1, 1), "SAME",
            dimension_numbers=dn, preferred_element_type=jnp.float32)

    def bn(y, g, bta):
        mean = y.mean(axis=(0, 2, 3), keepdims=True)
        var = ((y - mean) ** 2).mean(axis=(0, 2, 3), keepdims=True)
        yh = (y - mean) * lax.rsqrt(var + _EPS)
        return yh * g.reshape(1, -1, 1, 1) + bta.reshape(1, -1, 1, 1)

    h = jnp.maximum(bn(conv(x_nchw, w1_oihw), g1, b1), 0.0)
    z = bn(conv(h, w2_oihw), g2, b2)
    return jnp.maximum(z + x_nchw, 0.0)


if __name__ == "__main__":
    # BasicBlock(inplanes=4, planes=4, stride=1, downsample=None)
    N, C, H, W = 2, 4, 16, 16

    key = jax.random.PRNGKey(0)
    kx, k1, k2, kg1, kb1, kg2, kb2 = jax.random.split(key, 7)

    x = jax.random.normal(kx, (N, C, H, W), dtype=jnp.float32)
    w1 = 0.1 * jax.random.normal(k1, (C, C, 3, 3), dtype=jnp.float32)
    w2 = 0.1 * jax.random.normal(k2, (C, C, 3, 3), dtype=jnp.float32)
    g1 = 1.0 + 0.1 * jax.random.normal(kg1, (C,), dtype=jnp.float32)
    b1 = 0.1 * jax.random.normal(kb1, (C,), dtype=jnp.float32)
    g2 = 1.0 + 0.1 * jax.random.normal(kg2, (C,), dtype=jnp.float32)
    b2 = 0.1 * jax.random.normal(kb2, (C,), dtype=jnp.float32)

    out = jax.block_until_ready(basic_block_forward(x, w1, g1, b1, w2, g2, b2))
    ref = jax.block_until_ready(
        basic_block_reference(x, w1, g1, b1, w2, g2, b2))

    assert out.shape == (N, C, H, W), out.shape
    max_err = float(jnp.max(jnp.abs(out - ref)))
    assert jnp.allclose(out, ref, rtol=5e-3, atol=5e-3), max_err

    print("KERNEL_OK")
</pallas_src>

<mosaic_0001>
module attributes {stable_mosaic.version = 11 : i64} {
  func.func @_conv3x3_kernel(%arg0: i32, %arg1: memref<1x16x16x4xf32, #tpu.memory_space<vmem>>, %arg2: memref<36x4xbf16, #tpu.memory_space<vmem>>, %arg3: memref<1x4xf32, #tpu.memory_space<vmem>>, %arg4: memref<1x4xf32, #tpu.memory_space<vmem>>, %arg5: memref<1x16x16x4xf32, #tpu.memory_space<vmem>>, %arg6: memref<1x2x4xf32, #tpu.memory_space<vmem>>, %arg7: memref<18x18x4xbf16, #tpu.memory_space<vmem>>, %arg8: memref<256x36xbf16, #tpu.memory_space<vmem>>) attributes {dimension_semantics = [#tpu.dimension_semantics<parallel>], iteration_bounds = array<i64: 2>, scalar_prefetch = 0 : i64, scratch_operands = 2 : i64, tpu.core_type = #tpu.core_type<tc>, window_params = [{transform_indices = @transform_0, window_bounds = array<i64: 1, 16, 16, 4>}, {pipeline_mode = #tpu.pipeline_mode<synchronous>, transform_indices = @transform_1, window_bounds = array<i64: 36, 4>}, {pipeline_mode = #tpu.pipeline_mode<synchronous>, transform_indices = @transform_2, window_bounds = array<i64: 1, 4>}, {pipeline_mode = #tpu.pipeline_mode<synchronous>, transform_indices = @transform_3, window_bounds = array<i64: 1, 4>}, {transform_indices = @transform_4, window_bounds = array<i64: 1, 16, 16, 4>}, {transform_indices = @transform_5, window_bounds = array<i64: 1, 2, 4>}]} {
    %c0 = arith.constant 0 : index
    %c0_0 = arith.constant 0 : index
    %c0_1 = arith.constant 0 : index
    %c0_2 = arith.constant 0 : index
    %0 = vector.load %arg1[%c0, %c0_0, %c0_1, %c0_2] : memref<1x16x16x4xf32, #tpu.memory_space<vmem>>, vector<1x16x16x4xf32>
    %1 = vector.shape_cast %0 : vector<1x16x16x4xf32> to vector<16x16x4xf32>
    %cst = arith.constant 0.000000e+00 : bf16
    %2 = vector.broadcast %cst : bf16 to vector<1x18x4xbf16>
    %c0_3 = arith.constant 0 : index
    %c0_4 = arith.constant 0 : index
    %c0_5 = arith.constant 0 : index
    %3 = vector.load %arg7[%c0_3, %c0_4, %c0_5] : memref<18x18x4xbf16, #tpu.memory_space<vmem>>, vector<1x18x4xbf16>
    tpu.vector_store %arg7[%c0_3, %c0_4, %c0_5], %2 {strides = array<i32>} : memref<18x18x4xbf16, #tpu.memory_space<vmem>>, vector<1x18x4xbf16>,
    %c17 = arith.constant 17 : index
    %c0_6 = arith.constant 0 : index
    %c0_7 = arith.constant 0 : index
    %4 = vector.load %arg7[%c17, %c0_6, %c0_7] : memref<18x18x4xbf16, #tpu.memory_space<vmem>>, vector<1x18x4xbf16>
    tpu.vector_store %arg7[%c17, %c0_6, %c0_7], %2 {strides = array<i32>} : memref<18x18x4xbf16, #tpu.memory_space<vmem>>, vector<1x18x4xbf16>,
    %cst_8 = arith.constant 0.000000e+00 : bf16
    %5 = vector.broadcast %cst_8 : bf16 to vector<18x1x4xbf16>
    %c0_9 = arith.constant 0 : index
    %c0_10 = arith.constant 0 : index
    %c0_11 = arith.constant 0 : index
    %6 = vector.load %arg7[%c0_9, %c0_10, %c0_11] : memref<18x18x4xbf16, #tpu.memory_space<vmem>>, vector<18x1x4xbf16>
    tpu.vector_store %arg7[%c0_9, %c0_10, %c0_11], %5 {strides = array<i32>} : memref<18x18x4xbf16, #tpu.memory_space<vmem>>, vector<18x1x4xbf16>,
    %c0_12 = arith.constant 0 : index
    %c17_13 = arith.constant 17 : index
    %c0_14 = arith.constant 0 : index
    %7 = vector.load %arg7[%c0_12, %c17_13, %c0_14] : memref<18x18x4xbf16, #tpu.memory_space<vmem>>, vector<18x1x4xbf16>
    tpu.vector_store %arg7[%c0_12, %c17_13, %c0_14], %5 {strides = array<i32>} : memref<18x18x4xbf16, #tpu.memory_space<vmem>>, vector<18x1x4xbf16>,
    %8 = arith.truncf %1 : vector<16x16x4xf32> to vector<16x16x4xbf16>
    %c1 = arith.constant 1 : index
    %c1_15 = arith.constant 1 : index
    %c0_16 = arith.constant 0 : index
    %9 = vector.load %arg7[%c1, %c1_15, %c0_16] : memref<18x18x4xbf16, #tpu.memory_space<vmem>>, vector<16x16x4xbf16>
    tpu.vector_store %arg7[%c1, %c1_15, %c0_16], %8 {strides = array<i32>} : memref<18x18x4xbf16, #tpu.memory_space<vmem>>, vector<16x16x4xbf16>,
    %c0_17 = arith.constant 0 : index
    %c0_18 = arith.constant 0 : index
    %c0_19 = arith.constant 0 : index
    %10 = vector.load %arg7[%c0_17, %c0_18, %c0_19] : memref<18x18x4xbf16, #tpu.memory_space<vmem>>, vector<16x16x4xbf16>
    %11 = vector.shape_cast %10 : vector<16x16x4xbf16> to vector<256x4xbf16>
    %c0_20 = arith.constant 0 : index
    %c0_21 = arith.constant 0 : index
    %12 = vector.load %arg8[%c0_20, %c0_21] : memref<256x36xbf16, #tpu.memory_space<vmem>>, vector<256x4xbf16>
    tpu.vector_store %arg8[%c0_20, %c0_21], %11 {strides = array<i32>} : memref<256x36xbf16, #tpu.memory_space<vmem>>, vector<256x4xbf16>,
    %c0_22 = arith.constant 0 : index
    %c1_23 = arith.constant 1 : index
    %c0_24 = arith.constant 0 : index
    %13 = vector.load %arg7[%c0_22, %c1_23, %c0_24] : memref<18x18x4xbf16, #tpu.memory_space<vmem>>, vector<16x16x4xbf16>
    %14 = vector.shape_cast %13 : vector<16x16x4xbf16> to vector<256x4xbf16>
    %c0_25 = arith.constant 0 : index
    %c4 = arith.constant 4 : index
    %15 = vector.load %arg8[%c0_25, %c4] : memref<256x36xbf16, #tpu.memory_space<vmem>>, vector<256x4xbf16>
    tpu.vector_store %arg8[%c0_25, %c4], %14 {strides = array<i32>} : memref<256x36xbf16, #tpu.memory_space<vmem>>, vector<256x4xbf16>,
    %c0_26 = arith.constant 0 : index
    %c2 = arith.constant 2 : index
    %c0_27 = arith.constant 0 : index
    %16 = vector.load %arg7[%c0_26, %c2, %c0_27] : memref<18x18x4xbf16, #tpu.memory_space<vmem>>, vector<16x16x4xbf16>
    %17 = vector.shape_cast %16 : vector<16x16x4xbf16> to vector<256x4xbf16>
    %c0_28 = arith.constant 0 : index
    %c8 = arith.constant 8 : index
    %18 = vector.load %arg8[%c0_28, %c8] : memref<256x36xbf16, #tpu.memory_space<vmem>>, vector<256x4xbf16>
    tpu.vector_store %arg8[%c0_28, %c8], %17 {strides = array<i32>} : memref<256x36xbf16, #tpu.memory_space<vmem>>, vector<256x4xbf16>,
    %c1_29 = arith.constant 1 : index
    %c0_30 = arith.constant 0 : index
    %c0_31 = arith.constant 0 : index
    %19 = vector.load %arg7[%c1_29, %c0_30, %c0_31] : memref<18x18x4xbf16, #tpu.memory_space<vmem>>, vector<16x16x4xbf16>
    %20 = vector.shape_cast %19 : vector<16x16x4xbf16> to vector<256x4xbf16>
    %c0_32 = arith.constant 0 : index
    %c12 = arith.constant 12 : index
    %21 = vector.load %arg8[%c0_32, %c12] : memref<256x36xbf16, #tpu.memory_space<vmem>>, vector<256x4xbf16>
    tpu.vector_store %arg8[%c0_32, %c12], %20 {strides = array<i32>} : memref<256x36xbf16, #tpu.memory_space<vmem>>, vector<256x4xbf16>,
    %c1_33 = arith.constant 1 : index
    %c1_34 = arith.constant 1 : index
    %c0_35 = arith.constant 0 : index
    %22 = vector.load %arg7[%c1_33, %c1_34, %c0_35] : memref<18x18x4xbf16, #tpu.memory_space<vmem>>, vector<16x16x4xbf16>
    %23 = vector.shape_cast %22 : vector<16x16x4xbf16> to vector<256x4xbf16>
    %c0_36 = arith.constant 0 : index
    %c16 = arith.constant 16 : index
    %24 = vector.load %arg8[%c0_36, %c16] : memref<256x36xbf16, #tpu.memory_space<vmem>>, vector<256x4xbf16>
    tpu.vector_store %arg8[%c0_36, %c16], %23 {strides = array<i32>} : memref<256x36xbf16, #tpu.memory_space<vmem>>, vector<256x4xbf16>,
    %c1_37 = arith.constant 1 : index
    %c2_38 = arith.constant 2 : index
    %c0_39 = arith.constant 0 : index
    %25 = vector.load %arg7[%c1_37, %c2_38, %c0_39] : memref<18x18x4xbf16, #tpu.memory_space<vmem>>, vector<16x16x4xbf16>
    %26 = vector.shape_cast %25 : vector<16x16x4xbf16> to vector<256x4xbf16>
    %c0_40 = arith.constant 0 : index
    %c20 = arith.constant 20 : index
    %27 = vector.load %arg8[%c0_40, %c20] : memref<256x36xbf16, #tpu.memory_space<vmem>>, vector<256x4xbf16>
    tpu.vector_store %arg8[%c0_40, %c20], %26 {strides = array<i32>} : memref<256x36xbf16, #tpu.memory_space<vmem>>, vector<256x4xbf16>,
    %c2_41 = arith.constant 2 : index
    %c0_42 = arith.constant 0 : index
    %c0_43 = arith.constant 0 : index
    %28 = vector.load %arg7[%c2_41, %c0_42, %c0_43] : memref<18x18x4xbf16, #tpu.memory_space<vmem>>, vector<16x16x4xbf16>
    %29 = vector.shape_cast %28 : vector<16x16x4xbf16> to vector<256x4xbf16>
    %c0_44 = arith.constant 0 : index
    %c24 = arith.constant 24 : index
    %30 = vector.load %arg8[%c0_44, %c24] : memref<256x36xbf16, #tpu.memory_space<vmem>>, vector<256x4xbf16>
    tpu.vector_store %arg8[%c0_44, %c24], %29 {strides = array<i32>} : memref<256x36xbf16, #tpu.memory_space<vmem>>, vector<256x4xbf16>,
    %c2_45 = arith.constant 2 : index
    %c1_46 = arith.constant 1 : index
    %c0_47 = arith.constant 0 : index
    %31 = vector.load %arg7[%c2_45, %c1_46, %c0_47] : memref<18x18x4xbf16, #tpu.memory_space<vmem>>, vector<16x16x4xbf16>
    %32 = vector.shape_cast %31 : vector<16x16x4xbf16> to vector<256x4xbf16>
    %c0_48 = arith.constant 0 : index
    %c28 = arith.constant 28 : index
    %33 = vector.load %arg8[%c0_48, %c28] : memref<256x36xbf16, #tpu.memory_space<vmem>>, vector<256x4xbf16>
    tpu.vector_store %arg8[%c0_48, %c28], %32 {strides = array<i32>} : memref<256x36xbf16, #tpu.memory_space<vmem>>, vector<256x4xbf16>,
    %c2_49 = arith.constant 2 : index
    %c2_50 = arith.constant 2 : index
    %c0_51 = arith.constant 0 : index
    %34 = vector.load %arg7[%c2_49, %c2_50, %c0_51] : memref<18x18x4xbf16, #tpu.memory_space<vmem>>, vector<16x16x4xbf16>
    %35 = vector.shape_cast %34 : vector<16x16x4xbf16> to vector<256x4xbf16>
    %c0_52 = arith.constant 0 : index
    %c32 = arith.constant 32 : index
    %36 = vector.load %arg8[%c0_52, %c32] : memref<256x36xbf16, #tpu.memory_space<vmem>>, vector<256x4xbf16>
    tpu.vector_store %arg8[%c0_52, %c32], %35 {strides = array<i32>} : memref<256x36xbf16, #tpu.memory_space<vmem>>, vector<256x4xbf16>,
    %c0_53 = arith.constant 0 : index
    %c0_54 = arith.constant 0 : index
    %37 = vector.load %arg8[%c0_53, %c0_54] : memref<256x36xbf16, #tpu.memory_space<vmem>>, vector<256x36xbf16>
    %c0_55 = arith.constant 0 : index
    %c0_56 = arith.constant 0 : index
    %38 = vector.load %arg2[%c0_55, %c0_56] : memref<36x4xbf16, #tpu.memory_space<vmem>>, vector<36x4xbf16>
    %cst_57 = arith.constant dense<0.000000e+00> : vector<256x4xf32>
    %39 = tpu.matmul %37, %38, %cst_57 {dimension_numbers = #tpu.dot_dimension_numbers<[1], [0], [0], [1], [0, 0, 1, 1], [], []>} : vector<256x36xbf16>, vector<36x4xbf16>, vector<256x4xf32> -> vector<256x4xf32>
    %40 = vector.shape_cast %39 : vector<256x4xf32> to vector<16x16x4xf32>
    %c0_58 = arith.constant 0 : index
    %c0_59 = arith.constant 0 : index
    %c0_60 = arith.constant 0 : index
    %c0_61 = arith.constant 0 : index
    %41 = vector.load %arg5[%c0_58, %c0_59, %c0_60, %c0_61] : memref<1x16x16x4xf32, #tpu.memory_space<vmem>>, vector<1x16x16x4xf32>
    %42 = vector.shape_cast %41 : vector<1x16x16x4xf32> to vector<16x16x4xf32>
    %43 = vector.shape_cast %40 : vector<16x16x4xf32> to vector<1x16x16x4xf32>
    tpu.vector_store %arg5[%c0_58, %c0_59, %c0_60, %c0_61], %43 {strides = array<i32>} : memref<1x16x16x4xf32, #tpu.memory_space<vmem>>, vector<1x16x16x4xf32>,
    %cst_62 = arith.constant dense<0.000000e+00> : vector<4xf32>
    %44 = vector.multi_reduction <add>, %39, %cst_62 [0] : vector<256x4xf32> to vector<4xf32>
    %45 = vector.shape_cast %44 : vector<4xf32> to vector<1x4xf32>
    %c0_63 = arith.constant 0 : index
    %c0_64 = arith.constant 0 : index
    %c0_65 = arith.constant 0 : index
    %46 = vector.load %arg6[%c0_63, %c0_64, %c0_65] : memref<1x2x4xf32, #tpu.memory_space<vmem>>, vector<1x1x4xf32>
    %47 = vector.shape_cast %46 : vector<1x1x4xf32> to vector<1x4xf32>
    %48 = vector.shape_cast %45 : vector<1x4xf32> to vector<1x1x4xf32>
    tpu.vector_store %arg6[%c0_63, %c0_64, %c0_65], %48 {strides = array<i32>} : memref<1x2x4xf32, #tpu.memory_space<vmem>>, vector<1x1x4xf32>,
    %49 = arith.mulf %39, %39 : vector<256x4xf32>
    %cst_66 = arith.constant dense<0.000000e+00> : vector<4xf32>
    %50 = vector.multi_reduction <add>, %49, %cst_66 [0] : vector<256x4xf32> to vector<4xf32>
    %51 = vector.shape_cast %50 : vector<4xf32> to vector<1x4xf32>
    %c0_67 = arith.constant 0 : index
    %c1_68 = arith.constant 1 : index
    %c0_69 = arith.constant 0 : index
    %52 = vector.load %arg6[%c0_67, %c1_68, %c0_69] : memref<1x2x4xf32, #tpu.memory_space<vmem>>, vector<1x1x4xf32>
    %53 = vector.shape_cast %52 : vector<1x1x4xf32> to vector<1x4xf32>
    %54 = vector.shape_cast %51 : vector<1x4xf32> to vector<1x1x4xf32>
    tpu.vector_store %arg6[%c0_67, %c1_68, %c0_69], %54 {strides = array<i32>} : memref<1x2x4xf32, #tpu.memory_space<vmem>>, vector<1x1x4xf32>,
    return
  }
  func.func @transform_0(%arg0: i32) -> (i32, i32, i32, i32) {
    %c0_i32 = arith.constant 0 : i32
    %c0_i32_0 = arith.constant 0 : i32
    %c0_i32_1 = arith.constant 0 : i32
    %c0_i32_2 = arith.constant 0 : i32
    return %arg0, %c0_i32, %c0_i32_0, %c0_i32_1 : i32, i32, i32, i32
  }
  func.func @transform_1(%arg0: i32) -> (i32, i32) {
    %c0_i32 = arith.constant 0 : i32
    %c0_i32_0 = arith.constant 0 : i32
    %c0_i32_1 = arith.constant 0 : i32
    return %c0_i32, %c0_i32_0 : i32, i32
  }
  func.func @transform_2(%arg0: i32) -> (i32, i32) {
    %c0_i32 = arith.constant 0 : i32
    %c0_i32_0 = arith.constant 0 : i32
    %c0_i32_1 = arith.constant 0 : i32
    return %c0_i32, %c0_i32_0 : i32, i32
  }
  func.func @transform_3(%arg0: i32) -> (i32, i32) {
    %c0_i32 = arith.constant 0 : i32
    %c0_i32_0 = arith.constant 0 : i32
    %c0_i32_1 = arith.constant 0 : i32
    return %c0_i32, %c0_i32_0 : i32, i32
  }
  func.func @transform_4(%arg0: i32) -> (i32, i32, i32, i32) {
    %c0_i32 = arith.constant 0 : i32
    %c0_i32_0 = arith.constant 0 : i32
    %c0_i32_1 = arith.constant 0 : i32
    %c0_i32_2 = arith.constant 0 : i32
    return %arg0, %c0_i32, %c0_i32_0, %c0_i32_1 : i32, i32, i32, i32
  }
  func.func @transform_5(%arg0: i32) -> (i32, i32, i32) {
    %c0_i32 = arith.constant 0 : i32
    %c0_i32_0 = arith.constant 0 : i32
    %c0_i32_1 = arith.constant 0 : i32
    return %arg0, %c0_i32, %c0_i32_0 : i32, i32, i32
  }
}

module attributes {stable_mosaic.version = 11 : i64} {
  func.func @_bn_add_relu_kernel(%arg0: i32, %arg1: memref<1x16x16x4xf32, #tpu.memory_space<vmem>>, %arg2: memref<1x16x16x4xf32, #tpu.memory_space<vmem>>, %arg3: memref<1x4xf32, #tpu.memory_space<vmem>>, %arg4: memref<1x4xf32, #tpu.memory_space<vmem>>, %arg5: memref<1x16x16x4xf32, #tpu.memory_space<vmem>>) attributes {dimension_semantics = [#tpu.dimension_semantics<parallel>], iteration_bounds = array<i64: 2>, scalar_prefetch = 0 : i64, scratch_operands = 0 : i64, tpu.core_type = #tpu.core_type<tc>, window_params = [{transform_indices = @transform_0, window_bounds = array<i64: 1, 16, 16, 4>}, {transform_indices = @transform_1, window_bounds = array<i64: 1, 16, 16, 4>}, {pipeline_mode = #tpu.pipeline_mode<synchronous>, transform_indices = @transform_2, window_bounds = array<i64: 1, 4>}, {pipeline_mode = #tpu.pipeline_mode<synchronous>, transform_indices = @transform_3, window_bounds = array<i64: 1, 4>}, {transform_indices = @transform_4, window_bounds = array<i64: 1, 16, 16, 4>}]} {
    %c0 = arith.constant 0 : index
    %c0_0 = arith.constant 0 : index
    %c0_1 = arith.constant 0 : index
    %c0_2 = arith.constant 0 : index
    %0 = vector.load %arg1[%c0, %c0_0, %c0_1, %c0_2] : memref<1x16x16x4xf32, #tpu.memory_space<vmem>>, vector<1x16x16x4xf32>
    %1 = vector.shape_cast %0 : vector<1x16x16x4xf32> to vector<16x16x4xf32>
    %c0_3 = arith.constant 0 : index
    %c0_4 = arith.constant 0 : index
    %2 = vector.load %arg3[%c0_3, %c0_4] : memref<1x4xf32, #tpu.memory_space<vmem>>, vector<1x4xf32>
    %3 = vector.shape_cast %2 : vector<1x4xf32> to vector<1x1x4xf32>
    %4 = vector.broadcast %3 : vector<1x1x4xf32> to vector<16x16x4xf32>
    %5 = arith.mulf %1, %4 : vector<16x16x4xf32>
    %c0_5 = arith.constant 0 : index
    %c0_6 = arith.constant 0 : index
    %6 = vector.load %arg4[%c0_5, %c0_6] : memref<1x4xf32, #tpu.memory_space<vmem>>, vector<1x4xf32>
    %7 = vector.shape_cast %6 : vector<1x4xf32> to vector<1x1x4xf32>
    %8 = vector.broadcast %7 : vector<1x1x4xf32> to vector<16x16x4xf32>
    %9 = arith.addf %5, %8 : vector<16x16x4xf32>
    %c0_7 = arith.constant 0 : index
    %c0_8 = arith.constant 0 : index
    %c0_9 = arith.constant 0 : index
    %c0_10 = arith.constant 0 : index
    %10 = vector.load %arg2[%c0_7, %c0_8, %c0_9, %c0_10] : memref<1x16x16x4xf32, #tpu.memory_space<vmem>>, vector<1x16x16x4xf32>
    %11 = vector.shape_cast %10 : vector<1x16x16x4xf32> to vector<16x16x4xf32>
    %12 = arith.addf %9, %11 : vector<16x16x4xf32>
    %cst = arith.constant 0.000000e+00 : f32
    %13 = vector.broadcast %cst : f32 to vector<16x16x4xf32>
    %14 = arith.maximumf %12, %13 : vector<16x16x4xf32>
    %c0_11 = arith.constant 0 : index
    %c0_12 = arith.constant 0 : index
    %c0_13 = arith.constant 0 : index
    %c0_14 = arith.constant 0 : index
    %15 = vector.load %arg5[%c0_11, %c0_12, %c0_13, %c0_14] : memref<1x16x16x4xf32, #tpu.memory_space<vmem>>, vector<1x16x16x4xf32>
    %16 = vector.shape_cast %15 : vector<1x16x16x4xf32> to vector<16x16x4xf32>
    %17 = vector.shape_cast %14 : vector<16x16x4xf32> to vector<1x16x16x4xf32>
    tpu.vector_store %arg5[%c0_11, %c0_12, %c0_13, %c0_14], %17 {strides = array<i32>} : memref<1x16x16x4xf32, #tpu.memory_space<vmem>>, vector<1x16x16x4xf32>,
    return
  }
  func.func @transform_0(%arg0: i32) -> (i32, i32, i32, i32) {
    %c0_i32 = arith.constant 0 : i32
    %c0_i32_0 = arith.constant 0 : i32
    %c0_i32_1 = arith.constant 0 : i32
    %c0_i32_2 = arith.constant 0 : i32
    return %arg0, %c0_i32, %c0_i32_0, %c0_i32_1 : i32, i32, i32, i32
  }
  func.func @transform_1(%arg0: i32) -> (i32, i32, i32, i32) {
    %c0_i32 = arith.constant 0 : i32
    %c0_i32_0 = arith.constant 0 : i32
    %c0_i32_1 = arith.constant 0 : i32
    %c0_i32_2 = arith.constant 0 : i32
    return %arg0, %c0_i32, %c0_i32_0, %c0_i32_1 : i32, i32, i32, i32
  }
  func.func @transform_2(%arg0: i32) -> (i32, i32) {
    %c0_i32 = arith.constant 0 : i32
    %c0_i32_0 = arith.constant 0 : i32
    %c0_i32_1 = arith.constant 0 : i32
    return %c0_i32, %c0_i32_0 : i32, i32
  }
  func.func @transform_3(%arg0: i32) -> (i32, i32) {
    %c0_i32 = arith.constant 0 : i32
    %c0_i32_0 = arith.constant 0 : i32
    %c0_i32_1 = arith.constant 0 : i32
    return %c0_i32, %c0_i32_0 : i32, i32
  }
  func.func @transform_4(%arg0: i32) -> (i32, i32, i32, i32) {
    %c0_i32 = arith.constant 0 : i32
    %c0_i32_0 = arith.constant 0 : i32
    %c0_i32_1 = arith.constant 0 : i32
    %c0_i32_2 = arith.constant 0 : i32
    return %arg0, %c0_i32, %c0_i32_0, %c0_i32_1 : i32, i32, i32, i32
  }
}

module attributes {stable_mosaic.version = 11 : i64} {
  func.func @_conv3x3_kernel(%arg0: i32, %arg1: memref<1x16x16x4xf32, #tpu.memory_space<vmem>>, %arg2: memref<36x4xbf16, #tpu.memory_space<vmem>>, %arg3: memref<1x4xf32, #tpu.memory_space<vmem>>, %arg4: memref<1x4xf32, #tpu.memory_space<vmem>>, %arg5: memref<1x16x16x4xf32, #tpu.memory_space<vmem>>, %arg6: memref<1x2x4xf32, #tpu.memory_space<vmem>>, %arg7: memref<18x18x4xbf16, #tpu.memory_space<vmem>>, %arg8: memref<256x36xbf16, #tpu.memory_space<vmem>>) attributes {dimension_semantics = [#tpu.dimension_semantics<parallel>], iteration_bounds = array<i64: 2>, scalar_prefetch = 0 : i64, scratch_operands = 2 : i64, tpu.core_type = #tpu.core_type<tc>, window_params = [{transform_indices = @transform_0, window_bounds = array<i64: 1, 16, 16, 4>}, {pipeline_mode = #tpu.pipeline_mode<synchronous>, transform_indices = @transform_1, window_bounds = array<i64: 36, 4>}, {pipeline_mode = #tpu.pipeline_mode<synchronous>, transform_indices = @transform_2, window_bounds = array<i64: 1, 4>}, {pipeline_mode = #tpu.pipeline_mode<synchronous>, transform_indices = @transform_3, window_bounds = array<i64: 1, 4>}, {transform_indices = @transform_4, window_bounds = array<i64: 1, 16, 16, 4>}, {transform_indices = @transform_5, window_bounds = array<i64: 1, 2, 4>}]} {
    %c0 = arith.constant 0 : index
    %c0_0 = arith.constant 0 : index
    %c0_1 = arith.constant 0 : index
    %c0_2 = arith.constant 0 : index
    %0 = vector.load %arg1[%c0, %c0_0, %c0_1, %c0_2] : memref<1x16x16x4xf32, #tpu.memory_space<vmem>>, vector<1x16x16x4xf32>
    %1 = vector.shape_cast %0 : vector<1x16x16x4xf32> to vector<16x16x4xf32>
    %c0_3 = arith.constant 0 : index
    %c0_4 = arith.constant 0 : index
    %2 = vector.load %arg3[%c0_3, %c0_4] : memref<1x4xf32, #tpu.memory_space<vmem>>, vector<1x4xf32>
    %3 = vector.shape_cast %2 : vector<1x4xf32> to vector<1x1x4xf32>
    %4 = vector.broadcast %3 : vector<1x1x4xf32> to vector<16x16x4xf32>
    %5 = arith.mulf %1, %4 : vector<16x16x4xf32>
    %c0_5 = arith.constant 0 : index
    %c0_6 = arith.constant 0 : index
    %6 = vector.load %arg4[%c0_5, %c0_6] : memref<1x4xf32, #tpu.memory_space<vmem>>, vector<1x4xf32>
    %7 = vector.shape_cast %6 : vector<1x4xf32> to vector<1x1x4xf32>
    %8 = vector.broadcast %7 : vector<1x1x4xf32> to vector<16x16x4xf32>
    %9 = arith.addf %5, %8 : vector<16x16x4xf32>
    %cst = arith.constant 0.000000e+00 : f32
    %10 = vector.broadcast %cst : f32 to vector<16x16x4xf32>
    %11 = arith.maximumf %9, %10 : vector<16x16x4xf32>
    %cst_7 = arith.constant 0.000000e+00 : bf16
    %12 = vector.broadcast %cst_7 : bf16 to vector<1x18x4xbf16>
    %c0_8 = arith.constant 0 : index
    %c0_9 = arith.constant 0 : index
    %c0_10 = arith.constant 0 : index
    %13 = vector.load %arg7[%c0_8, %c0_9, %c0_10] : memref<18x18x4xbf16, #tpu.memory_space<vmem>>, vector<1x18x4xbf16>
    tpu.vector_store %arg7[%c0_8, %c0_9, %c0_10], %12 {strides = array<i32>} : memref<18x18x4xbf16, #tpu.memory_space<vmem>>, vector<1x18x4xbf16>,
    %c17 = arith.constant 17 : index
    %c0_11 = arith.constant 0 : index
    %c0_12 = arith.constant 0 : index
    %14 = vector.load %arg7[%c17, %c0_11, %c0_12] : memref<18x18x4xbf16, #tpu.memory_space<vmem>>, vector<1x18x4xbf16>
    tpu.vector_store %arg7[%c17, %c0_11, %c0_12], %12 {strides = array<i32>} : memref<18x18x4xbf16, #tpu.memory_space<vmem>>, vector<1x18x4xbf16>,
    %cst_13 = arith.constant 0.000000e+00 : bf16
    %15 = vector.broadcast %cst_13 : bf16 to vector<18x1x4xbf16>
    %c0_14 = arith.constant 0 : index
    %c0_15 = arith.constant 0 : index
    %c0_16 = arith.constant 0 : index
    %16 = vector.load %arg7[%c0_14, %c0_15, %c0_16] : memref<18x18x4xbf16, #tpu.memory_space<vmem>>, vector<18x1x4xbf16>
    tpu.vector_store %arg7[%c0_14, %c0_15, %c0_16], %15 {strides = array<i32>} : memref<18x18x4xbf16, #tpu.memory_space<vmem>>, vector<18x1x4xbf16>,
    %c0_17 = arith.constant 0 : index
    %c17_18 = arith.constant 17 : index
    %c0_19 = arith.constant 0 : index
    %17 = vector.load %arg7[%c0_17, %c17_18, %c0_19] : memref<18x18x4xbf16, #tpu.memory_space<vmem>>, vector<18x1x4xbf16>
    tpu.vector_store %arg7[%c0_17, %c17_18, %c0_19], %15 {strides = array<i32>} : memref<18x18x4xbf16, #tpu.memory_space<vmem>>, vector<18x1x4xbf16>,
    %18 = arith.truncf %11 : vector<16x16x4xf32> to vector<16x16x4xbf16>
    %c1 = arith.constant 1 : index
    %c1_20 = arith.constant 1 : index
    %c0_21 = arith.constant 0 : index
    %19 = vector.load %arg7[%c1, %c1_20, %c0_21] : memref<18x18x4xbf16, #tpu.memory_space<vmem>>, vector<16x16x4xbf16>
    tpu.vector_store %arg7[%c1, %c1_20, %c0_21], %18 {strides = array<i32>} : memref<18x18x4xbf16, #tpu.memory_space<vmem>>, vector<16x16x4xbf16>,
    %c0_22 = arith.constant 0 : index
    %c0_23 = arith.constant 0 : index
    %c0_24 = arith.constant 0 : index
    %20 = vector.load %arg7[%c0_22, %c0_23, %c0_24] : memref<18x18x4xbf16, #tpu.memory_space<vmem>>, vector<16x16x4xbf16>
    %21 = vector.shape_cast %20 : vector<16x16x4xbf16> to vector<256x4xbf16>
    %c0_25 = arith.constant 0 : index
    %c0_26 = arith.constant 0 : index
    %22 = vector.load %arg8[%c0_25, %c0_26] : memref<256x36xbf16, #tpu.memory_space<vmem>>, vector<256x4xbf16>
    tpu.vector_store %arg8[%c0_25, %c0_26], %21 {strides = array<i32>} : memref<256x36xbf16, #tpu.memory_space<vmem>>, vector<256x4xbf16>,
    %c0_27 = arith.constant 0 : index
    %c1_28 = arith.constant 1 : index
    %c0_29 = arith.constant 0 : index
    %23 = vector.load %arg7[%c0_27, %c1_28, %c0_29] : memref<18x18x4xbf16, #tpu.memory_space<vmem>>, vector<16x16x4xbf16>
    %24 = vector.shape_cast %23 : vector<16x16x4xbf16> to vector<256x4xbf16>
    %c0_30 = arith.constant 0 : index
    %c4 = arith.constant 4 : index
    %25 = vector.load %arg8[%c0_30, %c4] : memref<256x36xbf16, #tpu.memory_space<vmem>>, vector<256x4xbf16>
    tpu.vector_store %arg8[%c0_30, %c4], %24 {strides = array<i32>} : memref<256x36xbf16, #tpu.memory_space<vmem>>, vector<256x4xbf16>,
    %c0_31 = arith.constant 0 : index
    %c2 = arith.constant 2 : index
    %c0_32 = arith.constant 0 : index
    %26 = vector.load %arg7[%c0_31, %c2, %c0_32] : memref<18x18x4xbf16, #tpu.memory_space<vmem>>, vector<16x16x4xbf16>
    %27 = vector.shape_cast %26 : vector<16x16x4xbf16> to vector<256x4xbf16>
    %c0_33 = arith.constant 0 : index
    %c8 = arith.constant 8 : index
    %28 = vector.load %arg8[%c0_33, %c8] : memref<256x36xbf16, #tpu.memory_space<vmem>>, vector<256x4xbf16>
    tpu.vector_store %arg8[%c0_33, %c8], %27 {strides = array<i32>} : memref<256x36xbf16, #tpu.memory_space<vmem>>, vector<256x4xbf16>,
    %c1_34 = arith.constant 1 : index
    %c0_35 = arith.constant 0 : index
    %c0_36 = arith.constant 0 : index
    %29 = vector.load %arg7[%c1_34, %c0_35, %c0_36] : memref<18x18x4xbf16, #tpu.memory_space<vmem>>, vector<16x16x4xbf16>
    %30 = vector.shape_cast %29 : vector<16x16x4xbf16> to vector<256x4xbf16>
    %c0_37 = arith.constant 0 : index
    %c12 = arith.constant 12 : index
    %31 = vector.load %arg8[%c0_37, %c12] : memref<256x36xbf16, #tpu.memory_space<vmem>>, vector<256x4xbf16>
    tpu.vector_store %arg8[%c0_37, %c12], %30 {strides = array<i32>} : memref<256x36xbf16, #tpu.memory_space<vmem>>, vector<256x4xbf16>,
    %c1_38 = arith.constant 1 : index
    %c1_39 = arith.constant 1 : index
    %c0_40 = arith.constant 0 : index
    %32 = vector.load %arg7[%c1_38, %c1_39, %c0_40] : memref<18x18x4xbf16, #tpu.memory_space<vmem>>, vector<16x16x4xbf16>
    %33 = vector.shape_cast %32 : vector<16x16x4xbf16> to vector<256x4xbf16>
    %c0_41 = arith.constant 0 : index
    %c16 = arith.constant 16 : index
    %34 = vector.load %arg8[%c0_41, %c16] : memref<256x36xbf16, #tpu.memory_space<vmem>>, vector<256x4xbf16>
    tpu.vector_store %arg8[%c0_41, %c16], %33 {strides = array<i32>} : memref<256x36xbf16, #tpu.memory_space<vmem>>, vector<256x4xbf16>,
    %c1_42 = arith.constant 1 : index
    %c2_43 = arith.constant 2 : index
    %c0_44 = arith.constant 0 : index
    %35 = vector.load %arg7[%c1_42, %c2_43, %c0_44] : memref<18x18x4xbf16, #tpu.memory_space<vmem>>, vector<16x16x4xbf16>
    %36 = vector.shape_cast %35 : vector<16x16x4xbf16> to vector<256x4xbf16>
    %c0_45 = arith.constant 0 : index
    %c20 = arith.constant 20 : index
    %37 = vector.load %arg8[%c0_45, %c20] : memref<256x36xbf16, #tpu.memory_space<vmem>>, vector<256x4xbf16>
    tpu.vector_store %arg8[%c0_45, %c20], %36 {strides = array<i32>} : memref<256x36xbf16, #tpu.memory_space<vmem>>, vector<256x4xbf16>,
    %c2_46 = arith.constant 2 : index
    %c0_47 = arith.constant 0 : index
    %c0_48 = arith.constant 0 : index
    %38 = vector.load %arg7[%c2_46, %c0_47, %c0_48] : memref<18x18x4xbf16, #tpu.memory_space<vmem>>, vector<16x16x4xbf16>
    %39 = vector.shape_cast %38 : vector<16x16x4xbf16> to vector<256x4xbf16>
    %c0_49 = arith.constant 0 : index
    %c24 = arith.constant 24 : index
    %40 = vector.load %arg8[%c0_49, %c24] : memref<256x36xbf16, #tpu.memory_space<vmem>>, vector<256x4xbf16>
    tpu.vector_store %arg8[%c0_49, %c24], %39 {strides = array<i32>} : memref<256x36xbf16, #tpu.memory_space<vmem>>, vector<256x4xbf16>,
    %c2_50 = arith.constant 2 : index
    %c1_51 = arith.constant 1 : index
    %c0_52 = arith.constant 0 : index
    %41 = vector.load %arg7[%c2_50, %c1_51, %c0_52] : memref<18x18x4xbf16, #tpu.memory_space<vmem>>, vector<16x16x4xbf16>
    %42 = vector.shape_cast %41 : vector<16x16x4xbf16> to vector<256x4xbf16>
    %c0_53 = arith.constant 0 : index
    %c28 = arith.constant 28 : index
    %43 = vector.load %arg8[%c0_53, %c28] : memref<256x36xbf16, #tpu.memory_space<vmem>>, vector<256x4xbf16>
    tpu.vector_store %arg8[%c0_53, %c28], %42 {strides = array<i32>} : memref<256x36xbf16, #tpu.memory_space<vmem>>, vector<256x4xbf16>,
    %c2_54 = arith.constant 2 : index
    %c2_55 = arith.constant 2 : index
    %c0_56 = arith.constant 0 : index
    %44 = vector.load %arg7[%c2_54, %c2_55, %c0_56] : memref<18x18x4xbf16, #tpu.memory_space<vmem>>, vector<16x16x4xbf16>
    %45 = vector.shape_cast %44 : vector<16x16x4xbf16> to vector<256x4xbf16>
    %c0_57 = arith.constant 0 : index
    %c32 = arith.constant 32 : index
    %46 = vector.load %arg8[%c0_57, %c32] : memref<256x36xbf16, #tpu.memory_space<vmem>>, vector<256x4xbf16>
    tpu.vector_store %arg8[%c0_57, %c32], %45 {strides = array<i32>} : memref<256x36xbf16, #tpu.memory_space<vmem>>, vector<256x4xbf16>,
    %c0_58 = arith.constant 0 : index
    %c0_59 = arith.constant 0 : index
    %47 = vector.load %arg8[%c0_58, %c0_59] : memref<256x36xbf16, #tpu.memory_space<vmem>>, vector<256x36xbf16>
    %c0_60 = arith.constant 0 : index
    %c0_61 = arith.constant 0 : index
    %48 = vector.load %arg2[%c0_60, %c0_61] : memref<36x4xbf16, #tpu.memory_space<vmem>>, vector<36x4xbf16>
    %cst_62 = arith.constant dense<0.000000e+00> : vector<256x4xf32>
    %49 = tpu.matmul %47, %48, %cst_62 {dimension_numbers = #tpu.dot_dimension_numbers<[1], [0], [0], [1], [0, 0, 1, 1], [], []>} : vector<256x36xbf16>, vector<36x4xbf16>, vector<256x4xf32> -> vector<256x4xf32>
    %50 = vector.shape_cast %49 : vector<256x4xf32> to vector<16x16x4xf32>
    %c0_63 = arith.constant 0 : index
    %c0_64 = arith.constant 0 : index
    %c0_65 = arith.constant 0 : index
    %c0_66 = arith.constant 0 : index
    %51 = vector.load %arg5[%c0_63, %c0_64, %c0_65, %c0_66] : memref<1x16x16x4xf32, #tpu.memory_space<vmem>>, vector<1x16x16x4xf32>
    %52 = vector.shape_cast %51 : vector<1x16x16x4xf32> to vector<16x16x4xf32>
    %53 = vector.shape_cast %50 : vector<16x16x4xf32> to vector<1x16x16x4xf32>
    tpu.vector_store %arg5[%c0_63, %c0_64, %c0_65, %c0_66], %53 {strides = array<i32>} : memref<1x16x16x4xf32, #tpu.memory_space<vmem>>, vector<1x16x16x4xf32>,
    %cst_67 = arith.constant dense<0.000000e+00> : vector<4xf32>
    %54 = vector.multi_reduction <add>, %49, %cst_67 [0] : vector<256x4xf32> to vector<4xf32>
    %55 = vector.shape_cast %54 : vector<4xf32> to vector<1x4xf32>
    %c0_68 = arith.constant 0 : index
    %c0_69 = arith.constant 0 : index
    %c0_70 = arith.constant 0 : index
    %56 = vector.load %arg6[%c0_68, %c0_69, %c0_70] : memref<1x2x4xf32, #tpu.memory_space<vmem>>, vector<1x1x4xf32>
    %57 = vector.shape_cast %56 : vector<1x1x4xf32> to vector<1x4xf32>
    %58 = vector.shape_cast %55 : vector<1x4xf32> to vector<1x1x4xf32>
    tpu.vector_store %arg6[%c0_68, %c0_69, %c0_70], %58 {strides = array<i32>} : memref<1x2x4xf32, #tpu.memory_space<vmem>>, vector<1x1x4xf32>,
    %59 = arith.mulf %49, %49 : vector<256x4xf32>
    %cst_71 = arith.constant dense<0.000000e+00> : vector<4xf32>
    %60 = vector.multi_reduction <add>, %59, %cst_71 [0] : vector<256x4xf32> to vector<4xf32>
    %61 = vector.shape_cast %60 : vector<4xf32> to vector<1x4xf32>
    %c0_72 = arith.constant 0 : index
    %c1_73 = arith.constant 1 : index
    %c0_74 = arith.constant 0 : index
    %62 = vector.load %arg6[%c0_72, %c1_73, %c0_74] : memref<1x2x4xf32, #tpu.memory_space<vmem>>, vector<1x1x4xf32>
    %63 = vector.shape_cast %62 : vector<1x1x4xf32> to vector<1x4xf32>
    %64 = vector.shape_cast %61 : vector<1x4xf32> to vector<1x1x4xf32>
    tpu.vector_store %arg6[%c0_72, %c1_73, %c0_74], %64 {strides = array<i32>} : memref<1x2x4xf32, #tpu.memory_space<vmem>>, vector<1x1x4xf32>,
    return
  }
  func.func @transform_0(%arg0: i32) -> (i32, i32, i32, i32) {
    %c0_i32 = arith.constant 0 : i32
    %c0_i32_0 = arith.constant 0 : i32
    %c0_i32_1 = arith.constant 0 : i32
    %c0_i32_2 = arith.constant 0 : i32
    return %arg0, %c0_i32, %c0_i32_0, %c0_i32_1 : i32, i32, i32, i32
  }
  func.func @transform_1(%arg0: i32) -> (i32, i32) {
    %c0_i32 = arith.constant 0 : i32
    %c0_i32_0 = arith.constant 0 : i32
    %c0_i32_1 = arith.constant 0 : i32
    return %c0_i32, %c0_i32_0 : i32, i32
  }
  func.func @transform_2(%arg0: i32) -> (i32, i32) {
    %c0_i32 = arith.constant 0 : i32
    %c0_i32_0 = arith.constant 0 : i32
    %c0_i32_1 = arith.constant 0 : i32
    return %c0_i32, %c0_i32_0 : i32, i32
  }
  func.func @transform_3(%arg0: i32) -> (i32, i32) {
    %c0_i32 = arith.constant 0 : i32
    %c0_i32_0 = arith.constant 0 : i32
    %c0_i32_1 = arith.constant 0 : i32
    return %c0_i32, %c0_i32_0 : i32, i32
  }
  func.func @transform_4(%arg0: i32) -> (i32, i32, i32, i32) {
    %c0_i32 = arith.constant 0 : i32
    %c0_i32_0 = arith.constant 0 : i32
    %c0_i32_1 = arith.constant 0 : i32
    %c0_i32_2 = arith.constant 0 : i32
    return %arg0, %c0_i32, %c0_i32_0, %c0_i32_1 : i32, i32, i32, i32
  }
  func.func @transform_5(%arg0: i32) -> (i32, i32, i32) {
    %c0_i32 = arith.constant 0 : i32
    %c0_i32_0 = arith.constant 0 : i32
    %c0_i32_1 = arith.constant 0 : i32
    return %arg0, %c0_i32, %c0_i32_0 : i32, i32, i32
  }
}

</mosaic_0001>

<llo_original>
// kernel: basic_block_forward.5
$region0: #{basic_block_forward.5}
  #allocation0 [shape = 'u32[]', space=smem, size = 0x4, offset = 0x4, fixed_abs, tag = 'smem constant byte address 0x4 - core index']
  #allocation1 [shape = 'u32[144,128]{1,0:T(1,128)}', space=vmem, size = 0x12000, scoped, tag = 'internal scratch']
  %s0 = inlined_call_operand.vmem [shape: f32[2,16,16,4], index: 0, kind: input, shape index: {}]
  %s1 = inlined_call_operand.vmem [shape: f32[2,16,16,4], index: 1, kind: input, shape index: {}]
  %s2 = inlined_call_operand.vmem [shape: f32[1,4], index: 2, kind: input, shape index: {}]
  %s3 = inlined_call_operand.vmem [shape: f32[1,4], index: 3, kind: input, shape index: {}]
  %s4 = inlined_call_operand.vmem [shape: f32[2,16,16,4], index: 4, kind: output, shape index: {}]
  %s5 = sld [smem:[#allocation0]]
  $region49: #{basic_block_forward.5} parent=0
    _
  %s7 = ssub.s32 1, %s5
  %s8 = scalar_select 0, %s7, %s5
  loop: start=0, step=1, limit=4
  $region2: #{basic_block_forward.5} parent=0 // loop_pre_header
    _
  $region3: #{basic_block_forward.5} parent=0 // loop_header
    %s10 = sphi 0, %s14
    %p11 = scmp.ge.s32.totalorder %s10, 4
    %s20 = sphi 0, %s22
    %s23 = sphi 0, %s20
    %s24 = sphi 0, %s23
    %s40 = sphi 0, %s24
    %s46 = sphi 0, %s48
    %s49 = sphi 0, %s46
    %s50 = sphi 0, %s49
    %s66 = sphi 0, %s50
    %s70 = sphi 0, %s70
    %s72 = sphi 0, %s70
    %s73 = sphi 0, %s72
    %s87 = sphi 0, %s73
    %s91 = sphi 0, %s91
    %s93 = sphi 0, %s91
    %s94 = sphi 0, %s93
    %s108 = sphi 0, %s94
    %s114 = sphi 0, %s116
    %s117 = sphi 0, %s114
    %s118 = sphi 0, %s117
    %s134 = sphi 0, %s118
  $region4: #{basic_block_forward.5} parent=0 // loop_header_branch
    %13 = sbr.rel (%p11) target = $region8
  $region5: #{basic_block_forward.5} parent=0 // loop_body
    %s15 = ssub.s32 %s10, 1
    %s16 = ssub.s32 %s10, 2
    %s17 = sadd.s32 %s10, 1
    %s18 = ssub.s32 %s10, %s17
    %p19 = scmp.eq.s32.totalorder %s18, 0
    %s21 = sadd.s32 %s20, 1
    %s22 = scalar_select %p19, %s20, %s21
    %p25 = pneg %p19
    %p26 = scmp.eq.s32.totalorder %s10, 1
    %p27 = por %p25, %p26
    %p28 = scmp.ne.s32.totalorder %s20, %s23
    %p29 = scmp.eq.s32.totalorder %s10, 0
    %p30 = por %p28, %p29
    %p31 = scmp.ne.s32.totalorder %s20, %s23
    %p32 = scmp.eq.s32.totalorder %s15, 1
    %p33 = por %p31, %p32
    %p34 = scmp.ne.s32.totalorder %s23, %s24
    %p35 = scmp.eq.s32.totalorder %s15, 0
    %p36 = por %p34, %p35
    %p37 = scmp.ne.s32.totalorder %s23, %s24
    %p38 = scmp.eq.s32.totalorder %s16, 1
    %p39 = por %p37, %p38
    %p41 = scmp.ne.s32.totalorder %s24, %s40
    %p42 = scmp.eq.s32.totalorder %s16, 0
    %p43 = por %p41, %p42
    %s44 = ssub.s32 %s10, %s17
    %p45 = scmp.eq.s32.totalorder %s44, 0
    %s47 = sadd.s32 %s46, 1
    %s48 = scalar_select %p45, %s46, %s47
    %p51 = pneg %p45
    %p52 = scmp.eq.s32.totalorder %s10, 1
    %p53 = por %p51, %p52
    %p54 = scmp.ne.s32.totalorder %s46, %s49
    %p55 = scmp.eq.s32.totalorder %s10, 0
    %p56 = por %p54, %p55
    %p57 = scmp.ne.s32.totalorder %s46, %s49
    %p58 = scmp.eq.s32.totalorder %s15, 1
    %p59 = por %p57, %p58
    %p60 = scmp.ne.s32.totalorder %s49, %s50
    %p61 = scmp.eq.s32.totalorder %s15, 0
    %p62 = por %p60, %p61
    %p63 = scmp.ne.s32.totalorder %s49, %s50
    %p64 = scmp.eq.s32.totalorder %s16, 1
    %p65 = por %p63, %p64
    %p67 = scmp.ne.s32.totalorder %s50, %s66
    %p68 = scmp.eq.s32.totalorder %s16, 0
    %p69 = por %p67, %p68
    %s71 = sadd.s32 %s70, 1
    %p74 = scmp.eq.s32.totalorder %s10, 1
    %p75 = scmp.ne.s32.totalorder %s70, %s72
    %p76 = scmp.eq.s32.totalorder %s10, 0
    %p77 = por %p75, %p76
    %p78 = scmp.ne.s32.totalorder %s70, %s72
    %p79 = scmp.eq.s32.totalorder %s15, 1
    %p80 = por %p78, %p79
    %p81 = scmp.ne.s32.totalorder %s72, %s73
    %p82 = scmp.eq.s32.totalorder %s15, 0
    %p83 = por %p81, %p82
    %p84 = scmp.ne.s32.totalorder %s72, %s73
    %p85 = scmp.eq.s32.totalorder %s16, 1
    %p86 = por %p84, %p85
    %p88 = scmp.ne.s32.totalorder %s73, %s87
    %p89 = scmp.eq.s32.totalorder %s16, 0
    %p90 = por %p88, %p89
    %s92 = sadd.s32 %s91, 1
    %p95 = scmp.eq.s32.totalorder %s10, 1
    %p96 = scmp.ne.s32.totalorder %s91, %s93
    %p97 = scmp.eq.s32.totalorder %s10, 0
    %p98 = por %p96, %p97
    %p99 = scmp.ne.s32.totalorder %s91, %s93
    %p100 = scmp.eq.s32.totalorder %s15, 1
    %p101 = por %p99, %p100
    %p102 = scmp.ne.s32.totalorder %s93, %s94
    %p103 = scmp.eq.s32.totalorder %s15, 0
    %p104 = por %p102, %p103
    %p105 = scmp.ne.s32.totalorder %s93, %s94
    %p106 = scmp.eq.s32.totalorder %s16, 1
    %p107 = por %p105, %p106
    %p109 = scmp.ne.s32.totalorder %s94, %s108
    %p110 = scmp.eq.s32.totalorder %s16, 0
    %p111 = por %p109, %p110
    %s112 = ssub.s32 %s10, %s17
    %p113 = scmp.eq.s32.totalorder %s112, 0
    %s115 = sadd.s32 %s114, 1
    %s116 = scalar_select %p113, %s114, %s115
    %p119 = pneg %p113
    %p120 = scmp.eq.s32.totalorder %s10, 1
    %p121 = por %p119, %p120
    %p122 = scmp.ne.s32.totalorder %s114, %s117
    %p123 = scmp.eq.s32.totalorder %s10, 0
    %p124 = por %p122, %p123
    %p125 = scmp.ne.s32.totalorder %s114, %s117
    %p126 = scmp.eq.s32.totalorder %s15, 1
    %p127 = por %p125, %p126
    %p128 = scmp.ne.s32.totalorder %s117, %s118
    %p129 = scmp.eq.s32.totalorder %s15, 0
    %p130 = por %p128, %p129
    %p131 = scmp.ne.s32.totalorder %s117, %s118
    %p132 = scmp.eq.s32.totalorder %s16, 1
    %p133 = por %p131, %p132
    %p135 = scmp.ne.s32.totalorder %s118, %s134
    %p136 = scmp.eq.s32.totalorder %s16, 0
    %p137 = por %p135, %p136
    %p138 = scmp.le.s32.totalorder 1, %s10
    %p139 = scmp.lt.s32.totalorder %s10, 3
    %p140 = pnand %p138, %p139
    %p141 = pneg %p140
    // Predicated region
    $region9: #{basic_block_forward.5} parent=5 // pred_check
      _
    $region10: #{basic_block_forward.5} parent=5 // pred_check_branch
      %143 = sbr.rel (%p140) target = $region12
    $region11: #{basic_block_forward.5} parent=5 // pred_region
      %s144 = ssub.s32 %s10, 1
      // Predicated region
      $region13: #{basic_block_forward.5} parent=11 // pred_check
        %p145 = pneg %p83
      $region14: #{basic_block_forward.5} parent=11 // pred_check_branch
        %147 = sbr.rel (%p145) target = $region16
      $region15: #{basic_block_forward.5} parent=11 // pred_region
        _
      $region16: #{basic_block_forward.5} parent=11 // pred_fallthru
        _
      // Predicated region
      $region17: #{basic_block_forward.5} parent=11 // pred_check
        %p148 = pneg %p104
      $region18: #{basic_block_forward.5} parent=11 // pred_check_branch
        %150 = sbr.rel (%p148) target = $region20
      $region19: #{basic_block_forward.5} parent=11 // pred_region
        _
      $region20: #{basic_block_forward.5} parent=11 // pred_fallthru
        _
    $region12: #{basic_block_forward.5} parent=5 // pred_fallthru
      _
    %p151 = scmp.lt.s32.totalorder %s10, 2
    // Predicated region
    $region21: #{basic_block_forward.5} parent=5 // pred_check
      %p152 = pneg %p151
    $region22: #{basic_block_forward.5} parent=5 // pred_check_branch
      %154 = sbr.rel (%p152) target = $region24
    $region23: #{basic_block_forward.5} parent=5 // pred_region
      // Predicated region
      $region25: #{basic_block_forward.5} parent=23 // pred_check
        %p155 = pneg %p30
      $region26: #{basic_block_forward.5} parent=23 // pred_check_branch
        %157 = sbr.rel (%p155) target = $region28
      $region27: #{basic_block_forward.5} parent=23 // pred_region
        %p158 = scmp.lt.s32.totalorder %s10, 1
        %s159 = scalar_select %p158, %s10, 1
        %s160 = smul.addr %s159, 32
        %s161 = smul.addr %s160, 8
        %s162 = scalar_lea.vmem %s0, %s161
      $region28: #{basic_block_forward.5} parent=23 // pred_fallthru
        _
      // Predicated region
      $region29: #{basic_block_forward.5} parent=23 // pred_check
        %p163 = pneg %p56
      $region30: #{basic_block_forward.5} parent=23 // pred_check_branch
        %165 = sbr.rel (%p163) target = $region32
      $region31: #{basic_block_forward.5} parent=23 // pred_region
        %p166 = scmp.lt.s32.totalorder %s10, 1
        %s167 = scalar_select %p166, %s10, 1
        %s168 = smul.addr %s167, 32
        %s169 = smul.addr %s168, 8
        %s170 = scalar_lea.vmem %s1, %s169
      $region32: #{basic_block_forward.5} parent=23 // pred_fallthru
        _
    $region24: #{basic_block_forward.5} parent=5 // pred_fallthru
      _
    %p171 = scmp.le.s32.totalorder 1, %s10
    %p172 = scmp.lt.s32.totalorder %s10, 3
    %p173 = pnand %p171, %p172
    %p174 = pneg %p173
    // Predicated region
    $region33: #{basic_block_forward.5} parent=5 // pred_check
      _
    $region34: #{basic_block_forward.5} parent=5 // pred_check_branch
      %176 = sbr.rel (%p173) target = $region36
    $region35: #{basic_block_forward.5} parent=5 // pred_region
      %s177 = ssub.s32 %s10, 1
      %p178 = scmp.lt.s32.totalorder %s15, 1
      %s179 = scalar_select %p178, %s15, 1
      %s180 = smul.addr %s179, 32
      %s181 = smul.addr %s180, 8
      %s182 = scalar_lea.vmem %s0, %s181
      %p183 = pneg %p36
      %p184 = pneg %p33
      %p185 = scmp.lt.s32.totalorder %s15, 1
      %s186 = scalar_select %p185, %s15, 1
      %s187 = smul.addr %s186, 32
      %s188 = smul.addr %s187, 8
      %s189 = scalar_lea.vmem %s1, %s188
      %p190 = pneg %p62
      %p191 = pneg %p59
      %p192 = pneg %p83
      %p193 = pneg %p80
      %p194 = pneg %p104
      %p195 = pneg %p101
      %p196 = pneg %p130
      %p197 = pneg %p127
      %p198 = scmp.lt.s32.totalorder %s15, 1
      %s199 = scalar_select %p198, %s15, 1
      %s200 = smul.addr %s199, 32
      %s201 = smul.addr %s200, 8
      %s202 = scalar_lea.vmem %s4, %s201
      %p203 = scmp.lt.s32.totalorder %s15, 1
      %s204 = scalar_select %p203, %s15, 1
      %s205 = smul.addr %s204, 32
      %s206 = smul.addr %s205, 8
      %s207 = scalar_lea.vmem %s0, %s206
      %p208 = scmp.lt.s32.totalorder %s15, 1
      %s209 = scalar_select %p208, %s15, 1
      %s210 = smul.addr %s209, 32
      %s211 = smul.addr %s210, 8
      %s212 = scalar_lea.vmem %s1, %s211
      %p213 = scmp.lt.s32.totalorder %s15, 1
      %s214 = scalar_select %p213, %s15, 1
      %s215 = smul.addr %s214, 32
      %s216 = smul.addr %s215, 8
      %s217 = scalar_lea.vmem %s4, %s216
      %v218 = vld [vmem:[%s207] sm:$0xff]
      %v219 = vld [vmem:[%s207 + $0x8] sm:$0xff]
      %v220 = vld [vmem:[%s207 + $0x10] sm:$0xff]
      %v221 = vld [vmem:[%s207 + $0x18] sm:$0xff]
      %v222 = vld [vmem:[%s207 + $0x20] sm:$0xff]
      %v223 = vld [vmem:[%s207 + $0x28] sm:$0xff]
      %v224 = vld [vmem:[%s207 + $0x30] sm:$0xff]
      %v225 = vld [vmem:[%s207 + $0x38] sm:$0xff]
      %v226 = vld [vmem:[%s207 + $0x40] sm:$0xff]
      %v227 = vld [vmem:[%s207 + $0x48] sm:$0xff]
      %v228 = vld [vmem:[%s207 + $0x50] sm:$0xff]
      %v229 = vld [vmem:[%s207 + $0x58] sm:$0xff]
      %v230 = vld [vmem:[%s207 + $0x60] sm:$0xff]
      %v231 = vld [vmem:[%s207 + $0x68] sm:$0xff]
      %v232 = vld [vmem:[%s207 + $0x70] sm:$0xff]
      %v233 = vld [vmem:[%s207 + $0x78] sm:$0xff]
      %v234 = vld [vmem:[%s207 + $0x80] sm:$0xff]
      %v235 = vld [vmem:[%s207 + $0x88] sm:$0xff]
      %v236 = vld [vmem:[%s207 + $0x90] sm:$0xff]
      %v237 = vld [vmem:[%s207 + $0x98] sm:$0xff]
      %v238 = vld [vmem:[%s207 + $0xa0] sm:$0xff]
      %v239 = vld [vmem:[%s207 + $0xa8] sm:$0xff]
      %v240 = vld [vmem:[%s207 + $0xb0] sm:$0xff]
      %v241 = vld [vmem:[%s207 + $0xb8] sm:$0xff]
      %v242 = vld [vmem:[%s207 + $0xc0] sm:$0xff]
      %v243 = vld [vmem:[%s207 + $0xc8] sm:$0xff]
      %v244 = vld [vmem:[%s207 + $0xd0] sm:$0xff]
      %v245 = vld [vmem:[%s207 + $0xd8] sm:$0xff]
      %v246 = vld [vmem:[%s207 + $0xe0] sm:$0xff]
      %v247 = vld [vmem:[%s207 + $0xe8] sm:$0xff]
      %v248 = vld [vmem:[%s207 + $0xf0] sm:$0xff]
      %v249 = vld [vmem:[%s207 + $0xf8] sm:$0xff]
      %v250 = vld [vmem:[%s2] sm:$0x1]
      %v252 = vlaneseq
      %v253 = vshrl.u32 %v252, 7
      %v254 = vsub.s32 0, %v253
      %v255 = vrot.slane %v250, %v254
      %v257 = vmul.f32 %v218, %v255
      %v258 = vmul.f32 %v219, %v255
      %v259 = vmul.f32 %v220, %v255
      %v260 = vmul.f32 %v221, %v255
      %v261 = vmul.f32 %v222, %v255
      %v262 = vmul.f32 %v223, %v255
      %v263 = vmul.f32 %v224, %v255
      %v264 = vmul.f32 %v225, %v255
      %v265 = vmul.f32 %v226, %v255
      %v266 = vmul.f32 %v227, %v255
      %v267 = vmul.f32 %v228, %v255
      %v268 = vmul.f32 %v229, %v255
      %v269 = vmul.f32 %v230, %v255
      %v270 = vmul.f32 %v231, %v255
      %v271 = vmul.f32 %v232, %v255
      %v272 = vmul.f32 %v233, %v255
      %v273 = vmul.f32 %v234, %v255
      %v274 = vmul.f32 %v235, %v255
      %v275 = vmul.f32 %v236, %v255
      %v276 = vmul.f32 %v237, %v255
      %v277 = vmul.f32 %v238, %v255
      %v278 = vmul.f32 %v239, %v255
      %v279 = vmul.f32 %v240, %v255
      %v280 = vmul.f32 %v241, %v255
      %v281 = vmul.f32 %v242, %v255
      %v282 = vmul.f32 %v243, %v255
      %v283 = vmul.f32 %v244, %v255
      %v284 = vmul.f32 %v245, %v255
      %v285 = vmul.f32 %v246, %v255
      %v286 = vmul.f32 %v247, %v255
      %v287 = vmul.f32 %v248, %v255
      %v288 = vmul.f32 %v249, %v255
      %v289 = vld [vmem:[%s3] sm:$0x1]
      %v291 = vlaneseq
      %v292 = vshrl.u32 %v291, 7
      %v293 = vsub.s32 0, %v292
      %v294 = vrot.slane %v289, %v293
      %v296 = vadd.f32 %v257, %v294
      %v297 = vadd.f32 %v258, %v294
      %v298 = vadd.f32 %v259, %v294
      %v299 = vadd.f32 %v260, %v294
      %v300 = vadd.f32 %v261, %v294
      %v301 = vadd.f32 %v262, %v294
      %v302 = vadd.f32 %v263, %v294
      %v303 = vadd.f32 %v264, %v294
      %v304 = vadd.f32 %v265, %v294
      %v305 = vadd.f32 %v266, %v294
      %v306 = vadd.f32 %v267, %v294
      %v307 = vadd.f32 %v268, %v294
      %v308 = vadd.f32 %v269, %v294
      %v309 = vadd.f32 %v270, %v294
      %v310 = vadd.f32 %v271, %v294
      %v311 = vadd.f32 %v272, %v294
      %v312 = vadd.f32 %v273, %v294
      %v313 = vadd.f32 %v274, %v294
      %v314 = vadd.f32 %v275, %v294
      %v315 = vadd.f32 %v276, %v294
      %v316 = vadd.f32 %v277, %v294
      %v317 = vadd.f32 %v278, %v294
      %v318 = vadd.f32 %v279, %v294
      %v319 = vadd.f32 %v280, %v294
      %v320 = vadd.f32 %v281, %v294
      %v321 = vadd.f32 %v282, %v294
      %v322 = vadd.f32 %v283, %v294
      %v323 = vadd.f32 %v284, %v294
      %v324 = vadd.f32 %v285, %v294
      %v325 = vadd.f32 %v286, %v294
      %v326 = vadd.f32 %v287, %v294
      %v327 = vadd.f32 %v288, %v294
      %v328 = vld [vmem:[%s212] sm:$0xff]
      %v329 = vld [vmem:[%s212 + $0x8] sm:$0xff]
      %v330 = vld [vmem:[%s212 + $0x10] sm:$0xff]
      %v331 = vld [vmem:[%s212 + $0x18] sm:$0xff]
      %v332 = vld [vmem:[%s212 + $0x20] sm:$0xff]
      %v333 = vld [vmem:[%s212 + $0x28] sm:$0xff]
      %v334 = vld [vmem:[%s212 + $0x30] sm:$0xff]
      %v335 = vld [vmem:[%s212 + $0x38] sm:$0xff]
      %v336 = vld [vmem:[%s212 + $0x40] sm:$0xff]
      %v337 = vld [vmem:[%s212 + $0x48] sm:$0xff]
      %v338 = vld [vmem:[%s212 + $0x50] sm:$0xff]
      %v339 = vld [vmem:[%s212 + $0x58] sm:$0xff]
      %v340 = vld [vmem:[%s212 + $0x60] sm:$0xff]
      %v341 = vld [vmem:[%s212 + $0x68] sm:$0xff]
      %v342 = vld [vmem:[%s212 + $0x70] sm:$0xff]
      %v343 = vld [vmem:[%s212 + $0x78] sm:$0xff]
      %v344 = vld [vmem:[%s212 + $0x80] sm:$0xff]
      %v345 = vld [vmem:[%s212 + $0x88] sm:$0xff]
      %v346 = vld [vmem:[%s212 + $0x90] sm:$0xff]
      %v347 = vld [vmem:[%s212 + $0x98] sm:$0xff]
      %v348 = vld [vmem:[%s212 + $0xa0] sm:$0xff]
      %v349 = vld [vmem:[%s212 + $0xa8] sm:$0xff]
      %v350 = vld [vmem:[%s212 + $0xb0] sm:$0xff]
      %v351 = vld [vmem:[%s212 + $0xb8] sm:$0xff]
      %v352 = vld [vmem:[%s212 + $0xc0] sm:$0xff]
      %v353 = vld [vmem:[%s212 + $0xc8] sm:$0xff]
      %v354 = vld [vmem:[%s212 + $0xd0] sm:$0xff]
      %v355 = vld [vmem:[%s212 + $0xd8] sm:$0xff]
      %v356 = vld [vmem:[%s212 + $0xe0] sm:$0xff]
      %v357 = vld [vmem:[%s212 + $0xe8] sm:$0xff]
      %v358 = vld [vmem:[%s212 + $0xf0] sm:$0xff]
      %v359 = vld [vmem:[%s212 + $0xf8] sm:$0xff]
      %v360 = vadd.f32 %v296, %v328
      %v361 = vadd.f32 %v297, %v329
      %v362 = vadd.f32 %v298, %v330
      %v363 = vadd.f32 %v299, %v331
      %v364 = vadd.f32 %v300, %v332
      %v365 = vadd.f32 %v301, %v333
      %v366 = vadd.f32 %v302, %v334
      %v367 = vadd.f32 %v303, %v335
      %v368 = vadd.f32 %v304, %v336
      %v369 = vadd.f32 %v305, %v337
      %v370 = vadd.f32 %v306, %v338
      %v371 = vadd.f32 %v307, %v339
      %v372 = vadd.f32 %v308, %v340
      %v373 = vadd.f32 %v309, %v341
      %v374 = vadd.f32 %v310, %v342
      %v375 = vadd.f32 %v311, %v343
      %v376 = vadd.f32 %v312, %v344
      %v377 = vadd.f32 %v313, %v345
      %v378 = vadd.f32 %v314, %v346
      %v379 = vadd.f32 %v315, %v347
      %v380 = vadd.f32 %v316, %v348
      %v381 = vadd.f32 %v317, %v349
      %v382 = vadd.f32 %v318, %v350
      %v383 = vadd.f32 %v319, %v351
      %v384 = vadd.f32 %v320, %v352
      %v385 = vadd.f32 %v321, %v353
      %v386 = vadd.f32 %v322, %v354
      %v387 = vadd.f32 %v323, %v355
      %v388 = vadd.f32 %v324, %v356
      %v389 = vadd.f32 %v325, %v357
      %v390 = vadd.f32 %v326, %v358
      %v391 = vadd.f32 %v327, %v359
      %v392 = vmax.f32 %v360, 0.0
      %v393 = vmax.f32 %v361, 0.0
      %v394 = vmax.f32 %v362, 0.0
      %v395 = vmax.f32 %v363, 0.0
      %v396 = vmax.f32 %v364, 0.0
      %v397 = vmax.f32 %v365, 0.0
      %v398 = vmax.f32 %v366, 0.0
      %v399 = vmax.f32 %v367, 0.0
      %v400 = vmax.f32 %v368, 0.0
      %v401 = vmax.f32 %v369, 0.0
      %v402 = vmax.f32 %v370, 0.0
      %v403 = vmax.f32 %v371, 0.0
      %v404 = vmax.f32 %v372, 0.0
      %v405 = vmax.f32 %v373, 0.0
      %v406 = vmax.f32 %v374, 0.0
      %v407 = vmax.f32 %v375, 0.0
      %v408 = vmax.f32 %v376, 0.0
      %v409 = vmax.f32 %v377, 0.0
      %v410 = vmax.f32 %v378, 0.0
      %v411 = vmax.f32 %v379, 0.0
      %v412 = vmax.f32 %v380, 0.0
      %v413 = vmax.f32 %v381, 0.0
      %v414 = vmax.f32 %v382, 0.0
      %v415 = vmax.f32 %v383, 0.0
      %v416 = vmax.f32 %v384, 0.0
      %v417 = vmax.f32 %v385, 0.0
      %v418 = vmax.f32 %v386, 0.0
      %v419 = vmax.f32 %v387, 0.0
      %v420 = vmax.f32 %v388, 0.0
      %v421 = vmax.f32 %v389, 0.0
      %v422 = vmax.f32 %v390, 0.0
      %v423 = vmax.f32 %v391, 0.0
      %vm424 = vcmask 31744
      %425 = vst.msk [vmem:[%s217] sm:$0xff] %vm424, %v392
      %426 = vst.msk [vmem:[%s217 + $0x8] sm:$0xff] %vm424, %v393
      %427 = vst.msk [vmem:[%s217 + $0x10] sm:$0xff] %vm424, %v394
      %428 = vst.msk [vmem:[%s217 + $0x18] sm:$0xff] %vm424, %v395
      %429 = vst.msk [vmem:[%s217 + $0x20] sm:$0xff] %vm424, %v396
      %430 = vst.msk [vmem:[%s217 + $0x28] sm:$0xff] %vm424, %v397
      %431 = vst.msk [vmem:[%s217 + $0x30] sm:$0xff] %vm424, %v398
      %432 = vst.msk [vmem:[%s217 + $0x38] sm:$0xff] %vm424, %v399
      %433 = vst.msk [vmem:[%s217 + $0x40] sm:$0xff] %vm424, %v400
      %434 = vst.msk [vmem:[%s217 + $0x48] sm:$0xff] %vm424, %v401
      %435 = vst.msk [vmem:[%s217 + $0x50] sm:$0xff] %vm424, %v402
      %436 = vst.msk [vmem:[%s217 + $0x58] sm:$0xff] %vm424, %v403
      %437 = vst.msk [vmem:[%s217 + $0x60] sm:$0xff] %vm424, %v404
      %438 = vst.msk [vmem:[%s217 + $0x68] sm:$0xff] %vm424, %v405
      %439 = vst.msk [vmem:[%s217 + $0x70] sm:$0xff] %vm424, %v406
      %440 = vst.msk [vmem:[%s217 + $0x78] sm:$0xff] %vm424, %v407
      %441 = vst.msk [vmem:[%s217 + $0x80] sm:$0xff] %vm424, %v408
      %442 = vst.msk [vmem:[%s217 + $0x88] sm:$0xff] %vm424, %v409
      %443 = vst.msk [vmem:[%s217 + $0x90] sm:$0xff] %vm424, %v410
      %444 = vst.msk [vmem:[%s217 + $0x98] sm:$0xff] %vm424, %v411
      %445 = vst.msk [vmem:[%s217 + $0xa0] sm:$0xff] %vm424, %v412
      %446 = vst.msk [vmem:[%s217 + $0xa8] sm:$0xff] %vm424, %v413
      %447 = vst.msk [vmem:[%s217 + $0xb0] sm:$0xff] %vm424, %v414
      %448 = vst.msk [vmem:[%s217 + $0xb8] sm:$0xff] %vm424, %v415
      %449 = vst.msk [vmem:[%s217 + $0xc0] sm:$0xff] %vm424, %v416
      %450 = vst.msk [vmem:[%s217 + $0xc8] sm:$0xff] %vm424, %v417
      %451 = vst.msk [vmem:[%s217 + $0xd0] sm:$0xff] %vm424, %v418
      %452 = vst.msk [vmem:[%s217 + $0xd8] sm:$0xff] %vm424, %v419
      %453 = vst.msk [vmem:[%s217 + $0xe0] sm:$0xff] %vm424, %v420
      %454 = vst.msk [vmem:[%s217 + $0xe8] sm:$0xff] %vm424, %v421
      %455 = vst.msk [vmem:[%s217 + $0xf0] sm:$0xff] %vm424, %v422
      %456 = vst.msk [vmem:[%s217 + $0xf8] sm:$0xff] %vm424, %v423
      %p457 = scmp.lt.s32.totalorder %s15, 1
      %s458 = scalar_select %p457, %s15, 1
      %s459 = smul.addr %s458, 32
      %s460 = smul.addr %s459, 8
      %s461 = scalar_lea.vmem %s4, %s460
      // Predicated region
      $region37: #{basic_block_forward.5} parent=35 // pred_check
        %p462 = pneg %p127
      $region38: #{basic_block_forward.5} parent=35 // pred_check_branch
        %464 = sbr.rel (%p462) target = $region40
      $region39: #{basic_block_forward.5} parent=35 // pred_region
        _
      $region40: #{basic_block_forward.5} parent=35 // pred_fallthru
        _
    $region36: #{basic_block_forward.5} parent=5 // pred_fallthru
      _
    %p465 = scmp.le.s32.totalorder 2, %s10
    // Predicated region
    $region41: #{basic_block_forward.5} parent=5 // pred_check
      %p466 = pneg %p465
    $region42: #{basic_block_forward.5} parent=5 // pred_check_branch
      %468 = sbr.rel (%p466) target = $region44
    $region43: #{basic_block_forward.5} parent=5 // pred_region
      %s469 = ssub.s32 %s10, 2
      // Predicated region
      $region45: #{basic_block_forward.5} parent=43 // pred_check
        %p470 = pneg %p133
      $region46: #{basic_block_forward.5} parent=43 // pred_check_branch
        %472 = sbr.rel (%p470) target = $region48
      $region47: #{basic_block_forward.5} parent=43 // pred_region
        %p473 = scmp.lt.s32.totalorder %s16, 1
        %s474 = scalar_select %p473, %s16, 1
        %s475 = smul.addr %s474, 32
        %s476 = smul.addr %s475, 8
        %s477 = scalar_lea.vmem %s4, %s476
      $region48: #{basic_block_forward.5} parent=43 // pred_fallthru
        _
    $region44: #{basic_block_forward.5} parent=5 // pred_fallthru
      _
  $region6: #{basic_block_forward.5} parent=0 // loop_footer
    %s14 = sadd.s32 1, %s10
  $region7: #{basic_block_forward.5} parent=0 // loop_footer_branch
    %9 = sbr.rel target = $region3
  $region8: #{basic_block_forward.5} parent=0 // loop_exit
    _

// kernel: basic_block_forward.3
$region0: #{basic_block_forward.3}
  #allocation0 [shape = 'u32[]', space=smem, size = 0x4, offset = 0x4, fixed_abs, tag = 'smem constant byte address 0x4 - core index']
  #allocation1 [shape = 'u32[144,128]{1,0:T(1,128)}', space=vmem, size = 0x12000, scoped, tag = 'internal scratch']
  #allocation2 [shape = 'bf16[18,18,4]{2,1,0:T(8,128)(2,1)}', space=vmem, size = 0x1b000, scoped, tag = 'scratch operand']
  #allocation3 [shape = 'bf16[256,36]{1,0:T(16,128)(2,1)}', space=vmem, size = 0x10000, scoped, tag = 'scratch operand']
  %s0 = inlined_call_operand.vmem [shape: f32[2,16,16,4], index: 0, kind: input, shape index: {}]
  %s1 = inlined_call_operand.vmem [shape: bf16[36,4], index: 1, kind: input, shape index: {}]
  %s2 = inlined_call_operand.vmem [shape: f32[1,4], index: 2, kind: input, shape index: {}]
  %s3 = inlined_call_operand.vmem [shape: f32[1,4], index: 3, kind: input, shape index: {}]
  %s4 = inlined_call_operand.vmem [shape: f32[2,16,16,4], index: 4, kind: output, shape index: {0}]
  %s5 = inlined_call_operand.vmem [shape: f32[2,2,4], index: 5, kind: output, shape index: {1}]
  %6 = xla_tuple %s4, %s5
  %s7 = sld [smem:[#allocation0]]
  $region57: #{basic_block_forward.3} parent=0
    _
  %s9 = ssub.s32 1, %s7
  %s10 = scalar_select 0, %s9, %s7
  loop: start=0, step=1, limit=4
  $region2: #{basic_block_forward.3} parent=0 // loop_pre_header
    _
  $region3: #{basic_block_forward.3} parent=0 // loop_header
    %s12 = sphi 0, %s16
    %p13 = scmp.ge.s32.totalorder %s12, 4
    %s22 = sphi 0, %s24
    %s25 = sphi 0, %s22
    %s26 = sphi 0, %s25
    %s42 = sphi 0, %s26
    %s46 = sphi 0, %s46
    %s48 = sphi 0, %s46
    %s49 = sphi 0, %s48
    %s63 = sphi 0, %s49
    %s67 = sphi 0, %s67
    %s69 = sphi 0, %s67
    %s70 = sphi 0, %s69
    %s84 = sphi 0, %s70
    %s88 = sphi 0, %s88
    %s90 = sphi 0, %s88
    %s91 = sphi 0, %s90
    %s105 = sphi 0, %s91
    %s111 = sphi 0, %s113
    %s114 = sphi 0, %s111
    %s115 = sphi 0, %s114
    %s131 = sphi 0, %s115
    %s137 = sphi 0, %s139
    %s140 = sphi 0, %s137
    %s141 = sphi 0, %s140
    %s157 = sphi 0, %s141
  $region4: #{basic_block_forward.3} parent=0 // loop_header_branch
    %15 = sbr.rel (%p13) target = $region8
  $region5: #{basic_block_forward.3} parent=0 // loop_body
    %s17 = ssub.s32 %s12, 1
    %s18 = ssub.s32 %s12, 2
    %s19 = sadd.s32 %s12, 1
    %s20 = ssub.s32 %s12, %s19
    %p21 = scmp.eq.s32.totalorder %s20, 0
    %s23 = sadd.s32 %s22, 1
    %s24 = scalar_select %p21, %s22, %s23
    %p27 = pneg %p21
    %p28 = scmp.eq.s32.totalorder %s12, 1
    %p29 = por %p27, %p28
    %p30 = scmp.ne.s32.totalorder %s22, %s25
    %p31 = scmp.eq.s32.totalorder %s12, 0
    %p32 = por %p30, %p31
    %p33 = scmp.ne.s32.totalorder %s22, %s25
    %p34 = scmp.eq.s32.totalorder %s17, 1
    %p35 = por %p33, %p34
    %p36 = scmp.ne.s32.totalorder %s25, %s26
    %p37 = scmp.eq.s32.totalorder %s17, 0
    %p38 = por %p36, %p37
    %p39 = scmp.ne.s32.totalorder %s25, %s26
    %p40 = scmp.eq.s32.totalorder %s18, 1
    %p41 = por %p39, %p40
    %p43 = scmp.ne.s32.totalorder %s26, %s42
    %p44 = scmp.eq.s32.totalorder %s18, 0
    %p45 = por %p43, %p44
    %s47 = sadd.s32 %s46, 1
    %p50 = scmp.eq.s32.totalorder %s12, 1
    %p51 = scmp.ne.s32.totalorder %s46, %s48
    %p52 = scmp.eq.s32.totalorder %s12, 0
    %p53 = por %p51, %p52
    %p54 = scmp.ne.s32.totalorder %s46, %s48
    %p55 = scmp.eq.s32.totalorder %s17, 1
    %p56 = por %p54, %p55
    %p57 = scmp.ne.s32.totalorder %s48, %s49
    %p58 = scmp.eq.s32.totalorder %s17, 0
    %p59 = por %p57, %p58
    %p60 = scmp.ne.s32.totalorder %s48, %s49
    %p61 = scmp.eq.s32.totalorder %s18, 1
    %p62 = por %p60, %p61
    %p64 = scmp.ne.s32.totalorder %s49, %s63
    %p65 = scmp.eq.s32.totalorder %s18, 0
    %p66 = por %p64, %p65
    %s68 = sadd.s32 %s67, 1
    %p71 = scmp.eq.s32.totalorder %s12, 1
    %p72 = scmp.ne.s32.totalorder %s67, %s69
    %p73 = scmp.eq.s32.totalorder %s12, 0
    %p74 = por %p72, %p73
    %p75 = scmp.ne.s32.totalorder %s67, %s69
    %p76 = scmp.eq.s32.totalorder %s17, 1
    %p77 = por %p75, %p76
    %p78 = scmp.ne.s32.totalorder %s69, %s70
    %p79 = scmp.eq.s32.totalorder %s17, 0
    %p80 = por %p78, %p79
    %p81 = scmp.ne.s32.totalorder %s69, %s70
    %p82 = scmp.eq.s32.totalorder %s18, 1
    %p83 = por %p81, %p82
    %p85 = scmp.ne.s32.totalorder %s70, %s84
    %p86 = scmp.eq.s32.totalorder %s18, 0
    %p87 = por %p85, %p86
    %s89 = sadd.s32 %s88, 1
    %p92 = scmp.eq.s32.totalorder %s12, 1
    %p93 = scmp.ne.s32.totalorder %s88, %s90
    %p94 = scmp.eq.s32.totalorder %s12, 0
    %p95 = por %p93, %p94
    %p96 = scmp.ne.s32.totalorder %s88, %s90
    %p97 = scmp.eq.s32.totalorder %s17, 1
    %p98 = por %p96, %p97
    %p99 = scmp.ne.s32.totalorder %s90, %s91
    %p100 = scmp.eq.s32.totalorder %s17, 0
    %p101 = por %p99, %p100
    %p102 = scmp.ne.s32.totalorder %s90, %s91
    %p103 = scmp.eq.s32.totalorder %s18, 1
    %p104 = por %p102, %p103
    %p106 = scmp.ne.s32.totalorder %s91, %s105
    %p107 = scmp.eq.s32.totalorder %s18, 0
    %p108 = por %p106, %p107
    %s109 = ssub.s32 %s12, %s19
    %p110 = scmp.eq.s32.totalorder %s109, 0
    %s112 = sadd.s32 %s111, 1
    %s113 = scalar_select %p110, %s111, %s112
    %p116 = pneg %p110
    %p117 = scmp.eq.s32.totalorder %s12, 1
    %p118 = por %p116, %p117
    %p119 = scmp.ne.s32.totalorder %s111, %s114
    %p120 = scmp.eq.s32.totalorder %s12, 0
    %p121 = por %p119, %p120
    %p122 = scmp.ne.s32.totalorder %s111, %s114
    %p123 = scmp.eq.s32.totalorder %s17, 1
    %p124 = por %p122, %p123
    %p125 = scmp.ne.s32.totalorder %s114, %s115
    %p126 = scmp.eq.s32.totalorder %s17, 0
    %p127 = por %p125, %p126
    %p128 = scmp.ne.s32.totalorder %s114, %s115
    %p129 = scmp.eq.s32.totalorder %s18, 1
    %p130 = por %p128, %p129
    %p132 = scmp.ne.s32.totalorder %s115, %s131
    %p133 = scmp.eq.s32.totalorder %s18, 0
    %p134 = por %p132, %p133
    %s135 = ssub.s32 %s12, %s19
    %p136 = scmp.eq.s32.totalorder %s135, 0
    %s138 = sadd.s32 %s137, 1
    %s139 = scalar_select %p136, %s137, %s138
    %p142 = pneg %p136
    %p143 = scmp.eq.s32.totalorder %s12, 1
    %p144 = por %p142, %p143
    %p145 = scmp.ne.s32.totalorder %s137, %s140
    %p146 = scmp.eq.s32.totalorder %s12, 0
    %p147 = por %p145, %p146
    %p148 = scmp.ne.s32.totalorder %s137, %s140
    %p149 = scmp.eq.s32.totalorder %s17, 1
    %p150 = por %p148, %p149
    %p151 = scmp.ne.s32.totalorder %s140, %s141
    %p152 = scmp.eq.s32.totalorder %s17, 0
    %p153 = por %p151, %p152
    %p154 = scmp.ne.s32.totalorder %s140, %s141
    %p155 = scmp.eq.s32.totalorder %s18, 1
    %p156 = por %p154, %p155
    %p158 = scmp.ne.s32.totalorder %s141, %s157
    %p159 = scmp.eq.s32.totalorder %s18, 0
    %p160 = por %p158, %p159
    %p161 = scmp.le.s32.totalorder 1, %s12
    %p162 = scmp.lt.s32.totalorder %s12, 3
    %p163 = pnand %p161, %p162
    %p164 = pneg %p163
    // Predicated region
    $region9: #{basic_block_forward.3} parent=5 // pred_check
      _
    $region10: #{basic_block_forward.3} parent=5 // pred_check_branch
      %166 = sbr.rel (%p163) target = $region12
    $region11: #{basic_block_forward.3} parent=5 // pred_region
      %s167 = ssub.s32 %s12, 1
      // Predicated region
      $region13: #{basic_block_forward.3} parent=11 // pred_check
        %p168 = pneg %p59
      $region14: #{basic_block_forward.3} parent=11 // pred_check_branch
        %170 = sbr.rel (%p168) target = $region16
      $region15: #{basic_block_forward.3} parent=11 // pred_region
        _
      $region16: #{basic_block_forward.3} parent=11 // pred_fallthru
        _
      // Predicated region
      $region17: #{basic_block_forward.3} parent=11 // pred_check
        %p171 = pneg %p80
      $region18: #{basic_block_forward.3} parent=11 // pred_check_branch
        %173 = sbr.rel (%p171) target = $region20
      $region19: #{basic_block_forward.3} parent=11 // pred_region
        _
      $region20: #{basic_block_forward.3} parent=11 // pred_fallthru
        _
      // Predicated region
      $region21: #{basic_block_forward.3} parent=11 // pred_check
        %p174 = pneg %p101
      $region22: #{basic_block_forward.3} parent=11 // pred_check_branch
        %176 = sbr.rel (%p174) target = $region24
      $region23: #{basic_block_forward.3} parent=11 // pred_region
        _
      $region24: #{basic_block_forward.3} parent=11 // pred_fallthru
        _
    $region12: #{basic_block_forward.3} parent=5 // pred_fallthru
      _
    %p177 = scmp.lt.s32.totalorder %s12, 2
    // Predicated region
    $region25: #{basic_block_forward.3} parent=5 // pred_check
      %p178 = pneg %p177
    $region26: #{basic_block_forward.3} parent=5 // pred_check_branch
      %180 = sbr.rel (%p178) target = $region28
    $region27: #{basic_block_forward.3} parent=5 // pred_region
      // Predicated region
      $region29: #{basic_block_forward.3} parent=27 // pred_check
        %p181 = pneg %p32
      $region30: #{basic_block_forward.3} parent=27 // pred_check_branch
        %183 = sbr.rel (%p181) target = $region32
      $region31: #{basic_block_forward.3} parent=27 // pred_region
        %p184 = scmp.lt.s32.totalorder %s12, 1
        %s185 = scalar_select %p184, %s12, 1
        %s186 = smul.addr %s185, 32
        %s187 = smul.addr %s186, 8
        %s188 = scalar_lea.vmem %s0, %s187
      $region32: #{basic_block_forward.3} parent=27 // pred_fallthru
        _
    $region28: #{basic_block_forward.3} parent=5 // pred_fallthru
      _
    %p189 = scmp.le.s32.totalorder 1, %s12
    %p190 = scmp.lt.s32.totalorder %s12, 3
    %p191 = pnand %p189, %p190
    %p192 = pneg %p191
    // Predicated region
    $region33: #{basic_block_forward.3} parent=5 // pred_check
      _
    $region34: #{basic_block_forward.3} parent=5 // pred_check_branch
      %194 = sbr.rel (%p191) target = $region36
    $region35: #{basic_block_forward.3} parent=5 // pred_region
      %s195 = ssub.s32 %s12, 1
      %p196 = scmp.lt.s32.totalorder %s17, 1
      %s197 = scalar_select %p196, %s17, 1
      %s198 = smul.addr %s197, 32
      %s199 = smul.addr %s198, 8
      %s200 = scalar_lea.vmem %s0, %s199
      %p201 = pneg %p38
      %p202 = pneg %p35
      %p203 = pneg %p59
      %p204 = pneg %p56
      %p205 = pneg %p80
      %p206 = pneg %p77
      %p207 = pneg %p101
      %p208 = pneg %p98
      %p209 = pneg %p127
      %p210 = pneg %p124
      %p211 = scmp.lt.s32.totalorder %s17, 1
      %s212 = scalar_select %p211, %s17, 1
      %s213 = smul.addr %s212, 32
      %s214 = smul.addr %s213, 8
      %s215 = scalar_lea.vmem %s4, %s214
      %p216 = pneg %p153
      %p217 = pneg %p150
      %p218 = scmp.lt.s32.totalorder %s17, 1
      %s219 = scalar_select %p218, %s17, 1
      %s220 = smul.addr %s219, 2
      %s221 = scalar_lea.vmem %s5, %s220
      %p222 = scmp.lt.s32.totalorder %s17, 1
      %s223 = scalar_select %p222, %s17, 1
      %s224 = smul.addr %s223, 32
      %s225 = smul.addr %s224, 8
      %s226 = scalar_lea.vmem %s0, %s225
      %p227 = scmp.lt.s32.totalorder %s17, 1
      %s228 = scalar_select %p227, %s17, 1
      %s229 = smul.addr %s228, 32
      %s230 = smul.addr %s229, 8
      %s231 = scalar_lea.vmem %s4, %s230
      %p232 = scmp.lt.s32.totalorder %s17, 1
      %s233 = scalar_select %p232, %s17, 1
      %s234 = smul.addr %s233, 2
      %s235 = scalar_lea.vmem %s5, %s234
      %v237 = vld [vmem:[%s226] sm:$0xff]
      %v238 = vld [vmem:[%s226 + $0x8] sm:$0xff]
      %v239 = vld [vmem:[%s226 + $0x10] sm:$0xff]
      %v240 = vld [vmem:[%s226 + $0x18] sm:$0xff]
      %v241 = vld [vmem:[%s226 + $0x20] sm:$0xff]
      %v242 = vld [vmem:[%s226 + $0x28] sm:$0xff]
      %v243 = vld [vmem:[%s226 + $0x30] sm:$0xff]
      %v244 = vld [vmem:[%s226 + $0x38] sm:$0xff]
      %v245 = vld [vmem:[%s226 + $0x40] sm:$0xff]
      %v246 = vld [vmem:[%s226 + $0x48] sm:$0xff]
      %v247 = vld [vmem:[%s226 + $0x50] sm:$0xff]
      %v248 = vld [vmem:[%s226 + $0x58] sm:$0xff]
      %v249 = vld [vmem:[%s226 + $0x60] sm:$0xff]
      %v250 = vld [vmem:[%s226 + $0x68] sm:$0xff]
      %v251 = vld [vmem:[%s226 + $0x70] sm:$0xff]
      %v252 = vld [vmem:[%s226 + $0x78] sm:$0xff]
      %v253 = vld [vmem:[%s226 + $0x80] sm:$0xff]
      %v254 = vld [vmem:[%s226 + $0x88] sm:$0xff]
      %v255 = vld [vmem:[%s226 + $0x90] sm:$0xff]
      %v256 = vld [vmem:[%s226 + $0x98] sm:$0xff]
      %v257 = vld [vmem:[%s226 + $0xa0] sm:$0xff]
      %v258 = vld [vmem:[%s226 + $0xa8] sm:$0xff]
      %v259 = vld [vmem:[%s226 + $0xb0] sm:$0xff]
      %v260 = vld [vmem:[%s226 + $0xb8] sm:$0xff]
      %v261 = vld [vmem:[%s226 + $0xc0] sm:$0xff]
      %v262 = vld [vmem:[%s226 + $0xc8] sm:$0xff]
      %v263 = vld [vmem:[%s226 + $0xd0] sm:$0xff]
      %v264 = vld [vmem:[%s226 + $0xd8] sm:$0xff]
      %v265 = vld [vmem:[%s226 + $0xe0] sm:$0xff]
      %v266 = vld [vmem:[%s226 + $0xe8] sm:$0xff]
      %v267 = vld [vmem:[%s226 + $0xf0] sm:$0xff]
      %v268 = vld [vmem:[%s226 + $0xf8] sm:$0xff]
      %vm269 = vcmask 27648
      %270 = vst.msk [vmem:[#allocation2] sm:$0xf] %vm269, 0
      %271 = vst.msk [vmem:[#allocation2 + $0x4] sm:$0xf] %vm269, 0
      %vm272 = vcmask 24576
      %273 = vst.msk [vmem:[#allocation2 + $0x8] sm:$0x1] %vm272, 0
      %s274 = scalar_lea.vmem [#allocation2], 204
      %275 = vst.msk [vmem:[%s274] sm:$0xf] %vm269, 0
      %276 = vst.msk [vmem:[%s274 + $0x4] sm:$0xf] %vm269, 0
      %277 = vst.msk [vmem:[%s274 + $0x8] sm:$0x1] %vm272, 0
      %vm278 = vcmask 24576
      %vm279 = vsmask.f32 256
      %vm280 = vmand %vm278, %vm279
      %v281 = vld [vmem:[#allocation2] sm:$0x1]
      %v282 = vsel %vm280, 0, %v281
      %283 = vst [vmem:[#allocation2] sm:$0x1] %v282
      %v284 = vld [vmem:[#allocation2 + $0xc] sm:$0x1]
      %v285 = vsel %vm280, 0, %v284
      %286 = vst [vmem:[#allocation2 + $0xc] sm:$0x1] %v285
      %v287 = vld [vmem:[#allocation2 + $0x18] sm:$0x1]
      %v288 = vsel %vm280, 0, %v287
      %289 = vst [vmem:[#allocation2 + $0x18] sm:$0x1] %v288
      %v290 = vld [vmem:[#allocation2 + $0x24] sm:$0x1]
      %v291 = vsel %vm280, 0, %v290
      %292 = vst [vmem:[#allocation2 + $0x24] sm:$0x1] %v291
      %v293 = vld [vmem:[#allocation2 + $0x30] sm:$0x1]
      %v294 = vsel %vm280, 0, %v293
      %295 = vst [vmem:[#allocation2 + $0x30] sm:$0x1] %v294
      %v296 = vld [vmem:[#allocation2 + $0x3c] sm:$0x1]
      %v297 = vsel %vm280, 0, %v296
      %298 = vst [vmem:[#allocation2 + $0x3c] sm:$0x1] %v297
      %v299 = vld [vmem:[#allocation2 + $0x48] sm:$0x1]
      %v300 = vsel %vm280, 0, %v299
      %301 = vst [vmem:[#allocation2 + $0x48] sm:$0x1] %v300
      %v302 = vld [vmem:[#allocation2 + $0x54] sm:$0x1]
      %v303 = vsel %vm280, 0, %v302
      %304 = vst [vmem:[#allocation2 + $0x54] sm:$0x1] %v303
      %v305 = vld [vmem:[#allocation2 + $0x60] sm:$0x1]
      %v306 = vsel %vm280, 0, %v305
      %307 = vst [vmem:[#allocation2 + $0x60] sm:$0x1] %v306
      %v308 = vld [vmem:[#allocation2 + $0x6c] sm:$0x1]
      %v309 = vsel %vm280, 0, %v308
      %310 = vst [vmem:[#allocation2 + $0x6c] sm:$0x1] %v309
      %v311 = vld [vmem:[#allocation2 + $0x78] sm:$0x1]
      %v312 = vsel %vm280, 0, %v311
      %313 = vst [vmem:[#allocation2 + $0x78] sm:$0x1] %v312
      %v314 = vld [vmem:[#allocation2 + $0x84] sm:$0x1]
      %v315 = vsel %vm280, 0, %v314
      %316 = vst [vmem:[#allocation2 + $0x84] sm:$0x1] %v315
      %v317 = vld [vmem:[#allocation2 + $0x90] sm:$0x1]
      %v318 = vsel %vm280, 0, %v317
      %319 = vst [vmem:[#allocation2 + $0x90] sm:$0x1] %v318
      %v320 = vld [vmem:[#allocation2 + $0x9c] sm:$0x1]
      %v321 = vsel %vm280, 0, %v320
      %322 = vst [vmem:[#allocation2 + $0x9c] sm:$0x1] %v321
      %v323 = vld [vmem:[#allocation2 + $0xa8] sm:$0x1]
      %v324 = vsel %vm280, 0, %v323
      %325 = vst [vmem:[#allocation2 + $0xa8] sm:$0x1] %v324
      %v326 = vld [vmem:[#allocation2 + $0xb4] sm:$0x1]
      %v327 = vsel %vm280, 0, %v326
      %328 = vst [vmem:[#allocation2 + $0xb4] sm:$0x1] %v327
      %v329 = vld [vmem:[#allocation2 + $0xc0] sm:$0x1]
      %v330 = vsel %vm280, 0, %v329
      %331 = vst [vmem:[#allocation2 + $0xc0] sm:$0x1] %v330
      %v332 = vld [vmem:[#allocation2 + $0xcc] sm:$0x1]
      %v333 = vsel %vm280, 0, %v332
      %334 = vst [vmem:[#allocation2 + $0xcc] sm:$0x1] %v333
      %vm335 = vsmask.f32 7938
      %vm336 = vmand %vm278, %vm335
      %v337 = vld [vmem:[#allocation2 + $0x8] sm:$0x1]
      %v338 = vsel %vm336, 0, %v337
      %339 = vst [vmem:[#allocation2 + $0x8] sm:$0x1] %v338
      %v340 = vld [vmem:[#allocation2 + $0x14] sm:$0x1]
      %v341 = vsel %vm336, 0, %v340
      %342 = vst [vmem:[#allocation2 + $0x14] sm:$0x1] %v341
      %v343 = vld [vmem:[#allocation2 + $0x20] sm:$0x1]
      %v344 = vsel %vm336, 0, %v343
      %345 = vst [vmem:[#allocation2 + $0x20] sm:$0x1] %v344
      %v346 = vld [vmem:[#allocation2 + $0x2c] sm:$0x1]
      %v347 = vsel %vm336, 0, %v346
      %348 = vst [vmem:[#allocation2 + $0x2c] sm:$0x1] %v347
      %v349 = vld [vmem:[#allocation2 + $0x38] sm:$0x1]
      %v350 = vsel %vm336, 0, %v349
      %351 = vst [vmem:[#allocation2 + $0x38] sm:$0x1] %v350
      %v352 = vld [vmem:[#allocation2 + $0x44] sm:$0x1]
      %v353 = vsel %vm336, 0, %v352
      %354 = vst [vmem:[#allocation2 + $0x44] sm:$0x1] %v353
      %v355 = vld [vmem:[#allocation2 + $0x50] sm:$0x1]
      %v356 = vsel %vm336, 0, %v355
      %357 = vst [vmem:[#allocation2 + $0x50] sm:$0x1] %v356
      %v358 = vld [vmem:[#allocation2 + $0x5c] sm:$0x1]
      %v359 = vsel %vm336, 0, %v358
      %360 = vst [vmem:[#allocation2 + $0x5c] sm:$0x1] %v359
      %v361 = vld [vmem:[#allocation2 + $0x68] sm:$0x1]
      %v362 = vsel %vm336, 0, %v361
      %363 = vst [vmem:[#allocation2 + $0x68] sm:$0x1] %v362
      %v364 = vld [vmem:[#allocation2 + $0x74] sm:$0x1]
      %v365 = vsel %vm336, 0, %v364
      %366 = vst [vmem:[#allocation2 + $0x74] sm:$0x1] %v365
      %v367 = vld [vmem:[#allocation2 + $0x80] sm:$0x1]
      %v368 = vsel %vm336, 0, %v367
      %369 = vst [vmem:[#allocation2 + $0x80] sm:$0x1] %v368
      %v370 = vld [vmem:[#allocation2 + $0x8c] sm:$0x1]
      %v371 = vsel %vm336, 0, %v370
      %372 = vst [vmem:[#allocation2 + $0x8c] sm:$0x1] %v371
      %v373 = vld [vmem:[#allocation2 + $0x98] sm:$0x1]
      %v374 = vsel %vm336, 0, %v373
      %375 = vst [vmem:[#allocation2 + $0x98] sm:$0x1] %v374
      %v376 = vld [vmem:[#allocation2 + $0xa4] sm:$0x1]
      %v377 = vsel %vm336, 0, %v376
      %378 = vst [vmem:[#allocation2 + $0xa4] sm:$0x1] %v377
      %v379 = vld [vmem:[#allocation2 + $0xb0] sm:$0x1]
      %v380 = vsel %vm336, 0, %v379
      %381 = vst [vmem:[#allocation2 + $0xb0] sm:$0x1] %v380
      %v382 = vld [vmem:[#allocation2 + $0xbc] sm:$0x1]
      %v383 = vsel %vm336, 0, %v382
      %384 = vst [vmem:[#allocation2 + $0xbc] sm:$0x1] %v383
      %v385 = vld [vmem:[#allocation2 + $0xc8] sm:$0x1]
      %v386 = vsel %vm336, 0, %v385
      %387 = vst [vmem:[#allocation2 + $0xc8] sm:$0x1] %v386
      %v388 = vld [vmem:[#allocation2 + $0xd4] sm:$0x1]
      %v389 = vsel %vm336, 0, %v388
      %390 = vst [vmem:[#allocation2 + $0xd4] sm:$0x1] %v389
      %v391 = vpack.c.bf16 %v238, %v237
      %v392 = vpack.c.bf16 %v240, %v239
      %v393 = vpack.c.bf16 %v242, %v241
      %v394 = vpack.c.bf16 %v244, %v243
      %v395 = vpack.c.bf16 %v246, %v245
      %v396 = vpack.c.bf16 %v248, %v247
      %v397 = vpack.c.bf16 %v250, %v249
      %v398 = vpack.c.bf16 %v252, %v251
      %v399 = vpack.c.bf16 %v254, %v253
      %v400 = vpack.c.bf16 %v256, %v255
      %v401 = vpack.c.bf16 %v258, %v257
      %v402 = vpack.c.bf16 %v260, %v259
      %v403 = vpack.c.bf16 %v262, %v261
      %v404 = vpack.c.bf16 %v264, %v263
      %v405 = vpack.c.bf16 %v266, %v265
      %v406 = vpack.c.bf16 %v268, %v267
      %v423 = vunpack.c.l.b16 %v391
      %v424 = vunpack.c.h.b16 %v391
      %v425 = vunpack.c.l.b16 %v392
      %v426 = vunpack.c.h.b16 %v392
      %v427 = vunpack.c.l.b16 %v393
      %v428 = vunpack.c.h.b16 %v393
      %v429 = vunpack.c.l.b16 %v394
      %v430 = vunpack.c.h.b16 %v394
      %v431 = vunpack.c.l.b16 %v395
      %v432 = vunpack.c.h.b16 %v395
      %v433 = vunpack.c.l.b16 %v396
      %v434 = vunpack.c.h.b16 %v396
      %v435 = vunpack.c.l.b16 %v397
      %v436 = vunpack.c.h.b16 %v397
      %v437 = vunpack.c.l.b16 %v398
      %v438 = vunpack.c.h.b16 %v398
      %v439 = vunpack.c.l.b16 %v399
      %v440 = vunpack.c.h.b16 %v399
      %v441 = vunpack.c.l.b16 %v400
      %v442 = vunpack.c.h.b16 %v400
      %v443 = vunpack.c.l.b16 %v401
      %v444 = vunpack.c.h.b16 %v401
      %v445 = vunpack.c.l.b16 %v402
      %v446 = vunpack.c.h.b16 %v402
      %v447 = vunpack.c.l.b16 %v403
      %v448 = vunpack.c.h.b16 %v403
      %v449 = vunpack.c.l.b16 %v404
      %v450 = vunpack.c.h.b16 %v404
      %v451 = vunpack.c.l.b16 %v405
      %v452 = vunpack.c.h.b16 %v405
      %v453 = vunpack.c.l.b16 %v406
      %v454 = vunpack.c.h.b16 %v406
      %v455 = vpack.c.b16 %v423, %v423
      %v456 = vpack.c.b16 %v424, %v424
      %v457 = vpack.c.b16 %v425, %v425
      %v458 = vpack.c.b16 %v426, %v426
      %v459 = vpack.c.b16 %v427, %v427
      %v460 = vpack.c.b16 %v428, %v428
      %v461 = vpack.c.b16 %v429, %v429
      %v462 = vpack.c.b16 %v430, %v430
      %v463 = vpack.c.b16 %v431, %v431
      %v464 = vpack.c.b16 %v432, %v432
      %v465 = vpack.c.b16 %v433, %v433
      %v466 = vpack.c.b16 %v434, %v434
      %v467 = vpack.c.b16 %v435, %v435
      %v468 = vpack.c.b16 %v436, %v436
      %v469 = vpack.c.b16 %v437, %v437
      %v470 = vpack.c.b16 %v438, %v438
      %v471 = vpack.c.b16 %v439, %v439
      %v472 = vpack.c.b16 %v440, %v440
      %v473 = vpack.c.b16 %v441, %v441
      %v474 = vpack.c.b16 %v442, %v442
      %v475 = vpack.c.b16 %v443, %v443
      %v476 = vpack.c.b16 %v444, %v444
      %v477 = vpack.c.b16 %v445, %v445
      %v478 = vpack.c.b16 %v446, %v446
      %v479 = vpack.c.b16 %v447, %v447
      %v480 = vpack.c.b16 %v448, %v448
      %v481 = vpack.c.b16 %v449, %v449
      %v482 = vpack.c.b16 %v450, %v450
      %v483 = vpack.c.b16 %v451, %v451
      %v484 = vpack.c.b16 %v452, %v452
      %v485 = vpack.c.b16 %v453, %v453
      %v486 = vpack.c.b16 %v454, %v454
      %vm487 = vsmask.f32 4368
      %vm488 = vmor %vm279, %vm487
      %v490 = vshrl.u32 %v455, 16
      %v492 = vrot.slane %v490, 7
      %v493 = vshll.u32 %v455, 16
      %v495 = vor.u32 %v492, %v493
      %v496 = vrot.slane %v492, 4
      %v498 = vshrl.u32 %v456, 16
      %v500 = vrot.slane %v498, 7
      %v501 = vshll.u32 %v456, 16
      %v503 = vor.u32 %v500, %v501
      %v504 = vsel %vm488, %v496, %v503
      %v505 = vrot.slane %v500, 4
      %v507 = vshrl.u32 %v457, 16
      %v509 = vrot.slane %v507, 7
      %v510 = vshll.u32 %v457, 16
      %v512 = vor.u32 %v509, %v510
      %v513 = vrot.slane %v509, 4
      %v515 = vshrl.u32 %v458, 16
      %v517 = vrot.slane %v515, 7
      %v518 = vshll.u32 %v458, 16
      %v520 = vor.u32 %v517, %v518
      %v521 = vsel %vm488, %v513, %v520
      %v522 = vrot.slane %v517, 4
      %v524 = vshrl.u32 %v459, 16
      %v526 = vrot.slane %v524, 7
      %v527 = vshll.u32 %v459, 16
      %v529 = vor.u32 %v526, %v527
      %v530 = vrot.slane %v526, 4
      %v532 = vshrl.u32 %v460, 16
      %v534 = vrot.slane %v532, 7
      %v535 = vshll.u32 %v460, 16
      %v537 = vor.u32 %v534, %v535
      %v538 = vsel %vm488, %v530, %v537
      %v539 = vrot.slane %v534, 4
      %v541 = vshrl.u32 %v461, 16
      %v543 = vrot.slane %v541, 7
      %v544 = vshll.u32 %v461, 16
      %v546 = vor.u32 %v543, %v544
      %v547 = vrot.slane %v543, 4
      %v549 = vshrl.u32 %v462, 16
      %v551 = vrot.slane %v549, 7
      %v552 = vshll.u32 %v462, 16
      %v554 = vor.u32 %v551, %v552
      %v555 = vsel %vm488, %v547, %v554
      %v556 = vrot.slane %v551, 4
      %v558 = vshrl.u32 %v463, 16
      %v560 = vrot.slane %v558, 7
      %v561 = vshll.u32 %v463, 16
      %v563 = vor.u32 %v560, %v561
      %v564 = vrot.slane %v560, 4
      %v566 = vshrl.u32 %v464, 16
      %v568 = vrot.slane %v566, 7
      %v569 = vshll.u32 %v464, 16
      %v571 = vor.u32 %v568, %v569
      %v572 = vsel %vm488, %v564, %v571
      %v573 = vrot.slane %v568, 4
      %v575 = vshrl.u32 %v465, 16
      %v577 = vrot.slane %v575, 7
      %v578 = vshll.u32 %v465, 16
      %v580 = vor.u32 %v577, %v578
      %v581 = vrot.slane %v577, 4
      %v583 = vshrl.u32 %v466, 16
      %v585 = vrot.slane %v583, 7
      %v586 = vshll.u32 %v466, 16
      %v588 = vor.u32 %v585, %v586
      %v589 = vsel %vm488, %v581, %v588
      %v590 = vrot.slane %v585, 4
      %v592 = vshrl.u32 %v467, 16
      %v594 = vrot.slane %v592, 7
      %v595 = vshll.u32 %v467, 16
      %v597 = vor.u32 %v594, %v595
      %v598 = vrot.slane %v594, 4
      %v600 = vshrl.u32 %v468, 16
      %v602 = vrot.slane %v600, 7
      %v603 = vshll.u32 %v468, 16
      %v605 = vor.u32 %v602, %v603
      %v606 = vsel %vm488, %v598, %v605
      %v607 = vrot.slane %v602, 4
      %v609 = vshrl.u32 %v469, 16
      %v611 = vrot.slane %v609, 7
      %v612 = vshll.u32 %v469, 16
      %v614 = vor.u32 %v611, %v612
      %v615 = vrot.slane %v611, 4
      %v617 = vshrl.u32 %v470, 16
      %v619 = vrot.slane %v617, 7
      %v620 = vshll.u32 %v470, 16
      %v622 = vor.u32 %v619, %v620
      %v623 = vsel %vm488, %v615, %v622
      %v624 = vrot.slane %v619, 4
      %v626 = vshrl.u32 %v471, 16
      %v628 = vrot.slane %v626, 7
      %v629 = vshll.u32 %v471, 16
      %v631 = vor.u32 %v628, %v629
      %v632 = vrot.slane %v628, 4
      %v634 = vshrl.u32 %v472, 16
      %v636 = vrot.slane %v634, 7
      %v637 = vshll.u32 %v472, 16
      %v639 = vor.u32 %v636, %v637
      %v640 = vsel %vm488, %v632, %v639
      %v641 = vrot.slane %v636, 4
      %v643 = vshrl.u32 %v473, 16
      %v645 = vrot.slane %v643, 7
      %v646 = vshll.u32 %v473, 16
      %v648 = vor.u32 %v645, %v646
      %v649 = vrot.slane %v645, 4
      %v651 = vshrl.u32 %v474, 16
      %v653 = vrot.slane %v651, 7
      %v654 = vshll.u32 %v474, 16
      %v656 = vor.u32 %v653, %v654
      %v657 = vsel %vm488, %v649, %v656
      %v658 = vrot.slane %v653, 4
      %v660 = vshrl.u32 %v475, 16
      %v662 = vrot.slane %v660, 7
      %v663 = vshll.u32 %v475, 16
      %v665 = vor.u32 %v662, %v663
      %v666 = vrot.slane %v662, 4
      %v668 = vshrl.u32 %v476, 16
      %v670 = vrot.slane %v668, 7
      %v671 = vshll.u32 %v476, 16
      %v673 = vor.u32 %v670, %v671
      %v674 = vsel %vm488, %v666, %v673
      %v675 = vrot.slane %v670, 4
      %v677 = vshrl.u32 %v477, 16
      %v679 = vrot.slane %v677, 7
      %v680 = vshll.u32 %v477, 16
      %v682 = vor.u32 %v679, %v680
      %v683 = vrot.slane %v679, 4
      %v685 = vshrl.u32 %v478, 16
      %v687 = vrot.slane %v685, 7
      %v688 = vshll.u32 %v478, 16
      %v690 = vor.u32 %v687, %v688
      %v691 = vsel %vm488, %v683, %v690
      %v692 = vrot.slane %v687, 4
      %v694 = vshrl.u32 %v479, 16
      %v696 = vrot.slane %v694, 7
      %v697 = vshll.u32 %v479, 16
      %v699 = vor.u32 %v696, %v697
      %v700 = vrot.slane %v696, 4
      %v702 = vshrl.u32 %v480, 16
      %v704 = vrot.slane %v702, 7
      %v705 = vshll.u32 %v480, 16
      %v707 = vor.u32 %v704, %v705
      %v708 = vsel %vm488, %v700, %v707
      %v709 = vrot.slane %v704, 4
      %v711 = vshrl.u32 %v481, 16
      %v713 = vrot.slane %v711, 7
      %v714 = vshll.u32 %v481, 16
      %v716 = vor.u32 %v713, %v714
      %v717 = vrot.slane %v713, 4
      %v719 = vshrl.u32 %v482, 16
      %v721 = vrot.slane %v719, 7
      %v722 = vshll.u32 %v482, 16
      %v724 = vor.u32 %v721, %v722
      %v725 = vsel %vm488, %v717, %v724
      %v726 = vrot.slane %v721, 4
      %v728 = vshrl.u32 %v483, 16
      %v730 = vrot.slane %v728, 7
      %v731 = vshll.u32 %v483, 16
      %v733 = vor.u32 %v730, %v731
      %v734 = vrot.slane %v730, 4
      %v736 = vshrl.u32 %v484, 16
      %v738 = vrot.slane %v736, 7
      %v739 = vshll.u32 %v484, 16
      %v741 = vor.u32 %v738, %v739
      %v742 = vsel %vm488, %v734, %v741
      %v743 = vrot.slane %v738, 4
      %v745 = vshrl.u32 %v485, 16
      %v747 = vrot.slane %v745, 7
      %v748 = vshll.u32 %v485, 16
      %v750 = vor.u32 %v747, %v748
      %v751 = vrot.slane %v747, 4
      %v753 = vshrl.u32 %v486, 16
      %v755 = vrot.slane %v753, 7
      %v756 = vshll.u32 %v486, 16
      %v758 = vor.u32 %v755, %v756
      %v759 = vsel %vm488, %v751, %v758
      %v760 = vrot.slane %v755, 4
      %s809 = scalar_lea.vmem [#allocation2], 12
      %vm810 = vcmask 27648
      %vm811 = vmand %vm810, %vm335
      %v812 = vld [vmem:[%s809] sm:$0xf]
      %v813 = vsel %vm811, %v495, %v812
      %814 = vst [vmem:[%s809] sm:$0xf] %v813
      %815 = vst.msk [vmem:[%s809 + $0x4] sm:$0xf] %vm269, %v504
      %v816 = vld [vmem:[%s809 + $0x8] sm:$0x1]
      %v817 = vsel %vm280, %v505, %v816
      %818 = vst [vmem:[%s809 + $0x8] sm:$0x1] %v817
      %v819 = vld [vmem:[%s809 + $0xc] sm:$0xf]
      %v820 = vsel %vm811, %v512, %v819
      %821 = vst [vmem:[%s809 + $0xc] sm:$0xf] %v820
      %822 = vst.msk [vmem:[%s809 + $0x10] sm:$0xf] %vm269, %v521
      %v823 = vld [vmem:[%s809 + $0x14] sm:$0x1]
      %v824 = vsel %vm280, %v522, %v823
      %825 = vst [vmem:[%s809 + $0x14] sm:$0x1] %v824
      %v826 = vld [vmem:[%s809 + $0x18] sm:$0xf]
      %v827 = vsel %vm811, %v529, %v826
      %828 = vst [vmem:[%s809 + $0x18] sm:$0xf] %v827
      %829 = vst.msk [vmem:[%s809 + $0x1c] sm:$0xf] %vm269, %v538
      %v830 = vld [vmem:[%s809 + $0x20] sm:$0x1]
      %v831 = vsel %vm280, %v539, %v830
      %832 = vst [vmem:[%s809 + $0x20] sm:$0x1] %v831
      %v833 = vld [vmem:[%s809 + $0x24] sm:$0xf]
      %v834 = vsel %vm811, %v546, %v833
      %835 = vst [vmem:[%s809 + $0x24] sm:$0xf] %v834
      %836 = vst.msk [vmem:[%s809 + $0x28] sm:$0xf] %vm269, %v555
      %v837 = vld [vmem:[%s809 + $0x2c] sm:$0x1]
      %v838 = vsel %vm280, %v556, %v837
      %839 = vst [vmem:[%s809 + $0x2c] sm:$0x1] %v838
      %v840 = vld [vmem:[%s809 + $0x30] sm:$0xf]
      %v841 = vsel %vm811, %v563, %v840
      %842 = vst [vmem:[%s809 + $0x30] sm:$0xf] %v841
      %843 = vst.msk [vmem:[%s809 + $0x34] sm:$0xf] %vm269, %v572
      %v844 = vld [vmem:[%s809 + $0x38] sm:$0x1]
      %v845 = vsel %vm280, %v573, %v844
      %846 = vst [vmem:[%s809 + $0x38] sm:$0x1] %v845
      %v847 = vld [vmem:[%s809 + $0x3c] sm:$0xf]
      %v848 = vsel %vm811, %v580, %v847
      %849 = vst [vmem:[%s809 + $0x3c] sm:$0xf] %v848
      %850 = vst.msk [vmem:[%s809 + $0x40] sm:$0xf] %vm269, %v589
      %v851 = vld [vmem:[%s809 + $0x44] sm:$0x1]
      %v852 = vsel %vm280, %v590, %v851
      %853 = vst [vmem:[%s809 + $0x44] sm:$0x1] %v852
      %v854 = vld [vmem:[%s809 + $0x48] sm:$0xf]
      %v855 = vsel %vm811, %v597, %v854
      %856 = vst [vmem:[%s809 + $0x48] sm:$0xf] %v855
      %857 = vst.msk [vmem:[%s809 + $0x4c] sm:$0xf] %vm269, %v606
      %v858 = vld [vmem:[%s809 + $0x50] sm:$0x1]
      %v859 = vsel %vm280, %v607, %v858
      %860 = vst [vmem:[%s809 + $0x50] sm:$0x1] %v859
      %v861 = vld [vmem:[%s809 + $0x54] sm:$0xf]
      %v862 = vsel %vm811, %v614, %v861
      %863 = vst [vmem:[%s809 + $0x54] sm:$0xf] %v862
      %864 = vst.msk [vmem:[%s809 + $0x58] sm:$0xf] %vm269, %v623
      %v865 = vld [vmem:[%s809 + $0x5c] sm:$0x1]
      %v866 = vsel %vm280, %v624, %v865
      %867 = vst [vmem:[%s809 + $0x5c] sm:$0x1] %v866
      %v868 = vld [vmem:[%s809 + $0x60] sm:$0xf]
      %v869 = vsel %vm811, %v631, %v868
      %870 = vst [vmem:[%s809 + $0x60] sm:$0xf] %v869
      %871 = vst.msk [vmem:[%s809 + $0x64] sm:$0xf] %vm269, %v640
      %v872 = vld [vmem:[%s809 + $0x68] sm:$0x1]
      %v873 = vsel %vm280, %v641, %v872
      %874 = vst [vmem:[%s809 + $0x68] sm:$0x1] %v873
      %v875 = vld [vmem:[%s809 + $0x6c] sm:$0xf]
      %v876 = vsel %vm811, %v648, %v875
      %877 = vst [vmem:[%s809 + $0x6c] sm:$0xf] %v876
      %878 = vst.msk [vmem:[%s809 + $0x70] sm:$0xf] %vm269, %v657
      %v879 = vld [vmem:[%s809 + $0x74] sm:$0x1]
      %v880 = vsel %vm280, %v658, %v879
      %881 = vst [vmem:[%s809 + $0x74] sm:$0x1] %v880
      %v882 = vld [vmem:[%s809 + $0x78] sm:$0xf]
      %v883 = vsel %vm811, %v665, %v882
      %884 = vst [vmem:[%s809 + $0x78] sm:$0xf] %v883
      %885 = vst.msk [vmem:[%s809 + $0x7c] sm:$0xf] %vm269, %v674
      %v886 = vld [vmem:[%s809 + $0x80] sm:$0x1]
      %v887 = vsel %vm280, %v675, %v886
      %888 = vst [vmem:[%s809 + $0x80] sm:$0x1] %v887
      %v889 = vld [vmem:[%s809 + $0x84] sm:$0xf]
      %v890 = vsel %vm811, %v682, %v889
      %891 = vst [vmem:[%s809 + $0x84] sm:$0xf] %v890
      %892 = vst.msk [vmem:[%s809 + $0x88] sm:$0xf] %vm269, %v691
      %v893 = vld [vmem:[%s809 + $0x8c] sm:$0x1]
      %v894 = vsel %vm280, %v692, %v893
      %895 = vst [vmem:[%s809 + $0x8c] sm:$0x1] %v894
      %v896 = vld [vmem:[%s809 + $0x90] sm:$0xf]
      %v897 = vsel %vm811, %v699, %v896
      %898 = vst [vmem:[%s809 + $0x90] sm:$0xf] %v897
      %899 = vst.msk [vmem:[%s809 + $0x94] sm:$0xf] %vm269, %v708
      %v900 = vld [vmem:[%s809 + $0x98] sm:$0x1]
      %v901 = vsel %vm280, %v709, %v900
      %902 = vst [vmem:[%s809 + $0x98] sm:$0x1] %v901
      %v903 = vld [vmem:[%s809 + $0x9c] sm:$0xf]
      %v904 = vsel %vm811, %v716, %v903
      %905 = vst [vmem:[%s809 + $0x9c] sm:$0xf] %v904
      %906 = vst.msk [vmem:[%s809 + $0xa0] sm:$0xf] %vm269, %v725
      %v907 = vld [vmem:[%s809 + $0xa4] sm:$0x1]
      %v908 = vsel %vm280, %v726, %v907
      %909 = vst [vmem:[%s809 + $0xa4] sm:$0x1] %v908
      %v910 = vld [vmem:[%s809 + $0xa8] sm:$0xf]
      %v911 = vsel %vm811, %v733, %v910
      %912 = vst [vmem:[%s809 + $0xa8] sm:$0xf] %v911
      %913 = vst.msk [vmem:[%s809 + $0xac] sm:$0xf] %vm269, %v742
      %v914 = vld [vmem:[%s809 + $0xb0] sm:$0x1]
      %v915 = vsel %vm280, %v743, %v914
      %916 = vst [vmem:[%s809 + $0xb0] sm:$0x1] %v915
      %v917 = vld [vmem:[%s809 + $0xb4] sm:$0xf]
      %v918 = vsel %vm811, %v750, %v917
      %919 = vst [vmem:[%s809 + $0xb4] sm:$0xf] %v918
      %920 = vst.msk [vmem:[%s809 + $0xb8] sm:$0xf] %vm269, %v759
      %v921 = vld [vmem:[%s809 + $0xbc] sm:$0x1]
      %v922 = vsel %vm280, %v760, %v921
      %923 = vst [vmem:[%s809 + $0xbc] sm:$0x1] %v922
      %v924 = vld [vmem:[#allocation2] sm:$0xf]
      %v925 = vld [vmem:[#allocation2 + $0x4] sm:$0xf]
      %v926 = vld [vmem:[#allocation2 + $0xc] sm:$0xf]
      %v927 = vld [vmem:[#allocation2 + $0x10] sm:$0xf]
      %v928 = vld [vmem:[#allocation2 + $0x18] sm:$0xf]
      %v929 = vld [vmem:[#allocation2 + $0x1c] sm:$0xf]
      %v930 = vld [vmem:[#allocation2 + $0x24] sm:$0xf]
      %v931 = vld [vmem:[#allocation2 + $0x28] sm:$0xf]
      %v932 = vld [vmem:[#allocation2 + $0x30] sm:$0xf]
      %v933 = vld [vmem:[#allocation2 + $0x34] sm:$0xf]
      %v934 = vld [vmem:[#allocation2 + $0x3c] sm:$0xf]
      %v935 = vld [vmem:[#allocation2 + $0x40] sm:$0xf]
      %v936 = vld [vmem:[#allocation2 + $0x48] sm:$0xf]
      %v937 = vld [vmem:[#allocation2 + $0x4c] sm:$0xf]
      %v938 = vld [vmem:[#allocation2 + $0x54] sm:$0xf]
      %v939 = vld [vmem:[#allocation2 + $0x58] sm:$0xf]
      %v940 = vld [vmem:[#allocation2 + $0x60] sm:$0xf]
      %v941 = vld [vmem:[#allocation2 + $0x64] sm:$0xf]
      %v942 = vld [vmem:[#allocation2 + $0x6c] sm:$0xf]
      %v943 = vld [vmem:[#allocation2 + $0x70] sm:$0xf]
      %v944 = vld [vmem:[#allocation2 + $0x78] sm:$0xf]
      %v945 = vld [vmem:[#allocation2 + $0x7c] sm:$0xf]
      %v946 = vld [vmem:[#allocation2 + $0x84] sm:$0xf]
      %v947 = vld [vmem:[#allocation2 + $0x88] sm:$0xf]
      %v948 = vld [vmem:[#allocation2 + $0x90] sm:$0xf]
      %v949 = vld [vmem:[#allocation2 + $0x94] sm:$0xf]
      %v950 = vld [vmem:[#allocation2 + $0x9c] sm:$0xf]
      %v951 = vld [vmem:[#allocation2 + $0xa0] sm:$0xf]
      %v952 = vld [vmem:[#allocation2 + $0xa8] sm:$0xf]
      %v953 = vld [vmem:[#allocation2 + $0xac] sm:$0xf]
      %v954 = vld [vmem:[#allocation2 + $0xb4] sm:$0xf]
      %v955 = vld [vmem:[#allocation2 + $0xb8] sm:$0xf]
      %v988 = vunpack.c.l.b16 %v924
      %v989 = vunpack.c.l.b16 %v925
      %v990 = vunpack.c.l.b16 %v926
      %v991 = vunpack.c.l.b16 %v927
      %v992 = vunpack.c.l.b16 %v928
      %v993 = vunpack.c.l.b16 %v929
      %v994 = vunpack.c.l.b16 %v930
      %v995 = vunpack.c.l.b16 %v931
      %v996 = vunpack.c.l.b16 %v932
      %v997 = vunpack.c.l.b16 %v933
      %v998 = vunpack.c.l.b16 %v934
      %v999 = vunpack.c.l.b16 %v935
      %v1000 = vunpack.c.l.b16 %v936
      %v1001 = vunpack.c.l.b16 %v937
      %v1002 = vunpack.c.l.b16 %v938
      %v1003 = vunpack.c.l.b16 %v939
      %v1004 = vunpack.c.l.b16 %v940
      %v1005 = vunpack.c.l.b16 %v941
      %v1006 = vunpack.c.l.b16 %v942
      %v1007 = vunpack.c.l.b16 %v943
      %v1008 = vunpack.c.l.b16 %v944
      %v1009 = vunpack.c.l.b16 %v945
      %v1010 = vunpack.c.l.b16 %v946
      %v1011 = vunpack.c.l.b16 %v947
      %v1012 = vunpack.c.l.b16 %v948
      %v1013 = vunpack.c.l.b16 %v949
      %v1014 = vunpack.c.l.b16 %v950
      %v1015 = vunpack.c.l.b16 %v951
      %v1016 = vunpack.c.l.b16 %v952
      %v1017 = vunpack.c.l.b16 %v953
      %v1018 = vunpack.c.l.b16 %v954
      %v1019 = vunpack.c.l.b16 %v955
      %v1020 = vpack.c.b16 %v989, %v988
      %v1021 = vpack.c.b16 %v991, %v990
      %v1022 = vpack.c.b16 %v993, %v992
      %v1023 = vpack.c.b16 %v995, %v994
      %v1024 = vpack.c.b16 %v997, %v996
      %v1025 = vpack.c.b16 %v999, %v998
      %v1026 = vpack.c.b16 %v1001, %v1000
      %v1027 = vpack.c.b16 %v1003, %v1002
      %v1028 = vpack.c.b16 %v1005, %v1004
      %v1029 = vpack.c.b16 %v1007, %v1006
      %v1030 = vpack.c.b16 %v1009, %v1008
      %v1031 = vpack.c.b16 %v1011, %v1010
      %v1032 = vpack.c.b16 %v1013, %v1012
      %v1033 = vpack.c.b16 %v1015, %v1014
      %v1034 = vpack.c.b16 %v1017, %v1016
      %v1035 = vpack.c.b16 %v1019, %v1018
      %vm1052 = vcmask 31744
      %1053 = vst.msk [vmem:[#allocation3] sm:$0xff] %vm1052, %v1020
      %1054 = vst.msk [vmem:[#allocation3 + $0x8] sm:$0xff] %vm1052, %v1021
      %1055 = vst.msk [vmem:[#allocation3 + $0x10] sm:$0xff] %vm1052, %v1022
      %1056 = vst.msk [vmem:[#allocation3 + $0x18] sm:$0xff] %vm1052, %v1023
      %1057 = vst.msk [vmem:[#allocation3 + $0x20] sm:$0xff] %vm1052, %v1024
      %1058 = vst.msk [vmem:[#allocation3 + $0x28] sm:$0xff] %vm1052, %v1025
      %1059 = vst.msk [vmem:[#allocation3 + $0x30] sm:$0xff] %vm1052, %v1026
      %1060 = vst.msk [vmem:[#allocation3 + $0x38] sm:$0xff] %vm1052, %v1027
      %1061 = vst.msk [vmem:[#allocation3 + $0x40] sm:$0xff] %vm1052, %v1028
      %1062 = vst.msk [vmem:[#allocation3 + $0x48] sm:$0xff] %vm1052, %v1029
      %1063 = vst.msk [vmem:[#allocation3 + $0x50] sm:$0xff] %vm1052, %v1030
      %1064 = vst.msk [vmem:[#allocation3 + $0x58] sm:$0xff] %vm1052, %v1031
      %1065 = vst.msk [vmem:[#allocation3 + $0x60] sm:$0xff] %vm1052, %v1032
      %1066 = vst.msk [vmem:[#allocation3 + $0x68] sm:$0xff] %vm1052, %v1033
      %1067 = vst.msk [vmem:[#allocation3 + $0x70] sm:$0xff] %vm1052, %v1034
      %1068 = vst.msk [vmem:[#allocation3 + $0x78] sm:$0xff] %vm1052, %v1035
      %v1069 = vld [vmem:[#allocation2] sm:$0xf]
      %v1070 = vld [vmem:[#allocation2 + $0x4] sm:$0xf]
      %v1071 = vld [vmem:[#allocation2 + $0x8] sm:$0x1]
      %v1072 = vld [vmem:[#allocation2 + $0xc] sm:$0xf]
      %v1073 = vld [vmem:[#allocation2 + $0x10] sm:$0xf]
      %v1074 = vld [vmem:[#allocation2 + $0x14] sm:$0x1]
      %v1075 = vld [vmem:[#allocation2 + $0x18] sm:$0xf]
      %v1076 = vld [vmem:[#allocation2 + $0x1c] sm:$0xf]
      %v1077 = vld [vmem:[#allocation2 + $0x20] sm:$0x1]
      %v1078 = vld [vmem:[#allocation2 + $0x24] sm:$0xf]
      %v1079 = vld [vmem:[#allocation2 + $0x28] sm:$0xf]
      %v1080 = vld [vmem:[#allocation2 + $0x2c] sm:$0x1]
      %v1081 = vld [vmem:[#allocation2 + $0x30] sm:$0xf]
      %v1082 = vld [vmem:[#allocation2 + $0x34] sm:$0xf]
      %v1083 = vld [vmem:[#allocation2 + $0x38] sm:$0x1]
      %v1084 = vld [vmem:[#allocation2 + $0x3c] sm:$0xf]
      %v1085 = vld [vmem:[#allocation2 + $0x40] sm:$0xf]
      %v1086 = vld [vmem:[#allocation2 + $0x44] sm:$0x1]
      %v1087 = vld [vmem:[#allocation2 + $0x48] sm:$0xf]
      %v1088 = vld [vmem:[#allocation2 + $0x4c] sm:$0xf]
      %v1089 = vld [vmem:[#allocation2 + $0x50] sm:$0x1]
      %v1090 = vld [vmem:[#allocation2 + $0x54] sm:$0xf]
      %v1091 = vld [vmem:[#allocation2 + $0x58] sm:$0xf]
      %v1092 = vld [vmem:[#allocation2 + $0x5c] sm:$0x1]
      %v1093 = vld [vmem:[#allocation2 + $0x60] sm:$0xf]
      %v1094 = vld [vmem:[#allocation2 + $0x64] sm:$0xf]
      %v1095 = vld [vmem:[#allocation2 + $0x68] sm:$0x1]
      %v1096 = vld [vmem:[#allocation2 + $0x6c] sm:$0xf]
      %v1097 = vld [vmem:[#allocation2 + $0x70] sm:$0xf]
      %v1098 = vld [vmem:[#allocation2 + $0x74] sm:$0x1]
      %v1099 = vld [vmem:[#allocation2 + $0x78] sm:$0xf]
      %v1100 = vld [vmem:[#allocation2 + $0x7c] sm:$0xf]
      %v1101 = vld [vmem:[#allocation2 + $0x80] sm:$0x1]
      %v1102 = vld [vmem:[#allocation2 + $0x84] sm:$0xf]
      %v1103 = vld [vmem:[#allocation2 + $0x88] sm:$0xf]
      %v1104 = vld [vmem:[#allocation2 + $0x8c] sm:$0x1]
      %v1105 = vld [vmem:[#allocation2 + $0x90] sm:$0xf]
      %v1106 = vld [vmem:[#allocation2 + $0x94] sm:$0xf]
      %v1107 = vld [vmem:[#allocation2 + $0x98] sm:$0x1]
      %v1108 = vld [vmem:[#allocation2 + $0x9c] sm:$0xf]
      %v1109 = vld [vmem:[#allocation2 + $0xa0] sm:$0xf]
      %v1110 = vld [vmem:[#allocation2 + $0xa4] sm:$0x1]
      %v1111 = vld [vmem:[#allocation2 + $0xa8] sm:$0xf]
      %v1112 = vld [vmem:[#allocation2 + $0xac] sm:$0xf]
      %v1113 = vld [vmem:[#allocation2 + $0xb0] sm:$0x1]
      %v1114 = vld [vmem:[#allocation2 + $0xb4] sm:$0xf]
      %v1115 = vld [vmem:[#allocation2 + $0xb8] sm:$0xf]
      %v1116 = vld [vmem:[#allocation2 + $0xbc] sm:$0x1]
      %vm1117 = vsmask.f32 3328
      %vm1118 = vsmask.f32 7440
      %vm1119 = vmor %vm1117, %vm1118
      %v1121 = vshrl.u32 %v1069, 16
      %v1123 = vrot.slane %v1121, 4
      %v1124 = vshll.u32 %v1069, 16
      %v1126 = vrot.slane %v1124, 5
      %v1127 = vor.u32 %v1123, %v1126
      %v1128 = vrot.slane %v1127, 4
      %v1130 = vshll.u32 %v1070, 16
      %v1132 = vrot.slane %v1130, 5
      %v1133 = vsel %vm1119, %v1128, %v1132
      %v1134 = vshrl.u32 %v1070, 16
      %v1136 = vrot.slane %v1134, 4
      %v1137 = vor.u32 %v1136, %v1132
      %v1138 = vrot.slane %v1137, 4
      %v1140 = vshll.u32 %v1071, 16
      %v1142 = vrot.slane %v1140, 5
      %v1143 = vsel %vm1119, %v1138, %v1142
      %v1145 = vshrl.u32 %v1072, 16
      %v1147 = vrot.slane %v1145, 4
      %v1148 = vshll.u32 %v1072, 16
      %v1150 = vrot.slane %v1148, 5
      %v1151 = vor.u32 %v1147, %v1150
      %v1152 = vrot.slane %v1151, 4
      %v1154 = vshll.u32 %v1073, 16
      %v1156 = vrot.slane %v1154, 5
      %v1157 = vsel %vm1119, %v1152, %v1156
      %v1158 = vshrl.u32 %v1073, 16
      %v1160 = vrot.slane %v1158, 4
      %v1161 = vor.u32 %v1160, %v1156
      %v1162 = vrot.slane %v1161, 4
      %v1164 = vshll.u32 %v1074, 16
      %v1166 = vrot.slane %v1164, 5
      %v1167 = vsel %vm1119, %v1162, %v1166
      %v1169 = vshrl.u32 %v1075, 16
      %v1171 = vrot.slane %v1169, 4
      %v1172 = vshll.u32 %v1075, 16
      %v1174 = vrot.slane %v1172, 5
      %v1175 = vor.u32 %v1171, %v1174
      %v1176 = vrot.slane %v1175, 4
      %v1178 = vshll.u32 %v1076, 16
      %v1180 = vrot.slane %v1178, 5
      %v1181 = vsel %vm1119, %v1176, %v1180
      %v1182 = vshrl.u32 %v1076, 16
      %v1184 = vrot.slane %v1182, 4
      %v1185 = vor.u32 %v1184, %v1180
      %v1186 = vrot.slane %v1185, 4
      %v1188 = vshll.u32 %v1077, 16
      %v1190 = vrot.slane %v1188, 5
      %v1191 = vsel %vm1119, %v1186, %v1190
      %v1193 = vshrl.u32 %v1078, 16
      %v1195 = vrot.slane %v1193, 4
      %v1196 = vshll.u32 %v1078, 16
      %v1198 = vrot.slane %v1196, 5
      %v1199 = vor.u32 %v1195, %v1198
      %v1200 = vrot.slane %v1199, 4
      %v1202 = vshll.u32 %v1079, 16
      %v1204 = vrot.slane %v1202, 5
      %v1205 = vsel %vm1119, %v1200, %v1204
      %v1206 = vshrl.u32 %v1079, 16
      %v1208 = vrot.slane %v1206, 4
      %v1209 = vor.u32 %v1208, %v1204
      %v1210 = vrot.slane %v1209, 4
      %v1212 = vshll.u32 %v1080, 16
      %v1214 = vrot.slane %v1212, 5
      %v1215 = vsel %vm1119, %v1210, %v1214
      %v1217 = vshrl.u32 %v1081, 16
      %v1219 = vrot.slane %v1217, 4
      %v1220 = vshll.u32 %v1081, 16
      %v1222 = vrot.slane %v1220, 5
      %v1223 = vor.u32 %v1219, %v1222
      %v1224 = vrot.slane %v1223, 4
      %v1226 = vshll.u32 %v1082, 16
      %v1228 = vrot.slane %v1226, 5
      %v1229 = vsel %vm1119, %v1224, %v1228
      %v1230 = vshrl.u32 %v1082, 16
      %v1232 = vrot.slane %v1230, 4
      %v1233 = vor.u32 %v1232, %v1228
      %v1234 = vrot.slane %v1233, 4
      %v1236 = vshll.u32 %v1083, 16
      %v1238 = vrot.slane %v1236, 5
      %v1239 = vsel %vm1119, %v1234, %v1238
      %v1241 = vshrl.u32 %v1084, 16
      %v1243 = vrot.slane %v1241, 4
      %v1244 = vshll.u32 %v1084, 16
      %v1246 = vrot.slane %v1244, 5
      %v1247 = vor.u32 %v1243, %v1246
      %v1248 = vrot.slane %v1247, 4
      %v1250 = vshll.u32 %v1085, 16
      %v1252 = vrot.slane %v1250, 5
      %v1253 = vsel %vm1119, %v1248, %v1252
      %v1254 = vshrl.u32 %v1085, 16
      %v1256 = vrot.slane %v1254, 4
      %v1257 = vor.u32 %v1256, %v1252
      %v1258 = vrot.slane %v1257, 4
      %v1260 = vshll.u32 %v1086, 16
      %v1262 = vrot.slane %v1260, 5
      %v1263 = vsel %vm1119, %v1258, %v1262
      %v1265 = vshrl.u32 %v1087, 16
      %v1267 = vrot.slane %v1265, 4
      %v1268 = vshll.u32 %v1087, 16
      %v1270 = vrot.slane %v1268, 5
      %v1271 = vor.u32 %v1267, %v1270
      %v1272 = vrot.slane %v1271, 4
      %v1274 = vshll.u32 %v1088, 16
      %v1276 = vrot.slane %v1274, 5
      %v1277 = vsel %vm1119, %v1272, %v1276
      %v1278 = vshrl.u32 %v1088, 16
      %v1280 = vrot.slane %v1278, 4
      %v1281 = vor.u32 %v1280, %v1276
      %v1282 = vrot.slane %v1281, 4
      %v1284 = vshll.u32 %v1089, 16
      %v1286 = vrot.slane %v1284, 5
      %v1287 = vsel %vm1119, %v1282, %v1286
      %v1289 = vshrl.u32 %v1090, 16
      %v1291 = vrot.slane %v1289, 4
      %v1292 = vshll.u32 %v1090, 16
      %v1294 = vrot.slane %v1292, 5
      %v1295 = vor.u32 %v1291, %v1294
      %v1296 = vrot.slane %v1295, 4
      %v1298 = vshll.u32 %v1091, 16
      %v1300 = vrot.slane %v1298, 5
      %v1301 = vsel %vm1119, %v1296, %v1300
      %v1302 = vshrl.u32 %v1091, 16
      %v1304 = vrot.slane %v1302, 4
      %v1305 = vor.u32 %v1304, %v1300
      %v1306 = vrot.slane %v1305, 4
      %v1308 = vshll.u32 %v1092, 16
      %v1310 = vrot.slane %v1308, 5
      %v1311 = vsel %vm1119, %v1306, %v1310
      %v1313 = vshrl.u32 %v1093, 16
      %v1315 = vrot.slane %v1313, 4
      %v1316 = vshll.u32 %v1093, 16
      %v1318 = vrot.slane %v1316, 5
      %v1319 = vor.u32 %v1315, %v1318
      %v1320 = vrot.slane %v1319, 4
      %v1322 = vshll.u32 %v1094, 16
      %v1324 = vrot.slane %v1322, 5
      %v1325 = vsel %vm1119, %v1320, %v1324
      %v1326 = vshrl.u32 %v1094, 16
      %v1328 = vrot.slane %v1326, 4
      %v1329 = vor.u32 %v1328, %v1324
      %v1330 = vrot.slane %v1329, 4
      %v1332 = vshll.u32 %v1095, 16
      %v1334 = vrot.slane %v1332, 5
      %v1335 = vsel %vm1119, %v1330, %v1334
      %v1337 = vshrl.u32 %v1096, 16
      %v1339 = vrot.slane %v1337, 4
      %v1340 = vshll.u32 %v1096, 16
      %v1342 = vrot.slane %v1340, 5
      %v1343 = vor.u32 %v1339, %v1342
      %v1344 = vrot.slane %v1343, 4
      %v1346 = vshll.u32 %v1097, 16
      %v1348 = vrot.slane %v1346, 5
      %v1349 = vsel %vm1119, %v1344, %v1348
      %v1350 = vshrl.u32 %v1097, 16
      %v1352 = vrot.slane %v1350, 4
      %v1353 = vor.u32 %v1352, %v1348
      %v1354 = vrot.slane %v1353, 4
      %v1356 = vshll.u32 %v1098, 16
      %v1358 = vrot.slane %v1356, 5
      %v1359 = vsel %vm1119, %v1354, %v1358
      %v1361 = vshrl.u32 %v1099, 16
      %v1363 = vrot.slane %v1361, 4
      %v1364 = vshll.u32 %v1099, 16
      %v1366 = vrot.slane %v1364, 5
      %v1367 = vor.u32 %v1363, %v1366
      %v1368 = vrot.slane %v1367, 4
      %v1370 = vshll.u32 %v1100, 16
      %v1372 = vrot.slane %v1370, 5
      %v1373 = vsel %vm1119, %v1368, %v1372
      %v1374 = vshrl.u32 %v1100, 16
      %v1376 = vrot.slane %v1374, 4
      %v1377 = vor.u32 %v1376, %v1372
      %v1378 = vrot.slane %v1377, 4
      %v1380 = vshll.u32 %v1101, 16
      %v1382 = vrot.slane %v1380, 5
      %v1383 = vsel %vm1119, %v1378, %v1382
      %v1385 = vshrl.u32 %v1102, 16
      %v1387 = vrot.slane %v1385, 4
      %v1388 = vshll.u32 %v1102, 16
      %v1390 = vrot.slane %v1388, 5
      %v1391 = vor.u32 %v1387, %v1390
      %v1392 = vrot.slane %v1391, 4
      %v1394 = vshll.u32 %v1103, 16
      %v1396 = vrot.slane %v1394, 5
      %v1397 = vsel %vm1119, %v1392, %v1396
      %v1398 = vshrl.u32 %v1103, 16
      %v1400 = vrot.slane %v1398, 4
      %v1401 = vor.u32 %v1400, %v1396
      %v1402 = vrot.slane %v1401, 4
      %v1404 = vshll.u32 %v1104, 16
      %v1406 = vrot.slane %v1404, 5
      %v1407 = vsel %vm1119, %v1402, %v1406
      %v1409 = vshrl.u32 %v1105, 16
      %v1411 = vrot.slane %v1409, 4
      %v1412 = vshll.u32 %v1105, 16
      %v1414 = vrot.slane %v1412, 5
      %v1415 = vor.u32 %v1411, %v1414
      %v1416 = vrot.slane %v1415, 4
      %v1418 = vshll.u32 %v1106, 16
      %v1420 = vrot.slane %v1418, 5
      %v1421 = vsel %vm1119, %v1416, %v1420
      %v1422 = vshrl.u32 %v1106, 16
      %v1424 = vrot.slane %v1422, 4
      %v1425 = vor.u32 %v1424, %v1420
      %v1426 = vrot.slane %v1425, 4
      %v1428 = vshll.u32 %v1107, 16
      %v1430 = vrot.slane %v1428, 5
      %v1431 = vsel %vm1119, %v1426, %v1430
      %v1433 = vshrl.u32 %v1108, 16
      %v1435 = vrot.slane %v1433, 4
      %v1436 = vshll.u32 %v1108, 16
      %v1438 = vrot.slane %v1436, 5
      %v1439 = vor.u32 %v1435, %v1438
      %v1440 = vrot.slane %v1439, 4
      %v1442 = vshll.u32 %v1109, 16
      %v1444 = vrot.slane %v1442, 5
      %v1445 = vsel %vm1119, %v1440, %v1444
      %v1446 = vshrl.u32 %v1109, 16
      %v1448 = vrot.slane %v1446, 4
      %v1449 = vor.u32 %v1448, %v1444
      %v1450 = vrot.slane %v1449, 4
      %v1452 = vshll.u32 %v1110, 16
      %v1454 = vrot.slane %v1452, 5
      %v1455 = vsel %vm1119, %v1450, %v1454
      %v1457 = vshrl.u32 %v1111, 16
      %v1459 = vrot.slane %v1457, 4
      %v1460 = vshll.u32 %v1111, 16
      %v1462 = vrot.slane %v1460, 5
      %v1463 = vor.u32 %v1459, %v1462
      %v1464 = vrot.slane %v1463, 4
      %v1466 = vshll.u32 %v1112, 16
      %v1468 = vrot.slane %v1466, 5
      %v1469 = vsel %vm1119, %v1464, %v1468
      %v1470 = vshrl.u32 %v1112, 16
      %v1472 = vrot.slane %v1470, 4
      %v1473 = vor.u32 %v1472, %v1468
      %v1474 = vrot.slane %v1473, 4
      %v1476 = vshll.u32 %v1113, 16
      %v1478 = vrot.slane %v1476, 5
      %v1479 = vsel %vm1119, %v1474, %v1478
      %v1481 = vshrl.u32 %v1114, 16
      %v1483 = vrot.slane %v1481, 4
      %v1484 = vshll.u32 %v1114, 16
      %v1486 = vrot.slane %v1484, 5
      %v1487 = vor.u32 %v1483, %v1486
      %v1488 = vrot.slane %v1487, 4
      %v1490 = vshll.u32 %v1115, 16
      %v1492 = vrot.slane %v1490, 5
      %v1493 = vsel %vm1119, %v1488, %v1492
      %v1494 = vshrl.u32 %v1115, 16
      %v1496 = vrot.slane %v1494, 4
      %v1497 = vor.u32 %v1496, %v1492
      %v1498 = vrot.slane %v1497, 4
      %v1500 = vshll.u32 %v1116, 16
      %v1502 = vrot.slane %v1500, 5
      %v1503 = vsel %vm1119, %v1498, %v1502
      %v1504 = vunpack.c.l.b16 %v1133
      %v1505 = vunpack.c.l.b16 %v1143
      %v1506 = vunpack.c.l.b16 %v1157
      %v1507 = vunpack.c.l.b16 %v1167
      %v1508 = vunpack.c.l.b16 %v1181
      %v1509 = vunpack.c.l.b16 %v1191
      %v1510 = vunpack.c.l.b16 %v1205
      %v1511 = vunpack.c.l.b16 %v1215
      %v1512 = vunpack.c.l.b16 %v1229
      %v1513 = vunpack.c.l.b16 %v1239
      %v1514 = vunpack.c.l.b16 %v1253
      %v1515 = vunpack.c.l.b16 %v1263
      %v1516 = vunpack.c.l.b16 %v1277
      %v1517 = vunpack.c.l.b16 %v1287
      %v1518 = vunpack.c.l.b16 %v1301
      %v1519 = vunpack.c.l.b16 %v1311
      %v1520 = vunpack.c.l.b16 %v1325
      %v1521 = vunpack.c.l.b16 %v1335
      %v1522 = vunpack.c.l.b16 %v1349
      %v1523 = vunpack.c.l.b16 %v1359
      %v1524 = vunpack.c.l.b16 %v1373
      %v1525 = vunpack.c.l.b16 %v1383
      %v1526 = vunpack.c.l.b16 %v1397
      %v1527 = vunpack.c.l.b16 %v1407
      %v1528 = vunpack.c.l.b16 %v1421
      %v1529 = vunpack.c.l.b16 %v1431
      %v1530 = vunpack.c.l.b16 %v1445
      %v1531 = vunpack.c.l.b16 %v1455
      %v1532 = vunpack.c.l.b16 %v1469
      %v1533 = vunpack.c.l.b16 %v1479
      %v1534 = vunpack.c.l.b16 %v1493
      %v1535 = vunpack.c.l.b16 %v1503
      %v1536 = vpack.c.b16 %v1505, %v1504
      %v1537 = vpack.c.b16 %v1507, %v1506
      %v1538 = vpack.c.b16 %v1509, %v1508
      %v1539 = vpack.c.b16 %v1511, %v1510
      %v1540 = vpack.c.b16 %v1513, %v1512
      %v1541 = vpack.c.b16 %v1515, %v1514
      %v1542 = vpack.c.b16 %v1517, %v1516
      %v1543 = vpack.c.b16 %v1519, %v1518
      %v1544 = vpack.c.b16 %v1521, %v1520
      %v1545 = vpack.c.b16 %v1523, %v1522
      %v1546 = vpack.c.b16 %v1525, %v1524
      %v1547 = vpack.c.b16 %v1527, %v1526
      %v1548 = vpack.c.b16 %v1529, %v1528
      %v1549 = vpack.c.b16 %v1531, %v1530
      %v1550 = vpack.c.b16 %v1533, %v1532
      %v1551 = vpack.c.b16 %v1535, %v1534
      %1552 = vrot.lane.b32.xlu0 %v1536, 4
      %v1553 = vpop.permute.xlu0 %1552
      %1554 = vrot.lane.b32.xlu0 %v1537, 4
      %v1555 = vpop.permute.xlu0 %1554
      %1556 = vrot.lane.b32.xlu0 %v1538, 4
      %v1557 = vpop.permute.xlu0 %1556
      %1558 = vrot.lane.b32.xlu0 %v1539, 4
      %v1559 = vpop.permute.xlu0 %1558
      %1560 = vrot.lane.b32.xlu0 %v1540, 4
      %v1561 = vpop.permute.xlu0 %1560
      %1562 = vrot.lane.b32.xlu0 %v1541, 4
      %v1563 = vpop.permute.xlu0 %1562
      %1564 = vrot.lane.b32.xlu0 %v1542, 4
      %v1565 = vpop.permute.xlu0 %1564
      %1566 = vrot.lane.b32.xlu0 %v1543, 4
      %v1567 = vpop.permute.xlu0 %1566
      %1568 = vrot.lane.b32.xlu0 %v1544, 4
      %v1569 = vpop.permute.xlu0 %1568
      %1570 = vrot.lane.b32.xlu0 %v1545, 4
      %v1571 = vpop.permute.xlu0 %1570
      %1572 = vrot.lane.b32.xlu0 %v1546, 4
      %v1573 = vpop.permute.xlu0 %1572
      %1574 = vrot.lane.b32.xlu0 %v1547, 4
      %v1575 = vpop.permute.xlu0 %1574
      %1576 = vrot.lane.b32.xlu0 %v1548, 4
      %v1577 = vpop.permute.xlu0 %1576
      %1578 = vrot.lane.b32.xlu0 %v1549, 4
      %v1579 = vpop.permute.xlu0 %1578
      %1580 = vrot.lane.b32.xlu0 %v1550, 4
      %v1581 = vpop.permute.xlu0 %1580
      %1582 = vrot.lane.b32.xlu0 %v1551, 4
      %v1583 = vpop.permute.xlu0 %1582
      %vm1600 = vcmask 64544
      %1601 = vst.msk [vmem:[#allocation3] sm:$0xff] %vm1600, %v1553
      %1602 = vst.msk [vmem:[#allocation3 + $0x8] sm:$0xff] %vm1600, %v1555
      %1603 = vst.msk [vmem:[#allocation3 + $0x10] sm:$0xff] %vm1600, %v1557
      %1604 = vst.msk [vmem:[#allocation3 + $0x18] sm:$0xff] %vm1600, %v1559
      %1605 = vst.msk [vmem:[#allocation3 + $0x20] sm:$0xff] %vm1600, %v1561
      %1606 = vst.msk [vmem:[#allocation3 + $0x28] sm:$0xff] %vm1600, %v1563
      %1607 = vst.msk [vmem:[#allocation3 + $0x30] sm:$0xff] %vm1600, %v1565
      %1608 = vst.msk [vmem:[#allocation3 + $0x38] sm:$0xff] %vm1600, %v1567
      %1609 = vst.msk [vmem:[#allocation3 + $0x40] sm:$0xff] %vm1600, %v1569
      %1610 = vst.msk [vmem:[#allocation3 + $0x48] sm:$0xff] %vm1600, %v1571
      %1611 = vst.msk [vmem:[#allocation3 + $0x50] sm:$0xff] %vm1600, %v1573
      %1612 = vst.msk [vmem:[#allocation3 + $0x58] sm:$0xff] %vm1600, %v1575
      %1613 = vst.msk [vmem:[#allocation3 + $0x60] sm:$0xff] %vm1600, %v1577
      %1614 = vst.msk [vmem:[#allocation3 + $0x68] sm:$0xff] %vm1600, %v1579
      %1615 = vst.msk [vmem:[#allocation3 + $0x70] sm:$0xff] %vm1600, %v1581
      %1616 = vst.msk [vmem:[#allocation3 + $0x78] sm:$0xff] %vm1600, %v1583
      %v1617 = vld [vmem:[#allocation2] sm:$0xe]
      %v1618 = vld [vmem:[#allocation2 + $0x4] sm:$0xf]
      %v1619 = vld [vmem:[#allocation2 + $0x8] sm:$0x1]
      %v1620 = vld [vmem:[#allocation2 + $0xc] sm:$0xe]
      %v1621 = vld [vmem:[#allocation2 + $0x10] sm:$0xf]
      %v1622 = vld [vmem:[#allocation2 + $0x14] sm:$0x1]
      %v1623 = vld [vmem:[#allocation2 + $0x18] sm:$0xe]
      %v1624 = vld [vmem:[#allocation2 + $0x1c] sm:$0xf]
      %v1625 = vld [vmem:[#allocation2 + $0x20] sm:$0x1]
      %v1626 = vld [vmem:[#allocation2 + $0x24] sm:$0xe]
      %v1627 = vld [vmem:[#allocation2 + $0x28] sm:$0xf]
      %v1628 = vld [vmem:[#allocation2 + $0x2c] sm:$0x1]
      %v1629 = vld [vmem:[#allocation2 + $0x30] sm:$0xe]
      %v1630 = vld [vmem:[#allocation2 + $0x34] sm:$0xf]
      %v1631 = vld [vmem:[#allocation2 + $0x38] sm:$0x1]
      %v1632 = vld [vmem:[#allocation2 + $0x3c] sm:$0xe]
      %v1633 = vld [vmem:[#allocation2 + $0x40] sm:$0xf]
      %v1634 = vld [vmem:[#allocation2 + $0x44] sm:$0x1]
      %v1635 = vld [vmem:[#allocation2 + $0x48] sm:$0xe]
      %v1636 = vld [vmem:[#allocation2 + $0x4c] sm:$0xf]
      %v1637 = vld [vmem:[#allocation2 + $0x50] sm:$0x1]
      %v1638 = vld [vmem:[#allocation2 + $0x54] sm:$0xe]
      %v1639 = vld [vmem:[#allocation2 + $0x58] sm:$0xf]
      %v1640 = vld [vmem:[#allocation2 + $0x5c] sm:$0x1]
      %v1641 = vld [vmem:[#allocation2 + $0x60] sm:$0xe]
      %v1642 = vld [vmem:[#allocation2 + $0x64] sm:$0xf]
      %v1643 = vld [vmem:[#allocation2 + $0x68] sm:$0x1]
      %v1644 = vld [vmem:[#allocation2 + $0x6c] sm:$0xe]
      %v1645 = vld [vmem:[#allocation2 + $0x70] sm:$0xf]
      %v1646 = vld [vmem:[#allocation2 + $0x74] sm:$0x1]
      %v1647 = vld [vmem:[#allocation2 + $0x78] sm:$0xe]
      %v1648 = vld [vmem:[#allocation2 + $0x7c] sm:$0xf]
      %v1649 = vld [vmem:[#allocation2 + $0x80] sm:$0x1]
      %v1650 = vld [vmem:[#allocation2 + $0x84] sm:$0xe]
      %v1651 = vld [vmem:[#allocation2 + $0x88] sm:$0xf]
      %v1652 = vld [vmem:[#allocation2 + $0x8c] sm:$0x1]
      %v1653 = vld [vmem:[#allocation2 + $0x90] sm:$0xe]
      %v1654 = vld [vmem:[#allocation2 + $0x94] sm:$0xf]
      %v1655 = vld [vmem:[#allocation2 + $0x98] sm:$0x1]
      %v1656 = vld [vmem:[#allocation2 + $0x9c] sm:$0xe]
      %v1657 = vld [vmem:[#allocation2 + $0xa0] sm:$0xf]
      %v1658 = vld [vmem:[#allocation2 + $0xa4] sm:$0x1]
      %v1659 = vld [vmem:[#allocation2 + $0xa8] sm:$0xe]
      %v1660 = vld [vmem:[#allocation2 + $0xac] sm:$0xf]
      %v1661 = vld [vmem:[#allocation2 + $0xb0] sm:$0x1]
      %v1662 = vld [vmem:[#allocation2 + $0xb4] sm:$0xe]
      %v1663 = vld [vmem:[#allocation2 + $0xb8] sm:$0xf]
      %v1664 = vld [vmem:[#allocation2 + $0xbc] sm:$0x1]
      %vm1713 = vcmask 1042432
      %vm1714 = vcmask 1046532
      %vm1715 = vmor %vm1713, %vm1714
      %v1716 = vrot.slane %v1617, 5
      %v1717 = vrot.slane %v1716, 4
      %v1718 = vrot.slane %v1618, 5
      %v1719 = vsel %vm1715, %v1717, %v1718
      %v1720 = vrot.slane %v1718, 4
      %v1721 = vrot.slane %v1619, 5
      %v1722 = vsel %vm1715, %v1720, %v1721
      %v1723 = vrot.slane %v1620, 5
      %v1724 = vrot.slane %v1723, 4
      %v1725 = vrot.slane %v1621, 5
      %v1726 = vsel %vm1715, %v1724, %v1725
      %v1727 = vrot.slane %v1725, 4
      %v1728 = vrot.slane %v1622, 5
      %v1729 = vsel %vm1715, %v1727, %v1728
      %v1730 = vrot.slane %v1623, 5
      %v1731 = vrot.slane %v1730, 4
      %v1732 = vrot.slane %v1624, 5
      %v1733 = vsel %vm1715, %v1731, %v1732
      %v1734 = vrot.slane %v1732, 4
      %v1735 = vrot.slane %v1625, 5
      %v1736 = vsel %vm1715, %v1734, %v1735
      %v1737 = vrot.slane %v1626, 5
      %v1738 = vrot.slane %v1737, 4
      %v1739 = vrot.slane %v1627, 5
      %v1740 = vsel %vm1715, %v1738, %v1739
      %v1741 = vrot.slane %v1739, 4
      %v1742 = vrot.slane %v1628, 5
      %v1743 = vsel %vm1715, %v1741, %v1742
      %v1744 = vrot.slane %v1629, 5
      %v1745 = vrot.slane %v1744, 4
      %v1746 = vrot.slane %v1630, 5
      %v1747 = vsel %vm1715, %v1745, %v1746
      %v1748 = vrot.slane %v1746, 4
      %v1749 = vrot.slane %v1631, 5
      %v1750 = vsel %vm1715, %v1748, %v1749
      %v1751 = vrot.slane %v1632, 5
      %v1752 = vrot.slane %v1751, 4
      %v1753 = vrot.slane %v1633, 5
      %v1754 = vsel %vm1715, %v1752, %v1753
      %v1755 = vrot.slane %v1753, 4
      %v1756 = vrot.slane %v1634, 5
      %v1757 = vsel %vm1715, %v1755, %v1756
      %v1758 = vrot.slane %v1635, 5
      %v1759 = vrot.slane %v1758, 4
      %v1760 = vrot.slane %v1636, 5
      %v1761 = vsel %vm1715, %v1759, %v1760
      %v1762 = vrot.slane %v1760, 4
      %v1763 = vrot.slane %v1637, 5
      %v1764 = vsel %vm1715, %v1762, %v1763
      %v1765 = vrot.slane %v1638, 5
      %v1766 = vrot.slane %v1765, 4
      %v1767 = vrot.slane %v1639, 5
      %v1768 = vsel %vm1715, %v1766, %v1767
      %v1769 = vrot.slane %v1767, 4
      %v1770 = vrot.slane %v1640, 5
      %v1771 = vsel %vm1715, %v1769, %v1770
      %v1772 = vrot.slane %v1641, 5
      %v1773 = vrot.slane %v1772, 4
      %v1774 = vrot.slane %v1642, 5
      %v1775 = vsel %vm1715, %v1773, %v1774
      %v1776 = vrot.slane %v1774, 4
      %v1777 = vrot.slane %v1643, 5
      %v1778 = vsel %vm1715, %v1776, %v1777
      %v1779 = vrot.slane %v1644, 5
      %v1780 = vrot.slane %v1779, 4
      %v1781 = vrot.slane %v1645, 5
      %v1782 = vsel %vm1715, %v1780, %v1781
      %v1783 = vrot.slane %v1781, 4
      %v1784 = vrot.slane %v1646, 5
      %v1785 = vsel %vm1715, %v1783, %v1784
      %v1786 = vrot.slane %v1647, 5
      %v1787 = vrot.slane %v1786, 4
      %v1788 = vrot.slane %v1648, 5
      %v1789 = vsel %vm1715, %v1787, %v1788
      %v1790 = vrot.slane %v1788, 4
      %v1791 = vrot.slane %v1649, 5
      %v1792 = vsel %vm1715, %v1790, %v1791
      %v1793 = vrot.slane %v1650, 5
      %v1794 = vrot.slane %v1793, 4
      %v1795 = vrot.slane %v1651, 5
      %v1796 = vsel %vm1715, %v1794, %v1795
      %v1797 = vrot.slane %v1795, 4
      %v1798 = vrot.slane %v1652, 5
      %v1799 = vsel %vm1715, %v1797, %v1798
      %v1800 = vrot.slane %v1653, 5
      %v1801 = vrot.slane %v1800, 4
      %v1802 = vrot.slane %v1654, 5
      %v1803 = vsel %vm1715, %v1801, %v1802
      %v1804 = vrot.slane %v1802, 4
      %v1805 = vrot.slane %v1655, 5
      %v1806 = vsel %vm1715, %v1804, %v1805
      %v1807 = vrot.slane %v1656, 5
      %v1808 = vrot.slane %v1807, 4
      %v1809 = vrot.slane %v1657, 5
      %v1810 = vsel %vm1715, %v1808, %v1809
      %v1811 = vrot.slane %v1809, 4
      %v1812 = vrot.slane %v1658, 5
      %v1813 = vsel %vm1715, %v1811, %v1812
      %v1814 = vrot.slane %v1659, 5
      %v1815 = vrot.slane %v1814, 4
      %v1816 = vrot.slane %v1660, 5
      %v1817 = vsel %vm1715, %v1815, %v1816
      %v1818 = vrot.slane %v1816, 4
      %v1819 = vrot.slane %v1661, 5
      %v1820 = vsel %vm1715, %v1818, %v1819
      %v1821 = vrot.slane %v1662, 5
      %v1822 = vrot.slane %v1821, 4
      %v1823 = vrot.slane %v1663, 5
      %v1824 = vsel %vm1715, %v1822, %v1823
      %v1825 = vrot.slane %v1823, 4
      %v1826 = vrot.slane %v1664, 5
      %v1827 = vsel %vm1715, %v1825, %v1826
      %v1828 = vunpack.c.l.b16 %v1719
      %v1829 = vunpack.c.l.b16 %v1722
      %v1830 = vunpack.c.l.b16 %v1726
      %v1831 = vunpack.c.l.b16 %v1729
      %v1832 = vunpack.c.l.b16 %v1733
      %v1833 = vunpack.c.l.b16 %v1736
      %v1834 = vunpack.c.l.b16 %v1740
      %v1835 = vunpack.c.l.b16 %v1743
      %v1836 = vunpack.c.l.b16 %v1747
      %v1837 = vunpack.c.l.b16 %v1750
      %v1838 = vunpack.c.l.b16 %v1754
      %v1839 = vunpack.c.l.b16 %v1757
      %v1840 = vunpack.c.l.b16 %v1761
      %v1841 = vunpack.c.l.b16 %v1764
      %v1842 = vunpack.c.l.b16 %v1768
      %v1843 = vunpack.c.l.b16 %v1771
      %v1844 = vunpack.c.l.b16 %v1775
      %v1845 = vunpack.c.l.b16 %v1778
      %v1846 = vunpack.c.l.b16 %v1782
      %v1847 = vunpack.c.l.b16 %v1785
      %v1848 = vunpack.c.l.b16 %v1789
      %v1849 = vunpack.c.l.b16 %v1792
      %v1850 = vunpack.c.l.b16 %v1796
      %v1851 = vunpack.c.l.b16 %v1799
      %v1852 = vunpack.c.l.b16 %v1803
      %v1853 = vunpack.c.l.b16 %v1806
      %v1854 = vunpack.c.l.b16 %v1810
      %v1855 = vunpack.c.l.b16 %v1813
      %v1856 = vunpack.c.l.b16 %v1817
      %v1857 = vunpack.c.l.b16 %v1820
      %v1858 = vunpack.c.l.b16 %v1824
      %v1859 = vunpack.c.l.b16 %v1827
      %v1860 = vpack.c.b16 %v1829, %v1828
      %v1861 = vpack.c.b16 %v1831, %v1830
      %v1862 = vpack.c.b16 %v1833, %v1832
      %v1863 = vpack.c.b16 %v1835, %v1834
      %v1864 = vpack.c.b16 %v1837, %v1836
      %v1865 = vpack.c.b16 %v1839, %v1838
      %v1866 = vpack.c.b16 %v1841, %v1840
      %v1867 = vpack.c.b16 %v1843, %v1842
      %v1868 = vpack.c.b16 %v1845, %v1844
      %v1869 = vpack.c.b16 %v1847, %v1846
      %v1870 = vpack.c.b16 %v1849, %v1848
      %v1871 = vpack.c.b16 %v1851, %v1850
      %v1872 = vpack.c.b16 %v1853, %v1852
      %v1873 = vpack.c.b16 %v1855, %v1854
      %v1874 = vpack.c.b16 %v1857, %v1856
      %v1875 = vpack.c.b16 %v1859, %v1858
      %1876 = vrot.lane.b32.xlu0 %v1860, 8
      %v1877 = vpop.permute.xlu0 %1876
      %1878 = vrot.lane.b32.xlu0 %v1861, 8
      %v1879 = vpop.permute.xlu0 %1878
      %1880 = vrot.lane.b32.xlu0 %v1862, 8
      %v1881 = vpop.permute.xlu0 %1880
      %1882 = vrot.lane.b32.xlu0 %v1863, 8
      %v1883 = vpop.permute.xlu0 %1882
      %1884 = vrot.lane.b32.xlu0 %v1864, 8
      %v1885 = vpop.permute.xlu0 %1884
      %1886 = vrot.lane.b32.xlu0 %v1865, 8
      %v1887 = vpop.permute.xlu0 %1886
      %1888 = vrot.lane.b32.xlu0 %v1866, 8
      %v1889 = vpop.permute.xlu0 %1888
      %1890 = vrot.lane.b32.xlu0 %v1867, 8
      %v1891 = vpop.permute.xlu0 %1890
      %1892 = vrot.lane.b32.xlu0 %v1868, 8
      %v1893 = vpop.permute.xlu0 %1892
      %1894 = vrot.lane.b32.xlu0 %v1869, 8
      %v1895 = vpop.permute.xlu0 %1894
      %1896 = vrot.lane.b32.xlu0 %v1870, 8
      %v1897 = vpop.permute.xlu0 %1896
      %1898 = vrot.lane.b32.xlu0 %v1871, 8
      %v1899 = vpop.permute.xlu0 %1898
      %1900 = vrot.lane.b32.xlu0 %v1872, 8
      %v1901 = vpop.permute.xlu0 %1900
      %1902 = vrot.lane.b32.xlu0 %v1873, 8
      %v1903 = vpop.permute.xlu0 %1902
      %1904 = vrot.lane.b32.xlu0 %v1874, 8
      %v1905 = vpop.permute.xlu0 %1904
      %1906 = vrot.lane.b32.xlu0 %v1875, 8
      %v1907 = vpop.permute.xlu0 %1906
      %vm1924 = vcmask 97344
      %1925 = vst.msk [vmem:[#allocation3] sm:$0xff] %vm1924, %v1877
      %1926 = vst.msk [vmem:[#allocation3 + $0x8] sm:$0xff] %vm1924, %v1879
      %1927 = vst.msk [vmem:[#allocation3 + $0x10] sm:$0xff] %vm1924, %v1881
      %1928 = vst.msk [vmem:[#allocation3 + $0x18] sm:$0xff] %vm1924, %v1883
      %1929 = vst.msk [vmem:[#allocation3 + $0x20] sm:$0xff] %vm1924, %v1885
      %1930 = vst.msk [vmem:[#allocation3 + $0x28] sm:$0xff] %vm1924, %v1887
      %1931 = vst.msk [vmem:[#allocation3 + $0x30] sm:$0xff] %vm1924, %v1889
      %1932 = vst.msk [vmem:[#allocation3 + $0x38] sm:$0xff] %vm1924, %v1891
      %1933 = vst.msk [vmem:[#allocation3 + $0x40] sm:$0xff] %vm1924, %v1893
      %1934 = vst.msk [vmem:[#allocation3 + $0x48] sm:$0xff] %vm1924, %v1895
      %1935 = vst.msk [vmem:[#allocation3 + $0x50] sm:$0xff] %vm1924, %v1897
      %1936 = vst.msk [vmem:[#allocation3 + $0x58] sm:$0xff] %vm1924, %v1899
      %1937 = vst.msk [vmem:[#allocation3 + $0x60] sm:$0xff] %vm1924, %v1901
      %1938 = vst.msk [vmem:[#allocation3 + $0x68] sm:$0xff] %vm1924, %v1903
      %1939 = vst.msk [vmem:[#allocation3 + $0x70] sm:$0xff] %vm1924, %v1905
      %1940 = vst.msk [vmem:[#allocation3 + $0x78] sm:$0xff] %vm1924, %v1907
      %v1941 = vld [vmem:[%s809] sm:$0xf]
      %v1942 = vld [vmem:[%s809 + $0x4] sm:$0xf]
      %v1943 = vld [vmem:[%s809 + $0xc] sm:$0xf]
      %v1944 = vld [vmem:[%s809 + $0x10] sm:$0xf]
      %v1945 = vld [vmem:[%s809 + $0x18] sm:$0xf]
      %v1946 = vld [vmem:[%s809 + $0x1c] sm:$0xf]
      %v1947 = vld [vmem:[%s809 + $0x24] sm:$0xf]
      %v1948 = vld [vmem:[%s809 + $0x28] sm:$0xf]
      %v1949 = vld [vmem:[%s809 + $0x30] sm:$0xf]
      %v1950 = vld [vmem:[%s809 + $0x34] sm:$0xf]
      %v1951 = vld [vmem:[%s809 + $0x3c] sm:$0xf]
      %v1952 = vld [vmem:[%s809 + $0x40] sm:$0xf]
      %v1953 = vld [vmem:[%s809 + $0x48] sm:$0xf]
      %v1954 = vld [vmem:[%s809 + $0x4c] sm:$0xf]
      %v1955 = vld [vmem:[%s809 + $0x54] sm:$0xf]
      %v1956 = vld [vmem:[%s809 + $0x58] sm:$0xf]
      %v1957 = vld [vmem:[%s809 + $0x60] sm:$0xf]
      %v1958 = vld [vmem:[%s809 + $0x64] sm:$0xf]
      %v1959 = vld [vmem:[%s809 + $0x6c] sm:$0xf]
      %v1960 = vld [vmem:[%s809 + $0x70] sm:$0xf]
      %v1961 = vld [vmem:[%s809 + $0x78] sm:$0xf]
      %v1962 = vld [vmem:[%s809 + $0x7c] sm:$0xf]
      %v1963 = vld [vmem:[%s809 + $0x84] sm:$0xf]
      %v1964 = vld [vmem:[%s809 + $0x88] sm:$0xf]
      %v1965 = vld [vmem:[%s809 + $0x90] sm:$0xf]
      %v1966 = vld [vmem:[%s809 + $0x94] sm:$0xf]
      %v1967 = vld [vmem:[%s809 + $0x9c] sm:$0xf]
      %v1968 = vld [vmem:[%s809 + $0xa0] sm:$0xf]
      %v1969 = vld [vmem:[%s809 + $0xa8] sm:$0xf]
      %v1970 = vld [vmem:[%s809 + $0xac] sm:$0xf]
      %v1971 = vld [vmem:[%s809 + $0xb4] sm:$0xf]
      %v1972 = vld [vmem:[%s809 + $0xb8] sm:$0xf]
      %v2005 = vunpack.c.l.b16 %v1941
      %v2006 = vunpack.c.l.b16 %v1942
      %v2007 = vunpack.c.l.b16 %v1943
      %v2008 = vunpack.c.l.b16 %v1944
      %v2009 = vunpack.c.l.b16 %v1945
      %v2010 = vunpack.c.l.b16 %v1946
      %v2011 = vunpack.c.l.b16 %v1947
      %v2012 = vunpack.c.l.b16 %v1948
      %v2013 = vunpack.c.l.b16 %v1949
      %v2014 = vunpack.c.l.b16 %v1950
      %v2015 = vunpack.c.l.b16 %v1951
      %v2016 = vunpack.c.l.b16 %v1952
      %v2017 = vunpack.c.l.b16 %v1953
      %v2018 = vunpack.c.l.b16 %v1954
      %v2019 = vunpack.c.l.b16 %v1955
      %v2020 = vunpack.c.l.b16 %v1956
      %v2021 = vunpack.c.l.b16 %v1957
      %v2022 = vunpack.c.l.b16 %v1958
      %v2023 = vunpack.c.l.b16 %v1959
      %v2024 = vunpack.c.l.b16 %v1960
      %v2025 = vunpack.c.l.b16 %v1961
      %v2026 = vunpack.c.l.b16 %v1962
      %v2027 = vunpack.c.l.b16 %v1963
      %v2028 = vunpack.c.l.b16 %v1964
      %v2029 = vunpack.c.l.b16 %v1965
      %v2030 = vunpack.c.l.b16 %v1966
      %v2031 = vunpack.c.l.b16 %v1967
      %v2032 = vunpack.c.l.b16 %v1968
      %v2033 = vunpack.c.l.b16 %v1969
      %v2034 = vunpack.c.l.b16 %v1970
      %v2035 = vunpack.c.l.b16 %v1971
      %v2036 = vunpack.c.l.b16 %v1972
      %v2037 = vpack.c.b16 %v2006, %v2005
      %v2038 = vpack.c.b16 %v2008, %v2007
      %v2039 = vpack.c.b16 %v2010, %v2009
      %v2040 = vpack.c.b16 %v2012, %v2011
      %v2041 = vpack.c.b16 %v2014, %v2013
      %v2042 = vpack.c.b16 %v2016, %v2015
      %v2043 = vpack.c.b16 %v2018, %v2017
      %v2044 = vpack.c.b16 %v2020, %v2019
      %v2045 = vpack.c.b16 %v2022, %v2021
      %v2046 = vpack.c.b16 %v2024, %v2023
      %v2047 = vpack.c.b16 %v2026, %v2025
      %v2048 = vpack.c.b16 %v2028, %v2027
      %v2049 = vpack.c.b16 %v2030, %v2029
      %v2050 = vpack.c.b16 %v2032, %v2031
      %v2051 = vpack.c.b16 %v2034, %v2033
      %v2052 = vpack.c.b16 %v2036, %v2035
      %2053 = vrot.lane.b32.xlu0 %v2037, 12
      %v2054 = vpop.permute.xlu0 %2053
      %2055 = vrot.lane.b32.xlu0 %v2038, 12
      %v2056 = vpop.permute.xlu0 %2055
      %2057 = vrot.lane.b32.xlu0 %v2039, 12
      %v2058 = vpop.permute.xlu0 %2057
      %2059 = vrot.lane.b32.xlu0 %v2040, 12
      %v2060 = vpop.permute.xlu0 %2059
      %2061 = vrot.lane.b32.xlu0 %v2041, 12
      %v2062 = vpop.permute.xlu0 %2061
      %2063 = vrot.lane.b32.xlu0 %v2042, 12
      %v2064 = vpop.permute.xlu0 %2063
      %2065 = vrot.lane.b32.xlu0 %v2043, 12
      %v2066 = vpop.permute.xlu0 %2065
      %2067 = vrot.lane.b32.xlu0 %v2044, 12
      %v2068 = vpop.permute.xlu0 %2067
      %2069 = vrot.lane.b32.xlu0 %v2045, 12
      %v2070 = vpop.permute.xlu0 %2069
      %2071 = vrot.lane.b32.xlu0 %v2046, 12
      %v2072 = vpop.permute.xlu0 %2071
      %2073 = vrot.lane.b32.xlu0 %v2047, 12
      %v2074 = vpop.permute.xlu0 %2073
      %2075 = vrot.lane.b32.xlu0 %v2048, 12
      %v2076 = vpop.permute.xlu0 %2075
      %2077 = vrot.lane.b32.xlu0 %v2049, 12
      %v2078 = vpop.permute.xlu0 %2077
      %2079 = vrot.lane.b32.xlu0 %v2050, 12
      %v2080 = vpop.permute.xlu0 %2079
      %2081 = vrot.lane.b32.xlu0 %v2051, 12
      %v2082 = vpop.permute.xlu0 %2081
      %2083 = vrot.lane.b32.xlu0 %v2052, 12
      %v2084 = vpop.permute.xlu0 %2083
      %vm2101 = vcmask 130144
      %2102 = vst.msk [vmem:[#allocation3] sm:$0xff] %vm2101, %v2054
      %2103 = vst.msk [vmem:[#allocation3 + $0x8] sm:$0xff] %vm2101, %v2056
      %2104 = vst.msk [vmem:[#allocation3 + $0x10] sm:$0xff] %vm2101, %v2058
      %2105 = vst.msk [vmem:[#allocation3 + $0x18] sm:$0xff] %vm2101, %v2060
      %2106 = vst.msk [vmem:[#allocation3 + $0x20] sm:$0xff] %vm2101, %v2062
      %2107 = vst.msk [vmem:[#allocation3 + $0x28] sm:$0xff] %vm2101, %v2064
      %2108 = vst.msk [vmem:[#allocation3 + $0x30] sm:$0xff] %vm2101, %v2066
      %2109 = vst.msk [vmem:[#allocation3 + $0x38] sm:$0xff] %vm2101, %v2068
      %2110 = vst.msk [vmem:[#allocation3 + $0x40] sm:$0xff] %vm2101, %v2070
      %2111 = vst.msk [vmem:[#allocation3 + $0x48] sm:$0xff] %vm2101, %v2072
      %2112 = vst.msk [vmem:[#allocation3 + $0x50] sm:$0xff] %vm2101, %v2074
      %2113 = vst.msk [vmem:[#allocation3 + $0x58] sm:$0xff] %vm2101, %v2076
      %2114 = vst.msk [vmem:[#allocation3 + $0x60] sm:$0xff] %vm2101, %v2078
      %2115 = vst.msk [vmem:[#allocation3 + $0x68] sm:$0xff] %vm2101, %v2080
      %2116 = vst.msk [vmem:[#allocation3 + $0x70] sm:$0xff] %vm2101, %v2082
      %2117 = vst.msk [vmem:[#allocation3 + $0x78] sm:$0xff] %vm2101, %v2084
      %v2118 = vld [vmem:[%s809] sm:$0xf]
      %v2119 = vld [vmem:[%s809 + $0x4] sm:$0xf]
      %v2120 = vld [vmem:[%s809 + $0x8] sm:$0x1]
      %v2121 = vld [vmem:[%s809 + $0xc] sm:$0xf]
      %v2122 = vld [vmem:[%s809 + $0x10] sm:$0xf]
      %v2123 = vld [vmem:[%s809 + $0x14] sm:$0x1]
      %v2124 = vld [vmem:[%s809 + $0x18] sm:$0xf]
      %v2125 = vld [vmem:[%s809 + $0x1c] sm:$0xf]
      %v2126 = vld [vmem:[%s809 + $0x20] sm:$0x1]
      %v2127 = vld [vmem:[%s809 + $0x24] sm:$0xf]
      %v2128 = vld [vmem:[%s809 + $0x28] sm:$0xf]
      %v2129 = vld [vmem:[%s809 + $0x2c] sm:$0x1]
      %v2130 = vld [vmem:[%s809 + $0x30] sm:$0xf]
      %v2131 = vld [vmem:[%s809 + $0x34] sm:$0xf]
      %v2132 = vld [vmem:[%s809 + $0x38] sm:$0x1]
      %v2133 = vld [vmem:[%s809 + $0x3c] sm:$0xf]
      %v2134 = vld [vmem:[%s809 + $0x40] sm:$0xf]
      %v2135 = vld [vmem:[%s809 + $0x44] sm:$0x1]
      %v2136 = vld [vmem:[%s809 + $0x48] sm:$0xf]
      %v2137 = vld [vmem:[%s809 + $0x4c] sm:$0xf]
      %v2138 = vld [vmem:[%s809 + $0x50] sm:$0x1]
      %v2139 = vld [vmem:[%s809 + $0x54] sm:$0xf]
      %v2140 = vld [vmem:[%s809 + $0x58] sm:$0xf]
      %v2141 = vld [vmem:[%s809 + $0x5c] sm:$0x1]
      %v2142 = vld [vmem:[%s809 + $0x60] sm:$0xf]
      %v2143 = vld [vmem:[%s809 + $0x64] sm:$0xf]
      %v2144 = vld [vmem:[%s809 + $0x68] sm:$0x1]
      %v2145 = vld [vmem:[%s809 + $0x6c] sm:$0xf]
      %v2146 = vld [vmem:[%s809 + $0x70] sm:$0xf]
      %v2147 = vld [vmem:[%s809 + $0x74] sm:$0x1]
      %v2148 = vld [vmem:[%s809 + $0x78] sm:$0xf]
      %v2149 = vld [vmem:[%s809 + $0x7c] sm:$0xf]
      %v2150 = vld [vmem:[%s809 + $0x80] sm:$0x1]
      %v2151 = vld [vmem:[%s809 + $0x84] sm:$0xf]
      %v2152 = vld [vmem:[%s809 + $0x88] sm:$0xf]
      %v2153 = vld [vmem:[%s809 + $0x8c] sm:$0x1]
      %v2154 = vld [vmem:[%s809 + $0x90] sm:$0xf]
      %v2155 = vld [vmem:[%s809 + $0x94] sm:$0xf]
      %v2156 = vld [vmem:[%s809 + $0x98] sm:$0x1]
      %v2157 = vld [vmem:[%s809 + $0x9c] sm:$0xf]
      %v2158 = vld [vmem:[%s809 + $0xa0] sm:$0xf]
      %v2159 = vld [vmem:[%s809 + $0xa4] sm:$0x1]
      %v2160 = vld [vmem:[%s809 + $0xa8] sm:$0xf]
      %v2161 = vld [vmem:[%s809 + $0xac] sm:$0xf]
      %v2162 = vld [vmem:[%s809 + $0xb0] sm:$0x1]
      %v2163 = vld [vmem:[%s809 + $0xb4] sm:$0xf]
      %v2164 = vld [vmem:[%s809 + $0xb8] sm:$0xf]
      %v2165 = vld [vmem:[%s809 + $0xbc] sm:$0x1]
      %v2167 = vshrl.u32 %v2118, 16
      %v2169 = vrot.slane %v2167, 4
      %v2170 = vshll.u32 %v2118, 16
      %v2172 = vrot.slane %v2170, 5
      %v2173 = vor.u32 %v2169, %v2172
      %v2174 = vrot.slane %v2173, 4
      %v2176 = vshll.u32 %v2119, 16
      %v2178 = vrot.slane %v2176, 5
      %v2179 = vsel %vm1119, %v2174, %v2178
      %v2180 = vshrl.u32 %v2119, 16
      %v2182 = vrot.slane %v2180, 4
      %v2183 = vor.u32 %v2182, %v2178
      %v2184 = vrot.slane %v2183, 4
      %v2186 = vshll.u32 %v2120, 16
      %v2188 = vrot.slane %v2186, 5
      %v2189 = vsel %vm1119, %v2184, %v2188
      %v2191 = vshrl.u32 %v2121, 16
      %v2193 = vrot.slane %v2191, 4
      %v2194 = vshll.u32 %v2121, 16
      %v2196 = vrot.slane %v2194, 5
      %v2197 = vor.u32 %v2193, %v2196
      %v2198 = vrot.slane %v2197, 4
      %v2200 = vshll.u32 %v2122, 16
      %v2202 = vrot.slane %v2200, 5
      %v2203 = vsel %vm1119, %v2198, %v2202
      %v2204 = vshrl.u32 %v2122, 16
      %v2206 = vrot.slane %v2204, 4
      %v2207 = vor.u32 %v2206, %v2202
      %v2208 = vrot.slane %v2207, 4
      %v2210 = vshll.u32 %v2123, 16
      %v2212 = vrot.slane %v2210, 5
      %v2213 = vsel %vm1119, %v2208, %v2212
      %v2215 = vshrl.u32 %v2124, 16
      %v2217 = vrot.slane %v2215, 4
      %v2218 = vshll.u32 %v2124, 16
      %v2220 = vrot.slane %v2218, 5
      %v2221 = vor.u32 %v2217, %v2220
      %v2222 = vrot.slane %v2221, 4
      %v2224 = vshll.u32 %v2125, 16
      %v2226 = vrot.slane %v2224, 5
      %v2227 = vsel %vm1119, %v2222, %v2226
      %v2228 = vshrl.u32 %v2125, 16
      %v2230 = vrot.slane %v2228, 4
      %v2231 = vor.u32 %v2230, %v2226
      %v2232 = vrot.slane %v2231, 4
      %v2234 = vshll.u32 %v2126, 16
      %v2236 = vrot.slane %v2234, 5
      %v2237 = vsel %vm1119, %v2232, %v2236
      %v2239 = vshrl.u32 %v2127, 16
      %v2241 = vrot.slane %v2239, 4
      %v2242 = vshll.u32 %v2127, 16
      %v2244 = vrot.slane %v2242, 5
      %v2245 = vor.u32 %v2241, %v2244
      %v2246 = vrot.slane %v2245, 4
      %v2248 = vshll.u32 %v2128, 16
      %v2250 = vrot.slane %v2248, 5
      %v2251 = vsel %vm1119, %v2246, %v2250
      %v2252 = vshrl.u32 %v2128, 16
      %v2254 = vrot.slane %v2252, 4
      %v2255 = vor.u32 %v2254, %v2250
      %v2256 = vrot.slane %v2255, 4
      %v2258 = vshll.u32 %v2129, 16
      %v2260 = vrot.slane %v2258, 5
      %v2261 = vsel %vm1119, %v2256, %v2260
      %v2263 = vshrl.u32 %v2130, 16
      %v2265 = vrot.slane %v2263, 4
      %v2266 = vshll.u32 %v2130, 16
      %v2268 = vrot.slane %v2266, 5
      %v2269 = vor.u32 %v2265, %v2268
      %v2270 = vrot.slane %v2269, 4
      %v2272 = vshll.u32 %v2131, 16
      %v2274 = vrot.slane %v2272, 5
      %v2275 = vsel %vm1119, %v2270, %v2274
      %v2276 = vshrl.u32 %v2131, 16
      %v2278 = vrot.slane %v2276, 4
      %v2279 = vor.u32 %v2278, %v2274
      %v2280 = vrot.slane %v2279, 4
      %v2282 = vshll.u32 %v2132, 16
      %v2284 = vrot.slane %v2282, 5
      %v2285 = vsel %vm1119, %v2280, %v2284
      %v2287 = vshrl.u32 %v2133, 16
      %v2289 = vrot.slane %v2287, 4
      %v2290 = vshll.u32 %v2133, 16
      %v2292 = vrot.slane %v2290, 5
      %v2293 = vor.u32 %v2289, %v2292
      %v2294 = vrot.slane %v2293, 4
      %v2296 = vshll.u32 %v2134, 16
      %v2298 = vrot.slane %v2296, 5
      %v2299 = vsel %vm1119, %v2294, %v2298
      %v2300 = vshrl.u32 %v2134, 16
      %v2302 = vrot.slane %v2300, 4
      %v2303 = vor.u32 %v2302, %v2298
      %v2304 = vrot.slane %v2303, 4
      %v2306 = vshll.u32 %v2135, 16
      %v2308 = vrot.slane %v2306, 5
      %v2309 = vsel %vm1119, %v2304, %v2308
      %v2311 = vshrl.u32 %v2136, 16
      %v2313 = vrot.slane %v2311, 4
      %v2314 = vshll.u32 %v2136, 16
      %v2316 = vrot.slane %v2314, 5
      %v2317 = vor.u32 %v2313, %v2316
      %v2318 = vrot.slane %v2317, 4
      %v2320 = vshll.u32 %v2137, 16
      %v2322 = vrot.slane %v2320, 5
      %v2323 = vsel %vm1119, %v2318, %v2322
      %v2324 = vshrl.u32 %v2137, 16
      %v2326 = vrot.slane %v2324, 4
      %v2327 = vor.u32 %v2326, %v2322
      %v2328 = vrot.slane %v2327, 4
      %v2330 = vshll.u32 %v2138, 16
      %v2332 = vrot.slane %v2330, 5
      %v2333 = vsel %vm1119, %v2328, %v2332
      %v2335 = vshrl.u32 %v2139, 16
      %v2337 = vrot.slane %v2335, 4
      %v2338 = vshll.u32 %v2139, 16
      %v2340 = vrot.slane %v2338, 5
      %v2341 = vor.u32 %v2337, %v2340
      %v2342 = vrot.slane %v2341, 4
      %v2344 = vshll.u32 %v2140, 16
      %v2346 = vrot.slane %v2344, 5
      %v2347 = vsel %vm1119, %v2342, %v2346
      %v2348 = vshrl.u32 %v2140, 16
      %v2350 = vrot.slane %v2348, 4
      %v2351 = vor.u32 %v2350, %v2346
      %v2352 = vrot.slane %v2351, 4
      %v2354 = vshll.u32 %v2141, 16
      %v2356 = vrot.slane %v2354, 5
      %v2357 = vsel %vm1119, %v2352, %v2356
      %v2359 = vshrl.u32 %v2142, 16
      %v2361 = vrot.slane %v2359, 4
      %v2362 = vshll.u32 %v2142, 16
      %v2364 = vrot.slane %v2362, 5
      %v2365 = vor.u32 %v2361, %v2364
      %v2366 = vrot.slane %v2365, 4
      %v2368 = vshll.u32 %v2143, 16
      %v2370 = vrot.slane %v2368, 5
      %v2371 = vsel %vm1119, %v2366, %v2370
      %v2372 = vshrl.u32 %v2143, 16
      %v2374 = vrot.slane %v2372, 4
      %v2375 = vor.u32 %v2374, %v2370
      %v2376 = vrot.slane %v2375, 4
      %v2378 = vshll.u32 %v2144, 16
      %v2380 = vrot.slane %v2378, 5
      %v2381 = vsel %vm1119, %v2376, %v2380
      %v2383 = vshrl.u32 %v2145, 16
      %v2385 = vrot.slane %v2383, 4
      %v2386 = vshll.u32 %v2145, 16
      %v2388 = vrot.slane %v2386, 5
      %v2389 = vor.u32 %v2385, %v2388
      %v2390 = vrot.slane %v2389, 4
      %v2392 = vshll.u32 %v2146, 16
      %v2394 = vrot.slane %v2392, 5
      %v2395 = vsel %vm1119, %v2390, %v2394
      %v2396 = vshrl.u32 %v2146, 16
      %v2398 = vrot.slane %v2396, 4
      %v2399 = vor.u32 %v2398, %v2394
      %v2400 = vrot.slane %v2399, 4
      %v2402 = vshll.u32 %v2147, 16
      %v2404 = vrot.slane %v2402, 5
      %v2405 = vsel %vm1119, %v2400, %v2404
      %v2407 = vshrl.u32 %v2148, 16
      %v2409 = vrot.slane %v2407, 4
      %v2410 = vshll.u32 %v2148, 16
      %v2412 = vrot.slane %v2410, 5
      %v2413 = vor.u32 %v2409, %v2412
      %v2414 = vrot.slane %v2413, 4
      %v2416 = vshll.u32 %v2149, 16
      %v2418 = vrot.slane %v2416, 5
      %v2419 = vsel %vm1119, %v2414, %v2418
      %v2420 = vshrl.u32 %v2149, 16
      %v2422 = vrot.slane %v2420, 4
      %v2423 = vor.u32 %v2422, %v2418
      %v2424 = vrot.slane %v2423, 4
      %v2426 = vshll.u32 %v2150, 16
      %v2428 = vrot.slane %v2426, 5
      %v2429 = vsel %vm1119, %v2424, %v2428
      %v2431 = vshrl.u32 %v2151, 16
      %v2433 = vrot.slane %v2431, 4
      %v2434 = vshll.u32 %v2151, 16
      %v2436 = vrot.slane %v2434, 5
      %v2437 = vor.u32 %v2433, %v2436
      %v2438 = vrot.slane %v2437, 4
      %v2440 = vshll.u32 %v2152, 16
      %v2442 = vrot.slane %v2440, 5
      %v2443 = vsel %vm1119, %v2438, %v2442
      %v2444 = vshrl.u32 %v2152, 16
      %v2446 = vrot.slane %v2444, 4
      %v2447 = vor.u32 %v2446, %v2442
      %v2448 = vrot.slane %v2447, 4
      %v2450 = vshll.u32 %v2153, 16
      %v2452 = vrot.slane %v2450, 5
      %v2453 = vsel %vm1119, %v2448, %v2452
      %v2455 = vshrl.u32 %v2154, 16
      %v2457 = vrot.slane %v2455, 4
      %v2458 = vshll.u32 %v2154, 16
      %v2460 = vrot.slane %v2458, 5
      %v2461 = vor.u32 %v2457, %v2460
      %v2462 = vrot.slane %v2461, 4
      %v2464 = vshll.u32 %v2155, 16
      %v2466 = vrot.slane %v2464, 5
      %v2467 = vsel %vm1119, %v2462, %v2466
      %v2468 = vshrl.u32 %v2155, 16
      %v2470 = vrot.slane %v2468, 4
      %v2471 = vor.u32 %v2470, %v2466
      %v2472 = vrot.slane %v2471, 4
      %v2474 = vshll.u32 %v2156, 16
      %v2476 = vrot.slane %v2474, 5
      %v2477 = vsel %vm1119, %v2472, %v2476
      %v2479 = vshrl.u32 %v2157, 16
      %v2481 = vrot.slane %v2479, 4
      %v2482 = vshll.u32 %v2157, 16
      %v2484 = vrot.slane %v2482, 5
      %v2485 = vor.u32 %v2481, %v2484
      %v2486 = vrot.slane %v2485, 4
      %v2488 = vshll.u32 %v2158, 16
      %v2490 = vrot.slane %v2488, 5
      %v2491 = vsel %vm1119, %v2486, %v2490
      %v2492 = vshrl.u32 %v2158, 16
      %v2494 = vrot.slane %v2492, 4
      %v2495 = vor.u32 %v2494, %v2490
      %v2496 = vrot.slane %v2495, 4
      %v2498 = vshll.u32 %v2159, 16
      %v2500 = vrot.slane %v2498, 5
      %v2501 = vsel %vm1119, %v2496, %v2500
      %v2503 = vshrl.u32 %v2160, 16
      %v2505 = vrot.slane %v2503, 4
      %v2506 = vshll.u32 %v2160, 16
      %v2508 = vrot.slane %v2506, 5
      %v2509 = vor.u32 %v2505, %v2508
      %v2510 = vrot.slane %v2509, 4
      %v2512 = vshll.u32 %v2161, 16
      %v2514 = vrot.slane %v2512, 5
      %v2515 = vsel %vm1119, %v2510, %v2514
      %v2516 = vshrl.u32 %v2161, 16
      %v2518 = vrot.slane %v2516, 4
      %v2519 = vor.u32 %v2518, %v2514
      %v2520 = vrot.slane %v2519, 4
      %v2522 = vshll.u32 %v2162, 16
      %v2524 = vrot.slane %v2522, 5
      %v2525 = vsel %vm1119, %v2520, %v2524
      %v2527 = vshrl.u32 %v2163, 16
      %v2529 = vrot.slane %v2527, 4
      %v2530 = vshll.u32 %v2163, 16
      %v2532 = vrot.slane %v2530, 5
      %v2533 = vor.u32 %v2529, %v2532
      %v2534 = vrot.slane %v2533, 4
      %v2536 = vshll.u32 %v2164, 16
      %v2538 = vrot.slane %v2536, 5
      %v2539 = vsel %vm1119, %v2534, %v2538
      %v2540 = vshrl.u32 %v2164, 16
      %v2542 = vrot.slane %v2540, 4
      %v2543 = vor.u32 %v2542, %v2538
      %v2544 = vrot.slane %v2543, 4
      %v2546 = vshll.u32 %v2165, 16
      %v2548 = vrot.slane %v2546, 5
      %v2549 = vsel %vm1119, %v2544, %v2548
      %v2550 = vunpack.c.l.b16 %v2179
      %v2551 = vunpack.c.l.b16 %v2189
      %v2552 = vunpack.c.l.b16 %v2203
      %v2553 = vunpack.c.l.b16 %v2213
      %v2554 = vunpack.c.l.b16 %v2227
      %v2555 = vunpack.c.l.b16 %v2237
      %v2556 = vunpack.c.l.b16 %v2251
      %v2557 = vunpack.c.l.b16 %v2261
      %v2558 = vunpack.c.l.b16 %v2275
      %v2559 = vunpack.c.l.b16 %v2285
      %v2560 = vunpack.c.l.b16 %v2299
      %v2561 = vunpack.c.l.b16 %v2309
      %v2562 = vunpack.c.l.b16 %v2323
      %v2563 = vunpack.c.l.b16 %v2333
      %v2564 = vunpack.c.l.b16 %v2347
      %v2565 = vunpack.c.l.b16 %v2357
      %v2566 = vunpack.c.l.b16 %v2371
      %v2567 = vunpack.c.l.b16 %v2381
      %v2568 = vunpack.c.l.b16 %v2395
      %v2569 = vunpack.c.l.b16 %v2405
      %v2570 = vunpack.c.l.b16 %v2419
      %v2571 = vunpack.c.l.b16 %v2429
      %v2572 = vunpack.c.l.b16 %v2443
      %v2573 = vunpack.c.l.b16 %v2453
      %v2574 = vunpack.c.l.b16 %v2467
      %v2575 = vunpack.c.l.b16 %v2477
      %v2576 = vunpack.c.l.b16 %v2491
      %v2577 = vunpack.c.l.b16 %v2501
      %v2578 = vunpack.c.l.b16 %v2515
      %v2579 = vunpack.c.l.b16 %v2525
      %v2580 = vunpack.c.l.b16 %v2539
      %v2581 = vunpack.c.l.b16 %v2549
      %v2582 = vpack.c.b16 %v2551, %v2550
      %v2583 = vpack.c.b16 %v2553, %v2552
      %v2584 = vpack.c.b16 %v2555, %v2554
      %v2585 = vpack.c.b16 %v2557, %v2556
      %v2586 = vpack.c.b16 %v2559, %v2558
      %v2587 = vpack.c.b16 %v2561, %v2560
      %v2588 = vpack.c.b16 %v2563, %v2562
      %v2589 = vpack.c.b16 %v2565, %v2564
      %v2590 = vpack.c.b16 %v2567, %v2566
      %v2591 = vpack.c.b16 %v2569, %v2568
      %v2592 = vpack.c.b16 %v2571, %v2570
      %v2593 = vpack.c.b16 %v2573, %v2572
      %v2594 = vpack.c.b16 %v2575, %v2574
      %v2595 = vpack.c.b16 %v2577, %v2576
      %v2596 = vpack.c.b16 %v2579, %v2578
      %v2597 = vpack.c.b16 %v2581, %v2580
      %2598 = vrot.lane.b32.xlu0 %v2582, 16
      %v2599 = vpop.permute.xlu0 %2598
      %2600 = vrot.lane.b32.xlu0 %v2583, 16
      %v2601 = vpop.permute.xlu0 %2600
      %2602 = vrot.lane.b32.xlu0 %v2584, 16
      %v2603 = vpop.permute.xlu0 %2602
      %2604 = vrot.lane.b32.xlu0 %v2585, 16
      %v2605 = vpop.permute.xlu0 %2604
      %2606 = vrot.lane.b32.xlu0 %v2586, 16
      %v2607 = vpop.permute.xlu0 %2606
      %2608 = vrot.lane.b32.xlu0 %v2587, 16
      %v2609 = vpop.permute.xlu0 %2608
      %2610 = vrot.lane.b32.xlu0 %v2588, 16
      %v2611 = vpop.permute.xlu0 %2610
      %2612 = vrot.lane.b32.xlu0 %v2589, 16
      %v2613 = vpop.permute.xlu0 %2612
      %2614 = vrot.lane.b32.xlu0 %v2590, 16
      %v2615 = vpop.permute.xlu0 %2614
      %2616 = vrot.lane.b32.xlu0 %v2591, 16
      %v2617 = vpop.permute.xlu0 %2616
      %2618 = vrot.lane.b32.xlu0 %v2592, 16
      %v2619 = vpop.permute.xlu0 %2618
      %2620 = vrot.lane.b32.xlu0 %v2593, 16
      %v2621 = vpop.permute.xlu0 %2620
      %2622 = vrot.lane.b32.xlu0 %v2594, 16
      %v2623 = vpop.permute.xlu0 %2622
      %2624 = vrot.lane.b32.xlu0 %v2595, 16
      %v2625 = vpop.permute.xlu0 %2624
      %2626 = vrot.lane.b32.xlu0 %v2596, 16
      %v2627 = vpop.permute.xlu0 %2626
      %2628 = vrot.lane.b32.xlu0 %v2597, 16
      %v2629 = vpop.permute.xlu0 %2628
      %vm2646 = vcmask 162944
      %2647 = vst.msk [vmem:[#allocation3] sm:$0xff] %vm2646, %v2599
      %2648 = vst.msk [vmem:[#allocation3 + $0x8] sm:$0xff] %vm2646, %v2601
      %2649 = vst.msk [vmem:[#allocation3 + $0x10] sm:$0xff] %vm2646, %v2603
      %2650 = vst.msk [vmem:[#allocation3 + $0x18] sm:$0xff] %vm2646, %v2605
      %2651 = vst.msk [vmem:[#allocation3 + $0x20] sm:$0xff] %vm2646, %v2607
      %2652 = vst.msk [vmem:[#allocation3 + $0x28] sm:$0xff] %vm2646, %v2609
      %2653 = vst.msk [vmem:[#allocation3 + $0x30] sm:$0xff] %vm2646, %v2611
      %2654 = vst.msk [vmem:[#allocation3 + $0x38] sm:$0xff] %vm2646, %v2613
      %2655 = vst.msk [vmem:[#allocation3 + $0x40] sm:$0xff] %vm2646, %v2615
      %2656 = vst.msk [vmem:[#allocation3 + $0x48] sm:$0xff] %vm2646, %v2617
      %2657 = vst.msk [vmem:[#allocation3 + $0x50] sm:$0xff] %vm2646, %v2619
      %2658 = vst.msk [vmem:[#allocation3 + $0x58] sm:$0xff] %vm2646, %v2621
      %2659 = vst.msk [vmem:[#allocation3 + $0x60] sm:$0xff] %vm2646, %v2623
      %2660 = vst.msk [vmem:[#allocation3 + $0x68] sm:$0xff] %vm2646, %v2625
      %2661 = vst.msk [vmem:[#allocation3 + $0x70] sm:$0xff] %vm2646, %v2627
      %2662 = vst.msk [vmem:[#allocation3 + $0x78] sm:$0xff] %vm2646, %v2629
      %v2663 = vld [vmem:[%s809] sm:$0xe]
      %v2664 = vld [vmem:[%s809 + $0x4] sm:$0xf]
      %v2665 = vld [vmem:[%s809 + $0x8] sm:$0x1]
      %v2666 = vld [vmem:[%s809 + $0xc] sm:$0xe]
      %v2667 = vld [vmem:[%s809 + $0x10] sm:$0xf]
      %v2668 = vld [vmem:[%s809 + $0x14] sm:$0x1]
      %v2669 = vld [vmem:[%s809 + $0x18] sm:$0xe]
      %v2670 = vld [vmem:[%s809 + $0x1c] sm:$0xf]
      %v2671 = vld [vmem:[%s809 + $0x20] sm:$0x1]
      %v2672 = vld [vmem:[%s809 + $0x24] sm:$0xe]
      %v2673 = vld [vmem:[%s809 + $0x28] sm:$0xf]
      %v2674 = vld [vmem:[%s809 + $0x2c] sm:$0x1]
      %v2675 = vld [vmem:[%s809 + $0x30] sm:$0xe]
      %v2676 = vld [vmem:[%s809 + $0x34] sm:$0xf]
      %v2677 = vld [vmem:[%s809 + $0x38] sm:$0x1]
      %v2678 = vld [vmem:[%s809 + $0x3c] sm:$0xe]
      %v2679 = vld [vmem:[%s809 + $0x40] sm:$0xf]
      %v2680 = vld [vmem:[%s809 + $0x44] sm:$0x1]
      %v2681 = vld [vmem:[%s809 + $0x48] sm:$0xe]
      %v2682 = vld [vmem:[%s809 + $0x4c] sm:$0xf]
      %v2683 = vld [vmem:[%s809 + $0x50] sm:$0x1]
      %v2684 = vld [vmem:[%s809 + $0x54] sm:$0xe]
      %v2685 = vld [vmem:[%s809 + $0x58] sm:$0xf]
      %v2686 = vld [vmem:[%s809 + $0x5c] sm:$0x1]
      %v2687 = vld [vmem:[%s809 + $0x60] sm:$0xe]
      %v2688 = vld [vmem:[%s809 + $0x64] sm:$0xf]
      %v2689 = vld [vmem:[%s809 + $0x68] sm:$0x1]
      %v2690 = vld [vmem:[%s809 + $0x6c] sm:$0xe]
      %v2691 = vld [vmem:[%s809 + $0x70] sm:$0xf]
      %v2692 = vld [vmem:[%s809 + $0x74] sm:$0x1]
      %v2693 = vld [vmem:[%s809 + $0x78] sm:$0xe]
      %v2694 = vld [vmem:[%s809 + $0x7c] sm:$0xf]
      %v2695 = vld [vmem:[%s809 + $0x80] sm:$0x1]
      %v2696 = vld [vmem:[%s809 + $0x84] sm:$0xe]
      %v2697 = vld [vmem:[%s809 + $0x88] sm:$0xf]
      %v2698 = vld [vmem:[%s809 + $0x8c] sm:$0x1]
      %v2699 = vld [vmem:[%s809 + $0x90] sm:$0xe]
      %v2700 = vld [vmem:[%s809 + $0x94] sm:$0xf]
      %v2701 = vld [vmem:[%s809 + $0x98] sm:$0x1]
      %v2702 = vld [vmem:[%s809 + $0x9c] sm:$0xe]
      %v2703 = vld [vmem:[%s809 + $0xa0] sm:$0xf]
      %v2704 = vld [vmem:[%s809 + $0xa4] sm:$0x1]
      %v2705 = vld [vmem:[%s809 + $0xa8] sm:$0xe]
      %v2706 = vld [vmem:[%s809 + $0xac] sm:$0xf]
      %v2707 = vld [vmem:[%s809 + $0xb0] sm:$0x1]
      %v2708 = vld [vmem:[%s809 + $0xb4] sm:$0xe]
      %v2709 = vld [vmem:[%s809 + $0xb8] sm:$0xf]
      %v2710 = vld [vmem:[%s809 + $0xbc] sm:$0x1]
      %v2759 = vrot.slane %v2663, 5
      %v2760 = vrot.slane %v2759, 4
      %v2761 = vrot.slane %v2664, 5
      %v2762 = vsel %vm1715, %v2760, %v2761
      %v2763 = vrot.slane %v2761, 4
      %v2764 = vrot.slane %v2665, 5
      %v2765 = vsel %vm1715, %v2763, %v2764
      %v2766 = vrot.slane %v2666, 5
      %v2767 = vrot.slane %v2766, 4
      %v2768 = vrot.slane %v2667, 5
      %v2769 = vsel %vm1715, %v2767, %v2768
      %v2770 = vrot.slane %v2768, 4
      %v2771 = vrot.slane %v2668, 5
      %v2772 = vsel %vm1715, %v2770, %v2771
      %v2773 = vrot.slane %v2669, 5
      %v2774 = vrot.slane %v2773, 4
      %v2775 = vrot.slane %v2670, 5
      %v2776 = vsel %vm1715, %v2774, %v2775
      %v2777 = vrot.slane %v2775, 4
      %v2778 = vrot.slane %v2671, 5
      %v2779 = vsel %vm1715, %v2777, %v2778
      %v2780 = vrot.slane %v2672, 5
      %v2781 = vrot.slane %v2780, 4
      %v2782 = vrot.slane %v2673, 5
      %v2783 = vsel %vm1715, %v2781, %v2782
      %v2784 = vrot.slane %v2782, 4
      %v2785 = vrot.slane %v2674, 5
      %v2786 = vsel %vm1715, %v2784, %v2785
      %v2787 = vrot.slane %v2675, 5
      %v2788 = vrot.slane %v2787, 4
      %v2789 = vrot.slane %v2676, 5
      %v2790 = vsel %vm1715, %v2788, %v2789
      %v2791 = vrot.slane %v2789, 4
      %v2792 = vrot.slane %v2677, 5
      %v2793 = vsel %vm1715, %v2791, %v2792
      %v2794 = vrot.slane %v2678, 5
      %v2795 = vrot.slane %v2794, 4
      %v2796 = vrot.slane %v2679, 5
      %v2797 = vsel %vm1715, %v2795, %v2796
      %v2798 = vrot.slane %v2796, 4
      %v2799 = vrot.slane %v2680, 5
      %v2800 = vsel %vm1715, %v2798, %v2799
      %v2801 = vrot.slane %v2681, 5
      %v2802 = vrot.slane %v2801, 4
      %v2803 = vrot.slane %v2682, 5
      %v2804 = vsel %vm1715, %v2802, %v2803
      %v2805 = vrot.slane %v2803, 4
      %v2806 = vrot.slane %v2683, 5
      %v2807 = vsel %vm1715, %v2805, %v2806
      %v2808 = vrot.slane %v2684, 5
      %v2809 = vrot.slane %v2808, 4
      %v2810 = vrot.slane %v2685, 5
      %v2811 = vsel %vm1715, %v2809, %v2810
      %v2812 = vrot.slane %v2810, 4
      %v2813 = vrot.slane %v2686, 5
      %v2814 = vsel %vm1715, %v2812, %v2813
      %v2815 = vrot.slane %v2687, 5
      %v2816 = vrot.slane %v2815, 4
      %v2817 = vrot.slane %v2688, 5
      %v2818 = vsel %vm1715, %v2816, %v2817
      %v2819 = vrot.slane %v2817, 4
      %v2820 = vrot.slane %v2689, 5
      %v2821 = vsel %vm1715, %v2819, %v2820
      %v2822 = vrot.slane %v2690, 5
      %v2823 = vrot.slane %v2822, 4
      %v2824 = vrot.slane %v2691, 5
      %v2825 = vsel %vm1715, %v2823, %v2824
      %v2826 = vrot.slane %v2824, 4
      %v2827 = vrot.slane %v2692, 5
      %v2828 = vsel %vm1715, %v2826, %v2827
      %v2829 = vrot.slane %v2693, 5
      %v2830 = vrot.slane %v2829, 4
      %v2831 = vrot.slane %v2694, 5
      %v2832 = vsel %vm1715, %v2830, %v2831
      %v2833 = vrot.slane %v2831, 4
      %v2834 = vrot.slane %v2695, 5
      %v2835 = vsel %vm1715, %v2833, %v2834
      %v2836 = vrot.slane %v2696, 5
      %v2837 = vrot.slane %v2836, 4
      %v2838 = vrot.slane %v2697, 5
      %v2839 = vsel %vm1715, %v2837, %v2838
      %v2840 = vrot.slane %v2838, 4
      %v2841 = vrot.slane %v2698, 5
      %v2842 = vsel %vm1715, %v2840, %v2841
      %v2843 = vrot.slane %v2699, 5
      %v2844 = vrot.slane %v2843, 4
      %v2845 = vrot.slane %v2700, 5
      %v2846 = vsel %vm1715, %v2844, %v2845
      %v2847 = vrot.slane %v2845, 4
      %v2848 = vrot.slane %v2701, 5
      %v2849 = vsel %vm1715, %v2847, %v2848
      %v2850 = vrot.slane %v2702, 5
      %v2851 = vrot.slane %v2850, 4
      %v2852 = vrot.slane %v2703, 5
      %v2853 = vsel %vm1715, %v2851, %v2852
      %v2854 = vrot.slane %v2852, 4
      %v2855 = vrot.slane %v2704, 5
      %v2856 = vsel %vm1715, %v2854, %v2855
      %v2857 = vrot.slane %v2705, 5
      %v2858 = vrot.slane %v2857, 4
      %v2859 = vrot.slane %v2706, 5
      %v2860 = vsel %vm1715, %v2858, %v2859
      %v2861 = vrot.slane %v2859, 4
      %v2862 = vrot.slane %v2707, 5
      %v2863 = vsel %vm1715, %v2861, %v2862
      %v2864 = vrot.slane %v2708, 5
      %v2865 = vrot.slane %v2864, 4
      %v2866 = vrot.slane %v2709, 5
      %v2867 = vsel %vm1715, %v2865, %v2866
      %v2868 = vrot.slane %v2866, 4
      %v2869 = vrot.slane %v2710, 5
      %v2870 = vsel %vm1715, %v2868, %v2869
      %v2871 = vunpack.c.l.b16 %v2762
      %v2872 = vunpack.c.l.b16 %v2765
      %v2873 = vunpack.c.l.b16 %v2769
      %v2874 = vunpack.c.l.b16 %v2772
      %v2875 = vunpack.c.l.b16 %v2776
      %v2876 = vunpack.c.l.b16 %v2779
      %v2877 = vunpack.c.l.b16 %v2783
      %v2878 = vunpack.c.l.b16 %v2786
      %v2879 = vunpack.c.l.b16 %v2790
      %v2880 = vunpack.c.l.b16 %v2793
      %v2881 = vunpack.c.l.b16 %v2797
      %v2882 = vunpack.c.l.b16 %v2800
      %v2883 = vunpack.c.l.b16 %v2804
      %v2884 = vunpack.c.l.b16 %v2807
      %v2885 = vunpack.c.l.b16 %v2811
      %v2886 = vunpack.c.l.b16 %v2814
      %v2887 = vunpack.c.l.b16 %v2818
      %v2888 = vunpack.c.l.b16 %v2821
      %v2889 = vunpack.c.l.b16 %v2825
      %v2890 = vunpack.c.l.b16 %v2828
      %v2891 = vunpack.c.l.b16 %v2832
      %v2892 = vunpack.c.l.b16 %v2835
      %v2893 = vunpack.c.l.b16 %v2839
      %v2894 = vunpack.c.l.b16 %v2842
      %v2895 = vunpack.c.l.b16 %v2846
      %v2896 = vunpack.c.l.b16 %v2849
      %v2897 = vunpack.c.l.b16 %v2853
      %v2898 = vunpack.c.l.b16 %v2856
      %v2899 = vunpack.c.l.b16 %v2860
      %v2900 = vunpack.c.l.b16 %v2863
      %v2901 = vunpack.c.l.b16 %v2867
      %v2902 = vunpack.c.l.b16 %v2870
      %v2903 = vpack.c.b16 %v2872, %v2871
      %v2904 = vpack.c.b16 %v2874, %v2873
      %v2905 = vpack.c.b16 %v2876, %v2875
      %v2906 = vpack.c.b16 %v2878, %v2877
      %v2907 = vpack.c.b16 %v2880, %v2879
      %v2908 = vpack.c.b16 %v2882, %v2881
      %v2909 = vpack.c.b16 %v2884, %v2883
      %v2910 = vpack.c.b16 %v2886, %v2885
      %v2911 = vpack.c.b16 %v2888, %v2887
      %v2912 = vpack.c.b16 %v2890, %v2889
      %v2913 = vpack.c.b16 %v2892, %v2891
      %v2914 = vpack.c.b16 %v2894, %v2893
      %v2915 = vpack.c.b16 %v2896, %v2895
      %v2916 = vpack.c.b16 %v2898, %v2897
      %v2917 = vpack.c.b16 %v2900, %v2899
      %v2918 = vpack.c.b16 %v2902, %v2901
      %2919 = vrot.lane.b32.xlu0 %v2903, 20
      %v2920 = vpop.permute.xlu0 %2919
      %2921 = vrot.lane.b32.xlu0 %v2904, 20
      %v2922 = vpop.permute.xlu0 %2921
      %2923 = vrot.lane.b32.xlu0 %v2905, 20
      %v2924 = vpop.permute.xlu0 %2923
      %2925 = vrot.lane.b32.xlu0 %v2906, 20
      %v2926 = vpop.permute.xlu0 %2925
      %2927 = vrot.lane.b32.xlu0 %v2907, 20
      %v2928 = vpop.permute.xlu0 %2927
      %2929 = vrot.lane.b32.xlu0 %v2908, 20
      %v2930 = vpop.permute.xlu0 %2929
      %2931 = vrot.lane.b32.xlu0 %v2909, 20
      %v2932 = vpop.permute.xlu0 %2931
      %2933 = vrot.lane.b32.xlu0 %v2910, 20
      %v2934 = vpop.permute.xlu0 %2933
      %2935 = vrot.lane.b32.xlu0 %v2911, 20
      %v2936 = vpop.permute.xlu0 %2935
      %2937 = vrot.lane.b32.xlu0 %v2912, 20
      %v2938 = vpop.permute.xlu0 %2937
      %2939 = vrot.lane.b32.xlu0 %v2913, 20
      %v2940 = vpop.permute.xlu0 %2939
      %2941 = vrot.lane.b32.xlu0 %v2914, 20
      %v2942 = vpop.permute.xlu0 %2941
      %2943 = vrot.lane.b32.xlu0 %v2915, 20
      %v2944 = vpop.permute.xlu0 %2943
      %2945 = vrot.lane.b32.xlu0 %v2916, 20
      %v2946 = vpop.permute.xlu0 %2945
      %2947 = vrot.lane.b32.xlu0 %v2917, 20
      %v2948 = vpop.permute.xlu0 %2947
      %2949 = vrot.lane.b32.xlu0 %v2918, 20
      %v2950 = vpop.permute.xlu0 %2949
      %vm2967 = vcmask 195744
      %2968 = vst.msk [vmem:[#allocation3] sm:$0xff] %vm2967, %v2920
      %2969 = vst.msk [vmem:[#allocation3 + $0x8] sm:$0xff] %vm2967, %v2922
      %2970 = vst.msk [vmem:[#allocation3 + $0x10] sm:$0xff] %vm2967, %v2924
      %2971 = vst.msk [vmem:[#allocation3 + $0x18] sm:$0xff] %vm2967, %v2926
      %2972 = vst.msk [vmem:[#allocation3 + $0x20] sm:$0xff] %vm2967, %v2928
      %2973 = vst.msk [vmem:[#allocation3 + $0x28] sm:$0xff] %vm2967, %v2930
      %2974 = vst.msk [vmem:[#allocation3 + $0x30] sm:$0xff] %vm2967, %v2932
      %2975 = vst.msk [vmem:[#allocation3 + $0x38] sm:$0xff] %vm2967, %v2934
      %2976 = vst.msk [vmem:[#allocation3 + $0x40] sm:$0xff] %vm2967, %v2936
      %2977 = vst.msk [vmem:[#allocation3 + $0x48] sm:$0xff] %vm2967, %v2938
      %2978 = vst.msk [vmem:[#allocation3 + $0x50] sm:$0xff] %vm2967, %v2940
      %2979 = vst.msk [vmem:[#allocation3 + $0x58] sm:$0xff] %vm2967, %v2942
      %2980 = vst.msk [vmem:[#allocation3 + $0x60] sm:$0xff] %vm2967, %v2944
      %2981 = vst.msk [vmem:[#allocation3 + $0x68] sm:$0xff] %vm2967, %v2946
      %2982 = vst.msk [vmem:[#allocation3 + $0x70] sm:$0xff] %vm2967, %v2948
      %2983 = vst.msk [vmem:[#allocation3 + $0x78] sm:$0xff] %vm2967, %v2950
      %s2984 = scalar_lea.vmem [#allocation2], 24
      %v2985 = vld [vmem:[%s2984] sm:$0xf]
      %v2986 = vld [vmem:[%s2984 + $0x4] sm:$0xf]
      %v2987 = vld [vmem:[%s2984 + $0xc] sm:$0xf]
      %v2988 = vld [vmem:[%s2984 + $0x10] sm:$0xf]
      %v2989 = vld [vmem:[%s2984 + $0x18] sm:$0xf]
      %v2990 = vld [vmem:[%s2984 + $0x1c] sm:$0xf]
      %v2991 = vld [vmem:[%s2984 + $0x24] sm:$0xf]
      %v2992 = vld [vmem:[%s2984 + $0x28] sm:$0xf]
      %v2993 = vld [vmem:[%s2984 + $0x30] sm:$0xf]
      %v2994 = vld [vmem:[%s2984 + $0x34] sm:$0xf]
      %v2995 = vld [vmem:[%s2984 + $0x3c] sm:$0xf]
      %v2996 = vld [vmem:[%s2984 + $0x40] sm:$0xf]
      %v2997 = vld [vmem:[%s2984 + $0x48] sm:$0xf]
      %v2998 = vld [vmem:[%s2984 + $0x4c] sm:$0xf]
      %v2999 = vld [vmem:[%s2984 + $0x54] sm:$0xf]
      %v3000 = vld [vmem:[%s2984 + $0x58] sm:$0xf]
      %v3001 = vld [vmem:[%s2984 + $0x60] sm:$0xf]
      %v3002 = vld [vmem:[%s2984 + $0x64] sm:$0xf]
      %v3003 = vld [vmem:[%s2984 + $0x6c] sm:$0xf]
      %v3004 = vld [vmem:[%s2984 + $0x70] sm:$0xf]
      %v3005 = vld [vmem:[%s2984 + $0x78] sm:$0xf]
      %v3006 = vld [vmem:[%s2984 + $0x7c] sm:$0xf]
      %v3007 = vld [vmem:[%s2984 + $0x84] sm:$0xf]
      %v3008 = vld [vmem:[%s2984 + $0x88] sm:$0xf]
      %v3009 = vld [vmem:[%s2984 + $0x90] sm:$0xf]
      %v3010 = vld [vmem:[%s2984 + $0x94] sm:$0xf]
      %v3011 = vld [vmem:[%s2984 + $0x9c] sm:$0xf]
      %v3012 = vld [vmem:[%s2984 + $0xa0] sm:$0xf]
      %v3013 = vld [vmem:[%s2984 + $0xa8] sm:$0xf]
      %v3014 = vld [vmem:[%s2984 + $0xac] sm:$0xf]
      %v3015 = vld [vmem:[%s2984 + $0xb4] sm:$0xf]
      %v3016 = vld [vmem:[%s2984 + $0xb8] sm:$0xf]
      %v3049 = vunpack.c.l.b16 %v2985
      %v3050 = vunpack.c.l.b16 %v2986
      %v3051 = vunpack.c.l.b16 %v2987
      %v3052 = vunpack.c.l.b16 %v2988
      %v3053 = vunpack.c.l.b16 %v2989
      %v3054 = vunpack.c.l.b16 %v2990
      %v3055 = vunpack.c.l.b16 %v2991
      %v3056 = vunpack.c.l.b16 %v2992
      %v3057 = vunpack.c.l.b16 %v2993
      %v3058 = vunpack.c.l.b16 %v2994
      %v3059 = vunpack.c.l.b16 %v2995
      %v3060 = vunpack.c.l.b16 %v2996
      %v3061 = vunpack.c.l.b16 %v2997
      %v3062 = vunpack.c.l.b16 %v2998
      %v3063 = vunpack.c.l.b16 %v2999
      %v3064 = vunpack.c.l.b16 %v3000
      %v3065 = vunpack.c.l.b16 %v3001
      %v3066 = vunpack.c.l.b16 %v3002
      %v3067 = vunpack.c.l.b16 %v3003
      %v3068 = vunpack.c.l.b16 %v3004
      %v3069 = vunpack.c.l.b16 %v3005
      %v3070 = vunpack.c.l.b16 %v3006
      %v3071 = vunpack.c.l.b16 %v3007
      %v3072 = vunpack.c.l.b16 %v3008
      %v3073 = vunpack.c.l.b16 %v3009
      %v3074 = vunpack.c.l.b16 %v3010
      %v3075 = vunpack.c.l.b16 %v3011
      %v3076 = vunpack.c.l.b16 %v3012
      %v3077 = vunpack.c.l.b16 %v3013
      %v3078 = vunpack.c.l.b16 %v3014
      %v3079 = vunpack.c.l.b16 %v3015
      %v3080 = vunpack.c.l.b16 %v3016
      %v3081 = vpack.c.b16 %v3050, %v3049
      %v3082 = vpack.c.b16 %v3052, %v3051
      %v3083 = vpack.c.b16 %v3054, %v3053
      %v3084 = vpack.c.b16 %v3056, %v3055
      %v3085 = vpack.c.b16 %v3058, %v3057
      %v3086 = vpack.c.b16 %v3060, %v3059
      %v3087 = vpack.c.b16 %v3062, %v3061
      %v3088 = vpack.c.b16 %v3064, %v3063
      %v3089 = vpack.c.b16 %v3066, %v3065
      %v3090 = vpack.c.b16 %v3068, %v3067
      %v3091 = vpack.c.b16 %v3070, %v3069
      %v3092 = vpack.c.b16 %v3072, %v3071
      %v3093 = vpack.c.b16 %v3074, %v3073
      %v3094 = vpack.c.b16 %v3076, %v3075
      %v3095 = vpack.c.b16 %v3078, %v3077
      %v3096 = vpack.c.b16 %v3080, %v3079
      %3097 = vrot.lane.b32.xlu0 %v3081, 24
      %v3098 = vpop.permute.xlu0 %3097
      %3099 = vrot.lane.b32.xlu0 %v3082, 24
      %v3100 = vpop.permute.xlu0 %3099
      %3101 = vrot.lane.b32.xlu0 %v3083, 24
      %v3102 = vpop.permute.xlu0 %3101
      %3103 = vrot.lane.b32.xlu0 %v3084, 24
      %v3104 = vpop.permute.xlu0 %3103
      %3105 = vrot.lane.b32.xlu0 %v3085, 24
      %v3106 = vpop.permute.xlu0 %3105
      %3107 = vrot.lane.b32.xlu0 %v3086, 24
      %v3108 = vpop.permute.xlu0 %3107
      %3109 = vrot.lane.b32.xlu0 %v3087, 24
      %v3110 = vpop.permute.xlu0 %3109
      %3111 = vrot.lane.b32.xlu0 %v3088, 24
      %v3112 = vpop.permute.xlu0 %3111
      %3113 = vrot.lane.b32.xlu0 %v3089, 24
      %v3114 = vpop.permute.xlu0 %3113
      %3115 = vrot.lane.b32.xlu0 %v3090, 24
      %v3116 = vpop.permute.xlu0 %3115
      %3117 = vrot.lane.b32.xlu0 %v3091, 24
      %v3118 = vpop.permute.xlu0 %3117
      %3119 = vrot.lane.b32.xlu0 %v3092, 24
      %v3120 = vpop.permute.xlu0 %3119
      %3121 = vrot.lane.b32.xlu0 %v3093, 24
      %v3122 = vpop.permute.xlu0 %3121
      %3123 = vrot.lane.b32.xlu0 %v3094, 24
      %v3124 = vpop.permute.xlu0 %3123
      %3125 = vrot.lane.b32.xlu0 %v3095, 24
      %v3126 = vpop.permute.xlu0 %3125
      %3127 = vrot.lane.b32.xlu0 %v3096, 24
      %v3128 = vpop.permute.xlu0 %3127
      %vm3145 = vcmask 228544
      %3146 = vst.msk [vmem:[#allocation3] sm:$0xff] %vm3145, %v3098
      %3147 = vst.msk [vmem:[#allocation3 + $0x8] sm:$0xff] %vm3145, %v3100
      %3148 = vst.msk [vmem:[#allocation3 + $0x10] sm:$0xff] %vm3145, %v3102
      %3149 = vst.msk [vmem:[#allocation3 + $0x18] sm:$0xff] %vm3145, %v3104
      %3150 = vst.msk [vmem:[#allocation3 + $0x20] sm:$0xff] %vm3145, %v3106
      %3151 = vst.msk [vmem:[#allocation3 + $0x28] sm:$0xff] %vm3145, %v3108
      %3152 = vst.msk [vmem:[#allocation3 + $0x30] sm:$0xff] %vm3145, %v3110
      %3153 = vst.msk [vmem:[#allocation3 + $0x38] sm:$0xff] %vm3145, %v3112
      %3154 = vst.msk [vmem:[#allocation3 + $0x40] sm:$0xff] %vm3145, %v3114
      %3155 = vst.msk [vmem:[#allocation3 + $0x48] sm:$0xff] %vm3145, %v3116
      %3156 = vst.msk [vmem:[#allocation3 + $0x50] sm:$0xff] %vm3145, %v3118
      %3157 = vst.msk [vmem:[#allocation3 + $0x58] sm:$0xff] %vm3145, %v3120
      %3158 = vst.msk [vmem:[#allocation3 + $0x60] sm:$0xff] %vm3145, %v3122
      %3159 = vst.msk [vmem:[#allocation3 + $0x68] sm:$0xff] %vm3145, %v3124
      %3160 = vst.msk [vmem:[#allocation3 + $0x70] sm:$0xff] %vm3145, %v3126
      %3161 = vst.msk [vmem:[#allocation3 + $0x78] sm:$0xff] %vm3145, %v3128
      %v3162 = vld [vmem:[%s2984] sm:$0xf]
      %v3163 = vld [vmem:[%s2984 + $0x4] sm:$0xf]
      %v3164 = vld [vmem:[%s2984 + $0x8] sm:$0x1]
      %v3165 = vld [vmem:[%s2984 + $0xc] sm:$0xf]
      %v3166 = vld [vmem:[%s2984 + $0x10] sm:$0xf]
      %v3167 = vld [vmem:[%s2984 + $0x14] sm:$0x1]
      %v3168 = vld [vmem:[%s2984 + $0x18] sm:$0xf]
      %v3169 = vld [vmem:[%s2984 + $0x1c] sm:$0xf]
      %v3170 = vld [vmem:[%s2984 + $0x20] sm:$0x1]
      %v3171 = vld [vmem:[%s2984 + $0x24] sm:$0xf]
      %v3172 = vld [vmem:[%s2984 + $0x28] sm:$0xf]
      %v3173 = vld [vmem:[%s2984 + $0x2c] sm:$0x1]
      %v3174 = vld [vmem:[%s2984 + $0x30] sm:$0xf]
      %v3175 = vld [vmem:[%s2984 + $0x34] sm:$0xf]
      %v3176 = vld [vmem:[%s2984 + $0x38] sm:$0x1]
      %v3177 = vld [vmem:[%s2984 + $0x3c] sm:$0xf]
      %v3178 = vld [vmem:[%s2984 + $0x40] sm:$0xf]
      %v3179 = vld [vmem:[%s2984 + $0x44] sm:$0x1]
      %v3180 = vld [vmem:[%s2984 + $0x48] sm:$0xf]
      %v3181 = vld [vmem:[%s2984 + $0x4c] sm:$0xf]
      %v3182 = vld [vmem:[%s2984 + $0x50] sm:$0x1]
      %v3183 = vld [vmem:[%s2984 + $0x54] sm:$0xf]
      %v3184 = vld [vmem:[%s2984 + $0x58] sm:$0xf]
      %v3185 = vld [vmem:[%s2984 + $0x5c] sm:$0x1]
      %v3186 = vld [vmem:[%s2984 + $0x60] sm:$0xf]
      %v3187 = vld [vmem:[%s2984 + $0x64] sm:$0xf]
      %v3188 = vld [vmem:[%s2984 + $0x68] sm:$0x1]
      %v3189 = vld [vmem:[%s2984 + $0x6c] sm:$0xf]
      %v3190 = vld [vmem:[%s2984 + $0x70] sm:$0xf]
      %v3191 = vld [vmem:[%s2984 + $0x74] sm:$0x1]
      %v3192 = vld [vmem:[%s2984 + $0x78] sm:$0xf]
      %v3193 = vld [vmem:[%s2984 + $0x7c] sm:$0xf]
      %v3194 = vld [vmem:[%s2984 + $0x80] sm:$0x1]
      %v3195 = vld [vmem:[%s2984 + $0x84] sm:$0xf]
      %v3196 = vld [vmem:[%s2984 + $0x88] sm:$0xf]
      %v3197 = vld [vmem:[%s2984 + $0x8c] sm:$0x1]
      %v3198 = vld [vmem:[%s2984 + $0x90] sm:$0xf]
      %v3199 = vld [vmem:[%s2984 + $0x94] sm:$0xf]
      %v3200 = vld [vmem:[%s2984 + $0x98] sm:$0x1]
      %v3201 = vld [vmem:[%s2984 + $0x9c] sm:$0xf]
      %v3202 = vld [vmem:[%s2984 + $0xa0] sm:$0xf]
      %v3203 = vld [vmem:[%s2984 + $0xa4] sm:$0x1]
      %v3204 = vld [vmem:[%s2984 + $0xa8] sm:$0xf]
      %v3205 = vld [vmem:[%s2984 + $0xac] sm:$0xf]
      %v3206 = vld [vmem:[%s2984 + $0xb0] sm:$0x1]
      %v3207 = vld [vmem:[%s2984 + $0xb4] sm:$0xf]
      %v3208 = vld [vmem:[%s2984 + $0xb8] sm:$0xf]
      %v3209 = vld [vmem:[%s2984 + $0xbc] sm:$0x1]
      %v3211 = vshrl.u32 %v3162, 16
      %v3213 = vrot.slane %v3211, 4
      %v3214 = vshll.u32 %v3162, 16
      %v3216 = vrot.slane %v3214, 5
      %v3217 = vor.u32 %v3213, %v3216
      %v3218 = vrot.slane %v3217, 4
      %v3220 = vshll.u32 %v3163, 16
      %v3222 = vrot.slane %v3220, 5
      %v3223 = vsel %vm1119, %v3218, %v3222
      %v3224 = vshrl.u32 %v3163, 16
      %v3226 = vrot.slane %v3224, 4
      %v3227 = vor.u32 %v3226, %v3222
      %v3228 = vrot.slane %v3227, 4
      %v3230 = vshll.u32 %v3164, 16
      %v3232 = vrot.slane %v3230, 5
      %v3233 = vsel %vm1119, %v3228, %v3232
      %v3235 = vshrl.u32 %v3165, 16
      %v3237 = vrot.slane %v3235, 4
      %v3238 = vshll.u32 %v3165, 16
      %v3240 = vrot.slane %v3238, 5
      %v3241 = vor.u32 %v3237, %v3240
      %v3242 = vrot.slane %v3241, 4
      %v3244 = vshll.u32 %v3166, 16
      %v3246 = vrot.slane %v3244, 5
      %v3247 = vsel %vm1119, %v3242, %v3246
      %v3248 = vshrl.u32 %v3166, 16
      %v3250 = vrot.slane %v3248, 4
      %v3251 = vor.u32 %v3250, %v3246
      %v3252 = vrot.slane %v3251, 4
      %v3254 = vshll.u32 %v3167, 16
      %v3256 = vrot.slane %v3254, 5
      %v3257 = vsel %vm1119, %v3252, %v3256
      %v3259 = vshrl.u32 %v3168, 16
      %v3261 = vrot.slane %v3259, 4
      %v3262 = vshll.u32 %v3168, 16
      %v3264 = vrot.slane %v3262, 5
      %v3265 = vor.u32 %v3261, %v3264
      %v3266 = vrot.slane %v3265, 4
      %v3268 = vshll.u32 %v3169, 16
      %v3270 = vrot.slane %v3268, 5
      %v3271 = vsel %vm1119, %v3266, %v3270
      %v3272 = vshrl.u32 %v3169, 16
      %v3274 = vrot.slane %v3272, 4
      %v3275 = vor.u32 %v3274, %v3270
      %v3276 = vrot.slane %v3275, 4
      %v3278 = vshll.u32 %v3170, 16
      %v3280 = vrot.slane %v3278, 5
      %v3281 = vsel %vm1119, %v3276, %v3280
      %v3283 = vshrl.u32 %v3171, 16
      %v3285 = vrot.slane %v3283, 4
      %v3286 = vshll.u32 %v3171, 16
      %v3288 = vrot.slane %v3286, 5
      %v3289 = vor.u32 %v3285, %v3288
      %v3290 = vrot.slane %v3289, 4
      %v3292 = vshll.u32 %v3172, 16
      %v3294 = vrot.slane %v3292, 5
      %v3295 = vsel %vm1119, %v3290, %v3294
      %v3296 = vshrl.u32 %v3172, 16
      %v3298 = vrot.slane %v3296, 4
      %v3299 = vor.u32 %v3298, %v3294
      %v3300 = vrot.slane %v3299, 4
      %v3302 = vshll.u32 %v3173, 16
      %v3304 = vrot.slane %v3302, 5
      %v3305 = vsel %vm1119, %v3300, %v3304
      %v3307 = vshrl.u32 %v3174, 16
      %v3309 = vrot.slane %v3307, 4
      %v3310 = vshll.u32 %v3174, 16
      %v3312 = vrot.slane %v3310, 5
      %v3313 = vor.u32 %v3309, %v3312
      %v3314 = vrot.slane %v3313, 4
      %v3316 = vshll.u32 %v3175, 16
      %v3318 = vrot.slane %v3316, 5
      %v3319 = vsel %vm1119, %v3314, %v3318
      %v3320 = vshrl.u32 %v3175, 16
      %v3322 = vrot.slane %v3320, 4
      %v3323 = vor.u32 %v3322, %v3318
      %v3324 = vrot.slane %v3323, 4
      %v3326 = vshll.u32 %v3176, 16
      %v3328 = vrot.slane %v3326, 5
      %v3329 = vsel %vm1119, %v3324, %v3328
      %v3331 = vshrl.u32 %v3177, 16
      %v3333 = vrot.slane %v3331, 4
      %v3334 = vshll.u32 %v3177, 16
      %v3336 = vrot.slane %v3334, 5
      %v3337 = vor.u32 %v3333, %v3336
      %v3338 = vrot.slane %v3337, 4
      %v3340 = vshll.u32 %v3178, 16
      %v3342 = vrot.slane %v3340, 5
      %v3343 = vsel %vm1119, %v3338, %v3342
      %v3344 = vshrl.u32 %v3178, 16
      %v3346 = vrot.slane %v3344, 4
      %v3347 = vor.u32 %v3346, %v3342
      %v3348 = vrot.slane %v3347, 4
      %v3350 = vshll.u32 %v3179, 16
      %v3352 = vrot.slane %v3350, 5
      %v3353 = vsel %vm1119, %v3348, %v3352
      %v3355 = vshrl.u32 %v3180, 16
      %v3357 = vrot.slane %v3355, 4
      %v3358 = vshll.u32 %v3180, 16
      %v3360 = vrot.slane %v3358, 5
      %v3361 = vor.u32 %v3357, %v3360
      %v3362 = vrot.slane %v3361, 4
      %v3364 = vshll.u32 %v3181, 16
      %v3366 = vrot.slane %v3364, 5
      %v3367 = vsel %vm1119, %v3362, %v3366
      %v3368 = vshrl.u32 %v3181, 16
      %v3370 = vrot.slane %v3368, 4
      %v3371 = vor.u32 %v3370, %v3366
      %v3372 = vrot.slane %v3371, 4
      %v3374 = vshll.u32 %v3182, 16
      %v3376 = vrot.slane %v3374, 5
      %v3377 = vsel %vm1119, %v3372, %v3376
      %v3379 = vshrl.u32 %v3183, 16
      %v3381 = vrot.slane %v3379, 4
      %v3382 = vshll.u32 %v3183, 16
      %v3384 = vrot.slane %v3382, 5
      %v3385 = vor.u32 %v3381, %v3384
      %v3386 = vrot.slane %v3385, 4
      %v3388 = vshll.u32 %v3184, 16
      %v3390 = vrot.slane %v3388, 5
      %v3391 = vsel %vm1119, %v3386, %v3390
      %v3392 = vshrl.u32 %v3184, 16
      %v3394 = vrot.slane %v3392, 4
      %v3395 = vor.u32 %v3394, %v3390
      %v3396 = vrot.slane %v3395, 4
      %v3398 = vshll.u32 %v3185, 16
      %v3400 = vrot.slane %v3398, 5
      %v3401 = vsel %vm1119, %v3396, %v3400
      %v3403 = vshrl.u32 %v3186, 16
      %v3405 = vrot.slane %v3403, 4
      %v3406 = vshll.u32 %v3186, 16
      %v3408 = vrot.slane %v3406, 5
      %v3409 = vor.u32 %v3405, %v3408
      %v3410 = vrot.slane %v3409, 4
      %v3412 = vshll.u32 %v3187, 16
      %v3414 = vrot.slane %v3412, 5
      %v3415 = vsel %vm1119, %v3410, %v3414
      %v3416 = vshrl.u32 %v3187, 16
      %v3418 = vrot.slane %v3416, 4
      %v3419 = vor.u32 %v3418, %v3414
      %v3420 = vrot.slane %v3419, 4
      %v3422 = vshll.u32 %v3188, 16
      %v3424 = vrot.slane %v3422, 5
      %v3425 = vsel %vm1119, %v3420, %v3424
      %v3427 = vshrl.u32 %v3189, 16
      %v3429 = vrot.slane %v3427, 4
      %v3430 = vshll.u32 %v3189, 16
      %v3432 = vrot.slane %v3430, 5
      %v3433 = vor.u32 %v3429, %v3432
      %v3434 = vrot.slane %v3433, 4
      %v3436 = vshll.u32 %v3190, 16
      %v3438 = vrot.slane %v3436, 5
      %v3439 = vsel %vm1119, %v3434, %v3438
      %v3440 = vshrl.u32 %v3190, 16
      %v3442 = vrot.slane %v3440, 4
      %v3443 = vor.u32 %v3442, %v3438
      %v3444 = vrot.slane %v3443, 4
      %v3446 = vshll.u32 %v3191, 16
      %v3448 = vrot.slane %v3446, 5
      %v3449 = vsel %vm1119, %v3444, %v3448
      %v3451 = vshrl.u32 %v3192, 16
      %v3453 = vrot.slane %v3451, 4
      %v3454 = vshll.u32 %v3192, 16
      %v3456 = vrot.slane %v3454, 5
      %v3457 = vor.u32 %v3453, %v3456
      %v3458 = vrot.slane %v3457, 4
      %v3460 = vshll.u32 %v3193, 16
      %v3462 = vrot.slane %v3460, 5
      %v3463 = vsel %vm1119, %v3458, %v3462
      %v3464 = vshrl.u32 %v3193, 16
      %v3466 = vrot.slane %v3464, 4
      %v3467 = vor.u32 %v3466, %v3462
      %v3468 = vrot.slane %v3467, 4
      %v3470 = vshll.u32 %v3194, 16
      %v3472 = vrot.slane %v3470, 5
      %v3473 = vsel %vm1119, %v3468, %v3472
      %v3475 = vshrl.u32 %v3195, 16
      %v3477 = vrot.slane %v3475, 4
      %v3478 = vshll.u32 %v3195, 16
      %v3480 = vrot.slane %v3478, 5
      %v3481 = vor.u32 %v3477, %v3480
      %v3482 = vrot.slane %v3481, 4
      %v3484 = vshll.u32 %v3196, 16
      %v3486 = vrot.slane %v3484, 5
      %v3487 = vsel %vm1119, %v3482, %v3486
      %v3488 = vshrl.u32 %v3196, 16
      %v3490 = vrot.slane %v3488, 4
      %v3491 = vor.u32 %v3490, %v3486
      %v3492 = vrot.slane %v3491, 4
      %v3494 = vshll.u32 %v3197, 16
      %v3496 = vrot.slane %v3494, 5
      %v3497 = vsel %vm1119, %v3492, %v3496
      %v3499 = vshrl.u32 %v3198, 16
      %v3501 = vrot.slane %v3499, 4
      %v3502 = vshll.u32 %v3198, 16
      %v3504 = vrot.slane %v3502, 5
      %v3505 = vor.u32 %v3501, %v3504
      %v3506 = vrot.slane %v3505, 4
      %v3508 = vshll.u32 %v3199, 16
      %v3510 = vrot.slane %v3508, 5
      %v3511 = vsel %vm1119, %v3506, %v3510
      %v3512 = vshrl.u32 %v3199, 16
      %v3514 = vrot.slane %v3512, 4
      %v3515 = vor.u32 %v3514, %v3510
      %v3516 = vrot.slane %v3515, 4
      %v3518 = vshll.u32 %v3200, 16
      %v3520 = vrot.slane %v3518, 5
      %v3521 = vsel %vm1119, %v3516, %v3520
      %v3523 = vshrl.u32 %v3201, 16
      %v3525 = vrot.slane %v3523, 4
      %v3526 = vshll.u32 %v3201, 16
      %v3528 = vrot.slane %v3526, 5
      %v3529 = vor.u32 %v3525, %v3528
      %v3530 = vrot.slane %v3529, 4
      %v3532 = vshll.u32 %v3202, 16
      %v3534 = vrot.slane %v3532, 5
      %v3535 = vsel %vm1119, %v3530, %v3534
      %v3536 = vshrl.u32 %v3202, 16
      %v3538 = vrot.slane %v3536, 4
      %v3539 = vor.u32 %v3538, %v3534
      %v3540 = vrot.slane %v3539, 4
      %v3542 = vshll.u32 %v3203, 16
      %v3544 = vrot.slane %v3542, 5
      %v3545 = vsel %vm1119, %v3540, %v3544
      %v3547 = vshrl.u32 %v3204, 16
      %v3549 = vrot.slane %v3547, 4
      %v3550 = vshll.u32 %v3204, 16
      %v3552 = vrot.slane %v3550, 5
      %v3553 = vor.u32 %v3549, %v3552
      %v3554 = vrot.slane %v3553, 4
      %v3556 = vshll.u32 %v3205, 16
      %v3558 = vrot.slane %v3556, 5
      %v3559 = vsel %vm1119, %v3554, %v3558
      %v3560 = vshrl.u32 %v3205, 16
      %v3562 = vrot.slane %v3560, 4
      %v3563 = vor.u32 %v3562, %v3558
      %v3564 = vrot.slane %v3563, 4
      %v3566 = vshll.u32 %v3206, 16
      %v3568 = vrot.slane %v3566, 5
      %v3569 = vsel %vm1119, %v3564, %v3568
      %v3571 = vshrl.u32 %v3207, 16
      %v3573 = vrot.slane %v3571, 4
      %v3574 = vshll.u32 %v3207, 16
      %v3576 = vrot.slane %v3574, 5
      %v3577 = vor.u32 %v3573, %v3576
      %v3578 = vrot.slane %v3577, 4
      %v3580 = vshll.u32 %v3208, 16
      %v3582 = vrot.slane %v3580, 5
      %v3583 = vsel %vm1119, %v3578, %v3582
      %v3584 = vshrl.u32 %v3208, 16
      %v3586 = vrot.slane %v3584, 4
      %v3587 = vor.u32 %v3586, %v3582
      %v3588 = vrot.slane %v3587, 4
      %v3590 = vshll.u32 %v3209, 16
      %v3592 = vrot.slane %v3590, 5
      %v3593 = vsel %vm1119, %v3588, %v3592
      %v3594 = vunpack.c.l.b16 %v3223
      %v3595 = vunpack.c.l.b16 %v3233
      %v3596 = vunpack.c.l.b16 %v3247
      %v3597 = vunpack.c.l.b16 %v3257
      %v3598 = vunpack.c.l.b16 %v3271
      %v3599 = vunpack.c.l.b16 %v3281
      %v3600 = vunpack.c.l.b16 %v3295
      %v3601 = vunpack.c.l.b16 %v3305
      %v3602 = vunpack.c.l.b16 %v3319
      %v3603 = vunpack.c.l.b16 %v3329
      %v3604 = vunpack.c.l.b16 %v3343
      %v3605 = vunpack.c.l.b16 %v3353
      %v3606 = vunpack.c.l.b16 %v3367
      %v3607 = vunpack.c.l.b16 %v3377
      %v3608 = vunpack.c.l.b16 %v3391
      %v3609 = vunpack.c.l.b16 %v3401
      %v3610 = vunpack.c.l.b16 %v3415
      %v3611 = vunpack.c.l.b16 %v3425
      %v3612 = vunpack.c.l.b16 %v3439
      %v3613 = vunpack.c.l.b16 %v3449
      %v3614 = vunpack.c.l.b16 %v3463
      %v3615 = vunpack.c.l.b16 %v3473
      %v3616 = vunpack.c.l.b16 %v3487
      %v3617 = vunpack.c.l.b16 %v3497
      %v3618 = vunpack.c.l.b16 %v3511
      %v3619 = vunpack.c.l.b16 %v3521
      %v3620 = vunpack.c.l.b16 %v3535
      %v3621 = vunpack.c.l.b16 %v3545
      %v3622 = vunpack.c.l.b16 %v3559
      %v3623 = vunpack.c.l.b16 %v3569
      %v3624 = vunpack.c.l.b16 %v3583
      %v3625 = vunpack.c.l.b16 %v3593
      %v3626 = vpack.c.b16 %v3595, %v3594
      %v3627 = vpack.c.b16 %v3597, %v3596
      %v3628 = vpack.c.b16 %v3599, %v3598
      %v3629 = vpack.c.b16 %v3601, %v3600
      %v3630 = vpack.c.b16 %v3603, %v3602
      %v3631 = vpack.c.b16 %v3605, %v3604
      %v3632 = vpack.c.b16 %v3607, %v3606
      %v3633 = vpack.c.b16 %v3609, %v3608
      %v3634 = vpack.c.b16 %v3611, %v3610
      %v3635 = vpack.c.b16 %v3613, %v3612
      %v3636 = vpack.c.b16 %v3615, %v3614
      %v3637 = vpack.c.b16 %v3617, %v3616
      %v3638 = vpack.c.b16 %v3619, %v3618
      %v3639 = vpack.c.b16 %v3621, %v3620
      %v3640 = vpack.c.b16 %v3623, %v3622
      %v3641 = vpack.c.b16 %v3625, %v3624
      %3642 = vrot.lane.b32.xlu0 %v3626, 28
      %v3643 = vpop.permute.xlu0 %3642
      %3644 = vrot.lane.b32.xlu0 %v3627, 28
      %v3645 = vpop.permute.xlu0 %3644
      %3646 = vrot.lane.b32.xlu0 %v3628, 28
      %v3647 = vpop.permute.xlu0 %3646
      %3648 = vrot.lane.b32.xlu0 %v3629, 28
      %v3649 = vpop.permute.xlu0 %3648
      %3650 = vrot.lane.b32.xlu0 %v3630, 28
      %v3651 = vpop.permute.xlu0 %3650
      %3652 = vrot.lane.b32.xlu0 %v3631, 28
      %v3653 = vpop.permute.xlu0 %3652
      %3654 = vrot.lane.b32.xlu0 %v3632, 28
      %v3655 = vpop.permute.xlu0 %3654
      %3656 = vrot.lane.b32.xlu0 %v3633, 28
      %v3657 = vpop.permute.xlu0 %3656
      %3658 = vrot.lane.b32.xlu0 %v3634, 28
      %v3659 = vpop.permute.xlu0 %3658
      %3660 = vrot.lane.b32.xlu0 %v3635, 28
      %v3661 = vpop.permute.xlu0 %3660
      %3662 = vrot.lane.b32.xlu0 %v3636, 28
      %v3663 = vpop.permute.xlu0 %3662
      %3664 = vrot.lane.b32.xlu0 %v3637, 28
      %v3665 = vpop.permute.xlu0 %3664
      %3666 = vrot.lane.b32.xlu0 %v3638, 28
      %v3667 = vpop.permute.xlu0 %3666
      %3668 = vrot.lane.b32.xlu0 %v3639, 28
      %v3669 = vpop.permute.xlu0 %3668
      %3670 = vrot.lane.b32.xlu0 %v3640, 28
      %v3671 = vpop.permute.xlu0 %3670
      %3672 = vrot.lane.b32.xlu0 %v3641, 28
      %v3673 = vpop.permute.xlu0 %3672
      %vm3690 = vcmask 261344
      %3691 = vst.msk [vmem:[#allocation3] sm:$0xff] %vm3690, %v3643
      %3692 = vst.msk [vmem:[#allocation3 + $0x8] sm:$0xff] %vm3690, %v3645
      %3693 = vst.msk [vmem:[#allocation3 + $0x10] sm:$0xff] %vm3690, %v3647
      %3694 = vst.msk [vmem:[#allocation3 + $0x18] sm:$0xff] %vm3690, %v3649
      %3695 = vst.msk [vmem:[#allocation3 + $0x20] sm:$0xff] %vm3690, %v3651
      %3696 = vst.msk [vmem:[#allocation3 + $0x28] sm:$0xff] %vm3690, %v3653
      %3697 = vst.msk [vmem:[#allocation3 + $0x30] sm:$0xff] %vm3690, %v3655
      %3698 = vst.msk [vmem:[#allocation3 + $0x38] sm:$0xff] %vm3690, %v3657
      %3699 = vst.msk [vmem:[#allocation3 + $0x40] sm:$0xff] %vm3690, %v3659
      %3700 = vst.msk [vmem:[#allocation3 + $0x48] sm:$0xff] %vm3690, %v3661
      %3701 = vst.msk [vmem:[#allocation3 + $0x50] sm:$0xff] %vm3690, %v3663
      %3702 = vst.msk [vmem:[#allocation3 + $0x58] sm:$0xff] %vm3690, %v3665
      %3703 = vst.msk [vmem:[#allocation3 + $0x60] sm:$0xff] %vm3690, %v3667
      %3704 = vst.msk [vmem:[#allocation3 + $0x68] sm:$0xff] %vm3690, %v3669
      %3705 = vst.msk [vmem:[#allocation3 + $0x70] sm:$0xff] %vm3690, %v3671
      %3706 = vst.msk [vmem:[#allocation3 + $0x78] sm:$0xff] %vm3690, %v3673
      %v3707 = vld [vmem:[%s2984] sm:$0xe]
      %v3708 = vld [vmem:[%s2984 + $0x4] sm:$0xf]
      %v3709 = vld [vmem:[%s2984 + $0x8] sm:$0x1]
      %v3710 = vld [vmem:[%s2984 + $0xc] sm:$0xe]
      %v3711 = vld [vmem:[%s2984 + $0x10] sm:$0xf]
      %v3712 = vld [vmem:[%s2984 + $0x14] sm:$0x1]
      %v3713 = vld [vmem:[%s2984 + $0x18] sm:$0xe]
      %v3714 = vld [vmem:[%s2984 + $0x1c] sm:$0xf]
      %v3715 = vld [vmem:[%s2984 + $0x20] sm:$0x1]
      %v3716 = vld [vmem:[%s2984 + $0x24] sm:$0xe]
      %v3717 = vld [vmem:[%s2984 + $0x28] sm:$0xf]
      %v3718 = vld [vmem:[%s2984 + $0x2c] sm:$0x1]
      %v3719 = vld [vmem:[%s2984 + $0x30] sm:$0xe]
      %v3720 = vld [vmem:[%s2984 + $0x34] sm:$0xf]
      %v3721 = vld [vmem:[%s2984 + $0x38] sm:$0x1]
      %v3722 = vld [vmem:[%s2984 + $0x3c] sm:$0xe]
      %v3723 = vld [vmem:[%s2984 + $0x40] sm:$0xf]
      %v3724 = vld [vmem:[%s2984 + $0x44] sm:$0x1]
      %v3725 = vld [vmem:[%s2984 + $0x48] sm:$0xe]
      %v3726 = vld [vmem:[%s2984 + $0x4c] sm:$0xf]
      %v3727 = vld [vmem:[%s2984 + $0x50] sm:$0x1]
      %v3728 = vld [vmem:[%s2984 + $0x54] sm:$0xe]
      %v3729 = vld [vmem:[%s2984 + $0x58] sm:$0xf]
      %v3730 = vld [vmem:[%s2984 + $0x5c] sm:$0x1]
      %v3731 = vld [vmem:[%s2984 + $0x60] sm:$0xe]
      %v3732 = vld [vmem:[%s2984 + $0x64] sm:$0xf]
      %v3733 = vld [vmem:[%s2984 + $0x68] sm:$0x1]
      %v3734 = vld [vmem:[%s2984 + $0x6c] sm:$0xe]
      %v3735 = vld [vmem:[%s2984 + $0x70] sm:$0xf]
      %v3736 = vld [vmem:[%s2984 + $0x74] sm:$0x1]
      %v3737 = vld [vmem:[%s2984 + $0x78] sm:$0xe]
      %v3738 = vld [vmem:[%s2984 + $0x7c] sm:$0xf]
      %v3739 = vld [vmem:[%s2984 + $0x80] sm:$0x1]
      %v3740 = vld [vmem:[%s2984 + $0x84] sm:$0xe]
      %v3741 = vld [vmem:[%s2984 + $0x88] sm:$0xf]
      %v3742 = vld [vmem:[%s2984 + $0x8c] sm:$0x1]
      %v3743 = vld [vmem:[%s2984 + $0x90] sm:$0xe]
      %v3744 = vld [vmem:[%s2984 + $0x94] sm:$0xf]
      %v3745 = vld [vmem:[%s2984 + $0x98] sm:$0x1]
      %v3746 = vld [vmem:[%s2984 + $0x9c] sm:$0xe]
      %v3747 = vld [vmem:[%s2984 + $0xa0] sm:$0xf]
      %v3748 = vld [vmem:[%s2984 + $0xa4] sm:$0x1]
      %v3749 = vld [vmem:[%s2984 + $0xa8] sm:$0xe]
      %v3750 = vld [vmem:[%s2984 + $0xac] sm:$0xf]
      %v3751 = vld [vmem:[%s2984 + $0xb0] sm:$0x1]
      %v3752 = vld [vmem:[%s2984 + $0xb4] sm:$0xe]
      %v3753 = vld [vmem:[%s2984 + $0xb8] sm:$0xf]
      %v3754 = vld [vmem:[%s2984 + $0xbc] sm:$0x1]
      %v3803 = vrot.slane %v3707, 5
      %v3804 = vrot.slane %v3803, 4
      %v3805 = vrot.slane %v3708, 5
      %v3806 = vsel %vm1715, %v3804, %v3805
      %v3807 = vrot.slane %v3805, 4
      %v3808 = vrot.slane %v3709, 5
      %v3809 = vsel %vm1715, %v3807, %v3808
      %v3810 = vrot.slane %v3710, 5
      %v3811 = vrot.slane %v3810, 4
      %v3812 = vrot.slane %v3711, 5
      %v3813 = vsel %vm1715, %v3811, %v3812
      %v3814 = vrot.slane %v3812, 4
      %v3815 = vrot.slane %v3712, 5
      %v3816 = vsel %vm1715, %v3814, %v3815
      %v3817 = vrot.slane %v3713, 5
      %v3818 = vrot.slane %v3817, 4
      %v3819 = vrot.slane %v3714, 5
      %v3820 = vsel %vm1715, %v3818, %v3819
      %v3821 = vrot.slane %v3819, 4
      %v3822 = vrot.slane %v3715, 5
      %v3823 = vsel %vm1715, %v3821, %v3822
      %v3824 = vrot.slane %v3716, 5
      %v3825 = vrot.slane %v3824, 4
      %v3826 = vrot.slane %v3717, 5
      %v3827 = vsel %vm1715, %v3825, %v3826
      %v3828 = vrot.slane %v3826, 4
      %v3829 = vrot.slane %v3718, 5
      %v3830 = vsel %vm1715, %v3828, %v3829
      %v3831 = vrot.slane %v3719, 5
      %v3832 = vrot.slane %v3831, 4
      %v3833 = vrot.slane %v3720, 5
      %v3834 = vsel %vm1715, %v3832, %v3833
      %v3835 = vrot.slane %v3833, 4
      %v3836 = vrot.slane %v3721, 5
      %v3837 = vsel %vm1715, %v3835, %v3836
      %v3838 = vrot.slane %v3722, 5
      %v3839 = vrot.slane %v3838, 4
      %v3840 = vrot.slane %v3723, 5
      %v3841 = vsel %vm1715, %v3839, %v3840
      %v3842 = vrot.slane %v3840, 4
      %v3843 = vrot.slane %v3724, 5
      %v3844 = vsel %vm1715, %v3842, %v3843
      %v3845 = vrot.slane %v3725, 5
      %v3846 = vrot.slane %v3845, 4
      %v3847 = vrot.slane %v3726, 5
      %v3848 = vsel %vm1715, %v3846, %v3847
      %v3849 = vrot.slane %v3847, 4
      %v3850 = vrot.slane %v3727, 5
      %v3851 = vsel %vm1715, %v3849, %v3850
      %v3852 = vrot.slane %v3728, 5
      %v3853 = vrot.slane %v3852, 4
      %v3854 = vrot.slane %v3729, 5
      %v3855 = vsel %vm1715, %v3853, %v3854
      %v3856 = vrot.slane %v3854, 4
      %v3857 = vrot.slane %v3730, 5
      %v3858 = vsel %vm1715, %v3856, %v3857
      %v3859 = vrot.slane %v3731, 5
      %v3860 = vrot.slane %v3859, 4
      %v3861 = vrot.slane %v3732, 5
      %v3862 = vsel %vm1715, %v3860, %v3861
      %v3863 = vrot.slane %v3861, 4
      %v3864 = vrot.slane %v3733, 5
      %v3865 = vsel %vm1715, %v3863, %v3864
      %v3866 = vrot.slane %v3734, 5
      %v3867 = vrot.slane %v3866, 4
      %v3868 = vrot.slane %v3735, 5
      %v3869 = vsel %vm1715, %v3867, %v3868
      %v3870 = vrot.slane %v3868, 4
      %v3871 = vrot.slane %v3736, 5
      %v3872 = vsel %vm1715, %v3870, %v3871
      %v3873 = vrot.slane %v3737, 5
      %v3874 = vrot.slane %v3873, 4
      %v3875 = vrot.slane %v3738, 5
      %v3876 = vsel %vm1715, %v3874, %v3875
      %v3877 = vrot.slane %v3875, 4
      %v3878 = vrot.slane %v3739, 5
      %v3879 = vsel %vm1715, %v3877, %v3878
      %v3880 = vrot.slane %v3740, 5
      %v3881 = vrot.slane %v3880, 4
      %v3882 = vrot.slane %v3741, 5
      %v3883 = vsel %vm1715, %v3881, %v3882
      %v3884 = vrot.slane %v3882, 4
      %v3885 = vrot.slane %v3742, 5
      %v3886 = vsel %vm1715, %v3884, %v3885
      %v3887 = vrot.slane %v3743, 5
      %v3888 = vrot.slane %v3887, 4
      %v3889 = vrot.slane %v3744, 5
      %v3890 = vsel %vm1715, %v3888, %v3889
      %v3891 = vrot.slane %v3889, 4
      %v3892 = vrot.slane %v3745, 5
      %v3893 = vsel %vm1715, %v3891, %v3892
      %v3894 = vrot.slane %v3746, 5
      %v3895 = vrot.slane %v3894, 4
      %v3896 = vrot.slane %v3747, 5
      %v3897 = vsel %vm1715, %v3895, %v3896
      %v3898 = vrot.slane %v3896, 4
      %v3899 = vrot.slane %v3748, 5
      %v3900 = vsel %vm1715, %v3898, %v3899
      %v3901 = vrot.slane %v3749, 5
      %v3902 = vrot.slane %v3901, 4
      %v3903 = vrot.slane %v3750, 5
      %v3904 = vsel %vm1715, %v3902, %v3903
      %v3905 = vrot.slane %v3903, 4
      %v3906 = vrot.slane %v3751, 5
      %v3907 = vsel %vm1715, %v3905, %v3906
      %v3908 = vrot.slane %v3752, 5
      %v3909 = vrot.slane %v3908, 4
      %v3910 = vrot.slane %v3753, 5
      %v3911 = vsel %vm1715, %v3909, %v3910
      %v3912 = vrot.slane %v3910, 4
      %v3913 = vrot.slane %v3754, 5
      %v3914 = vsel %vm1715, %v3912, %v3913
      %v3915 = vunpack.c.l.b16 %v3806
      %v3916 = vunpack.c.l.b16 %v3809
      %v3917 = vunpack.c.l.b16 %v3813
      %v3918 = vunpack.c.l.b16 %v3816
      %v3919 = vunpack.c.l.b16 %v3820
      %v3920 = vunpack.c.l.b16 %v3823
      %v3921 = vunpack.c.l.b16 %v3827
      %v3922 = vunpack.c.l.b16 %v3830
      %v3923 = vunpack.c.l.b16 %v3834
      %v3924 = vunpack.c.l.b16 %v3837
      %v3925 = vunpack.c.l.b16 %v3841
      %v3926 = vunpack.c.l.b16 %v3844
      %v3927 = vunpack.c.l.b16 %v3848
      %v3928 = vunpack.c.l.b16 %v3851
      %v3929 = vunpack.c.l.b16 %v3855
      %v3930 = vunpack.c.l.b16 %v3858
      %v3931 = vunpack.c.l.b16 %v3862
      %v3932 = vunpack.c.l.b16 %v3865
      %v3933 = vunpack.c.l.b16 %v3869
      %v3934 = vunpack.c.l.b16 %v3872
      %v3935 = vunpack.c.l.b16 %v3876
      %v3936 = vunpack.c.l.b16 %v3879
      %v3937 = vunpack.c.l.b16 %v3883
      %v3938 = vunpack.c.l.b16 %v3886
      %v3939 = vunpack.c.l.b16 %v3890
      %v3940 = vunpack.c.l.b16 %v3893
      %v3941 = vunpack.c.l.b16 %v3897
      %v3942 = vunpack.c.l.b16 %v3900
      %v3943 = vunpack.c.l.b16 %v3904
      %v3944 = vunpack.c.l.b16 %v3907
      %v3945 = vunpack.c.l.b16 %v3911
      %v3946 = vunpack.c.l.b16 %v3914
      %v3947 = vpack.c.b16 %v3916, %v3915
      %v3948 = vpack.c.b16 %v3918, %v3917
      %v3949 = vpack.c.b16 %v3920, %v3919
      %v3950 = vpack.c.b16 %v3922, %v3921
      %v3951 = vpack.c.b16 %v3924, %v3923
      %v3952 = vpack.c.b16 %v3926, %v3925
      %v3953 = vpack.c.b16 %v3928, %v3927
      %v3954 = vpack.c.b16 %v3930, %v3929
      %v3955 = vpack.c.b16 %v3932, %v3931
      %v3956 = vpack.c.b16 %v3934, %v3933
      %v3957 = vpack.c.b16 %v3936, %v3935
      %v3958 = vpack.c.b16 %v3938, %v3937
      %v3959 = vpack.c.b16 %v3940, %v3939
      %v3960 = vpack.c.b16 %v3942, %v3941
      %v3961 = vpack.c.b16 %v3944, %v3943
      %v3962 = vpack.c.b16 %v3946, %v3945
      %3963 = vrot.lane.b32.xlu0 %v3947, 32
      %v3964 = vpop.permute.xlu0 %3963
      %3965 = vrot.lane.b32.xlu0 %v3948, 32
      %v3966 = vpop.permute.xlu0 %3965
      %3967 = vrot.lane.b32.xlu0 %v3949, 32
      %v3968 = vpop.permute.xlu0 %3967
      %3969 = vrot.lane.b32.xlu0 %v3950, 32
      %v3970 = vpop.permute.xlu0 %3969
      %3971 = vrot.lane.b32.xlu0 %v3951, 32
      %v3972 = vpop.permute.xlu0 %3971
      %3973 = vrot.lane.b32.xlu0 %v3952, 32
      %v3974 = vpop.permute.xlu0 %3973
      %3975 = vrot.lane.b32.xlu0 %v3953, 32
      %v3976 = vpop.permute.xlu0 %3975
      %3977 = vrot.lane.b32.xlu0 %v3954, 32
      %v3978 = vpop.permute.xlu0 %3977
      %3979 = vrot.lane.b32.xlu0 %v3955, 32
      %v3980 = vpop.permute.xlu0 %3979
      %3981 = vrot.lane.b32.xlu0 %v3956, 32
      %v3982 = vpop.permute.xlu0 %3981
      %3983 = vrot.lane.b32.xlu0 %v3957, 32
      %v3984 = vpop.permute.xlu0 %3983
      %3985 = vrot.lane.b32.xlu0 %v3958, 32
      %v3986 = vpop.permute.xlu0 %3985
      %3987 = vrot.lane.b32.xlu0 %v3959, 32
      %v3988 = vpop.permute.xlu0 %3987
      %3989 = vrot.lane.b32.xlu0 %v3960, 32
      %v3990 = vpop.permute.xlu0 %3989
      %3991 = vrot.lane.b32.xlu0 %v3961, 32
      %v3992 = vpop.permute.xlu0 %3991
      %3993 = vrot.lane.b32.xlu0 %v3962, 32
      %v3994 = vpop.permute.xlu0 %3993
      %vm4011 = vcmask 294144
      %4012 = vst.msk [vmem:[#allocation3] sm:$0xff] %vm4011, %v3964
      %4013 = vst.msk [vmem:[#allocation3 + $0x8] sm:$0xff] %vm4011, %v3966
      %4014 = vst.msk [vmem:[#allocation3 + $0x10] sm:$0xff] %vm4011, %v3968
      %4015 = vst.msk [vmem:[#allocation3 + $0x18] sm:$0xff] %vm4011, %v3970
      %4016 = vst.msk [vmem:[#allocation3 + $0x20] sm:$0xff] %vm4011, %v3972
      %4017 = vst.msk [vmem:[#allocation3 + $0x28] sm:$0xff] %vm4011, %v3974
      %4018 = vst.msk [vmem:[#allocation3 + $0x30] sm:$0xff] %vm4011, %v3976
      %4019 = vst.msk [vmem:[#allocation3 + $0x38] sm:$0xff] %vm4011, %v3978
      %4020 = vst.msk [vmem:[#allocation3 + $0x40] sm:$0xff] %vm4011, %v3980
      %4021 = vst.msk [vmem:[#allocation3 + $0x48] sm:$0xff] %vm4011, %v3982
      %4022 = vst.msk [vmem:[#allocation3 + $0x50] sm:$0xff] %vm4011, %v3984
      %4023 = vst.msk [vmem:[#allocation3 + $0x58] sm:$0xff] %vm4011, %v3986
      %4024 = vst.msk [vmem:[#allocation3 + $0x60] sm:$0xff] %vm4011, %v3988
      %4025 = vst.msk [vmem:[#allocation3 + $0x68] sm:$0xff] %vm4011, %v3990
      %4026 = vst.msk [vmem:[#allocation3 + $0x70] sm:$0xff] %vm4011, %v3992
      %4027 = vst.msk [vmem:[#allocation3 + $0x78] sm:$0xff] %vm4011, %v3994
      %v4028 = vld [vmem:[#allocation3] sm:$0xff]
      %v4029 = vld [vmem:[#allocation3 + $0x8] sm:$0xff]
      %v4030 = vld [vmem:[#allocation3 + $0x10] sm:$0xff]
      %v4031 = vld [vmem:[#allocation3 + $0x18] sm:$0xff]
      %v4032 = vld [vmem:[#allocation3 + $0x20] sm:$0xff]
      %v4033 = vld [vmem:[#allocation3 + $0x28] sm:$0xff]
      %v4034 = vld [vmem:[#allocation3 + $0x30] sm:$0xff]
      %v4035 = vld [vmem:[#allocation3 + $0x38] sm:$0xff]
      %v4036 = vld [vmem:[#allocation3 + $0x40] sm:$0xff]
      %v4037 = vld [vmem:[#allocation3 + $0x48] sm:$0xff]
      %v4038 = vld [vmem:[#allocation3 + $0x50] sm:$0xff]
      %v4039 = vld [vmem:[#allocation3 + $0x58] sm:$0xff]
      %v4040 = vld [vmem:[#allocation3 + $0x60] sm:$0xff]
      %v4041 = vld [vmem:[#allocation3 + $0x68] sm:$0xff]
      %v4042 = vld [vmem:[#allocation3 + $0x70] sm:$0xff]
      %v4043 = vld [vmem:[#allocation3 + $0x78] sm:$0xff]
      %v4044 = vld [vmem:[%s1] sm:$0xf]
      %v4045 = vld [vmem:[%s1 + $0x4] sm:$0xf]
      %v4046 = vld [vmem:[%s1 + $0x8] sm:$0xf]
      %v4047 = vld [vmem:[%s1 + $0xc] sm:$0xf]
      %v4048 = vld [vmem:[%s1 + $0x10] sm:$0x3]
      %v4054 = vunpack.c.l.b16 %v4044
      %v4055 = vunpack.c.l.b16 %v4045
      %v4056 = vunpack.c.l.b16 %v4046
      %v4057 = vunpack.c.l.b16 %v4047
      %v4058 = vunpack.c.l.b16 %v4048
      %v4059 = vpack.c.b16 %v4055, %v4054
      %v4060 = vpack.c.b16 %v4057, %v4056
      %v4061 = vpack.c.b16 %v4058, %v4058
      %vm4064 = vcmask 293888
      %v4066 = vsel %vm4064, %v4028, 0
      %v4069 = vsel %vm4064, %v4029, 0
      %v4072 = vsel %vm4064, %v4030, 0
      %v4075 = vsel %vm4064, %v4031, 0
      %v4078 = vsel %vm4064, %v4032, 0
      %v4081 = vsel %vm4064, %v4033, 0
      %v4084 = vsel %vm4064, %v4034, 0
      %v4087 = vsel %vm4064, %v4035, 0
      %v4090 = vsel %vm4064, %v4036, 0
      %v4093 = vsel %vm4064, %v4037, 0
      %v4096 = vsel %vm4064, %v4038, 0
      %v4099 = vsel %vm4064, %v4039, 0
      %v4102 = vsel %vm4064, %v4040, 0
      %v4105 = vsel %vm4064, %v4041, 0
      %v4108 = vsel %vm4064, %v4042, 0
      %v4111 = vsel %vm4064, %v4043, 0
      %vm4113 = vcmask 1041408
      %v4115 = vsel %vm4113, %v4061, 0
      %4117 = vmatprep.subr.bf16.mxu0 0
      %4118 = vmatpush1.bf16.msra.mxu0 %v4059
      %4119 = vmatprep.subr.bf16.mxu0 0
      %4120 = vmatpush1.bf16.msra.mxu0 %v4060
      %4121 = vmatprep.subr.bf16.mxu0 0
      %4122 = vmatpush1.bf16.msra.mxu0 %v4115
      %4123 = vmatprep.subr.bf16.mxu0 0
      %4124 = vmatpush1.bf16.msra.mxu0 0
      %4125 = vmatprep.subr.bf16.mxu0 0
      %4126 = vmatpush1.bf16.msra.mxu0 0
      %4127 = vmatprep.subr.bf16.mxu0 0
      %4128 = vmatpush1.bf16.msra.mxu0 0
      %4129 = vmatprep.subr.bf16.mxu0 0
      %4130 = vmatpush1.bf16.msra.mxu0 0
      %4131 = vmatprep.subr.bf16.mxu0 0
      %4132 = vmatpush1.bf16.msra.mxu0 0
      %4133 = vmatprep.subr.bf16.mxu0 0
      %4134 = vmatpush1.bf16.msra.mxu0 0
      %4135 = vmatprep.subr.bf16.mxu0 0
      %4136 = vmatpush1.bf16.msra.mxu0 0
      %4137 = vmatprep.subr.bf16.mxu0 0
      %4138 = vmatpush1.bf16.msra.mxu0 0
      %4139 = vmatprep.subr.bf16.mxu0 0
      %4140 = vmatpush1.bf16.msra.mxu0 0
      %4141 = vmatprep.subr.bf16.mxu0 0
      %4142 = vmatpush1.bf16.msra.mxu0 0
      %4143 = vmatprep.subr.bf16.mxu0 0
      %4144 = vmatpush1.bf16.msra.mxu0 0
      %4145 = vmatprep.subr.bf16.mxu0 0
      %4146 = vmatpush1.bf16.msra.mxu0 0
      %4147 = vmatprep.subr.bf16.mxu0 0
      %4148 = vmatpush1.bf16.msra.mxu0 0
      %4149 = vmatprep.mubr.bf16.mxu0 0
      %4150 = vmatmul.mubr.bf16.gmra.mrb[0].mxu0 %v4066
      %v4151 = vpop.f32.mrb[0].mxu0
      %v4152 = vadd.f32 0.0, %v4151
      %v4153 = vpop.f32.mrb[0].mxu0
      %v4154 = vpop.f32.mrb[0].mxu0
      %v4155 = vadd.f32 0.0, %v4154
      %v4156 = vpop.f32.mrb[0].mxu0
      %4157 = vmatprep.mubr.bf16.mxu0 0
      %4158 = vmatmul.mubr.bf16.gmra.mrb[0].mxu0 %v4069
      %v4159 = vpop.f32.mrb[0].mxu0
      %v4160 = vadd.f32 0.0, %v4159
      %v4161 = vpop.f32.mrb[0].mxu0
      %v4162 = vpop.f32.mrb[0].mxu0
      %v4163 = vadd.f32 0.0, %v4162
      %v4164 = vpop.f32.mrb[0].mxu0
      %4165 = vmatprep.mubr.bf16.mxu0 0
      %4166 = vmatmul.mubr.bf16.gmra.mrb[0].mxu0 %v4072
      %v4167 = vpop.f32.mrb[0].mxu0
      %v4168 = vadd.f32 0.0, %v4167
      %v4169 = vpop.f32.mrb[0].mxu0
      %v4170 = vpop.f32.mrb[0].mxu0
      %v4171 = vadd.f32 0.0, %v4170
      %v4172 = vpop.f32.mrb[0].mxu0
      %4173 = vmatprep.mubr.bf16.mxu0 0
      %4174 = vmatmul.mubr.bf16.gmra.mrb[0].mxu0 %v4075
      %v4175 = vpop.f32.mrb[0].mxu0
      %v4176 = vadd.f32 0.0, %v4175
      %v4177 = vpop.f32.mrb[0].mxu0
      %v4178 = vpop.f32.mrb[0].mxu0
      %v4179 = vadd.f32 0.0, %v4178
      %v4180 = vpop.f32.mrb[0].mxu0
      %4181 = vmatprep.mubr.bf16.mxu0 0
      %4182 = vmatmul.mubr.bf16.gmra.mrb[0].mxu0 %v4078
      %v4183 = vpop.f32.mrb[0].mxu0
      %v4184 = vadd.f32 0.0, %v4183
      %v4185 = vpop.f32.mrb[0].mxu0
      %v4186 = vpop.f32.mrb[0].mxu0
      %v4187 = vadd.f32 0.0, %v4186
      %v4188 = vpop.f32.mrb[0].mxu0
      %4189 = vmatprep.mubr.bf16.mxu0 0
      %4190 = vmatmul.mubr.bf16.gmra.mrb[0].mxu0 %v4081
      %v4191 = vpop.f32.mrb[0].mxu0
      %v4192 = vadd.f32 0.0, %v4191
      %v4193 = vpop.f32.mrb[0].mxu0
      %v4194 = vpop.f32.mrb[0].mxu0
      %v4195 = vadd.f32 0.0, %v4194
      %v4196 = vpop.f32.mrb[0].mxu0
      %4197 = vmatprep.mubr.bf16.mxu0 0
      %4198 = vmatmul.mubr.bf16.gmra.mrb[0].mxu0 %v4084
      %v4199 = vpop.f32.mrb[0].mxu0
      %v4200 = vadd.f32 0.0, %v4199
      %v4201 = vpop.f32.mrb[0].mxu0
      %v4202 = vpop.f32.mrb[0].mxu0
      %v4203 = vadd.f32 0.0, %v4202
      %v4204 = vpop.f32.mrb[0].mxu0
      %4205 = vmatprep.mubr.bf16.mxu0 0
      %4206 = vmatmul.mubr.bf16.gmra.mrb[0].mxu0 %v4087
      %v4207 = vpop.f32.mrb[0].mxu0
      %v4208 = vadd.f32 0.0, %v4207
      %v4209 = vpop.f32.mrb[0].mxu0
      %v4210 = vpop.f32.mrb[0].mxu0
      %v4211 = vadd.f32 0.0, %v4210
      %v4212 = vpop.f32.mrb[0].mxu0
      %4213 = vmatprep.mubr.bf16.mxu0 0
      %4214 = vmatmul.mubr.bf16.gmra.mrb[0].mxu0 %v4090
      %v4215 = vpop.f32.mrb[0].mxu0
      %v4216 = vadd.f32 0.0, %v4215
      %v4217 = vpop.f32.mrb[0].mxu0
      %v4218 = vpop.f32.mrb[0].mxu0
      %v4219 = vadd.f32 0.0, %v4218
      %v4220 = vpop.f32.mrb[0].mxu0
      %4221 = vmatprep.mubr.bf16.mxu0 0
      %4222 = vmatmul.mubr.bf16.gmra.mrb[0].mxu0 %v4093
      %v4223 = vpop.f32.mrb[0].mxu0
      %v4224 = vadd.f32 0.0, %v4223
      %v4225 = vpop.f32.mrb[0].mxu0
      %v4226 = vpop.f32.mrb[0].mxu0
      %v4227 = vadd.f32 0.0, %v4226
      %v4228 = vpop.f32.mrb[0].mxu0
      %4229 = vmatprep.mubr.bf16.mxu0 0
      %4230 = vmatmul.mubr.bf16.gmra.mrb[0].mxu0 %v4096
      %v4231 = vpop.f32.mrb[0].mxu0
      %v4232 = vadd.f32 0.0, %v4231
      %v4233 = vpop.f32.mrb[0].mxu0
      %v4234 = vpop.f32.mrb[0].mxu0
      %v4235 = vadd.f32 0.0, %v4234
      %v4236 = vpop.f32.mrb[0].mxu0
      %4237 = vmatprep.mubr.bf16.mxu0 0
      %4238 = vmatmul.mubr.bf16.gmra.mrb[0].mxu0 %v4099
      %v4239 = vpop.f32.mrb[0].mxu0
      %v4240 = vadd.f32 0.0, %v4239
      %v4241 = vpop.f32.mrb[0].mxu0
      %v4242 = vpop.f32.mrb[0].mxu0
      %v4243 = vadd.f32 0.0, %v4242
      %v4244 = vpop.f32.mrb[0].mxu0
      %4245 = vmatprep.mubr.bf16.mxu0 0
      %4246 = vmatmul.mubr.bf16.gmra.mrb[0].mxu0 %v4102
      %v4247 = vpop.f32.mrb[0].mxu0
      %v4248 = vadd.f32 0.0, %v4247
      %v4249 = vpop.f32.mrb[0].mxu0
      %v4250 = vpop.f32.mrb[0].mxu0
      %v4251 = vadd.f32 0.0, %v4250
      %v4252 = vpop.f32.mrb[0].mxu0
      %4253 = vmatprep.mubr.bf16.mxu0 0
      %4254 = vmatmul.mubr.bf16.gmra.mrb[0].mxu0 %v4105
      %v4255 = vpop.f32.mrb[0].mxu0
      %v4256 = vadd.f32 0.0, %v4255
      %v4257 = vpop.f32.mrb[0].mxu0
      %v4258 = vpop.f32.mrb[0].mxu0
      %v4259 = vadd.f32 0.0, %v4258
      %v4260 = vpop.f32.mrb[0].mxu0
      %4261 = vmatprep.mubr.bf16.mxu0 0
      %4262 = vmatmul.mubr.bf16.gmra.mrb[0].mxu0 %v4108
      %v4263 = vpop.f32.mrb[0].mxu0
      %v4264 = vadd.f32 0.0, %v4263
      %v4265 = vpop.f32.mrb[0].mxu0
      %v4266 = vpop.f32.mrb[0].mxu0
      %v4267 = vadd.f32 0.0, %v4266
      %v4268 = vpop.f32.mrb[0].mxu0
      %4269 = vmatprep.mubr.bf16.mxu0 0
      %4270 = vmatmul.mubr.bf16.gmra.mrb[0].mxu0 %v4111
      %v4271 = vpop.f32.mrb[0].mxu0
      %v4272 = vadd.f32 0.0, %v4271
      %v4273 = vpop.f32.mrb[0].mxu0
      %v4274 = vpop.f32.mrb[0].mxu0
      %v4275 = vadd.f32 0.0, %v4274
      %v4276 = vpop.f32.mrb[0].mxu0
      %4277 = vdwg.mxu0
      %4278 = vst.msk [vmem:[%s231] sm:$0xff] %vm1052, %v4152
      %4279 = vst.msk [vmem:[%s231 + $0x8] sm:$0xff] %vm1052, %v4155
      %4280 = vst.msk [vmem:[%s231 + $0x10] sm:$0xff] %vm1052, %v4160
      %4281 = vst.msk [vmem:[%s231 + $0x18] sm:$0xff] %vm1052, %v4163
      %4282 = vst.msk [vmem:[%s231 + $0x20] sm:$0xff] %vm1052, %v4168
      %4283 = vst.msk [vmem:[%s231 + $0x28] sm:$0xff] %vm1052, %v4171
      %4284 = vst.msk [vmem:[%s231 + $0x30] sm:$0xff] %vm1052, %v4176
      %4285 = vst.msk [vmem:[%s231 + $0x38] sm:$0xff] %vm1052, %v4179
      %4286 = vst.msk [vmem:[%s231 + $0x40] sm:$0xff] %vm1052, %v4184
      %4287 = vst.msk [vmem:[%s231 + $0x48] sm:$0xff] %vm1052, %v4187
      %4288 = vst.msk [vmem:[%s231 + $0x50] sm:$0xff] %vm1052, %v4192
      %4289 = vst.msk [vmem:[%s231 + $0x58] sm:$0xff] %vm1052, %v4195
      %4290 = vst.msk [vmem:[%s231 + $0x60] sm:$0xff] %vm1052, %v4200
      %4291 = vst.msk [vmem:[%s231 + $0x68] sm:$0xff] %vm1052, %v4203
      %4292 = vst.msk [vmem:[%s231 + $0x70] sm:$0xff] %vm1052, %v4208
      %4293 = vst.msk [vmem:[%s231 + $0x78] sm:$0xff] %vm1052, %v4211
      %4294 = vst.msk [vmem:[%s231 + $0x80] sm:$0xff] %vm1052, %v4216
      %4295 = vst.msk [vmem:[%s231 + $0x88] sm:$0xff] %vm1052, %v4219
      %4296 = vst.msk [vmem:[%s231 + $0x90] sm:$0xff] %vm1052, %v4224
      %4297 = vst.msk [vmem:[%s231 + $0x98] sm:$0xff] %vm1052, %v4227
      %4298 = vst.msk [vmem:[%s231 + $0xa0] sm:$0xff] %vm1052, %v4232
      %4299 = vst.msk [vmem:[%s231 + $0xa8] sm:$0xff] %vm1052, %v4235
      %4300 = vst.msk [vmem:[%s231 + $0xb0] sm:$0xff] %vm1052, %v4240
      %4301 = vst.msk [vmem:[%s231 + $0xb8] sm:$0xff] %vm1052, %v4243
      %4302 = vst.msk [vmem:[%s231 + $0xc0] sm:$0xff] %vm1052, %v4248
      %4303 = vst.msk [vmem:[%s231 + $0xc8] sm:$0xff] %vm1052, %v4251
      %4304 = vst.msk [vmem:[%s231 + $0xd0] sm:$0xff] %vm1052, %v4256
      %4305 = vst.msk [vmem:[%s231 + $0xd8] sm:$0xff] %vm1052, %v4259
      %4306 = vst.msk [vmem:[%s231 + $0xe0] sm:$0xff] %vm1052, %v4264
      %4307 = vst.msk [vmem:[%s231 + $0xe8] sm:$0xff] %vm1052, %v4267
      %4308 = vst.msk [vmem:[%s231 + $0xf0] sm:$0xff] %vm1052, %v4272
      %4309 = vst.msk [vmem:[%s231 + $0xf8] sm:$0xff] %vm1052, %v4275
      %v4310 = vsel %vm1052, %v4152, 0.0
      %v4311 = vsel %vm1052, %v4155, 0.0
      %v4312 = vadd.f32 %v4310, %v4311
      %v4313 = vsel %vm1052, %v4160, 0.0
      %v4314 = vadd.f32 %v4312, %v4313
      %v4315 = vsel %vm1052, %v4163, 0.0
      %v4316 = vadd.f32 %v4314, %v4315
      %v4317 = vsel %vm1052, %v4168, 0.0
      %v4318 = vadd.f32 %v4316, %v4317
      %v4319 = vsel %vm1052, %v4171, 0.0
      %v4320 = vadd.f32 %v4318, %v4319
      %v4321 = vsel %vm1052, %v4176, 0.0
      %v4322 = vadd.f32 %v4320, %v4321
      %v4323 = vsel %vm1052, %v4179, 0.0
      %v4324 = vadd.f32 %v4322, %v4323
      %v4325 = vsel %vm1052, %v4184, 0.0
      %v4326 = vadd.f32 %v4324, %v4325
      %v4327 = vsel %vm1052, %v4187, 0.0
      %v4328 = vadd.f32 %v4326, %v4327
      %v4329 = vsel %vm1052, %v4192, 0.0
      %v4330 = vadd.f32 %v4328, %v4329
      %v4331 = vsel %vm1052, %v4195, 0.0
      %v4332 = vadd.f32 %v4330, %v4331
      %v4333 = vsel %vm1052, %v4200, 0.0
      %v4334 = vadd.f32 %v4332, %v4333
      %v4335 = vsel %vm1052, %v4203, 0.0
      %v4336 = vadd.f32 %v4334, %v4335
      %v4337 = vsel %vm1052, %v4208, 0.0
      %v4338 = vadd.f32 %v4336, %v4337
      %v4339 = vsel %vm1052, %v4211, 0.0
      %v4340 = vadd.f32 %v4338, %v4339
      %v4341 = vsel %vm1052, %v4216, 0.0
      %v4342 = vadd.f32 %v4340, %v4341
      %v4343 = vsel %vm1052, %v4219, 0.0
      %v4344 = vadd.f32 %v4342, %v4343
      %v4345 = vsel %vm1052, %v4224, 0.0
      %v4346 = vadd.f32 %v4344, %v4345
      %v4347 = vsel %vm1052, %v4227, 0.0
      %v4348 = vadd.f32 %v4346, %v4347
      %v4349 = vsel %vm1052, %v4232, 0.0
      %v4350 = vadd.f32 %v4348, %v4349
      %v4351 = vsel %vm1052, %v4235, 0.0
      %v4352 = vadd.f32 %v4350, %v4351
      %v4353 = vsel %vm1052, %v4240, 0.0
      %v4354 = vadd.f32 %v4352, %v4353
      %v4355 = vsel %vm1052, %v4243, 0.0
      %v4356 = vadd.f32 %v4354, %v4355
      %v4357 = vsel %vm1052, %v4248, 0.0
      %v4358 = vadd.f32 %v4356, %v4357
      %v4359 = vsel %vm1052, %v4251, 0.0
      %v4360 = vadd.f32 %v4358, %v4359
      %v4361 = vsel %vm1052, %v4256, 0.0
      %v4362 = vadd.f32 %v4360, %v4361
      %v4363 = vsel %vm1052, %v4259, 0.0
      %v4364 = vadd.f32 %v4362, %v4363
      %v4365 = vsel %vm1052, %v4264, 0.0
      %v4366 = vadd.f32 %v4364, %v4365
      %v4367 = vsel %vm1052, %v4267, 0.0
      %v4368 = vadd.f32 %v4366, %v4367
      %v4369 = vsel %vm1052, %v4272, 0.0
      %v4370 = vadd.f32 %v4368, %v4369
      %v4371 = vsel %vm1052, %v4275, 0.0
      %v4372 = vadd.f32 %v4370, %v4371
      %v4373 = vrot.slane %v4372, 4
      %v4374 = vadd.f32 %v4372, %v4373
      %v4375 = vrot.slane %v4374, 2
      %v4376 = vadd.f32 %v4374, %v4375
      %v4377 = vrot.slane %v4376, 1
      %v4378 = vadd.f32 %v4376, %v4377
      %4379 = vst.msk [vmem:[%s235] sm:$0x1] %vm272, %v4378
      %v4380 = vmul.f32 %v4152, %v4152
      %v4381 = vmul.f32 %v4155, %v4155
      %v4382 = vmul.f32 %v4160, %v4160
      %v4383 = vmul.f32 %v4163, %v4163
      %v4384 = vmul.f32 %v4168, %v4168
      %v4385 = vmul.f32 %v4171, %v4171
      %v4386 = vmul.f32 %v4176, %v4176
      %v4387 = vmul.f32 %v4179, %v4179
      %v4388 = vmul.f32 %v4184, %v4184
      %v4389 = vmul.f32 %v4187, %v4187
      %v4390 = vmul.f32 %v4192, %v4192
      %v4391 = vmul.f32 %v4195, %v4195
      %v4392 = vmul.f32 %v4200, %v4200
      %v4393 = vmul.f32 %v4203, %v4203
      %v4394 = vmul.f32 %v4208, %v4208
      %v4395 = vmul.f32 %v4211, %v4211
      %v4396 = vmul.f32 %v4216, %v4216
      %v4397 = vmul.f32 %v4219, %v4219
      %v4398 = vmul.f32 %v4224, %v4224
      %v4399 = vmul.f32 %v4227, %v4227
      %v4400 = vmul.f32 %v4232, %v4232
      %v4401 = vmul.f32 %v4235, %v4235
      %v4402 = vmul.f32 %v4240, %v4240
      %v4403 = vmul.f32 %v4243, %v4243
      %v4404 = vmul.f32 %v4248, %v4248
      %v4405 = vmul.f32 %v4251, %v4251
      %v4406 = vmul.f32 %v4256, %v4256
      %v4407 = vmul.f32 %v4259, %v4259
      %v4408 = vmul.f32 %v4264, %v4264
      %v4409 = vmul.f32 %v4267, %v4267
      %v4410 = vmul.f32 %v4272, %v4272
      %v4411 = vmul.f32 %v4275, %v4275
      %v4412 = vsel %vm1052, %v4380, 0.0
      %v4413 = vsel %vm1052, %v4381, 0.0
      %v4414 = vadd.f32 %v4412, %v4413
      %v4415 = vsel %vm1052, %v4382, 0.0
      %v4416 = vadd.f32 %v4414, %v4415
      %v4417 = vsel %vm1052, %v4383, 0.0
      %v4418 = vadd.f32 %v4416, %v4417
      %v4419 = vsel %vm1052, %v4384, 0.0
      %v4420 = vadd.f32 %v4418, %v4419
      %v4421 = vsel %vm1052, %v4385, 0.0
      %v4422 = vadd.f32 %v4420, %v4421
      %v4423 = vsel %vm1052, %v4386, 0.0
      %v4424 = vadd.f32 %v4422, %v4423
      %v4425 = vsel %vm1052, %v4387, 0.0
      %v4426 = vadd.f32 %v4424, %v4425
      %v4427 = vsel %vm1052, %v4388, 0.0
      %v4428 = vadd.f32 %v4426, %v4427
      %v4429 = vsel %vm1052, %v4389, 0.0
      %v4430 = vadd.f32 %v4428, %v4429
      %v4431 = vsel %vm1052, %v4390, 0.0
      %v4432 = vadd.f32 %v4430, %v4431
      %v4433 = vsel %vm1052, %v4391, 0.0
      %v4434 = vadd.f32 %v4432, %v4433
      %v4435 = vsel %vm1052, %v4392, 0.0
      %v4436 = vadd.f32 %v4434, %v4435
      %v4437 = vsel %vm1052, %v4393, 0.0
      %v4438 = vadd.f32 %v4436, %v4437
      %v4439 = vsel %vm1052, %v4394, 0.0
      %v4440 = vadd.f32 %v4438, %v4439
      %v4441 = vsel %vm1052, %v4395, 0.0
      %v4442 = vadd.f32 %v4440, %v4441
      %v4443 = vsel %vm1052, %v4396, 0.0
      %v4444 = vadd.f32 %v4442, %v4443
      %v4445 = vsel %vm1052, %v4397, 0.0
      %v4446 = vadd.f32 %v4444, %v4445
      %v4447 = vsel %vm1052, %v4398, 0.0
      %v4448 = vadd.f32 %v4446, %v4447
      %v4449 = vsel %vm1052, %v4399, 0.0
      %v4450 = vadd.f32 %v4448, %v4449
      %v4451 = vsel %vm1052, %v4400, 0.0
      %v4452 = vadd.f32 %v4450, %v4451
      %v4453 = vsel %vm1052, %v4401, 0.0
      %v4454 = vadd.f32 %v4452, %v4453
      %v4455 = vsel %vm1052, %v4402, 0.0
      %v4456 = vadd.f32 %v4454, %v4455
      %v4457 = vsel %vm1052, %v4403, 0.0
      %v4458 = vadd.f32 %v4456, %v4457
      %v4459 = vsel %vm1052, %v4404, 0.0
      %v4460 = vadd.f32 %v4458, %v4459
      %v4461 = vsel %vm1052, %v4405, 0.0
      %v4462 = vadd.f32 %v4460, %v4461
      %v4463 = vsel %vm1052, %v4406, 0.0
      %v4464 = vadd.f32 %v4462, %v4463
      %v4465 = vsel %vm1052, %v4407, 0.0
      %v4466 = vadd.f32 %v4464, %v4465
      %v4467 = vsel %vm1052, %v4408, 0.0
      %v4468 = vadd.f32 %v4466, %v4467
      %v4469 = vsel %vm1052, %v4409, 0.0
      %v4470 = vadd.f32 %v4468, %v4469
      %v4471 = vsel %vm1052, %v4410, 0.0
      %v4472 = vadd.f32 %v4470, %v4471
      %v4473 = vsel %vm1052, %v4411, 0.0
      %v4474 = vadd.f32 %v4472, %v4473
      %v4475 = vrot.slane %v4474, 4
      %v4476 = vadd.f32 %v4474, %v4475
      %v4477 = vrot.slane %v4476, 2
      %v4478 = vadd.f32 %v4476, %v4477
      %v4479 = vrot.slane %v4478, 1
      %v4480 = vadd.f32 %v4478, %v4479
      %4481 = vst.msk [vmem:[%s235 + $0x1] sm:$0x1] %vm272, %v4480
      %p4482 = scmp.lt.s32.totalorder %s17, 1
      %s4483 = scalar_select %p4482, %s17, 1
      %s4484 = smul.addr %s4483, 32
      %s4485 = smul.addr %s4484, 8
      %s4486 = scalar_lea.vmem %s4, %s4485
      %p4487 = scmp.lt.s32.totalorder %s17, 1
      %s4488 = scalar_select %p4487, %s17, 1
      %s4489 = smul.addr %s4488, 2
      %s4490 = scalar_lea.vmem %s5, %s4489
      // Predicated region
      $region37: #{basic_block_forward.3} parent=35 // pred_check
        %p4491 = pneg %p124
      $region38: #{basic_block_forward.3} parent=35 // pred_check_branch
        %4493 = sbr.rel (%p4491) target = $region40
      $region39: #{basic_block_forward.3} parent=35 // pred_region
        _
      $region40: #{basic_block_forward.3} parent=35 // pred_fallthru
        _
      // Predicated region
      $region41: #{basic_block_forward.3} parent=35 // pred_check
        %p4494 = pneg %p150
      $region42: #{basic_block_forward.3} parent=35 // pred_check_branch
        %4496 = sbr.rel (%p4494) target = $region44
      $region43: #{basic_block_forward.3} parent=35 // pred_region
        _
      $region44: #{basic_block_forward.3} parent=35 // pred_fallthru
        _
    $region36: #{basic_block_forward.3} parent=5 // pred_fallthru
      _
    %p4497 = scmp.le.s32.totalorder 2, %s12
    // Predicated region
    $region45: #{basic_block_forward.3} parent=5 // pred_check
      %p4498 = pneg %p4497
    $region46: #{basic_block_forward.3} parent=5 // pred_check_branch
      %4500 = sbr.rel (%p4498) target = $region48
    $region47: #{basic_block_forward.3} parent=5 // pred_region
      %s4501 = ssub.s32 %s12, 2
      // Predicated region
      $region49: #{basic_block_forward.3} parent=47 // pred_check
        %p4502 = pneg %p130
      $region50: #{basic_block_forward.3} parent=47 // pred_check_branch
        %4504 = sbr.rel (%p4502) target = $region52
      $region51: #{basic_block_forward.3} parent=47 // pred_region
        %p4505 = scmp.lt.s32.totalorder %s18, 1
        %s4506 = scalar_select %p4505, %s18, 1
        %s4507 = smul.addr %s4506, 32
        %s4508 = smul.addr %s4507, 8
        %s4509 = scalar_lea.vmem %s4, %s4508
      $region52: #{basic_block_forward.3} parent=47 // pred_fallthru
        _
      // Predicated region
      $region53: #{basic_block_forward.3} parent=47 // pred_check
        %p4510 = pneg %p156
      $region54: #{basic_block_forward.3} parent=47 // pred_check_branch
        %4512 = sbr.rel (%p4510) target = $region56
      $region55: #{basic_block_forward.3} parent=47 // pred_region
        %p4513 = scmp.lt.s32.totalorder %s18, 1
        %s4514 = scalar_select %p4513, %s18, 1
        %s4515 = smul.addr %s4514, 2
        %s4516 = scalar_lea.vmem %s5, %s4515
      $region56: #{basic_block_forward.3} parent=47 // pred_fallthru
        _
    $region48: #{basic_block_forward.3} parent=5 // pred_fallthru
      _
  $region6: #{basic_block_forward.3} parent=0 // loop_footer
    %s16 = sadd.s32 1, %s12
  $region7: #{basic_block_forward.3} parent=0 // loop_footer_branch
    %11 = sbr.rel target = $region3
  $region8: #{basic_block_forward.3} parent=0 // loop_exit
    _

// kernel: basic_block_forward.4
$region0: #{basic_block_forward.4}
  #allocation0 [shape = 'u32[]', space=smem, size = 0x4, offset = 0x4, fixed_abs, tag = 'smem constant byte address 0x4 - core index']
  #allocation1 [shape = 'u32[144,128]{1,0:T(1,128)}', space=vmem, size = 0x12000, scoped, tag = 'internal scratch']
  #allocation2 [shape = 'bf16[18,18,4]{2,1,0:T(8,128)(2,1)}', space=vmem, size = 0x1b000, scoped, tag = 'scratch operand']
  #allocation3 [shape = 'bf16[256,36]{1,0:T(16,128)(2,1)}', space=vmem, size = 0x10000, scoped, tag = 'scratch operand']
  %s0 = inlined_call_operand.vmem [shape: f32[2,16,16,4], index: 0, kind: input, shape index: {}]
  %s1 = inlined_call_operand.vmem [shape: bf16[36,4], index: 1, kind: input, shape index: {}]
  %s2 = inlined_call_operand.vmem [shape: f32[1,4], index: 2, kind: input, shape index: {}]
  %s3 = inlined_call_operand.vmem [shape: f32[1,4], index: 3, kind: input, shape index: {}]
  %s4 = inlined_call_operand.vmem [shape: f32[2,16,16,4], index: 4, kind: output, shape index: {0}]
  %s5 = inlined_call_operand.vmem [shape: f32[2,2,4], index: 5, kind: output, shape index: {1}]
  %6 = xla_tuple %s4, %s5
  %s7 = sld [smem:[#allocation0]]
  $region57: #{basic_block_forward.4} parent=0
    _
  %s9 = ssub.s32 1, %s7
  %s10 = scalar_select 0, %s9, %s7
  loop: start=0, step=1, limit=4
  $region2: #{basic_block_forward.4} parent=0 // loop_pre_header
    _
  $region3: #{basic_block_forward.4} parent=0 // loop_header
    %s12 = sphi 0, %s16
    %p13 = scmp.ge.s32.totalorder %s12, 4
    %s22 = sphi 0, %s24
    %s25 = sphi 0, %s22
    %s26 = sphi 0, %s25
    %s42 = sphi 0, %s26
    %s46 = sphi 0, %s46
    %s48 = sphi 0, %s46
    %s49 = sphi 0, %s48
    %s63 = sphi 0, %s49
    %s67 = sphi 0, %s67
    %s69 = sphi 0, %s67
    %s70 = sphi 0, %s69
    %s84 = sphi 0, %s70
    %s88 = sphi 0, %s88
    %s90 = sphi 0, %s88
    %s91 = sphi 0, %s90
    %s105 = sphi 0, %s91
    %s111 = sphi 0, %s113
    %s114 = sphi 0, %s111
    %s115 = sphi 0, %s114
    %s131 = sphi 0, %s115
    %s137 = sphi 0, %s139
    %s140 = sphi 0, %s137
    %s141 = sphi 0, %s140
    %s157 = sphi 0, %s141
  $region4: #{basic_block_forward.4} parent=0 // loop_header_branch
    %15 = sbr.rel (%p13) target = $region8
  $region5: #{basic_block_forward.4} parent=0 // loop_body
    %s17 = ssub.s32 %s12, 1
    %s18 = ssub.s32 %s12, 2
    %s19 = sadd.s32 %s12, 1
    %s20 = ssub.s32 %s12, %s19
    %p21 = scmp.eq.s32.totalorder %s20, 0
    %s23 = sadd.s32 %s22, 1
    %s24 = scalar_select %p21, %s22, %s23
    %p27 = pneg %p21
    %p28 = scmp.eq.s32.totalorder %s12, 1
    %p29 = por %p27, %p28
    %p30 = scmp.ne.s32.totalorder %s22, %s25
    %p31 = scmp.eq.s32.totalorder %s12, 0
    %p32 = por %p30, %p31
    %p33 = scmp.ne.s32.totalorder %s22, %s25
    %p34 = scmp.eq.s32.totalorder %s17, 1
    %p35 = por %p33, %p34
    %p36 = scmp.ne.s32.totalorder %s25, %s26
    %p37 = scmp.eq.s32.totalorder %s17, 0
    %p38 = por %p36, %p37
    %p39 = scmp.ne.s32.totalorder %s25, %s26
    %p40 = scmp.eq.s32.totalorder %s18, 1
    %p41 = por %p39, %p40
    %p43 = scmp.ne.s32.totalorder %s26, %s42
    %p44 = scmp.eq.s32.totalorder %s18, 0
    %p45 = por %p43, %p44
    %s47 = sadd.s32 %s46, 1
    %p50 = scmp.eq.s32.totalorder %s12, 1
    %p51 = scmp.ne.s32.totalorder %s46, %s48
    %p52 = scmp.eq.s32.totalorder %s12, 0
    %p53 = por %p51, %p52
    %p54 = scmp.ne.s32.totalorder %s46, %s48
    %p55 = scmp.eq.s32.totalorder %s17, 1
    %p56 = por %p54, %p55
    %p57 = scmp.ne.s32.totalorder %s48, %s49
    %p58 = scmp.eq.s32.totalorder %s17, 0
    %p59 = por %p57, %p58
    %p60 = scmp.ne.s32.totalorder %s48, %s49
    %p61 = scmp.eq.s32.totalorder %s18, 1
    %p62 = por %p60, %p61
    %p64 = scmp.ne.s32.totalorder %s49, %s63
    %p65 = scmp.eq.s32.totalorder %s18, 0
    %p66 = por %p64, %p65
    %s68 = sadd.s32 %s67, 1
    %p71 = scmp.eq.s32.totalorder %s12, 1
    %p72 = scmp.ne.s32.totalorder %s67, %s69
    %p73 = scmp.eq.s32.totalorder %s12, 0
    %p74 = por %p72, %p73
    %p75 = scmp.ne.s32.totalorder %s67, %s69
    %p76 = scmp.eq.s32.totalorder %s17, 1
    %p77 = por %p75, %p76
    %p78 = scmp.ne.s32.totalorder %s69, %s70
    %p79 = scmp.eq.s32.totalorder %s17, 0
    %p80 = por %p78, %p79
    %p81 = scmp.ne.s32.totalorder %s69, %s70
    %p82 = scmp.eq.s32.totalorder %s18, 1
    %p83 = por %p81, %p82
    %p85 = scmp.ne.s32.totalorder %s70, %s84
    %p86 = scmp.eq.s32.totalorder %s18, 0
    %p87 = por %p85, %p86
    %s89 = sadd.s32 %s88, 1
    %p92 = scmp.eq.s32.totalorder %s12, 1
    %p93 = scmp.ne.s32.totalorder %s88, %s90
    %p94 = scmp.eq.s32.totalorder %s12, 0
    %p95 = por %p93, %p94
    %p96 = scmp.ne.s32.totalorder %s88, %s90
    %p97 = scmp.eq.s32.totalorder %s17, 1
    %p98 = por %p96, %p97
    %p99 = scmp.ne.s32.totalorder %s90, %s91
    %p100 = scmp.eq.s32.totalorder %s17, 0
    %p101 = por %p99, %p100
    %p102 = scmp.ne.s32.totalorder %s90, %s91
    %p103 = scmp.eq.s32.totalorder %s18, 1
    %p104 = por %p102, %p103
    %p106 = scmp.ne.s32.totalorder %s91, %s105
    %p107 = scmp.eq.s32.totalorder %s18, 0
    %p108 = por %p106, %p107
    %s109 = ssub.s32 %s12, %s19
    %p110 = scmp.eq.s32.totalorder %s109, 0
    %s112 = sadd.s32 %s111, 1
    %s113 = scalar_select %p110, %s111, %s112
    %p116 = pneg %p110
    %p117 = scmp.eq.s32.totalorder %s12, 1
    %p118 = por %p116, %p117
    %p119 = scmp.ne.s32.totalorder %s111, %s114
    %p120 = scmp.eq.s32.totalorder %s12, 0
    %p121 = por %p119, %p120
    %p122 = scmp.ne.s32.totalorder %s111, %s114
    %p123 = scmp.eq.s32.totalorder %s17, 1
    %p124 = por %p122, %p123
    %p125 = scmp.ne.s32.totalorder %s114, %s115
    %p126 = scmp.eq.s32.totalorder %s17, 0
    %p127 = por %p125, %p126
    %p128 = scmp.ne.s32.totalorder %s114, %s115
    %p129 = scmp.eq.s32.totalorder %s18, 1
    %p130 = por %p128, %p129
    %p132 = scmp.ne.s32.totalorder %s115, %s131
    %p133 = scmp.eq.s32.totalorder %s18, 0
    %p134 = por %p132, %p133
    %s135 = ssub.s32 %s12, %s19
    %p136 = scmp.eq.s32.totalorder %s135, 0
    %s138 = sadd.s32 %s137, 1
    %s139 = scalar_select %p136, %s137, %s138
    %p142 = pneg %p136
    %p143 = scmp.eq.s32.totalorder %s12, 1
    %p144 = por %p142, %p143
    %p145 = scmp.ne.s32.totalorder %s137, %s140
    %p146 = scmp.eq.s32.totalorder %s12, 0
    %p147 = por %p145, %p146
    %p148 = scmp.ne.s32.totalorder %s137, %s140
    %p149 = scmp.eq.s32.totalorder %s17, 1
    %p150 = por %p148, %p149
    %p151 = scmp.ne.s32.totalorder %s140, %s141
    %p152 = scmp.eq.s32.totalorder %s17, 0
    %p153 = por %p151, %p152
    %p154 = scmp.ne.s32.totalorder %s140, %s141
    %p155 = scmp.eq.s32.totalorder %s18, 1
    %p156 = por %p154, %p155
    %p158 = scmp.ne.s32.totalorder %s141, %s157
    %p159 = scmp.eq.s32.totalorder %s18, 0
    %p160 = por %p158, %p159
    %p161 = scmp.le.s32.totalorder 1, %s12
    %p162 = scmp.lt.s32.totalorder %s12, 3
    %p163 = pnand %p161, %p162
    %p164 = pneg %p163
    // Predicated region
    $region9: #{basic_block_forward.4} parent=5 // pred_check
      _
    $region10: #{basic_block_forward.4} parent=5 // pred_check_branch
      %166 = sbr.rel (%p163) target = $region12
    $region11: #{basic_block_forward.4} parent=5 // pred_region
      %s167 = ssub.s32 %s12, 1
      // Predicated region
      $region13: #{basic_block_forward.4} parent=11 // pred_check
        %p168 = pneg %p59
      $region14: #{basic_block_forward.4} parent=11 // pred_check_branch
        %170 = sbr.rel (%p168) target = $region16
      $region15: #{basic_block_forward.4} parent=11 // pred_region
        _
      $region16: #{basic_block_forward.4} parent=11 // pred_fallthru
        _
      // Predicated region
      $region17: #{basic_block_forward.4} parent=11 // pred_check
        %p171 = pneg %p80
      $region18: #{basic_block_forward.4} parent=11 // pred_check_branch
        %173 = sbr.rel (%p171) target = $region20
      $region19: #{basic_block_forward.4} parent=11 // pred_region
        _
      $region20: #{basic_block_forward.4} parent=11 // pred_fallthru
        _
      // Predicated region
      $region21: #{basic_block_forward.4} parent=11 // pred_check
        %p174 = pneg %p101
      $region22: #{basic_block_forward.4} parent=11 // pred_check_branch
        %176 = sbr.rel (%p174) target = $region24
      $region23: #{basic_block_forward.4} parent=11 // pred_region
        _
      $region24: #{basic_block_forward.4} parent=11 // pred_fallthru
        _
    $region12: #{basic_block_forward.4} parent=5 // pred_fallthru
      _
    %p177 = scmp.lt.s32.totalorder %s12, 2
    // Predicated region
    $region25: #{basic_block_forward.4} parent=5 // pred_check
      %p178 = pneg %p177
    $region26: #{basic_block_forward.4} parent=5 // pred_check_branch
      %180 = sbr.rel (%p178) target = $region28
    $region27: #{basic_block_forward.4} parent=5 // pred_region
      // Predicated region
      $region29: #{basic_block_forward.4} parent=27 // pred_check
        %p181 = pneg %p32
      $region30: #{basic_block_forward.4} parent=27 // pred_check_branch
        %183 = sbr.rel (%p181) target = $region32
      $region31: #{basic_block_forward.4} parent=27 // pred_region
        %p184 = scmp.lt.s32.totalorder %s12, 1
        %s185 = scalar_select %p184, %s12, 1
        %s186 = smul.addr %s185, 32
        %s187 = smul.addr %s186, 8
        %s188 = scalar_lea.vmem %s0, %s187
      $region32: #{basic_block_forward.4} parent=27 // pred_fallthru
        _
    $region28: #{basic_block_forward.4} parent=5 // pred_fallthru
      _
    %p189 = scmp.le.s32.totalorder 1, %s12
    %p190 = scmp.lt.s32.totalorder %s12, 3
    %p191 = pnand %p189, %p190
    %p192 = pneg %p191
    // Predicated region
    $region33: #{basic_block_forward.4} parent=5 // pred_check
      _
    $region34: #{basic_block_forward.4} parent=5 // pred_check_branch
      %194 = sbr.rel (%p191) target = $region36
    $region35: #{basic_block_forward.4} parent=5 // pred_region
      %s195 = ssub.s32 %s12, 1
      %p196 = scmp.lt.s32.totalorder %s17, 1
      %s197 = scalar_select %p196, %s17, 1
      %s198 = smul.addr %s197, 32
      %s199 = smul.addr %s198, 8
      %s200 = scalar_lea.vmem %s0, %s199
      %p201 = pneg %p38
      %p202 = pneg %p35
      %p203 = pneg %p59
      %p204 = pneg %p56
      %p205 = pneg %p80
      %p206 = pneg %p77
      %p207 = pneg %p101
      %p208 = pneg %p98
      %p209 = pneg %p127
      %p210 = pneg %p124
      %p211 = scmp.lt.s32.totalorder %s17, 1
      %s212 = scalar_select %p211, %s17, 1
      %s213 = smul.addr %s212, 32
      %s214 = smul.addr %s213, 8
      %s215 = scalar_lea.vmem %s4, %s214
      %p216 = pneg %p153
      %p217 = pneg %p150
      %p218 = scmp.lt.s32.totalorder %s17, 1
      %s219 = scalar_select %p218, %s17, 1
      %s220 = smul.addr %s219, 2
      %s221 = scalar_lea.vmem %s5, %s220
      %p222 = scmp.lt.s32.totalorder %s17, 1
      %s223 = scalar_select %p222, %s17, 1
      %s224 = smul.addr %s223, 32
      %s225 = smul.addr %s224, 8
      %s226 = scalar_lea.vmem %s0, %s225
      %p227 = scmp.lt.s32.totalorder %s17, 1
      %s228 = scalar_select %p227, %s17, 1
      %s229 = smul.addr %s228, 32
      %s230 = smul.addr %s229, 8
      %s231 = scalar_lea.vmem %s4, %s230
      %p232 = scmp.lt.s32.totalorder %s17, 1
      %s233 = scalar_select %p232, %s17, 1
      %s234 = smul.addr %s233, 2
      %s235 = scalar_lea.vmem %s5, %s234
      %v237 = vld [vmem:[%s226] sm:$0xff]
      %v238 = vld [vmem:[%s226 + $0x8] sm:$0xff]
      %v239 = vld [vmem:[%s226 + $0x10] sm:$0xff]
      %v240 = vld [vmem:[%s226 + $0x18] sm:$0xff]
      %v241 = vld [vmem:[%s226 + $0x20] sm:$0xff]
      %v242 = vld [vmem:[%s226 + $0x28] sm:$0xff]
      %v243 = vld [vmem:[%s226 + $0x30] sm:$0xff]
      %v244 = vld [vmem:[%s226 + $0x38] sm:$0xff]
      %v245 = vld [vmem:[%s226 + $0x40] sm:$0xff]
      %v246 = vld [vmem:[%s226 + $0x48] sm:$0xff]
      %v247 = vld [vmem:[%s226 + $0x50] sm:$0xff]
      %v248 = vld [vmem:[%s226 + $0x58] sm:$0xff]
      %v249 = vld [vmem:[%s226 + $0x60] sm:$0xff]
      %v250 = vld [vmem:[%s226 + $0x68] sm:$0xff]
      %v251 = vld [vmem:[%s226 + $0x70] sm:$0xff]
      %v252 = vld [vmem:[%s226 + $0x78] sm:$0xff]
      %v253 = vld [vmem:[%s226 + $0x80] sm:$0xff]
      %v254 = vld [vmem:[%s226 + $0x88] sm:$0xff]
      %v255 = vld [vmem:[%s226 + $0x90] sm:$0xff]
      %v256 = vld [vmem:[%s226 + $0x98] sm:$0xff]
      %v257 = vld [vmem:[%s226 + $0xa0] sm:$0xff]
      %v258 = vld [vmem:[%s226 + $0xa8] sm:$0xff]
      %v259 = vld [vmem:[%s226 + $0xb0] sm:$0xff]
      %v260 = vld [vmem:[%s226 + $0xb8] sm:$0xff]
      %v261 = vld [vmem:[%s226 + $0xc0] sm:$0xff]
      %v262 = vld [vmem:[%s226 + $0xc8] sm:$0xff]
      %v263 = vld [vmem:[%s226 + $0xd0] sm:$0xff]
      %v264 = vld [vmem:[%s226 + $0xd8] sm:$0xff]
      %v265 = vld [vmem:[%s226 + $0xe0] sm:$0xff]
      %v266 = vld [vmem:[%s226 + $0xe8] sm:$0xff]
      %v267 = vld [vmem:[%s226 + $0xf0] sm:$0xff]
      %v268 = vld [vmem:[%s226 + $0xf8] sm:$0xff]
      %v269 = vld [vmem:[%s2] sm:$0x1]
      %v271 = vlaneseq
      %v272 = vshrl.u32 %v271, 7
      %v273 = vsub.s32 0, %v272
      %v274 = vrot.slane %v269, %v273
      %v276 = vmul.f32 %v237, %v274
      %v277 = vmul.f32 %v238, %v274
      %v278 = vmul.f32 %v239, %v274
      %v279 = vmul.f32 %v240, %v274
      %v280 = vmul.f32 %v241, %v274
      %v281 = vmul.f32 %v242, %v274
      %v282 = vmul.f32 %v243, %v274
      %v283 = vmul.f32 %v244, %v274
      %v284 = vmul.f32 %v245, %v274
      %v285 = vmul.f32 %v246, %v274
      %v286 = vmul.f32 %v247, %v274
      %v287 = vmul.f32 %v248, %v274
      %v288 = vmul.f32 %v249, %v274
      %v289 = vmul.f32 %v250, %v274
      %v290 = vmul.f32 %v251, %v274
      %v291 = vmul.f32 %v252, %v274
      %v292 = vmul.f32 %v253, %v274
      %v293 = vmul.f32 %v254, %v274
      %v294 = vmul.f32 %v255, %v274
      %v295 = vmul.f32 %v256, %v274
      %v296 = vmul.f32 %v257, %v274
      %v297 = vmul.f32 %v258, %v274
      %v298 = vmul.f32 %v259, %v274
      %v299 = vmul.f32 %v260, %v274
      %v300 = vmul.f32 %v261, %v274
      %v301 = vmul.f32 %v262, %v274
      %v302 = vmul.f32 %v263, %v274
      %v303 = vmul.f32 %v264, %v274
      %v304 = vmul.f32 %v265, %v274
      %v305 = vmul.f32 %v266, %v274
      %v306 = vmul.f32 %v267, %v274
      %v307 = vmul.f32 %v268, %v274
      %v308 = vld [vmem:[%s3] sm:$0x1]
      %v310 = vlaneseq
      %v311 = vshrl.u32 %v310, 7
      %v312 = vsub.s32 0, %v311
      %v313 = vrot.slane %v308, %v312
      %v315 = vadd.f32 %v276, %v313
      %v316 = vadd.f32 %v277, %v313
      %v317 = vadd.f32 %v278, %v313
      %v318 = vadd.f32 %v279, %v313
      %v319 = vadd.f32 %v280, %v313
      %v320 = vadd.f32 %v281, %v313
      %v321 = vadd.f32 %v282, %v313
      %v322 = vadd.f32 %v283, %v313
      %v323 = vadd.f32 %v284, %v313
      %v324 = vadd.f32 %v285, %v313
      %v325 = vadd.f32 %v286, %v313
      %v326 = vadd.f32 %v287, %v313
      %v327 = vadd.f32 %v288, %v313
      %v328 = vadd.f32 %v289, %v313
      %v329 = vadd.f32 %v290, %v313
      %v330 = vadd.f32 %v291, %v313
      %v331 = vadd.f32 %v292, %v313
      %v332 = vadd.f32 %v293, %v313
      %v333 = vadd.f32 %v294, %v313
      %v334 = vadd.f32 %v295, %v313
      %v335 = vadd.f32 %v296, %v313
      %v336 = vadd.f32 %v297, %v313
      %v337 = vadd.f32 %v298, %v313
      %v338 = vadd.f32 %v299, %v313
      %v339 = vadd.f32 %v300, %v313
      %v340 = vadd.f32 %v301, %v313
      %v341 = vadd.f32 %v302, %v313
      %v342 = vadd.f32 %v303, %v313
      %v343 = vadd.f32 %v304, %v313
      %v344 = vadd.f32 %v305, %v313
      %v345 = vadd.f32 %v306, %v313
      %v346 = vadd.f32 %v307, %v313
      %v347 = vmax.f32 %v315, 0.0
      %v348 = vmax.f32 %v316, 0.0
      %v349 = vmax.f32 %v317, 0.0
      %v350 = vmax.f32 %v318, 0.0
      %v351 = vmax.f32 %v319, 0.0
      %v352 = vmax.f32 %v320, 0.0
      %v353 = vmax.f32 %v321, 0.0
      %v354 = vmax.f32 %v322, 0.0
      %v355 = vmax.f32 %v323, 0.0
      %v356 = vmax.f32 %v324, 0.0
      %v357 = vmax.f32 %v325, 0.0
      %v358 = vmax.f32 %v326, 0.0
      %v359 = vmax.f32 %v327, 0.0
      %v360 = vmax.f32 %v328, 0.0
      %v361 = vmax.f32 %v329, 0.0
      %v362 = vmax.f32 %v330, 0.0
      %v363 = vmax.f32 %v331, 0.0
      %v364 = vmax.f32 %v332, 0.0
      %v365 = vmax.f32 %v333, 0.0
      %v366 = vmax.f32 %v334, 0.0
      %v367 = vmax.f32 %v335, 0.0
      %v368 = vmax.f32 %v336, 0.0
      %v369 = vmax.f32 %v337, 0.0
      %v370 = vmax.f32 %v338, 0.0
      %v371 = vmax.f32 %v339, 0.0
      %v372 = vmax.f32 %v340, 0.0
      %v373 = vmax.f32 %v341, 0.0
      %v374 = vmax.f32 %v342, 0.0
      %v375 = vmax.f32 %v343, 0.0
      %v376 = vmax.f32 %v344, 0.0
      %v377 = vmax.f32 %v345, 0.0
      %v378 = vmax.f32 %v346, 0.0
      %vm379 = vcmask 27648
      %380 = vst.msk [vmem:[#allocation2] sm:$0xf] %vm379, 0
      %381 = vst.msk [vmem:[#allocation2 + $0x4] sm:$0xf] %vm379, 0
      %vm382 = vcmask 24576
      %383 = vst.msk [vmem:[#allocation2 + $0x8] sm:$0x1] %vm382, 0
      %s384 = scalar_lea.vmem [#allocation2], 204
      %385 = vst.msk [vmem:[%s384] sm:$0xf] %vm379, 0
      %386 = vst.msk [vmem:[%s384 + $0x4] sm:$0xf] %vm379, 0
      %387 = vst.msk [vmem:[%s384 + $0x8] sm:$0x1] %vm382, 0
      %vm388 = vcmask 24576
      %vm389 = vsmask.f32 256
      %vm390 = vmand %vm388, %vm389
      %v391 = vld [vmem:[#allocation2] sm:$0x1]
      %v392 = vsel %vm390, 0, %v391
      %393 = vst [vmem:[#allocation2] sm:$0x1] %v392
      %v394 = vld [vmem:[#allocation2 + $0xc] sm:$0x1]
      %v395 = vsel %vm390, 0, %v394
      %396 = vst [vmem:[#allocation2 + $0xc] sm:$0x1] %v395
      %v397 = vld [vmem:[#allocation2 + $0x18] sm:$0x1]
      %v398 = vsel %vm390, 0, %v397
      %399 = vst [vmem:[#allocation2 + $0x18] sm:$0x1] %v398
      %v400 = vld [vmem:[#allocation2 + $0x24] sm:$0x1]
      %v401 = vsel %vm390, 0, %v400
      %402 = vst [vmem:[#allocation2 + $0x24] sm:$0x1] %v401
      %v403 = vld [vmem:[#allocation2 + $0x30] sm:$0x1]
      %v404 = vsel %vm390, 0, %v403
      %405 = vst [vmem:[#allocation2 + $0x30] sm:$0x1] %v404
      %v406 = vld [vmem:[#allocation2 + $0x3c] sm:$0x1]
      %v407 = vsel %vm390, 0, %v406
      %408 = vst [vmem:[#allocation2 + $0x3c] sm:$0x1] %v407
      %v409 = vld [vmem:[#allocation2 + $0x48] sm:$0x1]
      %v410 = vsel %vm390, 0, %v409
      %411 = vst [vmem:[#allocation2 + $0x48] sm:$0x1] %v410
      %v412 = vld [vmem:[#allocation2 + $0x54] sm:$0x1]
      %v413 = vsel %vm390, 0, %v412
      %414 = vst [vmem:[#allocation2 + $0x54] sm:$0x1] %v413
      %v415 = vld [vmem:[#allocation2 + $0x60] sm:$0x1]
      %v416 = vsel %vm390, 0, %v415
      %417 = vst [vmem:[#allocation2 + $0x60] sm:$0x1] %v416
      %v418 = vld [vmem:[#allocation2 + $0x6c] sm:$0x1]
      %v419 = vsel %vm390, 0, %v418
      %420 = vst [vmem:[#allocation2 + $0x6c] sm:$0x1] %v419
      %v421 = vld [vmem:[#allocation2 + $0x78] sm:$0x1]
      %v422 = vsel %vm390, 0, %v421
      %423 = vst [vmem:[#allocation2 + $0x78] sm:$0x1] %v422
      %v424 = vld [vmem:[#allocation2 + $0x84] sm:$0x1]
      %v425 = vsel %vm390, 0, %v424
      %426 = vst [vmem:[#allocation2 + $0x84] sm:$0x1] %v425
      %v427 = vld [vmem:[#allocation2 + $0x90] sm:$0x1]
      %v428 = vsel %vm390, 0, %v427
      %429 = vst [vmem:[#allocation2 + $0x90] sm:$0x1] %v428
      %v430 = vld [vmem:[#allocation2 + $0x9c] sm:$0x1]
      %v431 = vsel %vm390, 0, %v430
      %432 = vst [vmem:[#allocation2 + $0x9c] sm:$0x1] %v431
      %v433 = vld [vmem:[#allocation2 + $0xa8] sm:$0x1]
      %v434 = vsel %vm390, 0, %v433
      %435 = vst [vmem:[#allocation2 + $0xa8] sm:$0x1] %v434
      %v436 = vld [vmem:[#allocation2 + $0xb4] sm:$0x1]
      %v437 = vsel %vm390, 0, %v436
      %438 = vst [vmem:[#allocation2 + $0xb4] sm:$0x1] %v437
      %v439 = vld [vmem:[#allocation2 + $0xc0] sm:$0x1]
      %v440 = vsel %vm390, 0, %v439
      %441 = vst [vmem:[#allocation2 + $0xc0] sm:$0x1] %v440
      %v442 = vld [vmem:[#allocation2 + $0xcc] sm:$0x1]
      %v443 = vsel %vm390, 0, %v442
      %444 = vst [vmem:[#allocation2 + $0xcc] sm:$0x1] %v443
      %vm445 = vsmask.f32 7938
      %vm446 = vmand %vm388, %vm445
      %v447 = vld [vmem:[#allocation2 + $0x8] sm:$0x1]
      %v448 = vsel %vm446, 0, %v447
      %449 = vst [vmem:[#allocation2 + $0x8] sm:$0x1] %v448
      %v450 = vld [vmem:[#allocation2 + $0x14] sm:$0x1]
      %v451 = vsel %vm446, 0, %v450
      %452 = vst [vmem:[#allocation2 + $0x14] sm:$0x1] %v451
      %v453 = vld [vmem:[#allocation2 + $0x20] sm:$0x1]
      %v454 = vsel %vm446, 0, %v453
      %455 = vst [vmem:[#allocation2 + $0x20] sm:$0x1] %v454
      %v456 = vld [vmem:[#allocation2 + $0x2c] sm:$0x1]
      %v457 = vsel %vm446, 0, %v456
      %458 = vst [vmem:[#allocation2 + $0x2c] sm:$0x1] %v457
      %v459 = vld [vmem:[#allocation2 + $0x38] sm:$0x1]
      %v460 = vsel %vm446, 0, %v459
      %461 = vst [vmem:[#allocation2 + $0x38] sm:$0x1] %v460
      %v462 = vld [vmem:[#allocation2 + $0x44] sm:$0x1]
      %v463 = vsel %vm446, 0, %v462
      %464 = vst [vmem:[#allocation2 + $0x44] sm:$0x1] %v463
      %v465 = vld [vmem:[#allocation2 + $0x50] sm:$0x1]
      %v466 = vsel %vm446, 0, %v465
      %467 = vst [vmem:[#allocation2 + $0x50] sm:$0x1] %v466
      %v468 = vld [vmem:[#allocation2 + $0x5c] sm:$0x1]
      %v469 = vsel %vm446, 0, %v468
      %470 = vst [vmem:[#allocation2 + $0x5c] sm:$0x1] %v469
      %v471 = vld [vmem:[#allocation2 + $0x68] sm:$0x1]
      %v472 = vsel %vm446, 0, %v471
      %473 = vst [vmem:[#allocation2 + $0x68] sm:$0x1] %v472
      %v474 = vld [vmem:[#allocation2 + $0x74] sm:$0x1]
      %v475 = vsel %vm446, 0, %v474
      %476 = vst [vmem:[#allocation2 + $0x74] sm:$0x1] %v475
      %v477 = vld [vmem:[#allocation2 + $0x80] sm:$0x1]
      %v478 = vsel %vm446, 0, %v477
      %479 = vst [vmem:[#allocation2 + $0x80] sm:$0x1] %v478
      %v480 = vld [vmem:[#allocation2 + $0x8c] sm:$0x1]
      %v481 = vsel %vm446, 0, %v480
      %482 = vst [vmem:[#allocation2 + $0x8c] sm:$0x1] %v481
      %v483 = vld [vmem:[#allocation2 + $0x98] sm:$0x1]
      %v484 = vsel %vm446, 0, %v483
      %485 = vst [vmem:[#allocation2 + $0x98] sm:$0x1] %v484
      %v486 = vld [vmem:[#allocation2 + $0xa4] sm:$0x1]
      %v487 = vsel %vm446, 0, %v486
      %488 = vst [vmem:[#allocation2 + $0xa4] sm:$0x1] %v487
      %v489 = vld [vmem:[#allocation2 + $0xb0] sm:$0x1]
      %v490 = vsel %vm446, 0, %v489
      %491 = vst [vmem:[#allocation2 + $0xb0] sm:$0x1] %v490
      %v492 = vld [vmem:[#allocation2 + $0xbc] sm:$0x1]
      %v493 = vsel %vm446, 0, %v492
      %494 = vst [vmem:[#allocation2 + $0xbc] sm:$0x1] %v493
      %v495 = vld [vmem:[#allocation2 + $0xc8] sm:$0x1]
      %v496 = vsel %vm446, 0, %v495
      %497 = vst [vmem:[#allocation2 + $0xc8] sm:$0x1] %v496
      %v498 = vld [vmem:[#allocation2 + $0xd4] sm:$0x1]
      %v499 = vsel %vm446, 0, %v498
      %500 = vst [vmem:[#allocation2 + $0xd4] sm:$0x1] %v499
      %v501 = vpack.c.bf16 %v348, %v347
      %v502 = vpack.c.bf16 %v350, %v349
      %v503 = vpack.c.bf16 %v352, %v351
      %v504 = vpack.c.bf16 %v354, %v353
      %v505 = vpack.c.bf16 %v356, %v355
      %v506 = vpack.c.bf16 %v358, %v357
      %v507 = vpack.c.bf16 %v360, %v359
      %v508 = vpack.c.bf16 %v362, %v361
      %v509 = vpack.c.bf16 %v364, %v363
      %v510 = vpack.c.bf16 %v366, %v365
      %v511 = vpack.c.bf16 %v368, %v367
      %v512 = vpack.c.bf16 %v370, %v369
      %v513 = vpack.c.bf16 %v372, %v371
      %v514 = vpack.c.bf16 %v374, %v373
      %v515 = vpack.c.bf16 %v376, %v375
      %v516 = vpack.c.bf16 %v378, %v377
      %v533 = vunpack.c.l.b16 %v501
      %v534 = vunpack.c.h.b16 %v501
      %v535 = vunpack.c.l.b16 %v502
      %v536 = vunpack.c.h.b16 %v502
      %v537 = vunpack.c.l.b16 %v503
      %v538 = vunpack.c.h.b16 %v503
      %v539 = vunpack.c.l.b16 %v504
      %v540 = vunpack.c.h.b16 %v504
      %v541 = vunpack.c.l.b16 %v505
      %v542 = vunpack.c.h.b16 %v505
      %v543 = vunpack.c.l.b16 %v506
      %v544 = vunpack.c.h.b16 %v506
      %v545 = vunpack.c.l.b16 %v507
      %v546 = vunpack.c.h.b16 %v507
      %v547 = vunpack.c.l.b16 %v508
      %v548 = vunpack.c.h.b16 %v508
      %v549 = vunpack.c.l.b16 %v509
      %v550 = vunpack.c.h.b16 %v509
      %v551 = vunpack.c.l.b16 %v510
      %v552 = vunpack.c.h.b16 %v510
      %v553 = vunpack.c.l.b16 %v511
      %v554 = vunpack.c.h.b16 %v511
      %v555 = vunpack.c.l.b16 %v512
      %v556 = vunpack.c.h.b16 %v512
      %v557 = vunpack.c.l.b16 %v513
      %v558 = vunpack.c.h.b16 %v513
      %v559 = vunpack.c.l.b16 %v514
      %v560 = vunpack.c.h.b16 %v514
      %v561 = vunpack.c.l.b16 %v515
      %v562 = vunpack.c.h.b16 %v515
      %v563 = vunpack.c.l.b16 %v516
      %v564 = vunpack.c.h.b16 %v516
      %v565 = vpack.c.b16 %v533, %v533
      %v566 = vpack.c.b16 %v534, %v534
      %v567 = vpack.c.b16 %v535, %v535
      %v568 = vpack.c.b16 %v536, %v536
      %v569 = vpack.c.b16 %v537, %v537
      %v570 = vpack.c.b16 %v538, %v538
      %v571 = vpack.c.b16 %v539, %v539
      %v572 = vpack.c.b16 %v540, %v540
      %v573 = vpack.c.b16 %v541, %v541
      %v574 = vpack.c.b16 %v542, %v542
      %v575 = vpack.c.b16 %v543, %v543
      %v576 = vpack.c.b16 %v544, %v544
      %v577 = vpack.c.b16 %v545, %v545
      %v578 = vpack.c.b16 %v546, %v546
      %v579 = vpack.c.b16 %v547, %v547
      %v580 = vpack.c.b16 %v548, %v548
      %v581 = vpack.c.b16 %v549, %v549
      %v582 = vpack.c.b16 %v550, %v550
      %v583 = vpack.c.b16 %v551, %v551
      %v584 = vpack.c.b16 %v552, %v552
      %v585 = vpack.c.b16 %v553, %v553
      %v586 = vpack.c.b16 %v554, %v554
      %v587 = vpack.c.b16 %v555, %v555
      %v588 = vpack.c.b16 %v556, %v556
      %v589 = vpack.c.b16 %v557, %v557
      %v590 = vpack.c.b16 %v558, %v558
      %v591 = vpack.c.b16 %v559, %v559
      %v592 = vpack.c.b16 %v560, %v560
      %v593 = vpack.c.b16 %v561, %v561
      %v594 = vpack.c.b16 %v562, %v562
      %v595 = vpack.c.b16 %v563, %v563
      %v596 = vpack.c.b16 %v564, %v564
      %vm597 = vsmask.f32 4368
      %vm598 = vmor %vm389, %vm597
      %v600 = vshrl.u32 %v565, 16
      %v602 = vrot.slane %v600, 7
      %v603 = vshll.u32 %v565, 16
      %v605 = vor.u32 %v602, %v603
      %v606 = vrot.slane %v602, 4
      %v608 = vshrl.u32 %v566, 16
      %v610 = vrot.slane %v608, 7
      %v611 = vshll.u32 %v566, 16
      %v613 = vor.u32 %v610, %v611
      %v614 = vsel %vm598, %v606, %v613
      %v615 = vrot.slane %v610, 4
      %v617 = vshrl.u32 %v567, 16
      %v619 = vrot.slane %v617, 7
      %v620 = vshll.u32 %v567, 16
      %v622 = vor.u32 %v619, %v620
      %v623 = vrot.slane %v619, 4
      %v625 = vshrl.u32 %v568, 16
      %v627 = vrot.slane %v625, 7
      %v628 = vshll.u32 %v568, 16
      %v630 = vor.u32 %v627, %v628
      %v631 = vsel %vm598, %v623, %v630
      %v632 = vrot.slane %v627, 4
      %v634 = vshrl.u32 %v569, 16
      %v636 = vrot.slane %v634, 7
      %v637 = vshll.u32 %v569, 16
      %v639 = vor.u32 %v636, %v637
      %v640 = vrot.slane %v636, 4
      %v642 = vshrl.u32 %v570, 16
      %v644 = vrot.slane %v642, 7
      %v645 = vshll.u32 %v570, 16
      %v647 = vor.u32 %v644, %v645
      %v648 = vsel %vm598, %v640, %v647
      %v649 = vrot.slane %v644, 4
      %v651 = vshrl.u32 %v571, 16
      %v653 = vrot.slane %v651, 7
      %v654 = vshll.u32 %v571, 16
      %v656 = vor.u32 %v653, %v654
      %v657 = vrot.slane %v653, 4
      %v659 = vshrl.u32 %v572, 16
      %v661 = vrot.slane %v659, 7
      %v662 = vshll.u32 %v572, 16
      %v664 = vor.u32 %v661, %v662
      %v665 = vsel %vm598, %v657, %v664
      %v666 = vrot.slane %v661, 4
      %v668 = vshrl.u32 %v573, 16
      %v670 = vrot.slane %v668, 7
      %v671 = vshll.u32 %v573, 16
      %v673 = vor.u32 %v670, %v671
      %v674 = vrot.slane %v670, 4
      %v676 = vshrl.u32 %v574, 16
      %v678 = vrot.slane %v676, 7
      %v679 = vshll.u32 %v574, 16
      %v681 = vor.u32 %v678, %v679
      %v682 = vsel %vm598, %v674, %v681
      %v683 = vrot.slane %v678, 4
      %v685 = vshrl.u32 %v575, 16
      %v687 = vrot.slane %v685, 7
      %v688 = vshll.u32 %v575, 16
      %v690 = vor.u32 %v687, %v688
      %v691 = vrot.slane %v687, 4
      %v693 = vshrl.u32 %v576, 16
      %v695 = vrot.slane %v693, 7
      %v696 = vshll.u32 %v576, 16
      %v698 = vor.u32 %v695, %v696
      %v699 = vsel %vm598, %v691, %v698
      %v700 = vrot.slane %v695, 4
      %v702 = vshrl.u32 %v577, 16
      %v704 = vrot.slane %v702, 7
      %v705 = vshll.u32 %v577, 16
      %v707 = vor.u32 %v704, %v705
      %v708 = vrot.slane %v704, 4
      %v710 = vshrl.u32 %v578, 16
      %v712 = vrot.slane %v710, 7
      %v713 = vshll.u32 %v578, 16
      %v715 = vor.u32 %v712, %v713
      %v716 = vsel %vm598, %v708, %v715
      %v717 = vrot.slane %v712, 4
      %v719 = vshrl.u32 %v579, 16
      %v721 = vrot.slane %v719, 7
      %v722 = vshll.u32 %v579, 16
      %v724 = vor.u32 %v721, %v722
      %v725 = vrot.slane %v721, 4
      %v727 = vshrl.u32 %v580, 16
      %v729 = vrot.slane %v727, 7
      %v730 = vshll.u32 %v580, 16
      %v732 = vor.u32 %v729, %v730
      %v733 = vsel %vm598, %v725, %v732
      %v734 = vrot.slane %v729, 4
      %v736 = vshrl.u32 %v581, 16
      %v738 = vrot.slane %v736, 7
      %v739 = vshll.u32 %v581, 16
      %v741 = vor.u32 %v738, %v739
      %v742 = vrot.slane %v738, 4
      %v744 = vshrl.u32 %v582, 16
      %v746 = vrot.slane %v744, 7
      %v747 = vshll.u32 %v582, 16
      %v749 = vor.u32 %v746, %v747
      %v750 = vsel %vm598, %v742, %v749
      %v751 = vrot.slane %v746, 4
      %v753 = vshrl.u32 %v583, 16
      %v755 = vrot.slane %v753, 7
      %v756 = vshll.u32 %v583, 16
      %v758 = vor.u32 %v755, %v756
      %v759 = vrot.slane %v755, 4
      %v761 = vshrl.u32 %v584, 16
      %v763 = vrot.slane %v761, 7
      %v764 = vshll.u32 %v584, 16
      %v766 = vor.u32 %v763, %v764
      %v767 = vsel %vm598, %v759, %v766
      %v768 = vrot.slane %v763, 4
      %v770 = vshrl.u32 %v585, 16
      %v772 = vrot.slane %v770, 7
      %v773 = vshll.u32 %v585, 16
      %v775 = vor.u32 %v772, %v773
      %v776 = vrot.slane %v772, 4
      %v778 = vshrl.u32 %v586, 16
      %v780 = vrot.slane %v778, 7
      %v781 = vshll.u32 %v586, 16
      %v783 = vor.u32 %v780, %v781
      %v784 = vsel %vm598, %v776, %v783
      %v785 = vrot.slane %v780, 4
      %v787 = vshrl.u32 %v587, 16
      %v789 = vrot.slane %v787, 7
      %v790 = vshll.u32 %v587, 16
      %v792 = vor.u32 %v789, %v790
      %v793 = vrot.slane %v789, 4
      %v795 = vshrl.u32 %v588, 16
      %v797 = vrot.slane %v795, 7
      %v798 = vshll.u32 %v588, 16
      %v800 = vor.u32 %v797, %v798
      %v801 = vsel %vm598, %v793, %v800
      %v802 = vrot.slane %v797, 4
      %v804 = vshrl.u32 %v589, 16
      %v806 = vrot.slane %v804, 7
      %v807 = vshll.u32 %v589, 16
      %v809 = vor.u32 %v806, %v807
      %v810 = vrot.slane %v806, 4
      %v812 = vshrl.u32 %v590, 16
      %v814 = vrot.slane %v812, 7
      %v815 = vshll.u32 %v590, 16
      %v817 = vor.u32 %v814, %v815
      %v818 = vsel %vm598, %v810, %v817
      %v819 = vrot.slane %v814, 4
      %v821 = vshrl.u32 %v591, 16
      %v823 = vrot.slane %v821, 7
      %v824 = vshll.u32 %v591, 16
      %v826 = vor.u32 %v823, %v824
      %v827 = vrot.slane %v823, 4
      %v829 = vshrl.u32 %v592, 16
      %v831 = vrot.slane %v829, 7
      %v832 = vshll.u32 %v592, 16
      %v834 = vor.u32 %v831, %v832
      %v835 = vsel %vm598, %v827, %v834
      %v836 = vrot.slane %v831, 4
      %v838 = vshrl.u32 %v593, 16
      %v840 = vrot.slane %v838, 7
      %v841 = vshll.u32 %v593, 16
      %v843 = vor.u32 %v840, %v841
      %v844 = vrot.slane %v840, 4
      %v846 = vshrl.u32 %v594, 16
      %v848 = vrot.slane %v846, 7
      %v849 = vshll.u32 %v594, 16
      %v851 = vor.u32 %v848, %v849
      %v852 = vsel %vm598, %v844, %v851
      %v853 = vrot.slane %v848, 4
      %v855 = vshrl.u32 %v595, 16
      %v857 = vrot.slane %v855, 7
      %v858 = vshll.u32 %v595, 16
      %v860 = vor.u32 %v857, %v858
      %v861 = vrot.slane %v857, 4
      %v863 = vshrl.u32 %v596, 16
      %v865 = vrot.slane %v863, 7
      %v866 = vshll.u32 %v596, 16
      %v868 = vor.u32 %v865, %v866
      %v869 = vsel %vm598, %v861, %v868
      %v870 = vrot.slane %v865, 4
      %s919 = scalar_lea.vmem [#allocation2], 12
      %vm920 = vcmask 27648
      %vm921 = vmand %vm920, %vm445
      %v922 = vld [vmem:[%s919] sm:$0xf]
      %v923 = vsel %vm921, %v605, %v922
      %924 = vst [vmem:[%s919] sm:$0xf] %v923
      %925 = vst.msk [vmem:[%s919 + $0x4] sm:$0xf] %vm379, %v614
      %v926 = vld [vmem:[%s919 + $0x8] sm:$0x1]
      %v927 = vsel %vm390, %v615, %v926
      %928 = vst [vmem:[%s919 + $0x8] sm:$0x1] %v927
      %v929 = vld [vmem:[%s919 + $0xc] sm:$0xf]
      %v930 = vsel %vm921, %v622, %v929
      %931 = vst [vmem:[%s919 + $0xc] sm:$0xf] %v930
      %932 = vst.msk [vmem:[%s919 + $0x10] sm:$0xf] %vm379, %v631
      %v933 = vld [vmem:[%s919 + $0x14] sm:$0x1]
      %v934 = vsel %vm390, %v632, %v933
      %935 = vst [vmem:[%s919 + $0x14] sm:$0x1] %v934
      %v936 = vld [vmem:[%s919 + $0x18] sm:$0xf]
      %v937 = vsel %vm921, %v639, %v936
      %938 = vst [vmem:[%s919 + $0x18] sm:$0xf] %v937
      %939 = vst.msk [vmem:[%s919 + $0x1c] sm:$0xf] %vm379, %v648
      %v940 = vld [vmem:[%s919 + $0x20] sm:$0x1]
      %v941 = vsel %vm390, %v649, %v940
      %942 = vst [vmem:[%s919 + $0x20] sm:$0x1] %v941
      %v943 = vld [vmem:[%s919 + $0x24] sm:$0xf]
      %v944 = vsel %vm921, %v656, %v943
      %945 = vst [vmem:[%s919 + $0x24] sm:$0xf] %v944
      %946 = vst.msk [vmem:[%s919 + $0x28] sm:$0xf] %vm379, %v665
      %v947 = vld [vmem:[%s919 + $0x2c] sm:$0x1]
      %v948 = vsel %vm390, %v666, %v947
      %949 = vst [vmem:[%s919 + $0x2c] sm:$0x1] %v948
      %v950 = vld [vmem:[%s919 + $0x30] sm:$0xf]
      %v951 = vsel %vm921, %v673, %v950
      %952 = vst [vmem:[%s919 + $0x30] sm:$0xf] %v951
      %953 = vst.msk [vmem:[%s919 + $0x34] sm:$0xf] %vm379, %v682
      %v954 = vld [vmem:[%s919 + $0x38] sm:$0x1]
      %v955 = vsel %vm390, %v683, %v954
      %956 = vst [vmem:[%s919 + $0x38] sm:$0x1] %v955
      %v957 = vld [vmem:[%s919 + $0x3c] sm:$0xf]
      %v958 = vsel %vm921, %v690, %v957
      %959 = vst [vmem:[%s919 + $0x3c] sm:$0xf] %v958
      %960 = vst.msk [vmem:[%s919 + $0x40] sm:$0xf] %vm379, %v699
      %v961 = vld [vmem:[%s919 + $0x44] sm:$0x1]
      %v962 = vsel %vm390, %v700, %v961
      %963 = vst [vmem:[%s919 + $0x44] sm:$0x1] %v962
      %v964 = vld [vmem:[%s919 + $0x48] sm:$0xf]
      %v965 = vsel %vm921, %v707, %v964
      %966 = vst [vmem:[%s919 + $0x48] sm:$0xf] %v965
      %967 = vst.msk [vmem:[%s919 + $0x4c] sm:$0xf] %vm379, %v716
      %v968 = vld [vmem:[%s919 + $0x50] sm:$0x1]
      %v969 = vsel %vm390, %v717, %v968
      %970 = vst [vmem:[%s919 + $0x50] sm:$0x1] %v969
      %v971 = vld [vmem:[%s919 + $0x54] sm:$0xf]
      %v972 = vsel %vm921, %v724, %v971
      %973 = vst [vmem:[%s919 + $0x54] sm:$0xf] %v972
      %974 = vst.msk [vmem:[%s919 + $0x58] sm:$0xf] %vm379, %v733
      %v975 = vld [vmem:[%s919 + $0x5c] sm:$0x1]
      %v976 = vsel %vm390, %v734, %v975
      %977 = vst [vmem:[%s919 + $0x5c] sm:$0x1] %v976
      %v978 = vld [vmem:[%s919 + $0x60] sm:$0xf]
      %v979 = vsel %vm921, %v741, %v978
      %980 = vst [vmem:[%s919 + $0x60] sm:$0xf] %v979
      %981 = vst.msk [vmem:[%s919 + $0x64] sm:$0xf] %vm379, %v750
      %v982 = vld [vmem:[%s919 + $0x68] sm:$0x1]
      %v983 = vsel %vm390, %v751, %v982
      %984 = vst [vmem:[%s919 + $0x68] sm:$0x1] %v983
      %v985 = vld [vmem:[%s919 + $0x6c] sm:$0xf]
      %v986 = vsel %vm921, %v758, %v985
      %987 = vst [vmem:[%s919 + $0x6c] sm:$0xf] %v986
      %988 = vst.msk [vmem:[%s919 + $0x70] sm:$0xf] %vm379, %v767
      %v989 = vld [vmem:[%s919 + $0x74] sm:$0x1]
      %v990 = vsel %vm390, %v768, %v989
      %991 = vst [vmem:[%s919 + $0x74] sm:$0x1] %v990
      %v992 = vld [vmem:[%s919 + $0x78] sm:$0xf]
      %v993 = vsel %vm921, %v775, %v992
      %994 = vst [vmem:[%s919 + $0x78] sm:$0xf] %v993
      %995 = vst.msk [vmem:[%s919 + $0x7c] sm:$0xf] %vm379, %v784
      %v996 = vld [vmem:[%s919 + $0x80] sm:$0x1]
      %v997 = vsel %vm390, %v785, %v996
      %998 = vst [vmem:[%s919 + $0x80] sm:$0x1] %v997
      %v999 = vld [vmem:[%s919 + $0x84] sm:$0xf]
      %v1000 = vsel %vm921, %v792, %v999
      %1001 = vst [vmem:[%s919 + $0x84] sm:$0xf] %v1000
      %1002 = vst.msk [vmem:[%s919 + $0x88] sm:$0xf] %vm379, %v801
      %v1003 = vld [vmem:[%s919 + $0x8c] sm:$0x1]
      %v1004 = vsel %vm390, %v802, %v1003
      %1005 = vst [vmem:[%s919 + $0x8c] sm:$0x1] %v1004
      %v1006 = vld [vmem:[%s919 + $0x90] sm:$0xf]
      %v1007 = vsel %vm921, %v809, %v1006
      %1008 = vst [vmem:[%s919 + $0x90] sm:$0xf] %v1007
      %1009 = vst.msk [vmem:[%s919 + $0x94] sm:$0xf] %vm379, %v818
      %v1010 = vld [vmem:[%s919 + $0x98] sm:$0x1]
      %v1011 = vsel %vm390, %v819, %v1010
      %1012 = vst [vmem:[%s919 + $0x98] sm:$0x1] %v1011
      %v1013 = vld [vmem:[%s919 + $0x9c] sm:$0xf]
      %v1014 = vsel %vm921, %v826, %v1013
      %1015 = vst [vmem:[%s919 + $0x9c] sm:$0xf] %v1014
      %1016 = vst.msk [vmem:[%s919 + $0xa0] sm:$0xf] %vm379, %v835
      %v1017 = vld [vmem:[%s919 + $0xa4] sm:$0x1]
      %v1018 = vsel %vm390, %v836, %v1017
      %1019 = vst [vmem:[%s919 + $0xa4] sm:$0x1] %v1018
      %v1020 = vld [vmem:[%s919 + $0xa8] sm:$0xf]
      %v1021 = vsel %vm921, %v843, %v1020
      %1022 = vst [vmem:[%s919 + $0xa8] sm:$0xf] %v1021
      %1023 = vst.msk [vmem:[%s919 + $0xac] sm:$0xf] %vm379, %v852
      %v1024 = vld [vmem:[%s919 + $0xb0] sm:$0x1]
      %v1025 = vsel %vm390, %v853, %v1024
      %1026 = vst [vmem:[%s919 + $0xb0] sm:$0x1] %v1025
      %v1027 = vld [vmem:[%s919 + $0xb4] sm:$0xf]
      %v1028 = vsel %vm921, %v860, %v1027
      %1029 = vst [vmem:[%s919 + $0xb4] sm:$0xf] %v1028
      %1030 = vst.msk [vmem:[%s919 + $0xb8] sm:$0xf] %vm379, %v869
      %v1031 = vld [vmem:[%s919 + $0xbc] sm:$0x1]
      %v1032 = vsel %vm390, %v870, %v1031
      %1033 = vst [vmem:[%s919 + $0xbc] sm:$0x1] %v1032
      %v1034 = vld [vmem:[#allocation2] sm:$0xf]
      %v1035 = vld [vmem:[#allocation2 + $0x4] sm:$0xf]
      %v1036 = vld [vmem:[#allocation2 + $0xc] sm:$0xf]
      %v1037 = vld [vmem:[#allocation2 + $0x10] sm:$0xf]
      %v1038 = vld [vmem:[#allocation2 + $0x18] sm:$0xf]
      %v1039 = vld [vmem:[#allocation2 + $0x1c] sm:$0xf]
      %v1040 = vld [vmem:[#allocation2 + $0x24] sm:$0xf]
      %v1041 = vld [vmem:[#allocation2 + $0x28] sm:$0xf]
      %v1042 = vld [vmem:[#allocation2 + $0x30] sm:$0xf]
      %v1043 = vld [vmem:[#allocation2 + $0x34] sm:$0xf]
      %v1044 = vld [vmem:[#allocation2 + $0x3c] sm:$0xf]
      %v1045 = vld [vmem:[#allocation2 + $0x40] sm:$0xf]
      %v1046 = vld [vmem:[#allocation2 + $0x48] sm:$0xf]
      %v1047 = vld [vmem:[#allocation2 + $0x4c] sm:$0xf]
      %v1048 = vld [vmem:[#allocation2 + $0x54] sm:$0xf]
      %v1049 = vld [vmem:[#allocation2 + $0x58] sm:$0xf]
      %v1050 = vld [vmem:[#allocation2 + $0x60] sm:$0xf]
      %v1051 = vld [vmem:[#allocation2 + $0x64] sm:$0xf]
      %v1052 = vld [vmem:[#allocation2 + $0x6c] sm:$0xf]
      %v1053 = vld [vmem:[#allocation2 + $0x70] sm:$0xf]
      %v1054 = vld [vmem:[#allocation2 + $0x78] sm:$0xf]
      %v1055 = vld [vmem:[#allocation2 + $0x7c] sm:$0xf]
      %v1056 = vld [vmem:[#allocation2 + $0x84] sm:$0xf]
      %v1057 = vld [vmem:[#allocation2 + $0x88] sm:$0xf]
      %v1058 = vld [vmem:[#allocation2 + $0x90] sm:$0xf]
      %v1059 = vld [vmem:[#allocation2 + $0x94] sm:$0xf]
      %v1060 = vld [vmem:[#allocation2 + $0x9c] sm:$0xf]
      %v1061 = vld [vmem:[#allocation2 + $0xa0] sm:$0xf]
      %v1062 = vld [vmem:[#allocation2 + $0xa8] sm:$0xf]
      %v1063 = vld [vmem:[#allocation2 + $0xac] sm:$0xf]
      %v1064 = vld [vmem:[#allocation2 + $0xb4] sm:$0xf]
      %v1065 = vld [vmem:[#allocation2 + $0xb8] sm:$0xf]
      %v1098 = vunpack.c.l.b16 %v1034
      %v1099 = vunpack.c.l.b16 %v1035
      %v1100 = vunpack.c.l.b16 %v1036
      %v1101 = vunpack.c.l.b16 %v1037
      %v1102 = vunpack.c.l.b16 %v1038
      %v1103 = vunpack.c.l.b16 %v1039
      %v1104 = vunpack.c.l.b16 %v1040
      %v1105 = vunpack.c.l.b16 %v1041
      %v1106 = vunpack.c.l.b16 %v1042
      %v1107 = vunpack.c.l.b16 %v1043
      %v1108 = vunpack.c.l.b16 %v1044
      %v1109 = vunpack.c.l.b16 %v1045
      %v1110 = vunpack.c.l.b16 %v1046
      %v1111 = vunpack.c.l.b16 %v1047
      %v1112 = vunpack.c.l.b16 %v1048
      %v1113 = vunpack.c.l.b16 %v1049
      %v1114 = vunpack.c.l.b16 %v1050
      %v1115 = vunpack.c.l.b16 %v1051
      %v1116 = vunpack.c.l.b16 %v1052
      %v1117 = vunpack.c.l.b16 %v1053
      %v1118 = vunpack.c.l.b16 %v1054
      %v1119 = vunpack.c.l.b16 %v1055
      %v1120 = vunpack.c.l.b16 %v1056
      %v1121 = vunpack.c.l.b16 %v1057
      %v1122 = vunpack.c.l.b16 %v1058
      %v1123 = vunpack.c.l.b16 %v1059
      %v1124 = vunpack.c.l.b16 %v1060
      %v1125 = vunpack.c.l.b16 %v1061
      %v1126 = vunpack.c.l.b16 %v1062
      %v1127 = vunpack.c.l.b16 %v1063
      %v1128 = vunpack.c.l.b16 %v1064
      %v1129 = vunpack.c.l.b16 %v1065
      %v1130 = vpack.c.b16 %v1099, %v1098
      %v1131 = vpack.c.b16 %v1101, %v1100
      %v1132 = vpack.c.b16 %v1103, %v1102
      %v1133 = vpack.c.b16 %v1105, %v1104
      %v1134 = vpack.c.b16 %v1107, %v1106
      %v1135 = vpack.c.b16 %v1109, %v1108
      %v1136 = vpack.c.b16 %v1111, %v1110
      %v1137 = vpack.c.b16 %v1113, %v1112
      %v1138 = vpack.c.b16 %v1115, %v1114
      %v1139 = vpack.c.b16 %v1117, %v1116
      %v1140 = vpack.c.b16 %v1119, %v1118
      %v1141 = vpack.c.b16 %v1121, %v1120
      %v1142 = vpack.c.b16 %v1123, %v1122
      %v1143 = vpack.c.b16 %v1125, %v1124
      %v1144 = vpack.c.b16 %v1127, %v1126
      %v1145 = vpack.c.b16 %v1129, %v1128
      %vm1162 = vcmask 31744
      %1163 = vst.msk [vmem:[#allocation3] sm:$0xff] %vm1162, %v1130
      %1164 = vst.msk [vmem:[#allocation3 + $0x8] sm:$0xff] %vm1162, %v1131
      %1165 = vst.msk [vmem:[#allocation3 + $0x10] sm:$0xff] %vm1162, %v1132
      %1166 = vst.msk [vmem:[#allocation3 + $0x18] sm:$0xff] %vm1162, %v1133
      %1167 = vst.msk [vmem:[#allocation3 + $0x20] sm:$0xff] %vm1162, %v1134
      %1168 = vst.msk [vmem:[#allocation3 + $0x28] sm:$0xff] %vm1162, %v1135
      %1169 = vst.msk [vmem:[#allocation3 + $0x30] sm:$0xff] %vm1162, %v1136
      %1170 = vst.msk [vmem:[#allocation3 + $0x38] sm:$0xff] %vm1162, %v1137
      %1171 = vst.msk [vmem:[#allocation3 + $0x40] sm:$0xff] %vm1162, %v1138
      %1172 = vst.msk [vmem:[#allocation3 + $0x48] sm:$0xff] %vm1162, %v1139
      %1173 = vst.msk [vmem:[#allocation3 + $0x50] sm:$0xff] %vm1162, %v1140
      %1174 = vst.msk [vmem:[#allocation3 + $0x58] sm:$0xff] %vm1162, %v1141
      %1175 = vst.msk [vmem:[#allocation3 + $0x60] sm:$0xff] %vm1162, %v1142
      %1176 = vst.msk [vmem:[#allocation3 + $0x68] sm:$0xff] %vm1162, %v1143
      %1177 = vst.msk [vmem:[#allocation3 + $0x70] sm:$0xff] %vm1162, %v1144
      %1178 = vst.msk [vmem:[#allocation3 + $0x78] sm:$0xff] %vm1162, %v1145
      %v1179 = vld [vmem:[#allocation2] sm:$0xf]
      %v1180 = vld [vmem:[#allocation2 + $0x4] sm:$0xf]
      %v1181 = vld [vmem:[#allocation2 + $0x8] sm:$0x1]
      %v1182 = vld [vmem:[#allocation2 + $0xc] sm:$0xf]
      %v1183 = vld [vmem:[#allocation2 + $0x10] sm:$0xf]
      %v1184 = vld [vmem:[#allocation2 + $0x14] sm:$0x1]
      %v1185 = vld [vmem:[#allocation2 + $0x18] sm:$0xf]
      %v1186 = vld [vmem:[#allocation2 + $0x1c] sm:$0xf]
      %v1187 = vld [vmem:[#allocation2 + $0x20] sm:$0x1]
      %v1188 = vld [vmem:[#allocation2 + $0x24] sm:$0xf]
      %v1189 = vld [vmem:[#allocation2 + $0x28] sm:$0xf]
      %v1190 = vld [vmem:[#allocation2 + $0x2c] sm:$0x1]
      %v1191 = vld [vmem:[#allocation2 + $0x30] sm:$0xf]
      %v1192 = vld [vmem:[#allocation2 + $0x34] sm:$0xf]
      %v1193 = vld [vmem:[#allocation2 + $0x38] sm:$0x1]
      %v1194 = vld [vmem:[#allocation2 + $0x3c] sm:$0xf]
      %v1195 = vld [vmem:[#allocation2 + $0x40] sm:$0xf]
      %v1196 = vld [vmem:[#allocation2 + $0x44] sm:$0x1]
      %v1197 = vld [vmem:[#allocation2 + $0x48] sm:$0xf]
      %v1198 = vld [vmem:[#allocation2 + $0x4c] sm:$0xf]
      %v1199 = vld [vmem:[#allocation2 + $0x50] sm:$0x1]
      %v1200 = vld [vmem:[#allocation2 + $0x54] sm:$0xf]
      %v1201 = vld [vmem:[#allocation2 + $0x58] sm:$0xf]
      %v1202 = vld [vmem:[#allocation2 + $0x5c] sm:$0x1]
      %v1203 = vld [vmem:[#allocation2 + $0x60] sm:$0xf]
      %v1204 = vld [vmem:[#allocation2 + $0x64] sm:$0xf]
      %v1205 = vld [vmem:[#allocation2 + $0x68] sm:$0x1]
      %v1206 = vld [vmem:[#allocation2 + $0x6c] sm:$0xf]
      %v1207 = vld [vmem:[#allocation2 + $0x70] sm:$0xf]
      %v1208 = vld [vmem:[#allocation2 + $0x74] sm:$0x1]
      %v1209 = vld [vmem:[#allocation2 + $0x78] sm:$0xf]
      %v1210 = vld [vmem:[#allocation2 + $0x7c] sm:$0xf]
      %v1211 = vld [vmem:[#allocation2 + $0x80] sm:$0x1]
      %v1212 = vld [vmem:[#allocation2 + $0x84] sm:$0xf]
      %v1213 = vld [vmem:[#allocation2 + $0x88] sm:$0xf]
      %v1214 = vld [vmem:[#allocation2 + $0x8c] sm:$0x1]
      %v1215 = vld [vmem:[#allocation2 + $0x90] sm:$0xf]
      %v1216 = vld [vmem:[#allocation2 + $0x94] sm:$0xf]
      %v1217 = vld [vmem:[#allocation2 + $0x98] sm:$0x1]
      %v1218 = vld [vmem:[#allocation2 + $0x9c] sm:$0xf]
      %v1219 = vld [vmem:[#allocation2 + $0xa0] sm:$0xf]
      %v1220 = vld [vmem:[#allocation2 + $0xa4] sm:$0x1]
      %v1221 = vld [vmem:[#allocation2 + $0xa8] sm:$0xf]
      %v1222 = vld [vmem:[#allocation2 + $0xac] sm:$0xf]
      %v1223 = vld [vmem:[#allocation2 + $0xb0] sm:$0x1]
      %v1224 = vld [vmem:[#allocation2 + $0xb4] sm:$0xf]
      %v1225 = vld [vmem:[#allocation2 + $0xb8] sm:$0xf]
      %v1226 = vld [vmem:[#allocation2 + $0xbc] sm:$0x1]
      %vm1227 = vsmask.f32 3328
      %vm1228 = vsmask.f32 7440
      %vm1229 = vmor %vm1227, %vm1228
      %v1231 = vshrl.u32 %v1179, 16
      %v1233 = vrot.slane %v1231, 4
      %v1234 = vshll.u32 %v1179, 16
      %v1236 = vrot.slane %v1234, 5
      %v1237 = vor.u32 %v1233, %v1236
      %v1238 = vrot.slane %v1237, 4
      %v1240 = vshll.u32 %v1180, 16
      %v1242 = vrot.slane %v1240, 5
      %v1243 = vsel %vm1229, %v1238, %v1242
      %v1244 = vshrl.u32 %v1180, 16
      %v1246 = vrot.slane %v1244, 4
      %v1247 = vor.u32 %v1246, %v1242
      %v1248 = vrot.slane %v1247, 4
      %v1250 = vshll.u32 %v1181, 16
      %v1252 = vrot.slane %v1250, 5
      %v1253 = vsel %vm1229, %v1248, %v1252
      %v1255 = vshrl.u32 %v1182, 16
      %v1257 = vrot.slane %v1255, 4
      %v1258 = vshll.u32 %v1182, 16
      %v1260 = vrot.slane %v1258, 5
      %v1261 = vor.u32 %v1257, %v1260
      %v1262 = vrot.slane %v1261, 4
      %v1264 = vshll.u32 %v1183, 16
      %v1266 = vrot.slane %v1264, 5
      %v1267 = vsel %vm1229, %v1262, %v1266
      %v1268 = vshrl.u32 %v1183, 16
      %v1270 = vrot.slane %v1268, 4
      %v1271 = vor.u32 %v1270, %v1266
      %v1272 = vrot.slane %v1271, 4
      %v1274 = vshll.u32 %v1184, 16
      %v1276 = vrot.slane %v1274, 5
      %v1277 = vsel %vm1229, %v1272, %v1276
      %v1279 = vshrl.u32 %v1185, 16
      %v1281 = vrot.slane %v1279, 4
      %v1282 = vshll.u32 %v1185, 16
      %v1284 = vrot.slane %v1282, 5
      %v1285 = vor.u32 %v1281, %v1284
      %v1286 = vrot.slane %v1285, 4
      %v1288 = vshll.u32 %v1186, 16
      %v1290 = vrot.slane %v1288, 5
      %v1291 = vsel %vm1229, %v1286, %v1290
      %v1292 = vshrl.u32 %v1186, 16
      %v1294 = vrot.slane %v1292, 4
      %v1295 = vor.u32 %v1294, %v1290
      %v1296 = vrot.slane %v1295, 4
      %v1298 = vshll.u32 %v1187, 16
      %v1300 = vrot.slane %v1298, 5
      %v1301 = vsel %vm1229, %v1296, %v1300
      %v1303 = vshrl.u32 %v1188, 16
      %v1305 = vrot.slane %v1303, 4
      %v1306 = vshll.u32 %v1188, 16
      %v1308 = vrot.slane %v1306, 5
      %v1309 = vor.u32 %v1305, %v1308
      %v1310 = vrot.slane %v1309, 4
      %v1312 = vshll.u32 %v1189, 16
      %v1314 = vrot.slane %v1312, 5
      %v1315 = vsel %vm1229, %v1310, %v1314
      %v1316 = vshrl.u32 %v1189, 16
      %v1318 = vrot.slane %v1316, 4
      %v1319 = vor.u32 %v1318, %v1314
      %v1320 = vrot.slane %v1319, 4
      %v1322 = vshll.u32 %v1190, 16
      %v1324 = vrot.slane %v1322, 5
      %v1325 = vsel %vm1229, %v1320, %v1324
      %v1327 = vshrl.u32 %v1191, 16
      %v1329 = vrot.slane %v1327, 4
      %v1330 = vshll.u32 %v1191, 16
      %v1332 = vrot.slane %v1330, 5
      %v1333 = vor.u32 %v1329, %v1332
      %v1334 = vrot.slane %v1333, 4
      %v1336 = vshll.u32 %v1192, 16
      %v1338 = vrot.slane %v1336, 5
      %v1339 = vsel %vm1229, %v1334, %v1338
      %v1340 = vshrl.u32 %v1192, 16
      %v1342 = vrot.slane %v1340, 4
      %v1343 = vor.u32 %v1342, %v1338
      %v1344 = vrot.slane %v1343, 4
      %v1346 = vshll.u32 %v1193, 16
      %v1348 = vrot.slane %v1346, 5
      %v1349 = vsel %vm1229, %v1344, %v1348
      %v1351 = vshrl.u32 %v1194, 16
      %v1353 = vrot.slane %v1351, 4
      %v1354 = vshll.u32 %v1194, 16
      %v1356 = vrot.slane %v1354, 5
      %v1357 = vor.u32 %v1353, %v1356
      %v1358 = vrot.slane %v1357, 4
      %v1360 = vshll.u32 %v1195, 16
      %v1362 = vrot.slane %v1360, 5
      %v1363 = vsel %vm1229, %v1358, %v1362
      %v1364 = vshrl.u32 %v1195, 16
      %v1366 = vrot.slane %v1364, 4
      %v1367 = vor.u32 %v1366, %v1362
      %v1368 = vrot.slane %v1367, 4
      %v1370 = vshll.u32 %v1196, 16
      %v1372 = vrot.slane %v1370, 5
      %v1373 = vsel %vm1229, %v1368, %v1372
      %v1375 = vshrl.u32 %v1197, 16
      %v1377 = vrot.slane %v1375, 4
      %v1378 = vshll.u32 %v1197, 16
      %v1380 = vrot.slane %v1378, 5
      %v1381 = vor.u32 %v1377, %v1380
      %v1382 = vrot.slane %v1381, 4
      %v1384 = vshll.u32 %v1198, 16
      %v1386 = vrot.slane %v1384, 5
      %v1387 = vsel %vm1229, %v1382, %v1386
      %v1388 = vshrl.u32 %v1198, 16
      %v1390 = vrot.slane %v1388, 4
      %v1391 = vor.u32 %v1390, %v1386
      %v1392 = vrot.slane %v1391, 4
      %v1394 = vshll.u32 %v1199, 16
      %v1396 = vrot.slane %v1394, 5
      %v1397 = vsel %vm1229, %v1392, %v1396
      %v1399 = vshrl.u32 %v1200, 16
      %v1401 = vrot.slane %v1399, 4
      %v1402 = vshll.u32 %v1200, 16
      %v1404 = vrot.slane %v1402, 5
      %v1405 = vor.u32 %v1401, %v1404
      %v1406 = vrot.slane %v1405, 4
      %v1408 = vshll.u32 %v1201, 16
      %v1410 = vrot.slane %v1408, 5
      %v1411 = vsel %vm1229, %v1406, %v1410
      %v1412 = vshrl.u32 %v1201, 16
      %v1414 = vrot.slane %v1412, 4
      %v1415 = vor.u32 %v1414, %v1410
      %v1416 = vrot.slane %v1415, 4
      %v1418 = vshll.u32 %v1202, 16
      %v1420 = vrot.slane %v1418, 5
      %v1421 = vsel %vm1229, %v1416, %v1420
      %v1423 = vshrl.u32 %v1203, 16
      %v1425 = vrot.slane %v1423, 4
      %v1426 = vshll.u32 %v1203, 16
      %v1428 = vrot.slane %v1426, 5
      %v1429 = vor.u32 %v1425, %v1428
      %v1430 = vrot.slane %v1429, 4
      %v1432 = vshll.u32 %v1204, 16
      %v1434 = vrot.slane %v1432, 5
      %v1435 = vsel %vm1229, %v1430, %v1434
      %v1436 = vshrl.u32 %v1204, 16
      %v1438 = vrot.slane %v1436, 4
      %v1439 = vor.u32 %v1438, %v1434
      %v1440 = vrot.slane %v1439, 4
      %v1442 = vshll.u32 %v1205, 16
      %v1444 = vrot.slane %v1442, 5
      %v1445 = vsel %vm1229, %v1440, %v1444
      %v1447 = vshrl.u32 %v1206, 16
      %v1449 = vrot.slane %v1447, 4
      %v1450 = vshll.u32 %v1206, 16
      %v1452 = vrot.slane %v1450, 5
      %v1453 = vor.u32 %v1449, %v1452
      %v1454 = vrot.slane %v1453, 4
      %v1456 = vshll.u32 %v1207, 16
      %v1458 = vrot.slane %v1456, 5
      %v1459 = vsel %vm1229, %v1454, %v1458
      %v1460 = vshrl.u32 %v1207, 16
      %v1462 = vrot.slane %v1460, 4
      %v1463 = vor.u32 %v1462, %v1458
      %v1464 = vrot.slane %v1463, 4
      %v1466 = vshll.u32 %v1208, 16
      %v1468 = vrot.slane %v1466, 5
      %v1469 = vsel %vm1229, %v1464, %v1468
      %v1471 = vshrl.u32 %v1209, 16
      %v1473 = vrot.slane %v1471, 4
      %v1474 = vshll.u32 %v1209, 16
      %v1476 = vrot.slane %v1474, 5
      %v1477 = vor.u32 %v1473, %v1476
      %v1478 = vrot.slane %v1477, 4
      %v1480 = vshll.u32 %v1210, 16
      %v1482 = vrot.slane %v1480, 5
      %v1483 = vsel %vm1229, %v1478, %v1482
      %v1484 = vshrl.u32 %v1210, 16
      %v1486 = vrot.slane %v1484, 4
      %v1487 = vor.u32 %v1486, %v1482
      %v1488 = vrot.slane %v1487, 4
      %v1490 = vshll.u32 %v1211, 16
      %v1492 = vrot.slane %v1490, 5
      %v1493 = vsel %vm1229, %v1488, %v1492
      %v1495 = vshrl.u32 %v1212, 16
      %v1497 = vrot.slane %v1495, 4
      %v1498 = vshll.u32 %v1212, 16
      %v1500 = vrot.slane %v1498, 5
      %v1501 = vor.u32 %v1497, %v1500
      %v1502 = vrot.slane %v1501, 4
      %v1504 = vshll.u32 %v1213, 16
      %v1506 = vrot.slane %v1504, 5
      %v1507 = vsel %vm1229, %v1502, %v1506
      %v1508 = vshrl.u32 %v1213, 16
      %v1510 = vrot.slane %v1508, 4
      %v1511 = vor.u32 %v1510, %v1506
      %v1512 = vrot.slane %v1511, 4
      %v1514 = vshll.u32 %v1214, 16
      %v1516 = vrot.slane %v1514, 5
      %v1517 = vsel %vm1229, %v1512, %v1516
      %v1519 = vshrl.u32 %v1215, 16
      %v1521 = vrot.slane %v1519, 4
      %v1522 = vshll.u32 %v1215, 16
      %v1524 = vrot.slane %v1522, 5
      %v1525 = vor.u32 %v1521, %v1524
      %v1526 = vrot.slane %v1525, 4
      %v1528 = vshll.u32 %v1216, 16
      %v1530 = vrot.slane %v1528, 5
      %v1531 = vsel %vm1229, %v1526, %v1530
      %v1532 = vshrl.u32 %v1216, 16
      %v1534 = vrot.slane %v1532, 4
      %v1535 = vor.u32 %v1534, %v1530
      %v1536 = vrot.slane %v1535, 4
      %v1538 = vshll.u32 %v1217, 16
      %v1540 = vrot.slane %v1538, 5
      %v1541 = vsel %vm1229, %v1536, %v1540
      %v1543 = vshrl.u32 %v1218, 16
      %v1545 = vrot.slane %v1543, 4
      %v1546 = vshll.u32 %v1218, 16
      %v1548 = vrot.slane %v1546, 5
      %v1549 = vor.u32 %v1545, %v1548
      %v1550 = vrot.slane %v1549, 4
      %v1552 = vshll.u32 %v1219, 16
      %v1554 = vrot.slane %v1552, 5
      %v1555 = vsel %vm1229, %v1550, %v1554
      %v1556 = vshrl.u32 %v1219, 16
      %v1558 = vrot.slane %v1556, 4
      %v1559 = vor.u32 %v1558, %v1554
      %v1560 = vrot.slane %v1559, 4
      %v1562 = vshll.u32 %v1220, 16
      %v1564 = vrot.slane %v1562, 5
      %v1565 = vsel %vm1229, %v1560, %v1564
      %v1567 = vshrl.u32 %v1221, 16
      %v1569 = vrot.slane %v1567, 4
      %v1570 = vshll.u32 %v1221, 16
      %v1572 = vrot.slane %v1570, 5
      %v1573 = vor.u32 %v1569, %v1572
      %v1574 = vrot.slane %v1573, 4
      %v1576 = vshll.u32 %v1222, 16
      %v1578 = vrot.slane %v1576, 5
      %v1579 = vsel %vm1229, %v1574, %v1578
      %v1580 = vshrl.u32 %v1222, 16
      %v1582 = vrot.slane %v1580, 4
      %v1583 = vor.u32 %v1582, %v1578
      %v1584 = vrot.slane %v1583, 4
      %v1586 = vshll.u32 %v1223, 16
      %v1588 = vrot.slane %v1586, 5
      %v1589 = vsel %vm1229, %v1584, %v1588
      %v1591 = vshrl.u32 %v1224, 16
      %v1593 = vrot.slane %v1591, 4
      %v1594 = vshll.u32 %v1224, 16
      %v1596 = vrot.slane %v1594, 5
      %v1597 = vor.u32 %v1593, %v1596
      %v1598 = vrot.slane %v1597, 4
      %v1600 = vshll.u32 %v1225, 16
      %v1602 = vrot.slane %v1600, 5
      %v1603 = vsel %vm1229, %v1598, %v1602
      %v1604 = vshrl.u32 %v1225, 16
      %v1606 = vrot.slane %v1604, 4
      %v1607 = vor.u32 %v1606, %v1602
      %v1608 = vrot.slane %v1607, 4
      %v1610 = vshll.u32 %v1226, 16
      %v1612 = vrot.slane %v1610, 5
      %v1613 = vsel %vm1229, %v1608, %v1612
      %v1614 = vunpack.c.l.b16 %v1243
      %v1615 = vunpack.c.l.b16 %v1253
      %v1616 = vunpack.c.l.b16 %v1267
      %v1617 = vunpack.c.l.b16 %v1277
      %v1618 = vunpack.c.l.b16 %v1291
      %v1619 = vunpack.c.l.b16 %v1301
      %v1620 = vunpack.c.l.b16 %v1315
      %v1621 = vunpack.c.l.b16 %v1325
      %v1622 = vunpack.c.l.b16 %v1339
      %v1623 = vunpack.c.l.b16 %v1349
      %v1624 = vunpack.c.l.b16 %v1363
      %v1625 = vunpack.c.l.b16 %v1373
      %v1626 = vunpack.c.l.b16 %v1387
      %v1627 = vunpack.c.l.b16 %v1397
      %v1628 = vunpack.c.l.b16 %v1411
      %v1629 = vunpack.c.l.b16 %v1421
      %v1630 = vunpack.c.l.b16 %v1435
      %v1631 = vunpack.c.l.b16 %v1445
      %v1632 = vunpack.c.l.b16 %v1459
      %v1633 = vunpack.c.l.b16 %v1469
      %v1634 = vunpack.c.l.b16 %v1483
      %v1635 = vunpack.c.l.b16 %v1493
      %v1636 = vunpack.c.l.b16 %v1507
      %v1637 = vunpack.c.l.b16 %v1517
      %v1638 = vunpack.c.l.b16 %v1531
      %v1639 = vunpack.c.l.b16 %v1541
      %v1640 = vunpack.c.l.b16 %v1555
      %v1641 = vunpack.c.l.b16 %v1565
      %v1642 = vunpack.c.l.b16 %v1579
      %v1643 = vunpack.c.l.b16 %v1589
      %v1644 = vunpack.c.l.b16 %v1603
      %v1645 = vunpack.c.l.b16 %v1613
      %v1646 = vpack.c.b16 %v1615, %v1614
      %v1647 = vpack.c.b16 %v1617, %v1616
      %v1648 = vpack.c.b16 %v1619, %v1618
      %v1649 = vpack.c.b16 %v1621, %v1620
      %v1650 = vpack.c.b16 %v1623, %v1622
      %v1651 = vpack.c.b16 %v1625, %v1624
      %v1652 = vpack.c.b16 %v1627, %v1626
      %v1653 = vpack.c.b16 %v1629, %v1628
      %v1654 = vpack.c.b16 %v1631, %v1630
      %v1655 = vpack.c.b16 %v1633, %v1632
      %v1656 = vpack.c.b16 %v1635, %v1634
      %v1657 = vpack.c.b16 %v1637, %v1636
      %v1658 = vpack.c.b16 %v1639, %v1638
      %v1659 = vpack.c.b16 %v1641, %v1640
      %v1660 = vpack.c.b16 %v1643, %v1642
      %v1661 = vpack.c.b16 %v1645, %v1644
      %1662 = vrot.lane.b32.xlu0 %v1646, 4
      %v1663 = vpop.permute.xlu0 %1662
      %1664 = vrot.lane.b32.xlu0 %v1647, 4
      %v1665 = vpop.permute.xlu0 %1664
      %1666 = vrot.lane.b32.xlu0 %v1648, 4
      %v1667 = vpop.permute.xlu0 %1666
      %1668 = vrot.lane.b32.xlu0 %v1649, 4
      %v1669 = vpop.permute.xlu0 %1668
      %1670 = vrot.lane.b32.xlu0 %v1650, 4
      %v1671 = vpop.permute.xlu0 %1670
      %1672 = vrot.lane.b32.xlu0 %v1651, 4
      %v1673 = vpop.permute.xlu0 %1672
      %1674 = vrot.lane.b32.xlu0 %v1652, 4
      %v1675 = vpop.permute.xlu0 %1674
      %1676 = vrot.lane.b32.xlu0 %v1653, 4
      %v1677 = vpop.permute.xlu0 %1676
      %1678 = vrot.lane.b32.xlu0 %v1654, 4
      %v1679 = vpop.permute.xlu0 %1678
      %1680 = vrot.lane.b32.xlu0 %v1655, 4
      %v1681 = vpop.permute.xlu0 %1680
      %1682 = vrot.lane.b32.xlu0 %v1656, 4
      %v1683 = vpop.permute.xlu0 %1682
      %1684 = vrot.lane.b32.xlu0 %v1657, 4
      %v1685 = vpop.permute.xlu0 %1684
      %1686 = vrot.lane.b32.xlu0 %v1658, 4
      %v1687 = vpop.permute.xlu0 %1686
      %1688 = vrot.lane.b32.xlu0 %v1659, 4
      %v1689 = vpop.permute.xlu0 %1688
      %1690 = vrot.lane.b32.xlu0 %v1660, 4
      %v1691 = vpop.permute.xlu0 %1690
      %1692 = vrot.lane.b32.xlu0 %v1661, 4
      %v1693 = vpop.permute.xlu0 %1692
      %vm1710 = vcmask 64544
      %1711 = vst.msk [vmem:[#allocation3] sm:$0xff] %vm1710, %v1663
      %1712 = vst.msk [vmem:[#allocation3 + $0x8] sm:$0xff] %vm1710, %v1665
      %1713 = vst.msk [vmem:[#allocation3 + $0x10] sm:$0xff] %vm1710, %v1667
      %1714 = vst.msk [vmem:[#allocation3 + $0x18] sm:$0xff] %vm1710, %v1669
      %1715 = vst.msk [vmem:[#allocation3 + $0x20] sm:$0xff] %vm1710, %v1671
      %1716 = vst.msk [vmem:[#allocation3 + $0x28] sm:$0xff] %vm1710, %v1673
      %1717 = vst.msk [vmem:[#allocation3 + $0x30] sm:$0xff] %vm1710, %v1675
      %1718 = vst.msk [vmem:[#allocation3 + $0x38] sm:$0xff] %vm1710, %v1677
      %1719 = vst.msk [vmem:[#allocation3 + $0x40] sm:$0xff] %vm1710, %v1679
      %1720 = vst.msk [vmem:[#allocation3 + $0x48] sm:$0xff] %vm1710, %v1681
      %1721 = vst.msk [vmem:[#allocation3 + $0x50] sm:$0xff] %vm1710, %v1683
      %1722 = vst.msk [vmem:[#allocation3 + $0x58] sm:$0xff] %vm1710, %v1685
      %1723 = vst.msk [vmem:[#allocation3 + $0x60] sm:$0xff] %vm1710, %v1687
      %1724 = vst.msk [vmem:[#allocation3 + $0x68] sm:$0xff] %vm1710, %v1689
      %1725 = vst.msk [vmem:[#allocation3 + $0x70] sm:$0xff] %vm1710, %v1691
      %1726 = vst.msk [vmem:[#allocation3 + $0x78] sm:$0xff] %vm1710, %v1693
      %v1727 = vld [vmem:[#allocation2] sm:$0xe]
      %v1728 = vld [vmem:[#allocation2 + $0x4] sm:$0xf]
      %v1729 = vld [vmem:[#allocation2 + $0x8] sm:$0x1]
      %v1730 = vld [vmem:[#allocation2 + $0xc] sm:$0xe]
      %v1731 = vld [vmem:[#allocation2 + $0x10] sm:$0xf]
      %v1732 = vld [vmem:[#allocation2 + $0x14] sm:$0x1]
      %v1733 = vld [vmem:[#allocation2 + $0x18] sm:$0xe]
      %v1734 = vld [vmem:[#allocation2 + $0x1c] sm:$0xf]
      %v1735 = vld [vmem:[#allocation2 + $0x20] sm:$0x1]
      %v1736 = vld [vmem:[#allocation2 + $0x24] sm:$0xe]
      %v1737 = vld [vmem:[#allocation2 + $0x28] sm:$0xf]
      %v1738 = vld [vmem:[#allocation2 + $0x2c] sm:$0x1]
      %v1739 = vld [vmem:[#allocation2 + $0x30] sm:$0xe]
      %v1740 = vld [vmem:[#allocation2 + $0x34] sm:$0xf]
      %v1741 = vld [vmem:[#allocation2 + $0x38] sm:$0x1]
      %v1742 = vld [vmem:[#allocation2 + $0x3c] sm:$0xe]
      %v1743 = vld [vmem:[#allocation2 + $0x40] sm:$0xf]
      %v1744 = vld [vmem:[#allocation2 + $0x44] sm:$0x1]
      %v1745 = vld [vmem:[#allocation2 + $0x48] sm:$0xe]
      %v1746 = vld [vmem:[#allocation2 + $0x4c] sm:$0xf]
      %v1747 = vld [vmem:[#allocation2 + $0x50] sm:$0x1]
      %v1748 = vld [vmem:[#allocation2 + $0x54] sm:$0xe]
      %v1749 = vld [vmem:[#allocation2 + $0x58] sm:$0xf]
      %v1750 = vld [vmem:[#allocation2 + $0x5c] sm:$0x1]
      %v1751 = vld [vmem:[#allocation2 + $0x60] sm:$0xe]
      %v1752 = vld [vmem:[#allocation2 + $0x64] sm:$0xf]
      %v1753 = vld [vmem:[#allocation2 + $0x68] sm:$0x1]
      %v1754 = vld [vmem:[#allocation2 + $0x6c] sm:$0xe]
      %v1755 = vld [vmem:[#allocation2 + $0x70] sm:$0xf]
      %v1756 = vld [vmem:[#allocation2 + $0x74] sm:$0x1]
      %v1757 = vld [vmem:[#allocation2 + $0x78] sm:$0xe]
      %v1758 = vld [vmem:[#allocation2 + $0x7c] sm:$0xf]
      %v1759 = vld [vmem:[#allocation2 + $0x80] sm:$0x1]
      %v1760 = vld [vmem:[#allocation2 + $0x84] sm:$0xe]
      %v1761 = vld [vmem:[#allocation2 + $0x88] sm:$0xf]
      %v1762 = vld [vmem:[#allocation2 + $0x8c] sm:$0x1]
      %v1763 = vld [vmem:[#allocation2 + $0x90] sm:$0xe]
      %v1764 = vld [vmem:[#allocation2 + $0x94] sm:$0xf]
      %v1765 = vld [vmem:[#allocation2 + $0x98] sm:$0x1]
      %v1766 = vld [vmem:[#allocation2 + $0x9c] sm:$0xe]
      %v1767 = vld [vmem:[#allocation2 + $0xa0] sm:$0xf]
      %v1768 = vld [vmem:[#allocation2 + $0xa4] sm:$0x1]
      %v1769 = vld [vmem:[#allocation2 + $0xa8] sm:$0xe]
      %v1770 = vld [vmem:[#allocation2 + $0xac] sm:$0xf]
      %v1771 = vld [vmem:[#allocation2 + $0xb0] sm:$0x1]
      %v1772 = vld [vmem:[#allocation2 + $0xb4] sm:$0xe]
      %v1773 = vld [vmem:[#allocation2 + $0xb8] sm:$0xf]
      %v1774 = vld [vmem:[#allocation2 + $0xbc] sm:$0x1]
      %vm1823 = vcmask 1042432
      %vm1824 = vcmask 1046532
      %vm1825 = vmor %vm1823, %vm1824
      %v1826 = vrot.slane %v1727, 5
      %v1827 = vrot.slane %v1826, 4
      %v1828 = vrot.slane %v1728, 5
      %v1829 = vsel %vm1825, %v1827, %v1828
      %v1830 = vrot.slane %v1828, 4
      %v1831 = vrot.slane %v1729, 5
      %v1832 = vsel %vm1825, %v1830, %v1831
      %v1833 = vrot.slane %v1730, 5
      %v1834 = vrot.slane %v1833, 4
      %v1835 = vrot.slane %v1731, 5
      %v1836 = vsel %vm1825, %v1834, %v1835
      %v1837 = vrot.slane %v1835, 4
      %v1838 = vrot.slane %v1732, 5
      %v1839 = vsel %vm1825, %v1837, %v1838
      %v1840 = vrot.slane %v1733, 5
      %v1841 = vrot.slane %v1840, 4
      %v1842 = vrot.slane %v1734, 5
      %v1843 = vsel %vm1825, %v1841, %v1842
      %v1844 = vrot.slane %v1842, 4
      %v1845 = vrot.slane %v1735, 5
      %v1846 = vsel %vm1825, %v1844, %v1845
      %v1847 = vrot.slane %v1736, 5
      %v1848 = vrot.slane %v1847, 4
      %v1849 = vrot.slane %v1737, 5
      %v1850 = vsel %vm1825, %v1848, %v1849
      %v1851 = vrot.slane %v1849, 4
      %v1852 = vrot.slane %v1738, 5
      %v1853 = vsel %vm1825, %v1851, %v1852
      %v1854 = vrot.slane %v1739, 5
      %v1855 = vrot.slane %v1854, 4
      %v1856 = vrot.slane %v1740, 5
      %v1857 = vsel %vm1825, %v1855, %v1856
      %v1858 = vrot.slane %v1856, 4
      %v1859 = vrot.slane %v1741, 5
      %v1860 = vsel %vm1825, %v1858, %v1859
      %v1861 = vrot.slane %v1742, 5
      %v1862 = vrot.slane %v1861, 4
      %v1863 = vrot.slane %v1743, 5
      %v1864 = vsel %vm1825, %v1862, %v1863
      %v1865 = vrot.slane %v1863, 4
      %v1866 = vrot.slane %v1744, 5
      %v1867 = vsel %vm1825, %v1865, %v1866
      %v1868 = vrot.slane %v1745, 5
      %v1869 = vrot.slane %v1868, 4
      %v1870 = vrot.slane %v1746, 5
      %v1871 = vsel %vm1825, %v1869, %v1870
      %v1872 = vrot.slane %v1870, 4
      %v1873 = vrot.slane %v1747, 5
      %v1874 = vsel %vm1825, %v1872, %v1873
      %v1875 = vrot.slane %v1748, 5
      %v1876 = vrot.slane %v1875, 4
      %v1877 = vrot.slane %v1749, 5
      %v1878 = vsel %vm1825, %v1876, %v1877
      %v1879 = vrot.slane %v1877, 4
      %v1880 = vrot.slane %v1750, 5
      %v1881 = vsel %vm1825, %v1879, %v1880
      %v1882 = vrot.slane %v1751, 5
      %v1883 = vrot.slane %v1882, 4
      %v1884 = vrot.slane %v1752, 5
      %v1885 = vsel %vm1825, %v1883, %v1884
      %v1886 = vrot.slane %v1884, 4
      %v1887 = vrot.slane %v1753, 5
      %v1888 = vsel %vm1825, %v1886, %v1887
      %v1889 = vrot.slane %v1754, 5
      %v1890 = vrot.slane %v1889, 4
      %v1891 = vrot.slane %v1755, 5
      %v1892 = vsel %vm1825, %v1890, %v1891
      %v1893 = vrot.slane %v1891, 4
      %v1894 = vrot.slane %v1756, 5
      %v1895 = vsel %vm1825, %v1893, %v1894
      %v1896 = vrot.slane %v1757, 5
      %v1897 = vrot.slane %v1896, 4
      %v1898 = vrot.slane %v1758, 5
      %v1899 = vsel %vm1825, %v1897, %v1898
      %v1900 = vrot.slane %v1898, 4
      %v1901 = vrot.slane %v1759, 5
      %v1902 = vsel %vm1825, %v1900, %v1901
      %v1903 = vrot.slane %v1760, 5
      %v1904 = vrot.slane %v1903, 4
      %v1905 = vrot.slane %v1761, 5
      %v1906 = vsel %vm1825, %v1904, %v1905
      %v1907 = vrot.slane %v1905, 4
      %v1908 = vrot.slane %v1762, 5
      %v1909 = vsel %vm1825, %v1907, %v1908
      %v1910 = vrot.slane %v1763, 5
      %v1911 = vrot.slane %v1910, 4
      %v1912 = vrot.slane %v1764, 5
      %v1913 = vsel %vm1825, %v1911, %v1912
      %v1914 = vrot.slane %v1912, 4
      %v1915 = vrot.slane %v1765, 5
      %v1916 = vsel %vm1825, %v1914, %v1915
      %v1917 = vrot.slane %v1766, 5
      %v1918 = vrot.slane %v1917, 4
      %v1919 = vrot.slane %v1767, 5
      %v1920 = vsel %vm1825, %v1918, %v1919
      %v1921 = vrot.slane %v1919, 4
      %v1922 = vrot.slane %v1768, 5
      %v1923 = vsel %vm1825, %v1921, %v1922
      %v1924 = vrot.slane %v1769, 5
      %v1925 = vrot.slane %v1924, 4
      %v1926 = vrot.slane %v1770, 5
      %v1927 = vsel %vm1825, %v1925, %v1926
      %v1928 = vrot.slane %v1926, 4
      %v1929 = vrot.slane %v1771, 5
      %v1930 = vsel %vm1825, %v1928, %v1929
      %v1931 = vrot.slane %v1772, 5
      %v1932 = vrot.slane %v1931, 4
      %v1933 = vrot.slane %v1773, 5
      %v1934 = vsel %vm1825, %v1932, %v1933
      %v1935 = vrot.slane %v1933, 4
      %v1936 = vrot.slane %v1774, 5
      %v1937 = vsel %vm1825, %v1935, %v1936
      %v1938 = vunpack.c.l.b16 %v1829
      %v1939 = vunpack.c.l.b16 %v1832
      %v1940 = vunpack.c.l.b16 %v1836
      %v1941 = vunpack.c.l.b16 %v1839
      %v1942 = vunpack.c.l.b16 %v1843
      %v1943 = vunpack.c.l.b16 %v1846
      %v1944 = vunpack.c.l.b16 %v1850
      %v1945 = vunpack.c.l.b16 %v1853
      %v1946 = vunpack.c.l.b16 %v1857
      %v1947 = vunpack.c.l.b16 %v1860
      %v1948 = vunpack.c.l.b16 %v1864
      %v1949 = vunpack.c.l.b16 %v1867
      %v1950 = vunpack.c.l.b16 %v1871
      %v1951 = vunpack.c.l.b16 %v1874
      %v1952 = vunpack.c.l.b16 %v1878
      %v1953 = vunpack.c.l.b16 %v1881
      %v1954 = vunpack.c.l.b16 %v1885
      %v1955 = vunpack.c.l.b16 %v1888
      %v1956 = vunpack.c.l.b16 %v1892
      %v1957 = vunpack.c.l.b16 %v1895
      %v1958 = vunpack.c.l.b16 %v1899
      %v1959 = vunpack.c.l.b16 %v1902
      %v1960 = vunpack.c.l.b16 %v1906
      %v1961 = vunpack.c.l.b16 %v1909
      %v1962 = vunpack.c.l.b16 %v1913
      %v1963 = vunpack.c.l.b16 %v1916
      %v1964 = vunpack.c.l.b16 %v1920
      %v1965 = vunpack.c.l.b16 %v1923
      %v1966 = vunpack.c.l.b16 %v1927
      %v1967 = vunpack.c.l.b16 %v1930
      %v1968 = vunpack.c.l.b16 %v1934
      %v1969 = vunpack.c.l.b16 %v1937
      %v1970 = vpack.c.b16 %v1939, %v1938
      %v1971 = vpack.c.b16 %v1941, %v1940
      %v1972 = vpack.c.b16 %v1943, %v1942
      %v1973 = vpack.c.b16 %v1945, %v1944
      %v1974 = vpack.c.b16 %v1947, %v1946
      %v1975 = vpack.c.b16 %v1949, %v1948
      %v1976 = vpack.c.b16 %v1951, %v1950
      %v1977 = vpack.c.b16 %v1953, %v1952
      %v1978 = vpack.c.b16 %v1955, %v1954
      %v1979 = vpack.c.b16 %v1957, %v1956
      %v1980 = vpack.c.b16 %v1959, %v1958
      %v1981 = vpack.c.b16 %v1961, %v1960
      %v1982 = vpack.c.b16 %v1963, %v1962
      %v1983 = vpack.c.b16 %v1965, %v1964
      %v1984 = vpack.c.b16 %v1967, %v1966
      %v1985 = vpack.c.b16 %v1969, %v1968
      %1986 = vrot.lane.b32.xlu0 %v1970, 8
      %v1987 = vpop.permute.xlu0 %1986
      %1988 = vrot.lane.b32.xlu0 %v1971, 8
      %v1989 = vpop.permute.xlu0 %1988
      %1990 = vrot.lane.b32.xlu0 %v1972, 8
      %v1991 = vpop.permute.xlu0 %1990
      %1992 = vrot.lane.b32.xlu0 %v1973, 8
      %v1993 = vpop.permute.xlu0 %1992
      %1994 = vrot.lane.b32.xlu0 %v1974, 8
      %v1995 = vpop.permute.xlu0 %1994
      %1996 = vrot.lane.b32.xlu0 %v1975, 8
      %v1997 = vpop.permute.xlu0 %1996
      %1998 = vrot.lane.b32.xlu0 %v1976, 8
      %v1999 = vpop.permute.xlu0 %1998
      %2000 = vrot.lane.b32.xlu0 %v1977, 8
      %v2001 = vpop.permute.xlu0 %2000
      %2002 = vrot.lane.b32.xlu0 %v1978, 8
      %v2003 = vpop.permute.xlu0 %2002
      %2004 = vrot.lane.b32.xlu0 %v1979, 8
      %v2005 = vpop.permute.xlu0 %2004
      %2006 = vrot.lane.b32.xlu0 %v1980, 8
      %v2007 = vpop.permute.xlu0 %2006
      %2008 = vrot.lane.b32.xlu0 %v1981, 8
      %v2009 = vpop.permute.xlu0 %2008
      %2010 = vrot.lane.b32.xlu0 %v1982, 8
      %v2011 = vpop.permute.xlu0 %2010
      %2012 = vrot.lane.b32.xlu0 %v1983, 8
      %v2013 = vpop.permute.xlu0 %2012
      %2014 = vrot.lane.b32.xlu0 %v1984, 8
      %v2015 = vpop.permute.xlu0 %2014
      %2016 = vrot.lane.b32.xlu0 %v1985, 8
      %v2017 = vpop.permute.xlu0 %2016
      %vm2034 = vcmask 97344
      %2035 = vst.msk [vmem:[#allocation3] sm:$0xff] %vm2034, %v1987
      %2036 = vst.msk [vmem:[#allocation3 + $0x8] sm:$0xff] %vm2034, %v1989
      %2037 = vst.msk [vmem:[#allocation3 + $0x10] sm:$0xff] %vm2034, %v1991
      %2038 = vst.msk [vmem:[#allocation3 + $0x18] sm:$0xff] %vm2034, %v1993
      %2039 = vst.msk [vmem:[#allocation3 + $0x20] sm:$0xff] %vm2034, %v1995
      %2040 = vst.msk [vmem:[#allocation3 + $0x28] sm:$0xff] %vm2034, %v1997
      %2041 = vst.msk [vmem:[#allocation3 + $0x30] sm:$0xff] %vm2034, %v1999
      %2042 = vst.msk [vmem:[#allocation3 + $0x38] sm:$0xff] %vm2034, %v2001
      %2043 = vst.msk [vmem:[#allocation3 + $0x40] sm:$0xff] %vm2034, %v2003
      %2044 = vst.msk [vmem:[#allocation3 + $0x48] sm:$0xff] %vm2034, %v2005
      %2045 = vst.msk [vmem:[#allocation3 + $0x50] sm:$0xff] %vm2034, %v2007
      %2046 = vst.msk [vmem:[#allocation3 + $0x58] sm:$0xff] %vm2034, %v2009
      %2047 = vst.msk [vmem:[#allocation3 + $0x60] sm:$0xff] %vm2034, %v2011
      %2048 = vst.msk [vmem:[#allocation3 + $0x68] sm:$0xff] %vm2034, %v2013
      %2049 = vst.msk [vmem:[#allocation3 + $0x70] sm:$0xff] %vm2034, %v2015
      %2050 = vst.msk [vmem:[#allocation3 + $0x78] sm:$0xff] %vm2034, %v2017
      %v2051 = vld [vmem:[%s919] sm:$0xf]
      %v2052 = vld [vmem:[%s919 + $0x4] sm:$0xf]
      %v2053 = vld [vmem:[%s919 + $0xc] sm:$0xf]
      %v2054 = vld [vmem:[%s919 + $0x10] sm:$0xf]
      %v2055 = vld [vmem:[%s919 + $0x18] sm:$0xf]
      %v2056 = vld [vmem:[%s919 + $0x1c] sm:$0xf]
      %v2057 = vld [vmem:[%s919 + $0x24] sm:$0xf]
      %v2058 = vld [vmem:[%s919 + $0x28] sm:$0xf]
      %v2059 = vld [vmem:[%s919 + $0x30] sm:$0xf]
      %v2060 = vld [vmem:[%s919 + $0x34] sm:$0xf]
      %v2061 = vld [vmem:[%s919 + $0x3c] sm:$0xf]
      %v2062 = vld [vmem:[%s919 + $0x40] sm:$0xf]
      %v2063 = vld [vmem:[%s919 + $0x48] sm:$0xf]
      %v2064 = vld [vmem:[%s919 + $0x4c] sm:$0xf]
      %v2065 = vld [vmem:[%s919 + $0x54] sm:$0xf]
      %v2066 = vld [vmem:[%s919 + $0x58] sm:$0xf]
      %v2067 = vld [vmem:[%s919 + $0x60] sm:$0xf]
      %v2068 = vld [vmem:[%s919 + $0x64] sm:$0xf]
      %v2069 = vld [vmem:[%s919 + $0x6c] sm:$0xf]
      %v2070 = vld [vmem:[%s919 + $0x70] sm:$0xf]
      %v2071 = vld [vmem:[%s919 + $0x78] sm:$0xf]
      %v2072 = vld [vmem:[%s919 + $0x7c] sm:$0xf]
      %v2073 = vld [vmem:[%s919 + $0x84] sm:$0xf]
      %v2074 = vld [vmem:[%s919 + $0x88] sm:$0xf]
      %v2075 = vld [vmem:[%s919 + $0x90] sm:$0xf]
      %v2076 = vld [vmem:[%s919 + $0x94] sm:$0xf]
      %v2077 = vld [vmem:[%s919 + $0x9c] sm:$0xf]
      %v2078 = vld [vmem:[%s919 + $0xa0] sm:$0xf]
      %v2079 = vld [vmem:[%s919 + $0xa8] sm:$0xf]
      %v2080 = vld [vmem:[%s919 + $0xac] sm:$0xf]
      %v2081 = vld [vmem:[%s919 + $0xb4] sm:$0xf]
      %v2082 = vld [vmem:[%s919 + $0xb8] sm:$0xf]
      %v2115 = vunpack.c.l.b16 %v2051
      %v2116 = vunpack.c.l.b16 %v2052
      %v2117 = vunpack.c.l.b16 %v2053
      %v2118 = vunpack.c.l.b16 %v2054
      %v2119 = vunpack.c.l.b16 %v2055
      %v2120 = vunpack.c.l.b16 %v2056
      %v2121 = vunpack.c.l.b16 %v2057
      %v2122 = vunpack.c.l.b16 %v2058
      %v2123 = vunpack.c.l.b16 %v2059
      %v2124 = vunpack.c.l.b16 %v2060
      %v2125 = vunpack.c.l.b16 %v2061
      %v2126 = vunpack.c.l.b16 %v2062
      %v2127 = vunpack.c.l.b16 %v2063
      %v2128 = vunpack.c.l.b16 %v2064
      %v2129 = vunpack.c.l.b16 %v2065
      %v2130 = vunpack.c.l.b16 %v2066
      %v2131 = vunpack.c.l.b16 %v2067
      %v2132 = vunpack.c.l.b16 %v2068
      %v2133 = vunpack.c.l.b16 %v2069
      %v2134 = vunpack.c.l.b16 %v2070
      %v2135 = vunpack.c.l.b16 %v2071
      %v2136 = vunpack.c.l.b16 %v2072
      %v2137 = vunpack.c.l.b16 %v2073
      %v2138 = vunpack.c.l.b16 %v2074
      %v2139 = vunpack.c.l.b16 %v2075
      %v2140 = vunpack.c.l.b16 %v2076
      %v2141 = vunpack.c.l.b16 %v2077
      %v2142 = vunpack.c.l.b16 %v2078
      %v2143 = vunpack.c.l.b16 %v2079
      %v2144 = vunpack.c.l.b16 %v2080
      %v2145 = vunpack.c.l.b16 %v2081
      %v2146 = vunpack.c.l.b16 %v2082
      %v2147 = vpack.c.b16 %v2116, %v2115
      %v2148 = vpack.c.b16 %v2118, %v2117
      %v2149 = vpack.c.b16 %v2120, %v2119
      %v2150 = vpack.c.b16 %v2122, %v2121
      %v2151 = vpack.c.b16 %v2124, %v2123
      %v2152 = vpack.c.b16 %v2126, %v2125
      %v2153 = vpack.c.b16 %v2128, %v2127
      %v2154 = vpack.c.b16 %v2130, %v2129
      %v2155 = vpack.c.b16 %v2132, %v2131
      %v2156 = vpack.c.b16 %v2134, %v2133
      %v2157 = vpack.c.b16 %v2136, %v2135
      %v2158 = vpack.c.b16 %v2138, %v2137
      %v2159 = vpack.c.b16 %v2140, %v2139
      %v2160 = vpack.c.b16 %v2142, %v2141
      %v2161 = vpack.c.b16 %v2144, %v2143
      %v2162 = vpack.c.b16 %v2146, %v2145
      %2163 = vrot.lane.b32.xlu0 %v2147, 12
      %v2164 = vpop.permute.xlu0 %2163
      %2165 = vrot.lane.b32.xlu0 %v2148, 12
      %v2166 = vpop.permute.xlu0 %2165
      %2167 = vrot.lane.b32.xlu0 %v2149, 12
      %v2168 = vpop.permute.xlu0 %2167
      %2169 = vrot.lane.b32.xlu0 %v2150, 12
      %v2170 = vpop.permute.xlu0 %2169
      %2171 = vrot.lane.b32.xlu0 %v2151, 12
      %v2172 = vpop.permute.xlu0 %2171
      %2173 = vrot.lane.b32.xlu0 %v2152, 12
      %v2174 = vpop.permute.xlu0 %2173
      %2175 = vrot.lane.b32.xlu0 %v2153, 12
      %v2176 = vpop.permute.xlu0 %2175
      %2177 = vrot.lane.b32.xlu0 %v2154, 12
      %v2178 = vpop.permute.xlu0 %2177
      %2179 = vrot.lane.b32.xlu0 %v2155, 12
      %v2180 = vpop.permute.xlu0 %2179
      %2181 = vrot.lane.b32.xlu0 %v2156, 12
      %v2182 = vpop.permute.xlu0 %2181
      %2183 = vrot.lane.b32.xlu0 %v2157, 12
      %v2184 = vpop.permute.xlu0 %2183
      %2185 = vrot.lane.b32.xlu0 %v2158, 12
      %v2186 = vpop.permute.xlu0 %2185
      %2187 = vrot.lane.b32.xlu0 %v2159, 12
      %v2188 = vpop.permute.xlu0 %2187
      %2189 = vrot.lane.b32.xlu0 %v2160, 12
      %v2190 = vpop.permute.xlu0 %2189
      %2191 = vrot.lane.b32.xlu0 %v2161, 12
      %v2192 = vpop.permute.xlu0 %2191
      %2193 = vrot.lane.b32.xlu0 %v2162, 12
      %v2194 = vpop.permute.xlu0 %2193
      %vm2211 = vcmask 130144
      %2212 = vst.msk [vmem:[#allocation3] sm:$0xff] %vm2211, %v2164
      %2213 = vst.msk [vmem:[#allocation3 + $0x8] sm:$0xff] %vm2211, %v2166
      %2214 = vst.msk [vmem:[#allocation3 + $0x10] sm:$0xff] %vm2211, %v2168
      %2215 = vst.msk [vmem:[#allocation3 + $0x18] sm:$0xff] %vm2211, %v2170
      %2216 = vst.msk [vmem:[#allocation3 + $0x20] sm:$0xff] %vm2211, %v2172
      %2217 = vst.msk [vmem:[#allocation3 + $0x28] sm:$0xff] %vm2211, %v2174
      %2218 = vst.msk [vmem:[#allocation3 + $0x30] sm:$0xff] %vm2211, %v2176
      %2219 = vst.msk [vmem:[#allocation3 + $0x38] sm:$0xff] %vm2211, %v2178
      %2220 = vst.msk [vmem:[#allocation3 + $0x40] sm:$0xff] %vm2211, %v2180
      %2221 = vst.msk [vmem:[#allocation3 + $0x48] sm:$0xff] %vm2211, %v2182
      %2222 = vst.msk [vmem:[#allocation3 + $0x50] sm:$0xff] %vm2211, %v2184
      %2223 = vst.msk [vmem:[#allocation3 + $0x58] sm:$0xff] %vm2211, %v2186
      %2224 = vst.msk [vmem:[#allocation3 + $0x60] sm:$0xff] %vm2211, %v2188
      %2225 = vst.msk [vmem:[#allocation3 + $0x68] sm:$0xff] %vm2211, %v2190
      %2226 = vst.msk [vmem:[#allocation3 + $0x70] sm:$0xff] %vm2211, %v2192
      %2227 = vst.msk [vmem:[#allocation3 + $0x78] sm:$0xff] %vm2211, %v2194
      %v2228 = vld [vmem:[%s919] sm:$0xf]
      %v2229 = vld [vmem:[%s919 + $0x4] sm:$0xf]
      %v2230 = vld [vmem:[%s919 + $0x8] sm:$0x1]
      %v2231 = vld [vmem:[%s919 + $0xc] sm:$0xf]
      %v2232 = vld [vmem:[%s919 + $0x10] sm:$0xf]
      %v2233 = vld [vmem:[%s919 + $0x14] sm:$0x1]
      %v2234 = vld [vmem:[%s919 + $0x18] sm:$0xf]
      %v2235 = vld [vmem:[%s919 + $0x1c] sm:$0xf]
      %v2236 = vld [vmem:[%s919 + $0x20] sm:$0x1]
      %v2237 = vld [vmem:[%s919 + $0x24] sm:$0xf]
      %v2238 = vld [vmem:[%s919 + $0x28] sm:$0xf]
      %v2239 = vld [vmem:[%s919 + $0x2c] sm:$0x1]
      %v2240 = vld [vmem:[%s919 + $0x30] sm:$0xf]
      %v2241 = vld [vmem:[%s919 + $0x34] sm:$0xf]
      %v2242 = vld [vmem:[%s919 + $0x38] sm:$0x1]
      %v2243 = vld [vmem:[%s919 + $0x3c] sm:$0xf]
      %v2244 = vld [vmem:[%s919 + $0x40] sm:$0xf]
      %v2245 = vld [vmem:[%s919 + $0x44] sm:$0x1]
      %v2246 = vld [vmem:[%s919 + $0x48] sm:$0xf]
      %v2247 = vld [vmem:[%s919 + $0x4c] sm:$0xf]
      %v2248 = vld [vmem:[%s919 + $0x50] sm:$0x1]
      %v2249 = vld [vmem:[%s919 + $0x54] sm:$0xf]
      %v2250 = vld [vmem:[%s919 + $0x58] sm:$0xf]
      %v2251 = vld [vmem:[%s919 + $0x5c] sm:$0x1]
      %v2252 = vld [vmem:[%s919 + $0x60] sm:$0xf]
      %v2253 = vld [vmem:[%s919 + $0x64] sm:$0xf]
      %v2254 = vld [vmem:[%s919 + $0x68] sm:$0x1]
      %v2255 = vld [vmem:[%s919 + $0x6c] sm:$0xf]
      %v2256 = vld [vmem:[%s919 + $0x70] sm:$0xf]
      %v2257 = vld [vmem:[%s919 + $0x74] sm:$0x1]
      %v2258 = vld [vmem:[%s919 + $0x78] sm:$0xf]
      %v2259 = vld [vmem:[%s919 + $0x7c] sm:$0xf]
      %v2260 = vld [vmem:[%s919 + $0x80] sm:$0x1]
      %v2261 = vld [vmem:[%s919 + $0x84] sm:$0xf]
      %v2262 = vld [vmem:[%s919 + $0x88] sm:$0xf]
      %v2263 = vld [vmem:[%s919 + $0x8c] sm:$0x1]
      %v2264 = vld [vmem:[%s919 + $0x90] sm:$0xf]
      %v2265 = vld [vmem:[%s919 + $0x94] sm:$0xf]
      %v2266 = vld [vmem:[%s919 + $0x98] sm:$0x1]
      %v2267 = vld [vmem:[%s919 + $0x9c] sm:$0xf]
      %v2268 = vld [vmem:[%s919 + $0xa0] sm:$0xf]
      %v2269 = vld [vmem:[%s919 + $0xa4] sm:$0x1]
      %v2270 = vld [vmem:[%s919 + $0xa8] sm:$0xf]
      %v2271 = vld [vmem:[%s919 + $0xac] sm:$0xf]
      %v2272 = vld [vmem:[%s919 + $0xb0] sm:$0x1]
      %v2273 = vld [vmem:[%s919 + $0xb4] sm:$0xf]
      %v2274 = vld [vmem:[%s919 + $0xb8] sm:$0xf]
      %v2275 = vld [vmem:[%s919 + $0xbc] sm:$0x1]
      %v2277 = vshrl.u32 %v2228, 16
      %v2279 = vrot.slane %v2277, 4
      %v2280 = vshll.u32 %v2228, 16
      %v2282 = vrot.slane %v2280, 5
      %v2283 = vor.u32 %v2279, %v2282
      %v2284 = vrot.slane %v2283, 4
      %v2286 = vshll.u32 %v2229, 16
      %v2288 = vrot.slane %v2286, 5
      %v2289 = vsel %vm1229, %v2284, %v2288
      %v2290 = vshrl.u32 %v2229, 16
      %v2292 = vrot.slane %v2290, 4
      %v2293 = vor.u32 %v2292, %v2288
      %v2294 = vrot.slane %v2293, 4
      %v2296 = vshll.u32 %v2230, 16
      %v2298 = vrot.slane %v2296, 5
      %v2299 = vsel %vm1229, %v2294, %v2298
      %v2301 = vshrl.u32 %v2231, 16
      %v2303 = vrot.slane %v2301, 4
      %v2304 = vshll.u32 %v2231, 16
      %v2306 = vrot.slane %v2304, 5
      %v2307 = vor.u32 %v2303, %v2306
      %v2308 = vrot.slane %v2307, 4
      %v2310 = vshll.u32 %v2232, 16
      %v2312 = vrot.slane %v2310, 5
      %v2313 = vsel %vm1229, %v2308, %v2312
      %v2314 = vshrl.u32 %v2232, 16
      %v2316 = vrot.slane %v2314, 4
      %v2317 = vor.u32 %v2316, %v2312
      %v2318 = vrot.slane %v2317, 4
      %v2320 = vshll.u32 %v2233, 16
      %v2322 = vrot.slane %v2320, 5
      %v2323 = vsel %vm1229, %v2318, %v2322
      %v2325 = vshrl.u32 %v2234, 16
      %v2327 = vrot.slane %v2325, 4
      %v2328 = vshll.u32 %v2234, 16
      %v2330 = vrot.slane %v2328, 5
      %v2331 = vor.u32 %v2327, %v2330
      %v2332 = vrot.slane %v2331, 4
      %v2334 = vshll.u32 %v2235, 16
      %v2336 = vrot.slane %v2334, 5
      %v2337 = vsel %vm1229, %v2332, %v2336
      %v2338 = vshrl.u32 %v2235, 16
      %v2340 = vrot.slane %v2338, 4
      %v2341 = vor.u32 %v2340, %v2336
      %v2342 = vrot.slane %v2341, 4
      %v2344 = vshll.u32 %v2236, 16
      %v2346 = vrot.slane %v2344, 5
      %v2347 = vsel %vm1229, %v2342, %v2346
      %v2349 = vshrl.u32 %v2237, 16
      %v2351 = vrot.slane %v2349, 4
      %v2352 = vshll.u32 %v2237, 16
      %v2354 = vrot.slane %v2352, 5
      %v2355 = vor.u32 %v2351, %v2354
      %v2356 = vrot.slane %v2355, 4
      %v2358 = vshll.u32 %v2238, 16
      %v2360 = vrot.slane %v2358, 5
      %v2361 = vsel %vm1229, %v2356, %v2360
      %v2362 = vshrl.u32 %v2238, 16
      %v2364 = vrot.slane %v2362, 4
      %v2365 = vor.u32 %v2364, %v2360
      %v2366 = vrot.slane %v2365, 4
      %v2368 = vshll.u32 %v2239, 16
      %v2370 = vrot.slane %v2368, 5
      %v2371 = vsel %vm1229, %v2366, %v2370
      %v2373 = vshrl.u32 %v2240, 16
      %v2375 = vrot.slane %v2373, 4
      %v2376 = vshll.u32 %v2240, 16
      %v2378 = vrot.slane %v2376, 5
      %v2379 = vor.u32 %v2375, %v2378
      %v2380 = vrot.slane %v2379, 4
      %v2382 = vshll.u32 %v2241, 16
      %v2384 = vrot.slane %v2382, 5
      %v2385 = vsel %vm1229, %v2380, %v2384
      %v2386 = vshrl.u32 %v2241, 16
      %v2388 = vrot.slane %v2386, 4
      %v2389 = vor.u32 %v2388, %v2384
      %v2390 = vrot.slane %v2389, 4
      %v2392 = vshll.u32 %v2242, 16
      %v2394 = vrot.slane %v2392, 5
      %v2395 = vsel %vm1229, %v2390, %v2394
      %v2397 = vshrl.u32 %v2243, 16
      %v2399 = vrot.slane %v2397, 4
      %v2400 = vshll.u32 %v2243, 16
      %v2402 = vrot.slane %v2400, 5
      %v2403 = vor.u32 %v2399, %v2402
      %v2404 = vrot.slane %v2403, 4
      %v2406 = vshll.u32 %v2244, 16
      %v2408 = vrot.slane %v2406, 5
      %v2409 = vsel %vm1229, %v2404, %v2408
      %v2410 = vshrl.u32 %v2244, 16
      %v2412 = vrot.slane %v2410, 4
      %v2413 = vor.u32 %v2412, %v2408
      %v2414 = vrot.slane %v2413, 4
      %v2416 = vshll.u32 %v2245, 16
      %v2418 = vrot.slane %v2416, 5
      %v2419 = vsel %vm1229, %v2414, %v2418
      %v2421 = vshrl.u32 %v2246, 16
      %v2423 = vrot.slane %v2421, 4
      %v2424 = vshll.u32 %v2246, 16
      %v2426 = vrot.slane %v2424, 5
      %v2427 = vor.u32 %v2423, %v2426
      %v2428 = vrot.slane %v2427, 4
      %v2430 = vshll.u32 %v2247, 16
      %v2432 = vrot.slane %v2430, 5
      %v2433 = vsel %vm1229, %v2428, %v2432
      %v2434 = vshrl.u32 %v2247, 16
      %v2436 = vrot.slane %v2434, 4
      %v2437 = vor.u32 %v2436, %v2432
      %v2438 = vrot.slane %v2437, 4
      %v2440 = vshll.u32 %v2248, 16
      %v2442 = vrot.slane %v2440, 5
      %v2443 = vsel %vm1229, %v2438, %v2442
      %v2445 = vshrl.u32 %v2249, 16
      %v2447 = vrot.slane %v2445, 4
      %v2448 = vshll.u32 %v2249, 16
      %v2450 = vrot.slane %v2448, 5
      %v2451 = vor.u32 %v2447, %v2450
      %v2452 = vrot.slane %v2451, 4
      %v2454 = vshll.u32 %v2250, 16
      %v2456 = vrot.slane %v2454, 5
      %v2457 = vsel %vm1229, %v2452, %v2456
      %v2458 = vshrl.u32 %v2250, 16
      %v2460 = vrot.slane %v2458, 4
      %v2461 = vor.u32 %v2460, %v2456
      %v2462 = vrot.slane %v2461, 4
      %v2464 = vshll.u32 %v2251, 16
      %v2466 = vrot.slane %v2464, 5
      %v2467 = vsel %vm1229, %v2462, %v2466
      %v2469 = vshrl.u32 %v2252, 16
      %v2471 = vrot.slane %v2469, 4
      %v2472 = vshll.u32 %v2252, 16
      %v2474 = vrot.slane %v2472, 5
      %v2475 = vor.u32 %v2471, %v2474
      %v2476 = vrot.slane %v2475, 4
      %v2478 = vshll.u32 %v2253, 16
      %v2480 = vrot.slane %v2478, 5
      %v2481 = vsel %vm1229, %v2476, %v2480
      %v2482 = vshrl.u32 %v2253, 16
      %v2484 = vrot.slane %v2482, 4
      %v2485 = vor.u32 %v2484, %v2480
      %v2486 = vrot.slane %v2485, 4
      %v2488 = vshll.u32 %v2254, 16
      %v2490 = vrot.slane %v2488, 5
      %v2491 = vsel %vm1229, %v2486, %v2490
      %v2493 = vshrl.u32 %v2255, 16
      %v2495 = vrot.slane %v2493, 4
      %v2496 = vshll.u32 %v2255, 16
      %v2498 = vrot.slane %v2496, 5
      %v2499 = vor.u32 %v2495, %v2498
      %v2500 = vrot.slane %v2499, 4
      %v2502 = vshll.u32 %v2256, 16
      %v2504 = vrot.slane %v2502, 5
      %v2505 = vsel %vm1229, %v2500, %v2504
      %v2506 = vshrl.u32 %v2256, 16
      %v2508 = vrot.slane %v2506, 4
      %v2509 = vor.u32 %v2508, %v2504
      %v2510 = vrot.slane %v2509, 4
      %v2512 = vshll.u32 %v2257, 16
      %v2514 = vrot.slane %v2512, 5
      %v2515 = vsel %vm1229, %v2510, %v2514
      %v2517 = vshrl.u32 %v2258, 16
      %v2519 = vrot.slane %v2517, 4
      %v2520 = vshll.u32 %v2258, 16
      %v2522 = vrot.slane %v2520, 5
      %v2523 = vor.u32 %v2519, %v2522
      %v2524 = vrot.slane %v2523, 4
      %v2526 = vshll.u32 %v2259, 16
      %v2528 = vrot.slane %v2526, 5
      %v2529 = vsel %vm1229, %v2524, %v2528
      %v2530 = vshrl.u32 %v2259, 16
      %v2532 = vrot.slane %v2530, 4
      %v2533 = vor.u32 %v2532, %v2528
      %v2534 = vrot.slane %v2533, 4
      %v2536 = vshll.u32 %v2260, 16
      %v2538 = vrot.slane %v2536, 5
      %v2539 = vsel %vm1229, %v2534, %v2538
      %v2541 = vshrl.u32 %v2261, 16
      %v2543 = vrot.slane %v2541, 4
      %v2544 = vshll.u32 %v2261, 16
      %v2546 = vrot.slane %v2544, 5
      %v2547 = vor.u32 %v2543, %v2546
      %v2548 = vrot.slane %v2547, 4
      %v2550 = vshll.u32 %v2262, 16
      %v2552 = vrot.slane %v2550, 5
      %v2553 = vsel %vm1229, %v2548, %v2552
      %v2554 = vshrl.u32 %v2262, 16
      %v2556 = vrot.slane %v2554, 4
      %v2557 = vor.u32 %v2556, %v2552
      %v2558 = vrot.slane %v2557, 4
      %v2560 = vshll.u32 %v2263, 16
      %v2562 = vrot.slane %v2560, 5
      %v2563 = vsel %vm1229, %v2558, %v2562
      %v2565 = vshrl.u32 %v2264, 16
      %v2567 = vrot.slane %v2565, 4
      %v2568 = vshll.u32 %v2264, 16
      %v2570 = vrot.slane %v2568, 5
      %v2571 = vor.u32 %v2567, %v2570
      %v2572 = vrot.slane %v2571, 4
      %v2574 = vshll.u32 %v2265, 16
      %v2576 = vrot.slane %v2574, 5
      %v2577 = vsel %vm1229, %v2572, %v2576
      %v2578 = vshrl.u32 %v2265, 16
      %v2580 = vrot.slane %v2578, 4
      %v2581 = vor.u32 %v2580, %v2576
      %v2582 = vrot.slane %v2581, 4
      %v2584 = vshll.u32 %v2266, 16
      %v2586 = vrot.slane %v2584, 5
      %v2587 = vsel %vm1229, %v2582, %v2586
      %v2589 = vshrl.u32 %v2267, 16
      %v2591 = vrot.slane %v2589, 4
      %v2592 = vshll.u32 %v2267, 16
      %v2594 = vrot.slane %v2592, 5
      %v2595 = vor.u32 %v2591, %v2594
      %v2596 = vrot.slane %v2595, 4
      %v2598 = vshll.u32 %v2268, 16
      %v2600 = vrot.slane %v2598, 5
      %v2601 = vsel %vm1229, %v2596, %v2600
      %v2602 = vshrl.u32 %v2268, 16
      %v2604 = vrot.slane %v2602, 4
      %v2605 = vor.u32 %v2604, %v2600
      %v2606 = vrot.slane %v2605, 4
      %v2608 = vshll.u32 %v2269, 16
      %v2610 = vrot.slane %v2608, 5
      %v2611 = vsel %vm1229, %v2606, %v2610
      %v2613 = vshrl.u32 %v2270, 16
      %v2615 = vrot.slane %v2613, 4
      %v2616 = vshll.u32 %v2270, 16
      %v2618 = vrot.slane %v2616, 5
      %v2619 = vor.u32 %v2615, %v2618
      %v2620 = vrot.slane %v2619, 4
      %v2622 = vshll.u32 %v2271, 16
      %v2624 = vrot.slane %v2622, 5
      %v2625 = vsel %vm1229, %v2620, %v2624
      %v2626 = vshrl.u32 %v2271, 16
      %v2628 = vrot.slane %v2626, 4
      %v2629 = vor.u32 %v2628, %v2624
      %v2630 = vrot.slane %v2629, 4
      %v2632 = vshll.u32 %v2272, 16
      %v2634 = vrot.slane %v2632, 5
      %v2635 = vsel %vm1229, %v2630, %v2634
      %v2637 = vshrl.u32 %v2273, 16
      %v2639 = vrot.slane %v2637, 4
      %v2640 = vshll.u32 %v2273, 16
      %v2642 = vrot.slane %v2640, 5
      %v2643 = vor.u32 %v2639, %v2642
      %v2644 = vrot.slane %v2643, 4
      %v2646 = vshll.u32 %v2274, 16
      %v2648 = vrot.slane %v2646, 5
      %v2649 = vsel %vm1229, %v2644, %v2648
      %v2650 = vshrl.u32 %v2274, 16
      %v2652 = vrot.slane %v2650, 4
      %v2653 = vor.u32 %v2652, %v2648
      %v2654 = vrot.slane %v2653, 4
      %v2656 = vshll.u32 %v2275, 16
      %v2658 = vrot.slane %v2656, 5
      %v2659 = vsel %vm1229, %v2654, %v2658
      %v2660 = vunpack.c.l.b16 %v2289
      %v2661 = vunpack.c.l.b16 %v2299
      %v2662 = vunpack.c.l.b16 %v2313
      %v2663 = vunpack.c.l.b16 %v2323
      %v2664 = vunpack.c.l.b16 %v2337
      %v2665 = vunpack.c.l.b16 %v2347
      %v2666 = vunpack.c.l.b16 %v2361
      %v2667 = vunpack.c.l.b16 %v2371
      %v2668 = vunpack.c.l.b16 %v2385
      %v2669 = vunpack.c.l.b16 %v2395
      %v2670 = vunpack.c.l.b16 %v2409
      %v2671 = vunpack.c.l.b16 %v2419
      %v2672 = vunpack.c.l.b16 %v2433
      %v2673 = vunpack.c.l.b16 %v2443
      %v2674 = vunpack.c.l.b16 %v2457
      %v2675 = vunpack.c.l.b16 %v2467
      %v2676 = vunpack.c.l.b16 %v2481
      %v2677 = vunpack.c.l.b16 %v2491
      %v2678 = vunpack.c.l.b16 %v2505
      %v2679 = vunpack.c.l.b16 %v2515
      %v2680 = vunpack.c.l.b16 %v2529
      %v2681 = vunpack.c.l.b16 %v2539
      %v2682 = vunpack.c.l.b16 %v2553
      %v2683 = vunpack.c.l.b16 %v2563
      %v2684 = vunpack.c.l.b16 %v2577
      %v2685 = vunpack.c.l.b16 %v2587
      %v2686 = vunpack.c.l.b16 %v2601
      %v2687 = vunpack.c.l.b16 %v2611
      %v2688 = vunpack.c.l.b16 %v2625
      %v2689 = vunpack.c.l.b16 %v2635
      %v2690 = vunpack.c.l.b16 %v2649
      %v2691 = vunpack.c.l.b16 %v2659
      %v2692 = vpack.c.b16 %v2661, %v2660
      %v2693 = vpack.c.b16 %v2663, %v2662
      %v2694 = vpack.c.b16 %v2665, %v2664
      %v2695 = vpack.c.b16 %v2667, %v2666
      %v2696 = vpack.c.b16 %v2669, %v2668
      %v2697 = vpack.c.b16 %v2671, %v2670
      %v2698 = vpack.c.b16 %v2673, %v2672
      %v2699 = vpack.c.b16 %v2675, %v2674
      %v2700 = vpack.c.b16 %v2677, %v2676
      %v2701 = vpack.c.b16 %v2679, %v2678
      %v2702 = vpack.c.b16 %v2681, %v2680
      %v2703 = vpack.c.b16 %v2683, %v2682
      %v2704 = vpack.c.b16 %v2685, %v2684
      %v2705 = vpack.c.b16 %v2687, %v2686
      %v2706 = vpack.c.b16 %v2689, %v2688
      %v2707 = vpack.c.b16 %v2691, %v2690
      %2708 = vrot.lane.b32.xlu0 %v2692, 16
      %v2709 = vpop.permute.xlu0 %2708
      %2710 = vrot.lane.b32.xlu0 %v2693, 16
      %v2711 = vpop.permute.xlu0 %2710
      %2712 = vrot.lane.b32.xlu0 %v2694, 16
      %v2713 = vpop.permute.xlu0 %2712
      %2714 = vrot.lane.b32.xlu0 %v2695, 16
      %v2715 = vpop.permute.xlu0 %2714
      %2716 = vrot.lane.b32.xlu0 %v2696, 16
      %v2717 = vpop.permute.xlu0 %2716
      %2718 = vrot.lane.b32.xlu0 %v2697, 16
      %v2719 = vpop.permute.xlu0 %2718
      %2720 = vrot.lane.b32.xlu0 %v2698, 16
      %v2721 = vpop.permute.xlu0 %2720
      %2722 = vrot.lane.b32.xlu0 %v2699, 16
      %v2723 = vpop.permute.xlu0 %2722
      %2724 = vrot.lane.b32.xlu0 %v2700, 16
      %v2725 = vpop.permute.xlu0 %2724
      %2726 = vrot.lane.b32.xlu0 %v2701, 16
      %v2727 = vpop.permute.xlu0 %2726
      %2728 = vrot.lane.b32.xlu0 %v2702, 16
      %v2729 = vpop.permute.xlu0 %2728
      %2730 = vrot.lane.b32.xlu0 %v2703, 16
      %v2731 = vpop.permute.xlu0 %2730
      %2732 = vrot.lane.b32.xlu0 %v2704, 16
      %v2733 = vpop.permute.xlu0 %2732
      %2734 = vrot.lane.b32.xlu0 %v2705, 16
      %v2735 = vpop.permute.xlu0 %2734
      %2736 = vrot.lane.b32.xlu0 %v2706, 16
      %v2737 = vpop.permute.xlu0 %2736
      %2738 = vrot.lane.b32.xlu0 %v2707, 16
      %v2739 = vpop.permute.xlu0 %2738
      %vm2756 = vcmask 162944
      %2757 = vst.msk [vmem:[#allocation3] sm:$0xff] %vm2756, %v2709
      %2758 = vst.msk [vmem:[#allocation3 + $0x8] sm:$0xff] %vm2756, %v2711
      %2759 = vst.msk [vmem:[#allocation3 + $0x10] sm:$0xff] %vm2756, %v2713
      %2760 = vst.msk [vmem:[#allocation3 + $0x18] sm:$0xff] %vm2756, %v2715
      %2761 = vst.msk [vmem:[#allocation3 + $0x20] sm:$0xff] %vm2756, %v2717
      %2762 = vst.msk [vmem:[#allocation3 + $0x28] sm:$0xff] %vm2756, %v2719
      %2763 = vst.msk [vmem:[#allocation3 + $0x30] sm:$0xff] %vm2756, %v2721
      %2764 = vst.msk [vmem:[#allocation3 + $0x38] sm:$0xff] %vm2756, %v2723
      %2765 = vst.msk [vmem:[#allocation3 + $0x40] sm:$0xff] %vm2756, %v2725
      %2766 = vst.msk [vmem:[#allocation3 + $0x48] sm:$0xff] %vm2756, %v2727
      %2767 = vst.msk [vmem:[#allocation3 + $0x50] sm:$0xff] %vm2756, %v2729
      %2768 = vst.msk [vmem:[#allocation3 + $0x58] sm:$0xff] %vm2756, %v2731
      %2769 = vst.msk [vmem:[#allocation3 + $0x60] sm:$0xff] %vm2756, %v2733
      %2770 = vst.msk [vmem:[#allocation3 + $0x68] sm:$0xff] %vm2756, %v2735
      %2771 = vst.msk [vmem:[#allocation3 + $0x70] sm:$0xff] %vm2756, %v2737
      %2772 = vst.msk [vmem:[#allocation3 + $0x78] sm:$0xff] %vm2756, %v2739
      %v2773 = vld [vmem:[%s919] sm:$0xe]
      %v2774 = vld [vmem:[%s919 + $0x4] sm:$0xf]
      %v2775 = vld [vmem:[%s919 + $0x8] sm:$0x1]
      %v2776 = vld [vmem:[%s919 + $0xc] sm:$0xe]
      %v2777 = vld [vmem:[%s919 + $0x10] sm:$0xf]
      %v2778 = vld [vmem:[%s919 + $0x14] sm:$0x1]
      %v2779 = vld [vmem:[%s919 + $0x18] sm:$0xe]
      %v2780 = vld [vmem:[%s919 + $0x1c] sm:$0xf]
      %v2781 = vld [vmem:[%s919 + $0x20] sm:$0x1]
      %v2782 = vld [vmem:[%s919 + $0x24] sm:$0xe]
      %v2783 = vld [vmem:[%s919 + $0x28] sm:$0xf]
      %v2784 = vld [vmem:[%s919 + $0x2c] sm:$0x1]
      %v2785 = vld [vmem:[%s919 + $0x30] sm:$0xe]
      %v2786 = vld [vmem:[%s919 + $0x34] sm:$0xf]
      %v2787 = vld [vmem:[%s919 + $0x38] sm:$0x1]
      %v2788 = vld [vmem:[%s919 + $0x3c] sm:$0xe]
      %v2789 = vld [vmem:[%s919 + $0x40] sm:$0xf]
      %v2790 = vld [vmem:[%s919 + $0x44] sm:$0x1]
      %v2791 = vld [vmem:[%s919 + $0x48] sm:$0xe]
      %v2792 = vld [vmem:[%s919 + $0x4c] sm:$0xf]
      %v2793 = vld [vmem:[%s919 + $0x50] sm:$0x1]
      %v2794 = vld [vmem:[%s919 + $0x54] sm:$0xe]
      %v2795 = vld [vmem:[%s919 + $0x58] sm:$0xf]
      %v2796 = vld [vmem:[%s919 + $0x5c] sm:$0x1]
      %v2797 = vld [vmem:[%s919 + $0x60] sm:$0xe]
      %v2798 = vld [vmem:[%s919 + $0x64] sm:$0xf]
      %v2799 = vld [vmem:[%s919 + $0x68] sm:$0x1]
      %v2800 = vld [vmem:[%s919 + $0x6c] sm:$0xe]
      %v2801 = vld [vmem:[%s919 + $0x70] sm:$0xf]
      %v2802 = vld [vmem:[%s919 + $0x74] sm:$0x1]
      %v2803 = vld [vmem:[%s919 + $0x78] sm:$0xe]
      %v2804 = vld [vmem:[%s919 + $0x7c] sm:$0xf]
      %v2805 = vld [vmem:[%s919 + $0x80] sm:$0x1]
      %v2806 = vld [vmem:[%s919 + $0x84] sm:$0xe]
      %v2807 = vld [vmem:[%s919 + $0x88] sm:$0xf]
      %v2808 = vld [vmem:[%s919 + $0x8c] sm:$0x1]
      %v2809 = vld [vmem:[%s919 + $0x90] sm:$0xe]
      %v2810 = vld [vmem:[%s919 + $0x94] sm:$0xf]
      %v2811 = vld [vmem:[%s919 + $0x98] sm:$0x1]
      %v2812 = vld [vmem:[%s919 + $0x9c] sm:$0xe]
      %v2813 = vld [vmem:[%s919 + $0xa0] sm:$0xf]
      %v2814 = vld [vmem:[%s919 + $0xa4] sm:$0x1]
      %v2815 = vld [vmem:[%s919 + $0xa8] sm:$0xe]
      %v2816 = vld [vmem:[%s919 + $0xac] sm:$0xf]
      %v2817 = vld [vmem:[%s919 + $0xb0] sm:$0x1]
      %v2818 = vld [vmem:[%s919 + $0xb4] sm:$0xe]
      %v2819 = vld [vmem:[%s919 + $0xb8] sm:$0xf]
      %v2820 = vld [vmem:[%s919 + $0xbc] sm:$0x1]
      %v2869 = vrot.slane %v2773, 5
      %v2870 = vrot.slane %v2869, 4
      %v2871 = vrot.slane %v2774, 5
      %v2872 = vsel %vm1825, %v2870, %v2871
      %v2873 = vrot.slane %v2871, 4
      %v2874 = vrot.slane %v2775, 5
      %v2875 = vsel %vm1825, %v2873, %v2874
      %v2876 = vrot.slane %v2776, 5
      %v2877 = vrot.slane %v2876, 4
      %v2878 = vrot.slane %v2777, 5
      %v2879 = vsel %vm1825, %v2877, %v2878
      %v2880 = vrot.slane %v2878, 4
      %v2881 = vrot.slane %v2778, 5
      %v2882 = vsel %vm1825, %v2880, %v2881
      %v2883 = vrot.slane %v2779, 5
      %v2884 = vrot.slane %v2883, 4
      %v2885 = vrot.slane %v2780, 5
      %v2886 = vsel %vm1825, %v2884, %v2885
      %v2887 = vrot.slane %v2885, 4
      %v2888 = vrot.slane %v2781, 5
      %v2889 = vsel %vm1825, %v2887, %v2888
      %v2890 = vrot.slane %v2782, 5
      %v2891 = vrot.slane %v2890, 4
      %v2892 = vrot.slane %v2783, 5
      %v2893 = vsel %vm1825, %v2891, %v2892
      %v2894 = vrot.slane %v2892, 4
      %v2895 = vrot.slane %v2784, 5
      %v2896 = vsel %vm1825, %v2894, %v2895
      %v2897 = vrot.slane %v2785, 5
      %v2898 = vrot.slane %v2897, 4
      %v2899 = vrot.slane %v2786, 5
      %v2900 = vsel %vm1825, %v2898, %v2899
      %v2901 = vrot.slane %v2899, 4
      %v2902 = vrot.slane %v2787, 5
      %v2903 = vsel %vm1825, %v2901, %v2902
      %v2904 = vrot.slane %v2788, 5
      %v2905 = vrot.slane %v2904, 4
      %v2906 = vrot.slane %v2789, 5
      %v2907 = vsel %vm1825, %v2905, %v2906
      %v2908 = vrot.slane %v2906, 4
      %v2909 = vrot.slane %v2790, 5
      %v2910 = vsel %vm1825, %v2908, %v2909
      %v2911 = vrot.slane %v2791, 5
      %v2912 = vrot.slane %v2911, 4
      %v2913 = vrot.slane %v2792, 5
      %v2914 = vsel %vm1825, %v2912, %v2913
      %v2915 = vrot.slane %v2913, 4
      %v2916 = vrot.slane %v2793, 5
      %v2917 = vsel %vm1825, %v2915, %v2916
      %v2918 = vrot.slane %v2794, 5
      %v2919 = vrot.slane %v2918, 4
      %v2920 = vrot.slane %v2795, 5
      %v2921 = vsel %vm1825, %v2919, %v2920
      %v2922 = vrot.slane %v2920, 4
      %v2923 = vrot.slane %v2796, 5
      %v2924 = vsel %vm1825, %v2922, %v2923
      %v2925 = vrot.slane %v2797, 5
      %v2926 = vrot.slane %v2925, 4
      %v2927 = vrot.slane %v2798, 5
      %v2928 = vsel %vm1825, %v2926, %v2927
      %v2929 = vrot.slane %v2927, 4
      %v2930 = vrot.slane %v2799, 5
      %v2931 = vsel %vm1825, %v2929, %v2930
      %v2932 = vrot.slane %v2800, 5
      %v2933 = vrot.slane %v2932, 4
      %v2934 = vrot.slane %v2801, 5
      %v2935 = vsel %vm1825, %v2933, %v2934
      %v2936 = vrot.slane %v2934, 4
      %v2937 = vrot.slane %v2802, 5
      %v2938 = vsel %vm1825, %v2936, %v2937
      %v2939 = vrot.slane %v2803, 5
      %v2940 = vrot.slane %v2939, 4
      %v2941 = vrot.slane %v2804, 5
      %v2942 = vsel %vm1825, %v2940, %v2941
      %v2943 = vrot.slane %v2941, 4
      %v2944 = vrot.slane %v2805, 5
      %v2945 = vsel %vm1825, %v2943, %v2944
      %v2946 = vrot.slane %v2806, 5
      %v2947 = vrot.slane %v2946, 4
      %v2948 = vrot.slane %v2807, 5
      %v2949 = vsel %vm1825, %v2947, %v2948
      %v2950 = vrot.slane %v2948, 4
      %v2951 = vrot.slane %v2808, 5
      %v2952 = vsel %vm1825, %v2950, %v2951
      %v2953 = vrot.slane %v2809, 5
      %v2954 = vrot.slane %v2953, 4
      %v2955 = vrot.slane %v2810, 5
      %v2956 = vsel %vm1825, %v2954, %v2955
      %v2957 = vrot.slane %v2955, 4
      %v2958 = vrot.slane %v2811, 5
      %v2959 = vsel %vm1825, %v2957, %v2958
      %v2960 = vrot.slane %v2812, 5
      %v2961 = vrot.slane %v2960, 4
      %v2962 = vrot.slane %v2813, 5
      %v2963 = vsel %vm1825, %v2961, %v2962
      %v2964 = vrot.slane %v2962, 4
      %v2965 = vrot.slane %v2814, 5
      %v2966 = vsel %vm1825, %v2964, %v2965
      %v2967 = vrot.slane %v2815, 5
      %v2968 = vrot.slane %v2967, 4
      %v2969 = vrot.slane %v2816, 5
      %v2970 = vsel %vm1825, %v2968, %v2969
      %v2971 = vrot.slane %v2969, 4
      %v2972 = vrot.slane %v2817, 5
      %v2973 = vsel %vm1825, %v2971, %v2972
      %v2974 = vrot.slane %v2818, 5
      %v2975 = vrot.slane %v2974, 4
      %v2976 = vrot.slane %v2819, 5
      %v2977 = vsel %vm1825, %v2975, %v2976
      %v2978 = vrot.slane %v2976, 4
      %v2979 = vrot.slane %v2820, 5
      %v2980 = vsel %vm1825, %v2978, %v2979
      %v2981 = vunpack.c.l.b16 %v2872
      %v2982 = vunpack.c.l.b16 %v2875
      %v2983 = vunpack.c.l.b16 %v2879
      %v2984 = vunpack.c.l.b16 %v2882
      %v2985 = vunpack.c.l.b16 %v2886
      %v2986 = vunpack.c.l.b16 %v2889
      %v2987 = vunpack.c.l.b16 %v2893
      %v2988 = vunpack.c.l.b16 %v2896
      %v2989 = vunpack.c.l.b16 %v2900
      %v2990 = vunpack.c.l.b16 %v2903
      %v2991 = vunpack.c.l.b16 %v2907
      %v2992 = vunpack.c.l.b16 %v2910
      %v2993 = vunpack.c.l.b16 %v2914
      %v2994 = vunpack.c.l.b16 %v2917
      %v2995 = vunpack.c.l.b16 %v2921
      %v2996 = vunpack.c.l.b16 %v2924
      %v2997 = vunpack.c.l.b16 %v2928
      %v2998 = vunpack.c.l.b16 %v2931
      %v2999 = vunpack.c.l.b16 %v2935
      %v3000 = vunpack.c.l.b16 %v2938
      %v3001 = vunpack.c.l.b16 %v2942
      %v3002 = vunpack.c.l.b16 %v2945
      %v3003 = vunpack.c.l.b16 %v2949
      %v3004 = vunpack.c.l.b16 %v2952
      %v3005 = vunpack.c.l.b16 %v2956
      %v3006 = vunpack.c.l.b16 %v2959
      %v3007 = vunpack.c.l.b16 %v2963
      %v3008 = vunpack.c.l.b16 %v2966
      %v3009 = vunpack.c.l.b16 %v2970
      %v3010 = vunpack.c.l.b16 %v2973
      %v3011 = vunpack.c.l.b16 %v2977
      %v3012 = vunpack.c.l.b16 %v2980
      %v3013 = vpack.c.b16 %v2982, %v2981
      %v3014 = vpack.c.b16 %v2984, %v2983
      %v3015 = vpack.c.b16 %v2986, %v2985
      %v3016 = vpack.c.b16 %v2988, %v2987
      %v3017 = vpack.c.b16 %v2990, %v2989
      %v3018 = vpack.c.b16 %v2992, %v2991
      %v3019 = vpack.c.b16 %v2994, %v2993
      %v3020 = vpack.c.b16 %v2996, %v2995
      %v3021 = vpack.c.b16 %v2998, %v2997
      %v3022 = vpack.c.b16 %v3000, %v2999
      %v3023 = vpack.c.b16 %v3002, %v3001
      %v3024 = vpack.c.b16 %v3004, %v3003
      %v3025 = vpack.c.b16 %v3006, %v3005
      %v3026 = vpack.c.b16 %v3008, %v3007
      %v3027 = vpack.c.b16 %v3010, %v3009
      %v3028 = vpack.c.b16 %v3012, %v3011
      %3029 = vrot.lane.b32.xlu0 %v3013, 20
      %v3030 = vpop.permute.xlu0 %3029
      %3031 = vrot.lane.b32.xlu0 %v3014, 20
      %v3032 = vpop.permute.xlu0 %3031
      %3033 = vrot.lane.b32.xlu0 %v3015, 20
      %v3034 = vpop.permute.xlu0 %3033
      %3035 = vrot.lane.b32.xlu0 %v3016, 20
      %v3036 = vpop.permute.xlu0 %3035
      %3037 = vrot.lane.b32.xlu0 %v3017, 20
      %v3038 = vpop.permute.xlu0 %3037
      %3039 = vrot.lane.b32.xlu0 %v3018, 20
      %v3040 = vpop.permute.xlu0 %3039
      %3041 = vrot.lane.b32.xlu0 %v3019, 20
      %v3042 = vpop.permute.xlu0 %3041
      %3043 = vrot.lane.b32.xlu0 %v3020, 20
      %v3044 = vpop.permute.xlu0 %3043
      %3045 = vrot.lane.b32.xlu0 %v3021, 20
      %v3046 = vpop.permute.xlu0 %3045
      %3047 = vrot.lane.b32.xlu0 %v3022, 20
      %v3048 = vpop.permute.xlu0 %3047
      %3049 = vrot.lane.b32.xlu0 %v3023, 20
      %v3050 = vpop.permute.xlu0 %3049
      %3051 = vrot.lane.b32.xlu0 %v3024, 20
      %v3052 = vpop.permute.xlu0 %3051
      %3053 = vrot.lane.b32.xlu0 %v3025, 20
      %v3054 = vpop.permute.xlu0 %3053
      %3055 = vrot.lane.b32.xlu0 %v3026, 20
      %v3056 = vpop.permute.xlu0 %3055
      %3057 = vrot.lane.b32.xlu0 %v3027, 20
      %v3058 = vpop.permute.xlu0 %3057
      %3059 = vrot.lane.b32.xlu0 %v3028, 20
      %v3060 = vpop.permute.xlu0 %3059
      %vm3077 = vcmask 195744
      %3078 = vst.msk [vmem:[#allocation3] sm:$0xff] %vm3077, %v3030
      %3079 = vst.msk [vmem:[#allocation3 + $0x8] sm:$0xff] %vm3077, %v3032
      %3080 = vst.msk [vmem:[#allocation3 + $0x10] sm:$0xff] %vm3077, %v3034
      %3081 = vst.msk [vmem:[#allocation3 + $0x18] sm:$0xff] %vm3077, %v3036
      %3082 = vst.msk [vmem:[#allocation3 + $0x20] sm:$0xff] %vm3077, %v3038
      %3083 = vst.msk [vmem:[#allocation3 + $0x28] sm:$0xff] %vm3077, %v3040
      %3084 = vst.msk [vmem:[#allocation3 + $0x30] sm:$0xff] %vm3077, %v3042
      %3085 = vst.msk [vmem:[#allocation3 + $0x38] sm:$0xff] %vm3077, %v3044
      %3086 = vst.msk [vmem:[#allocation3 + $0x40] sm:$0xff] %vm3077, %v3046
      %3087 = vst.msk [vmem:[#allocation3 + $0x48] sm:$0xff] %vm3077, %v3048
      %3088 = vst.msk [vmem:[#allocation3 + $0x50] sm:$0xff] %vm3077, %v3050
      %3089 = vst.msk [vmem:[#allocation3 + $0x58] sm:$0xff] %vm3077, %v3052
      %3090 = vst.msk [vmem:[#allocation3 + $0x60] sm:$0xff] %vm3077, %v3054
      %3091 = vst.msk [vmem:[#allocation3 + $0x68] sm:$0xff] %vm3077, %v3056
      %3092 = vst.msk [vmem:[#allocation3 + $0x70] sm:$0xff] %vm3077, %v3058
      %3093 = vst.msk [vmem:[#allocation3 + $0x78] sm:$0xff] %vm3077, %v3060
      %s3094 = scalar_lea.vmem [#allocation2], 24
      %v3095 = vld [vmem:[%s3094] sm:$0xf]
      %v3096 = vld [vmem:[%s3094 + $0x4] sm:$0xf]
      %v3097 = vld [vmem:[%s3094 + $0xc] sm:$0xf]
      %v3098 = vld [vmem:[%s3094 + $0x10] sm:$0xf]
      %v3099 = vld [vmem:[%s3094 + $0x18] sm:$0xf]
      %v3100 = vld [vmem:[%s3094 + $0x1c] sm:$0xf]
      %v3101 = vld [vmem:[%s3094 + $0x24] sm:$0xf]
      %v3102 = vld [vmem:[%s3094 + $0x28] sm:$0xf]
      %v3103 = vld [vmem:[%s3094 + $0x30] sm:$0xf]
      %v3104 = vld [vmem:[%s3094 + $0x34] sm:$0xf]
      %v3105 = vld [vmem:[%s3094 + $0x3c] sm:$0xf]
      %v3106 = vld [vmem:[%s3094 + $0x40] sm:$0xf]
      %v3107 = vld [vmem:[%s3094 + $0x48] sm:$0xf]
      %v3108 = vld [vmem:[%s3094 + $0x4c] sm:$0xf]
      %v3109 = vld [vmem:[%s3094 + $0x54] sm:$0xf]
      %v3110 = vld [vmem:[%s3094 + $0x58] sm:$0xf]
      %v3111 = vld [vmem:[%s3094 + $0x60] sm:$0xf]
      %v3112 = vld [vmem:[%s3094 + $0x64] sm:$0xf]
      %v3113 = vld [vmem:[%s3094 + $0x6c] sm:$0xf]
      %v3114 = vld [vmem:[%s3094 + $0x70] sm:$0xf]
      %v3115 = vld [vmem:[%s3094 + $0x78] sm:$0xf]
      %v3116 = vld [vmem:[%s3094 + $0x7c] sm:$0xf]
      %v3117 = vld [vmem:[%s3094 + $0x84] sm:$0xf]
      %v3118 = vld [vmem:[%s3094 + $0x88] sm:$0xf]
      %v3119 = vld [vmem:[%s3094 + $0x90] sm:$0xf]
      %v3120 = vld [vmem:[%s3094 + $0x94] sm:$0xf]
      %v3121 = vld [vmem:[%s3094 + $0x9c] sm:$0xf]
      %v3122 = vld [vmem:[%s3094 + $0xa0] sm:$0xf]
      %v3123 = vld [vmem:[%s3094 + $0xa8] sm:$0xf]
      %v3124 = vld [vmem:[%s3094 + $0xac] sm:$0xf]
      %v3125 = vld [vmem:[%s3094 + $0xb4] sm:$0xf]
      %v3126 = vld [vmem:[%s3094 + $0xb8] sm:$0xf]
      %v3159 = vunpack.c.l.b16 %v3095
      %v3160 = vunpack.c.l.b16 %v3096
      %v3161 = vunpack.c.l.b16 %v3097
      %v3162 = vunpack.c.l.b16 %v3098
      %v3163 = vunpack.c.l.b16 %v3099
      %v3164 = vunpack.c.l.b16 %v3100
      %v3165 = vunpack.c.l.b16 %v3101
      %v3166 = vunpack.c.l.b16 %v3102
      %v3167 = vunpack.c.l.b16 %v3103
      %v3168 = vunpack.c.l.b16 %v3104
      %v3169 = vunpack.c.l.b16 %v3105
      %v3170 = vunpack.c.l.b16 %v3106
      %v3171 = vunpack.c.l.b16 %v3107
      %v3172 = vunpack.c.l.b16 %v3108
      %v3173 = vunpack.c.l.b16 %v3109
      %v3174 = vunpack.c.l.b16 %v3110
      %v3175 = vunpack.c.l.b16 %v3111
      %v3176 = vunpack.c.l.b16 %v3112
      %v3177 = vunpack.c.l.b16 %v3113
      %v3178 = vunpack.c.l.b16 %v3114
      %v3179 = vunpack.c.l.b16 %v3115
      %v3180 = vunpack.c.l.b16 %v3116
      %v3181 = vunpack.c.l.b16 %v3117
      %v3182 = vunpack.c.l.b16 %v3118
      %v3183 = vunpack.c.l.b16 %v3119
      %v3184 = vunpack.c.l.b16 %v3120
      %v3185 = vunpack.c.l.b16 %v3121
      %v3186 = vunpack.c.l.b16 %v3122
      %v3187 = vunpack.c.l.b16 %v3123
      %v3188 = vunpack.c.l.b16 %v3124
      %v3189 = vunpack.c.l.b16 %v3125
      %v3190 = vunpack.c.l.b16 %v3126
      %v3191 = vpack.c.b16 %v3160, %v3159
      %v3192 = vpack.c.b16 %v3162, %v3161
      %v3193 = vpack.c.b16 %v3164, %v3163
      %v3194 = vpack.c.b16 %v3166, %v3165
      %v3195 = vpack.c.b16 %v3168, %v3167
      %v3196 = vpack.c.b16 %v3170, %v3169
      %v3197 = vpack.c.b16 %v3172, %v3171
      %v3198 = vpack.c.b16 %v3174, %v3173
      %v3199 = vpack.c.b16 %v3176, %v3175
      %v3200 = vpack.c.b16 %v3178, %v3177
      %v3201 = vpack.c.b16 %v3180, %v3179
      %v3202 = vpack.c.b16 %v3182, %v3181
      %v3203 = vpack.c.b16 %v3184, %v3183
      %v3204 = vpack.c.b16 %v3186, %v3185
      %v3205 = vpack.c.b16 %v3188, %v3187
      %v3206 = vpack.c.b16 %v3190, %v3189
      %3207 = vrot.lane.b32.xlu0 %v3191, 24
      %v3208 = vpop.permute.xlu0 %3207
      %3209 = vrot.lane.b32.xlu0 %v3192, 24
      %v3210 = vpop.permute.xlu0 %3209
      %3211 = vrot.lane.b32.xlu0 %v3193, 24
      %v3212 = vpop.permute.xlu0 %3211
      %3213 = vrot.lane.b32.xlu0 %v3194, 24
      %v3214 = vpop.permute.xlu0 %3213
      %3215 = vrot.lane.b32.xlu0 %v3195, 24
      %v3216 = vpop.permute.xlu0 %3215
      %3217 = vrot.lane.b32.xlu0 %v3196, 24
      %v3218 = vpop.permute.xlu0 %3217
      %3219 = vrot.lane.b32.xlu0 %v3197, 24
      %v3220 = vpop.permute.xlu0 %3219
      %3221 = vrot.lane.b32.xlu0 %v3198, 24
      %v3222 = vpop.permute.xlu0 %3221
      %3223 = vrot.lane.b32.xlu0 %v3199, 24
      %v3224 = vpop.permute.xlu0 %3223
      %3225 = vrot.lane.b32.xlu0 %v3200, 24
      %v3226 = vpop.permute.xlu0 %3225
      %3227 = vrot.lane.b32.xlu0 %v3201, 24
      %v3228 = vpop.permute.xlu0 %3227
      %3229 = vrot.lane.b32.xlu0 %v3202, 24
      %v3230 = vpop.permute.xlu0 %3229
      %3231 = vrot.lane.b32.xlu0 %v3203, 24
      %v3232 = vpop.permute.xlu0 %3231
      %3233 = vrot.lane.b32.xlu0 %v3204, 24
      %v3234 = vpop.permute.xlu0 %3233
      %3235 = vrot.lane.b32.xlu0 %v3205, 24
      %v3236 = vpop.permute.xlu0 %3235
      %3237 = vrot.lane.b32.xlu0 %v3206, 24
      %v3238 = vpop.permute.xlu0 %3237
      %vm3255 = vcmask 228544
      %3256 = vst.msk [vmem:[#allocation3] sm:$0xff] %vm3255, %v3208
      %3257 = vst.msk [vmem:[#allocation3 + $0x8] sm:$0xff] %vm3255, %v3210
      %3258 = vst.msk [vmem:[#allocation3 + $0x10] sm:$0xff] %vm3255, %v3212
      %3259 = vst.msk [vmem:[#allocation3 + $0x18] sm:$0xff] %vm3255, %v3214
      %3260 = vst.msk [vmem:[#allocation3 + $0x20] sm:$0xff] %vm3255, %v3216
      %3261 = vst.msk [vmem:[#allocation3 + $0x28] sm:$0xff] %vm3255, %v3218
      %3262 = vst.msk [vmem:[#allocation3 + $0x30] sm:$0xff] %vm3255, %v3220
      %3263 = vst.msk [vmem:[#allocation3 + $0x38] sm:$0xff] %vm3255, %v3222
      %3264 = vst.msk [vmem:[#allocation3 + $0x40] sm:$0xff] %vm3255, %v3224
      %3265 = vst.msk [vmem:[#allocation3 + $0x48] sm:$0xff] %vm3255, %v3226
      %3266 = vst.msk [vmem:[#allocation3 + $0x50] sm:$0xff] %vm3255, %v3228
      %3267 = vst.msk [vmem:[#allocation3 + $0x58] sm:$0xff] %vm3255, %v3230
      %3268 = vst.msk [vmem:[#allocation3 + $0x60] sm:$0xff] %vm3255, %v3232
      %3269 = vst.msk [vmem:[#allocation3 + $0x68] sm:$0xff] %vm3255, %v3234
      %3270 = vst.msk [vmem:[#allocation3 + $0x70] sm:$0xff] %vm3255, %v3236
      %3271 = vst.msk [vmem:[#allocation3 + $0x78] sm:$0xff] %vm3255, %v3238
      %v3272 = vld [vmem:[%s3094] sm:$0xf]
      %v3273 = vld [vmem:[%s3094 + $0x4] sm:$0xf]
      %v3274 = vld [vmem:[%s3094 + $0x8] sm:$0x1]
      %v3275 = vld [vmem:[%s3094 + $0xc] sm:$0xf]
      %v3276 = vld [vmem:[%s3094 + $0x10] sm:$0xf]
      %v3277 = vld [vmem:[%s3094 + $0x14] sm:$0x1]
      %v3278 = vld [vmem:[%s3094 + $0x18] sm:$0xf]
      %v3279 = vld [vmem:[%s3094 + $0x1c] sm:$0xf]
      %v3280 = vld [vmem:[%s3094 + $0x20] sm:$0x1]
      %v3281 = vld [vmem:[%s3094 + $0x24] sm:$0xf]
      %v3282 = vld [vmem:[%s3094 + $0x28] sm:$0xf]
      %v3283 = vld [vmem:[%s3094 + $0x2c] sm:$0x1]
      %v3284 = vld [vmem:[%s3094 + $0x30] sm:$0xf]
      %v3285 = vld [vmem:[%s3094 + $0x34] sm:$0xf]
      %v3286 = vld [vmem:[%s3094 + $0x38] sm:$0x1]
      %v3287 = vld [vmem:[%s3094 + $0x3c] sm:$0xf]
      %v3288 = vld [vmem:[%s3094 + $0x40] sm:$0xf]
      %v3289 = vld [vmem:[%s3094 + $0x44] sm:$0x1]
      %v3290 = vld [vmem:[%s3094 + $0x48] sm:$0xf]
      %v3291 = vld [vmem:[%s3094 + $0x4c] sm:$0xf]
      %v3292 = vld [vmem:[%s3094 + $0x50] sm:$0x1]
      %v3293 = vld [vmem:[%s3094 + $0x54] sm:$0xf]
      %v3294 = vld [vmem:[%s3094 + $0x58] sm:$0xf]
      %v3295 = vld [vmem:[%s3094 + $0x5c] sm:$0x1]
      %v3296 = vld [vmem:[%s3094 + $0x60] sm:$0xf]
      %v3297 = vld [vmem:[%s3094 + $0x64] sm:$0xf]
      %v3298 = vld [vmem:[%s3094 + $0x68] sm:$0x1]
      %v3299 = vld [vmem:[%s3094 + $0x6c] sm:$0xf]
      %v3300 = vld [vmem:[%s3094 + $0x70] sm:$0xf]
      %v3301 = vld [vmem:[%s3094 + $0x74] sm:$0x1]
      %v3302 = vld [vmem:[%s3094 + $0x78] sm:$0xf]
      %v3303 = vld [vmem:[%s3094 + $0x7c] sm:$0xf]
      %v3304 = vld [vmem:[%s3094 + $0x80] sm:$0x1]
      %v3305 = vld [vmem:[%s3094 + $0x84] sm:$0xf]
      %v3306 = vld [vmem:[%s3094 + $0x88] sm:$0xf]
      %v3307 = vld [vmem:[%s3094 + $0x8c] sm:$0x1]
      %v3308 = vld [vmem:[%s3094 + $0x90] sm:$0xf]
      %v3309 = vld [vmem:[%s3094 + $0x94] sm:$0xf]
      %v3310 = vld [vmem:[%s3094 + $0x98] sm:$0x1]
      %v3311 = vld [vmem:[%s3094 + $0x9c] sm:$0xf]
      %v3312 = vld [vmem:[%s3094 + $0xa0] sm:$0xf]
      %v3313 = vld [vmem:[%s3094 + $0xa4] sm:$0x1]
      %v3314 = vld [vmem:[%s3094 + $0xa8] sm:$0xf]
      %v3315 = vld [vmem:[%s3094 + $0xac] sm:$0xf]
      %v3316 = vld [vmem:[%s3094 + $0xb0] sm:$0x1]
      %v3317 = vld [vmem:[%s3094 + $0xb4] sm:$0xf]
      %v3318 = vld [vmem:[%s3094 + $0xb8] sm:$0xf]
      %v3319 = vld [vmem:[%s3094 + $0xbc] sm:$0x1]
      %v3321 = vshrl.u32 %v3272, 16
      %v3323 = vrot.slane %v3321, 4
      %v3324 = vshll.u32 %v3272, 16
      %v3326 = vrot.slane %v3324, 5
      %v3327 = vor.u32 %v3323, %v3326
      %v3328 = vrot.slane %v3327, 4
      %v3330 = vshll.u32 %v3273, 16
      %v3332 = vrot.slane %v3330, 5
      %v3333 = vsel %vm1229, %v3328, %v3332
      %v3334 = vshrl.u32 %v3273, 16
      %v3336 = vrot.slane %v3334, 4
      %v3337 = vor.u32 %v3336, %v3332
      %v3338 = vrot.slane %v3337, 4
      %v3340 = vshll.u32 %v3274, 16
      %v3342 = vrot.slane %v3340, 5
      %v3343 = vsel %vm1229, %v3338, %v3342
      %v3345 = vshrl.u32 %v3275, 16
      %v3347 = vrot.slane %v3345, 4
      %v3348 = vshll.u32 %v3275, 16
      %v3350 = vrot.slane %v3348, 5
      %v3351 = vor.u32 %v3347, %v3350
      %v3352 = vrot.slane %v3351, 4
      %v3354 = vshll.u32 %v3276, 16
      %v3356 = vrot.slane %v3354, 5
      %v3357 = vsel %vm1229, %v3352, %v3356
      %v3358 = vshrl.u32 %v3276, 16
      %v3360 = vrot.slane %v3358, 4
      %v3361 = vor.u32 %v3360, %v3356
      %v3362 = vrot.slane %v3361, 4
      %v3364 = vshll.u32 %v3277, 16
      %v3366 = vrot.slane %v3364, 5
      %v3367 = vsel %vm1229, %v3362, %v3366
      %v3369 = vshrl.u32 %v3278, 16
      %v3371 = vrot.slane %v3369, 4
      %v3372 = vshll.u32 %v3278, 16
      %v3374 = vrot.slane %v3372, 5
      %v3375 = vor.u32 %v3371, %v3374
      %v3376 = vrot.slane %v3375, 4
      %v3378 = vshll.u32 %v3279, 16
      %v3380 = vrot.slane %v3378, 5
      %v3381 = vsel %vm1229, %v3376, %v3380
      %v3382 = vshrl.u32 %v3279, 16
      %v3384 = vrot.slane %v3382, 4
      %v3385 = vor.u32 %v3384, %v3380
      %v3386 = vrot.slane %v3385, 4
      %v3388 = vshll.u32 %v3280, 16
      %v3390 = vrot.slane %v3388, 5
      %v3391 = vsel %vm1229, %v3386, %v3390
      %v3393 = vshrl.u32 %v3281, 16
      %v3395 = vrot.slane %v3393, 4
      %v3396 = vshll.u32 %v3281, 16
      %v3398 = vrot.slane %v3396, 5
      %v3399 = vor.u32 %v3395, %v3398
      %v3400 = vrot.slane %v3399, 4
      %v3402 = vshll.u32 %v3282, 16
      %v3404 = vrot.slane %v3402, 5
      %v3405 = vsel %vm1229, %v3400, %v3404
      %v3406 = vshrl.u32 %v3282, 16
      %v3408 = vrot.slane %v3406, 4
      %v3409 = vor.u32 %v3408, %v3404
      %v3410 = vrot.slane %v3409, 4
      %v3412 = vshll.u32 %v3283, 16
      %v3414 = vrot.slane %v3412, 5
      %v3415 = vsel %vm1229, %v3410, %v3414
      %v3417 = vshrl.u32 %v3284, 16
      %v3419 = vrot.slane %v3417, 4
      %v3420 = vshll.u32 %v3284, 16
      %v3422 = vrot.slane %v3420, 5
      %v3423 = vor.u32 %v3419, %v3422
      %v3424 = vrot.slane %v3423, 4
      %v3426 = vshll.u32 %v3285, 16
      %v3428 = vrot.slane %v3426, 5
      %v3429 = vsel %vm1229, %v3424, %v3428
      %v3430 = vshrl.u32 %v3285, 16
      %v3432 = vrot.slane %v3430, 4
      %v3433 = vor.u32 %v3432, %v3428
      %v3434 = vrot.slane %v3433, 4
      %v3436 = vshll.u32 %v3286, 16
      %v3438 = vrot.slane %v3436, 5
      %v3439 = vsel %vm1229, %v3434, %v3438
      %v3441 = vshrl.u32 %v3287, 16
      %v3443 = vrot.slane %v3441, 4
      %v3444 = vshll.u32 %v3287, 16
      %v3446 = vrot.slane %v3444, 5
      %v3447 = vor.u32 %v3443, %v3446
      %v3448 = vrot.slane %v3447, 4
      %v3450 = vshll.u32 %v3288, 16
      %v3452 = vrot.slane %v3450, 5
      %v3453 = vsel %vm1229, %v3448, %v3452
      %v3454 = vshrl.u32 %v3288, 16
      %v3456 = vrot.slane %v3454, 4
      %v3457 = vor.u32 %v3456, %v3452
      %v3458 = vrot.slane %v3457, 4
      %v3460 = vshll.u32 %v3289, 16
      %v3462 = vrot.slane %v3460, 5
      %v3463 = vsel %vm1229, %v3458, %v3462
      %v3465 = vshrl.u32 %v3290, 16
      %v3467 = vrot.slane %v3465, 4
      %v3468 = vshll.u32 %v3290, 16
      %v3470 = vrot.slane %v3468, 5
      %v3471 = vor.u32 %v3467, %v3470
      %v3472 = vrot.slane %v3471, 4
      %v3474 = vshll.u32 %v3291, 16
      %v3476 = vrot.slane %v3474, 5
      %v3477 = vsel %vm1229, %v3472, %v3476
      %v3478 = vshrl.u32 %v3291, 16
      %v3480 = vrot.slane %v3478, 4
      %v3481 = vor.u32 %v3480, %v3476
      %v3482 = vrot.slane %v3481, 4
      %v3484 = vshll.u32 %v3292, 16
      %v3486 = vrot.slane %v3484, 5
      %v3487 = vsel %vm1229, %v3482, %v3486
      %v3489 = vshrl.u32 %v3293, 16
      %v3491 = vrot.slane %v3489, 4
      %v3492 = vshll.u32 %v3293, 16
      %v3494 = vrot.slane %v3492, 5
      %v3495 = vor.u32 %v3491, %v3494
      %v3496 = vrot.slane %v3495, 4
      %v3498 = vshll.u32 %v3294, 16
      %v3500 = vrot.slane %v3498, 5
      %v3501 = vsel %vm1229, %v3496, %v3500
      %v3502 = vshrl.u32 %v3294, 16
      %v3504 = vrot.slane %v3502, 4
      %v3505 = vor.u32 %v3504, %v3500
      %v3506 = vrot.slane %v3505, 4
      %v3508 = vshll.u32 %v3295, 16
      %v3510 = vrot.slane %v3508, 5
      %v3511 = vsel %vm1229, %v3506, %v3510
      %v3513 = vshrl.u32 %v3296, 16
      %v3515 = vrot.slane %v3513, 4
      %v3516 = vshll.u32 %v3296, 16
      %v3518 = vrot.slane %v3516, 5
      %v3519 = vor.u32 %v3515, %v3518
      %v3520 = vrot.slane %v3519, 4
      %v3522 = vshll.u32 %v3297, 16
      %v3524 = vrot.slane %v3522, 5
      %v3525 = vsel %vm1229, %v3520, %v3524
      %v3526 = vshrl.u32 %v3297, 16
      %v3528 = vrot.slane %v3526, 4
      %v3529 = vor.u32 %v3528, %v3524
      %v3530 = vrot.slane %v3529, 4
      %v3532 = vshll.u32 %v3298, 16
      %v3534 = vrot.slane %v3532, 5
      %v3535 = vsel %vm1229, %v3530, %v3534
      %v3537 = vshrl.u32 %v3299, 16
      %v3539 = vrot.slane %v3537, 4
      %v3540 = vshll.u32 %v3299, 16
      %v3542 = vrot.slane %v3540, 5
      %v3543 = vor.u32 %v3539, %v3542
      %v3544 = vrot.slane %v3543, 4
      %v3546 = vshll.u32 %v3300, 16
      %v3548 = vrot.slane %v3546, 5
      %v3549 = vsel %vm1229, %v3544, %v3548
      %v3550 = vshrl.u32 %v3300, 16
      %v3552 = vrot.slane %v3550, 4
      %v3553 = vor.u32 %v3552, %v3548
      %v3554 = vrot.slane %v3553, 4
      %v3556 = vshll.u32 %v3301, 16
      %v3558 = vrot.slane %v3556, 5
      %v3559 = vsel %vm1229, %v3554, %v3558
      %v3561 = vshrl.u32 %v3302, 16
      %v3563 = vrot.slane %v3561, 4
      %v3564 = vshll.u32 %v3302, 16
      %v3566 = vrot.slane %v3564, 5
      %v3567 = vor.u32 %v3563, %v3566
      %v3568 = vrot.slane %v3567, 4
      %v3570 = vshll.u32 %v3303, 16
      %v3572 = vrot.slane %v3570, 5
      %v3573 = vsel %vm1229, %v3568, %v3572
      %v3574 = vshrl.u32 %v3303, 16
      %v3576 = vrot.slane %v3574, 4
      %v3577 = vor.u32 %v3576, %v3572
      %v3578 = vrot.slane %v3577, 4
      %v3580 = vshll.u32 %v3304, 16
      %v3582 = vrot.slane %v3580, 5
      %v3583 = vsel %vm1229, %v3578, %v3582
      %v3585 = vshrl.u32 %v3305, 16
      %v3587 = vrot.slane %v3585, 4
      %v3588 = vshll.u32 %v3305, 16
      %v3590 = vrot.slane %v3588, 5
      %v3591 = vor.u32 %v3587, %v3590
      %v3592 = vrot.slane %v3591, 4
      %v3594 = vshll.u32 %v3306, 16
      %v3596 = vrot.slane %v3594, 5
      %v3597 = vsel %vm1229, %v3592, %v3596
      %v3598 = vshrl.u32 %v3306, 16
      %v3600 = vrot.slane %v3598, 4
      %v3601 = vor.u32 %v3600, %v3596
      %v3602 = vrot.slane %v3601, 4
      %v3604 = vshll.u32 %v3307, 16
      %v3606 = vrot.slane %v3604, 5
      %v3607 = vsel %vm1229, %v3602, %v3606
      %v3609 = vshrl.u32 %v3308, 16
      %v3611 = vrot.slane %v3609, 4
      %v3612 = vshll.u32 %v3308, 16
      %v3614 = vrot.slane %v3612, 5
      %v3615 = vor.u32 %v3611, %v3614
      %v3616 = vrot.slane %v3615, 4
      %v3618 = vshll.u32 %v3309, 16
      %v3620 = vrot.slane %v3618, 5
      %v3621 = vsel %vm1229, %v3616, %v3620
      %v3622 = vshrl.u32 %v3309, 16
      %v3624 = vrot.slane %v3622, 4
      %v3625 = vor.u32 %v3624, %v3620
      %v3626 = vrot.slane %v3625, 4
      %v3628 = vshll.u32 %v3310, 16
      %v3630 = vrot.slane %v3628, 5
      %v3631 = vsel %vm1229, %v3626, %v3630
      %v3633 = vshrl.u32 %v3311, 16
      %v3635 = vrot.slane %v3633, 4
      %v3636 = vshll.u32 %v3311, 16
      %v3638 = vrot.slane %v3636, 5
      %v3639 = vor.u32 %v3635, %v3638
      %v3640 = vrot.slane %v3639, 4
      %v3642 = vshll.u32 %v3312, 16
      %v3644 = vrot.slane %v3642, 5
      %v3645 = vsel %vm1229, %v3640, %v3644
      %v3646 = vshrl.u32 %v3312, 16
      %v3648 = vrot.slane %v3646, 4
      %v3649 = vor.u32 %v3648, %v3644
      %v3650 = vrot.slane %v3649, 4
      %v3652 = vshll.u32 %v3313, 16
      %v3654 = vrot.slane %v3652, 5
      %v3655 = vsel %vm1229, %v3650, %v3654
      %v3657 = vshrl.u32 %v3314, 16
      %v3659 = vrot.slane %v3657, 4
      %v3660 = vshll.u32 %v3314, 16
      %v3662 = vrot.slane %v3660, 5
      %v3663 = vor.u32 %v3659, %v3662
      %v3664 = vrot.slane %v3663, 4
      %v3666 = vshll.u32 %v3315, 16
      %v3668 = vrot.slane %v3666, 5
      %v3669 = vsel %vm1229, %v3664, %v3668
      %v3670 = vshrl.u32 %v3315, 16
      %v3672 = vrot.slane %v3670, 4
      %v3673 = vor.u32 %v3672, %v3668
      %v3674 = vrot.slane %v3673, 4
      %v3676 = vshll.u32 %v3316, 16
      %v3678 = vrot.slane %v3676, 5
      %v3679 = vsel %vm1229, %v3674, %v3678
      %v3681 = vshrl.u32 %v3317, 16
      %v3683 = vrot.slane %v3681, 4
      %v3684 = vshll.u32 %v3317, 16
      %v3686 = vrot.slane %v3684, 5
      %v3687 = vor.u32 %v3683, %v3686
      %v3688 = vrot.slane %v3687, 4
      %v3690 = vshll.u32 %v3318, 16
      %v3692 = vrot.slane %v3690, 5
      %v3693 = vsel %vm1229, %v3688, %v3692
      %v3694 = vshrl.u32 %v3318, 16
      %v3696 = vrot.slane %v3694, 4
      %v3697 = vor.u32 %v3696, %v3692
      %v3698 = vrot.slane %v3697, 4
      %v3700 = vshll.u32 %v3319, 16
      %v3702 = vrot.slane %v3700, 5
      %v3703 = vsel %vm1229, %v3698, %v3702
      %v3704 = vunpack.c.l.b16 %v3333
      %v3705 = vunpack.c.l.b16 %v3343
      %v3706 = vunpack.c.l.b16 %v3357
      %v3707 = vunpack.c.l.b16 %v3367
      %v3708 = vunpack.c.l.b16 %v3381
      %v3709 = vunpack.c.l.b16 %v3391
      %v3710 = vunpack.c.l.b16 %v3405
      %v3711 = vunpack.c.l.b16 %v3415
      %v3712 = vunpack.c.l.b16 %v3429
      %v3713 = vunpack.c.l.b16 %v3439
      %v3714 = vunpack.c.l.b16 %v3453
      %v3715 = vunpack.c.l.b16 %v3463
      %v3716 = vunpack.c.l.b16 %v3477
      %v3717 = vunpack.c.l.b16 %v3487
      %v3718 = vunpack.c.l.b16 %v3501
      %v3719 = vunpack.c.l.b16 %v3511
      %v3720 = vunpack.c.l.b16 %v3525
      %v3721 = vunpack.c.l.b16 %v3535
      %v3722 = vunpack.c.l.b16 %v3549
      %v3723 = vunpack.c.l.b16 %v3559
      %v3724 = vunpack.c.l.b16 %v3573
      %v3725 = vunpack.c.l.b16 %v3583
      %v3726 = vunpack.c.l.b16 %v3597
      %v3727 = vunpack.c.l.b16 %v3607
      %v3728 = vunpack.c.l.b16 %v3621
      %v3729 = vunpack.c.l.b16 %v3631
      %v3730 = vunpack.c.l.b16 %v3645
      %v3731 = vunpack.c.l.b16 %v3655
      %v3732 = vunpack.c.l.b16 %v3669
      %v3733 = vunpack.c.l.b16 %v3679
      %v3734 = vunpack.c.l.b16 %v3693
      %v3735 = vunpack.c.l.b16 %v3703
      %v3736 = vpack.c.b16 %v3705, %v3704
      %v3737 = vpack.c.b16 %v3707, %v3706
      %v3738 = vpack.c.b16 %v3709, %v3708
      %v3739 = vpack.c.b16 %v3711, %v3710
      %v3740 = vpack.c.b16 %v3713, %v3712
      %v3741 = vpack.c.b16 %v3715, %v3714
      %v3742 = vpack.c.b16 %v3717, %v3716
      %v3743 = vpack.c.b16 %v3719, %v3718
      %v3744 = vpack.c.b16 %v3721, %v3720
      %v3745 = vpack.c.b16 %v3723, %v3722
      %v3746 = vpack.c.b16 %v3725, %v3724
      %v3747 = vpack.c.b16 %v3727, %v3726
      %v3748 = vpack.c.b16 %v3729, %v3728
      %v3749 = vpack.c.b16 %v3731, %v3730
      %v3750 = vpack.c.b16 %v3733, %v3732
      %v3751 = vpack.c.b16 %v3735, %v3734
      %3752 = vrot.lane.b32.xlu0 %v3736, 28
      %v3753 = vpop.permute.xlu0 %3752
      %3754 = vrot.lane.b32.xlu0 %v3737, 28
      %v3755 = vpop.permute.xlu0 %3754
      %3756 = vrot.lane.b32.xlu0 %v3738, 28
      %v3757 = vpop.permute.xlu0 %3756
      %3758 = vrot.lane.b32.xlu0 %v3739, 28
      %v3759 = vpop.permute.xlu0 %3758
      %3760 = vrot.lane.b32.xlu0 %v3740, 28
      %v3761 = vpop.permute.xlu0 %3760
      %3762 = vrot.lane.b32.xlu0 %v3741, 28
      %v3763 = vpop.permute.xlu0 %3762
      %3764 = vrot.lane.b32.xlu0 %v3742, 28
      %v3765 = vpop.permute.xlu0 %3764
      %3766 = vrot.lane.b32.xlu0 %v3743, 28
      %v3767 = vpop.permute.xlu0 %3766
      %3768 = vrot.lane.b32.xlu0 %v3744, 28
      %v3769 = vpop.permute.xlu0 %3768
      %3770 = vrot.lane.b32.xlu0 %v3745, 28
      %v3771 = vpop.permute.xlu0 %3770
      %3772 = vrot.lane.b32.xlu0 %v3746, 28
      %v3773 = vpop.permute.xlu0 %3772
      %3774 = vrot.lane.b32.xlu0 %v3747, 28
      %v3775 = vpop.permute.xlu0 %3774
      %3776 = vrot.lane.b32.xlu0 %v3748, 28
      %v3777 = vpop.permute.xlu0 %3776
      %3778 = vrot.lane.b32.xlu0 %v3749, 28
      %v3779 = vpop.permute.xlu0 %3778
      %3780 = vrot.lane.b32.xlu0 %v3750, 28
      %v3781 = vpop.permute.xlu0 %3780
      %3782 = vrot.lane.b32.xlu0 %v3751, 28
      %v3783 = vpop.permute.xlu0 %3782
      %vm3800 = vcmask 261344
      %3801 = vst.msk [vmem:[#allocation3] sm:$0xff] %vm3800, %v3753
      %3802 = vst.msk [vmem:[#allocation3 + $0x8] sm:$0xff] %vm3800, %v3755
      %3803 = vst.msk [vmem:[#allocation3 + $0x10] sm:$0xff] %vm3800, %v3757
      %3804 = vst.msk [vmem:[#allocation3 + $0x18] sm:$0xff] %vm3800, %v3759
      %3805 = vst.msk [vmem:[#allocation3 + $0x20] sm:$0xff] %vm3800, %v3761
      %3806 = vst.msk [vmem:[#allocation3 + $0x28] sm:$0xff] %vm3800, %v3763
      %3807 = vst.msk [vmem:[#allocation3 + $0x30] sm:$0xff] %vm3800, %v3765
      %3808 = vst.msk [vmem:[#allocation3 + $0x38] sm:$0xff] %vm3800, %v3767
      %3809 = vst.msk [vmem:[#allocation3 + $0x40] sm:$0xff] %vm3800, %v3769
      %3810 = vst.msk [vmem:[#allocation3 + $0x48] sm:$0xff] %vm3800, %v3771
      %3811 = vst.msk [vmem:[#allocation3 + $0x50] sm:$0xff] %vm3800, %v3773
      %3812 = vst.msk [vmem:[#allocation3 + $0x58] sm:$0xff] %vm3800, %v3775
      %3813 = vst.msk [vmem:[#allocation3 + $0x60] sm:$0xff] %vm3800, %v3777
      %3814 = vst.msk [vmem:[#allocation3 + $0x68] sm:$0xff] %vm3800, %v3779
      %3815 = vst.msk [vmem:[#allocation3 + $0x70] sm:$0xff] %vm3800, %v3781
      %3816 = vst.msk [vmem:[#allocation3 + $0x78] sm:$0xff] %vm3800, %v3783
      %v3817 = vld [vmem:[%s3094] sm:$0xe]
      %v3818 = vld [vmem:[%s3094 + $0x4] sm:$0xf]
      %v3819 = vld [vmem:[%s3094 + $0x8] sm:$0x1]
      %v3820 = vld [vmem:[%s3094 + $0xc] sm:$0xe]
      %v3821 = vld [vmem:[%s3094 + $0x10] sm:$0xf]
      %v3822 = vld [vmem:[%s3094 + $0x14] sm:$0x1]
      %v3823 = vld [vmem:[%s3094 + $0x18] sm:$0xe]
      %v3824 = vld [vmem:[%s3094 + $0x1c] sm:$0xf]
      %v3825 = vld [vmem:[%s3094 + $0x20] sm:$0x1]
      %v3826 = vld [vmem:[%s3094 + $0x24] sm:$0xe]
      %v3827 = vld [vmem:[%s3094 + $0x28] sm:$0xf]
      %v3828 = vld [vmem:[%s3094 + $0x2c] sm:$0x1]
      %v3829 = vld [vmem:[%s3094 + $0x30] sm:$0xe]
      %v3830 = vld [vmem:[%s3094 + $0x34] sm:$0xf]
      %v3831 = vld [vmem:[%s3094 + $0x38] sm:$0x1]
      %v3832 = vld [vmem:[%s3094 + $0x3c] sm:$0xe]
      %v3833 = vld [vmem:[%s3094 + $0x40] sm:$0xf]
      %v3834 = vld [vmem:[%s3094 + $0x44] sm:$0x1]
      %v3835 = vld [vmem:[%s3094 + $0x48] sm:$0xe]
      %v3836 = vld [vmem:[%s3094 + $0x4c] sm:$0xf]
      %v3837 = vld [vmem:[%s3094 + $0x50] sm:$0x1]
      %v3838 = vld [vmem:[%s3094 + $0x54] sm:$0xe]
      %v3839 = vld [vmem:[%s3094 + $0x58] sm:$0xf]
      %v3840 = vld [vmem:[%s3094 + $0x5c] sm:$0x1]
      %v3841 = vld [vmem:[%s3094 + $0x60] sm:$0xe]
      %v3842 = vld [vmem:[%s3094 + $0x64] sm:$0xf]
      %v3843 = vld [vmem:[%s3094 + $0x68] sm:$0x1]
      %v3844 = vld [vmem:[%s3094 + $0x6c] sm:$0xe]
      %v3845 = vld [vmem:[%s3094 + $0x70] sm:$0xf]
      %v3846 = vld [vmem:[%s3094 + $0x74] sm:$0x1]
      %v3847 = vld [vmem:[%s3094 + $0x78] sm:$0xe]
      %v3848 = vld [vmem:[%s3094 + $0x7c] sm:$0xf]
      %v3849 = vld [vmem:[%s3094 + $0x80] sm:$0x1]
      %v3850 = vld [vmem:[%s3094 + $0x84] sm:$0xe]
      %v3851 = vld [vmem:[%s3094 + $0x88] sm:$0xf]
      %v3852 = vld [vmem:[%s3094 + $0x8c] sm:$0x1]
      %v3853 = vld [vmem:[%s3094 + $0x90] sm:$0xe]
      %v3854 = vld [vmem:[%s3094 + $0x94] sm:$0xf]
      %v3855 = vld [vmem:[%s3094 + $0x98] sm:$0x1]
      %v3856 = vld [vmem:[%s3094 + $0x9c] sm:$0xe]
      %v3857 = vld [vmem:[%s3094 + $0xa0] sm:$0xf]
      %v3858 = vld [vmem:[%s3094 + $0xa4] sm:$0x1]
      %v3859 = vld [vmem:[%s3094 + $0xa8] sm:$0xe]
      %v3860 = vld [vmem:[%s3094 + $0xac] sm:$0xf]
      %v3861 = vld [vmem:[%s3094 + $0xb0] sm:$0x1]
      %v3862 = vld [vmem:[%s3094 + $0xb4] sm:$0xe]
      %v3863 = vld [vmem:[%s3094 + $0xb8] sm:$0xf]
      %v3864 = vld [vmem:[%s3094 + $0xbc] sm:$0x1]
      %v3913 = vrot.slane %v3817, 5
      %v3914 = vrot.slane %v3913, 4
      %v3915 = vrot.slane %v3818, 5
      %v3916 = vsel %vm1825, %v3914, %v3915
      %v3917 = vrot.slane %v3915, 4
      %v3918 = vrot.slane %v3819, 5
      %v3919 = vsel %vm1825, %v3917, %v3918
      %v3920 = vrot.slane %v3820, 5
      %v3921 = vrot.slane %v3920, 4
      %v3922 = vrot.slane %v3821, 5
      %v3923 = vsel %vm1825, %v3921, %v3922
      %v3924 = vrot.slane %v3922, 4
      %v3925 = vrot.slane %v3822, 5
      %v3926 = vsel %vm1825, %v3924, %v3925
      %v3927 = vrot.slane %v3823, 5
      %v3928 = vrot.slane %v3927, 4
      %v3929 = vrot.slane %v3824, 5
      %v3930 = vsel %vm1825, %v3928, %v3929
      %v3931 = vrot.slane %v3929, 4
      %v3932 = vrot.slane %v3825, 5
      %v3933 = vsel %vm1825, %v3931, %v3932
      %v3934 = vrot.slane %v3826, 5
      %v3935 = vrot.slane %v3934, 4
      %v3936 = vrot.slane %v3827, 5
      %v3937 = vsel %vm1825, %v3935, %v3936
      %v3938 = vrot.slane %v3936, 4
      %v3939 = vrot.slane %v3828, 5
      %v3940 = vsel %vm1825, %v3938, %v3939
      %v3941 = vrot.slane %v3829, 5
      %v3942 = vrot.slane %v3941, 4
      %v3943 = vrot.slane %v3830, 5
      %v3944 = vsel %vm1825, %v3942, %v3943
      %v3945 = vrot.slane %v3943, 4
      %v3946 = vrot.slane %v3831, 5
      %v3947 = vsel %vm1825, %v3945, %v3946
      %v3948 = vrot.slane %v3832, 5
      %v3949 = vrot.slane %v3948, 4
      %v3950 = vrot.slane %v3833, 5
      %v3951 = vsel %vm1825, %v3949, %v3950
      %v3952 = vrot.slane %v3950, 4
      %v3953 = vrot.slane %v3834, 5
      %v3954 = vsel %vm1825, %v3952, %v3953
      %v3955 = vrot.slane %v3835, 5
      %v3956 = vrot.slane %v3955, 4
      %v3957 = vrot.slane %v3836, 5
      %v3958 = vsel %vm1825, %v3956, %v3957
      %v3959 = vrot.slane %v3957, 4
      %v3960 = vrot.slane %v3837, 5
      %v3961 = vsel %vm1825, %v3959, %v3960
      %v3962 = vrot.slane %v3838, 5
      %v3963 = vrot.slane %v3962, 4
      %v3964 = vrot.slane %v3839, 5
      %v3965 = vsel %vm1825, %v3963, %v3964
      %v3966 = vrot.slane %v3964, 4
      %v3967 = vrot.slane %v3840, 5
      %v3968 = vsel %vm1825, %v3966, %v3967
      %v3969 = vrot.slane %v3841, 5
      %v3970 = vrot.slane %v3969, 4
      %v3971 = vrot.slane %v3842, 5
      %v3972 = vsel %vm1825, %v3970, %v3971
      %v3973 = vrot.slane %v3971, 4
      %v3974 = vrot.slane %v3843, 5
      %v3975 = vsel %vm1825, %v3973, %v3974
      %v3976 = vrot.slane %v3844, 5
      %v3977 = vrot.slane %v3976, 4
      %v3978 = vrot.slane %v3845, 5
      %v3979 = vsel %vm1825, %v3977, %v3978
      %v3980 = vrot.slane %v3978, 4
      %v3981 = vrot.slane %v3846, 5
      %v3982 = vsel %vm1825, %v3980, %v3981
      %v3983 = vrot.slane %v3847, 5
      %v3984 = vrot.slane %v3983, 4
      %v3985 = vrot.slane %v3848, 5
      %v3986 = vsel %vm1825, %v3984, %v3985
      %v3987 = vrot.slane %v3985, 4
      %v3988 = vrot.slane %v3849, 5
      %v3989 = vsel %vm1825, %v3987, %v3988
      %v3990 = vrot.slane %v3850, 5
      %v3991 = vrot.slane %v3990, 4
      %v3992 = vrot.slane %v3851, 5
      %v3993 = vsel %vm1825, %v3991, %v3992
      %v3994 = vrot.slane %v3992, 4
      %v3995 = vrot.slane %v3852, 5
      %v3996 = vsel %vm1825, %v3994, %v3995
      %v3997 = vrot.slane %v3853, 5
      %v3998 = vrot.slane %v3997, 4
      %v3999 = vrot.slane %v3854, 5
      %v4000 = vsel %vm1825, %v3998, %v3999
      %v4001 = vrot.slane %v3999, 4
      %v4002 = vrot.slane %v3855, 5
      %v4003 = vsel %vm1825, %v4001, %v4002
      %v4004 = vrot.slane %v3856, 5
      %v4005 = vrot.slane %v4004, 4
      %v4006 = vrot.slane %v3857, 5
      %v4007 = vsel %vm1825, %v4005, %v4006
      %v4008 = vrot.slane %v4006, 4
      %v4009 = vrot.slane %v3858, 5
      %v4010 = vsel %vm1825, %v4008, %v4009
      %v4011 = vrot.slane %v3859, 5
      %v4012 = vrot.slane %v4011, 4
      %v4013 = vrot.slane %v3860, 5
      %v4014 = vsel %vm1825, %v4012, %v4013
      %v4015 = vrot.slane %v4013, 4
      %v4016 = vrot.slane %v3861, 5
      %v4017 = vsel %vm1825, %v4015, %v4016
      %v4018 = vrot.slane %v3862, 5
      %v4019 = vrot.slane %v4018, 4
      %v4020 = vrot.slane %v3863, 5
      %v4021 = vsel %vm1825, %v4019, %v4020
      %v4022 = vrot.slane %v4020, 4
      %v4023 = vrot.slane %v3864, 5
      %v4024 = vsel %vm1825, %v4022, %v4023
      %v4025 = vunpack.c.l.b16 %v3916
      %v4026 = vunpack.c.l.b16 %v3919
      %v4027 = vunpack.c.l.b16 %v3923
      %v4028 = vunpack.c.l.b16 %v3926
      %v4029 = vunpack.c.l.b16 %v3930
      %v4030 = vunpack.c.l.b16 %v3933
      %v4031 = vunpack.c.l.b16 %v3937
      %v4032 = vunpack.c.l.b16 %v3940
      %v4033 = vunpack.c.l.b16 %v3944
      %v4034 = vunpack.c.l.b16 %v3947
      %v4035 = vunpack.c.l.b16 %v3951
      %v4036 = vunpack.c.l.b16 %v3954
      %v4037 = vunpack.c.l.b16 %v3958
      %v4038 = vunpack.c.l.b16 %v3961
      %v4039 = vunpack.c.l.b16 %v3965
      %v4040 = vunpack.c.l.b16 %v3968
      %v4041 = vunpack.c.l.b16 %v3972
      %v4042 = vunpack.c.l.b16 %v3975
      %v4043 = vunpack.c.l.b16 %v3979
      %v4044 = vunpack.c.l.b16 %v3982
      %v4045 = vunpack.c.l.b16 %v3986
      %v4046 = vunpack.c.l.b16 %v3989
      %v4047 = vunpack.c.l.b16 %v3993
      %v4048 = vunpack.c.l.b16 %v3996
      %v4049 = vunpack.c.l.b16 %v4000
      %v4050 = vunpack.c.l.b16 %v4003
      %v4051 = vunpack.c.l.b16 %v4007
      %v4052 = vunpack.c.l.b16 %v4010
      %v4053 = vunpack.c.l.b16 %v4014
      %v4054 = vunpack.c.l.b16 %v4017
      %v4055 = vunpack.c.l.b16 %v4021
      %v4056 = vunpack.c.l.b16 %v4024
      %v4057 = vpack.c.b16 %v4026, %v4025
      %v4058 = vpack.c.b16 %v4028, %v4027
      %v4059 = vpack.c.b16 %v4030, %v4029
      %v4060 = vpack.c.b16 %v4032, %v4031
      %v4061 = vpack.c.b16 %v4034, %v4033
      %v4062 = vpack.c.b16 %v4036, %v4035
      %v4063 = vpack.c.b16 %v4038, %v4037
      %v4064 = vpack.c.b16 %v4040, %v4039
      %v4065 = vpack.c.b16 %v4042, %v4041
      %v4066 = vpack.c.b16 %v4044, %v4043
      %v4067 = vpack.c.b16 %v4046, %v4045
      %v4068 = vpack.c.b16 %v4048, %v4047
      %v4069 = vpack.c.b16 %v4050, %v4049
      %v4070 = vpack.c.b16 %v4052, %v4051
      %v4071 = vpack.c.b16 %v4054, %v4053
      %v4072 = vpack.c.b16 %v4056, %v4055
      %4073 = vrot.lane.b32.xlu0 %v4057, 32
      %v4074 = vpop.permute.xlu0 %4073
      %4075 = vrot.lane.b32.xlu0 %v4058, 32
      %v4076 = vpop.permute.xlu0 %4075
      %4077 = vrot.lane.b32.xlu0 %v4059, 32
      %v4078 = vpop.permute.xlu0 %4077
      %4079 = vrot.lane.b32.xlu0 %v4060, 32
      %v4080 = vpop.permute.xlu0 %4079
      %4081 = vrot.lane.b32.xlu0 %v4061, 32
      %v4082 = vpop.permute.xlu0 %4081
      %4083 = vrot.lane.b32.xlu0 %v4062, 32
      %v4084 = vpop.permute.xlu0 %4083
      %4085 = vrot.lane.b32.xlu0 %v4063, 32
      %v4086 = vpop.permute.xlu0 %4085
      %4087 = vrot.lane.b32.xlu0 %v4064, 32
      %v4088 = vpop.permute.xlu0 %4087
      %4089 = vrot.lane.b32.xlu0 %v4065, 32
      %v4090 = vpop.permute.xlu0 %4089
      %4091 = vrot.lane.b32.xlu0 %v4066, 32
      %v4092 = vpop.permute.xlu0 %4091
      %4093 = vrot.lane.b32.xlu0 %v4067, 32
      %v4094 = vpop.permute.xlu0 %4093
      %4095 = vrot.lane.b32.xlu0 %v4068, 32
      %v4096 = vpop.permute.xlu0 %4095
      %4097 = vrot.lane.b32.xlu0 %v4069, 32
      %v4098 = vpop.permute.xlu0 %4097
      %4099 = vrot.lane.b32.xlu0 %v4070, 32
      %v4100 = vpop.permute.xlu0 %4099
      %4101 = vrot.lane.b32.xlu0 %v4071, 32
      %v4102 = vpop.permute.xlu0 %4101
      %4103 = vrot.lane.b32.xlu0 %v4072, 32
      %v4104 = vpop.permute.xlu0 %4103
      %vm4121 = vcmask 294144
      %4122 = vst.msk [vmem:[#allocation3] sm:$0xff] %vm4121, %v4074
      %4123 = vst.msk [vmem:[#allocation3 + $0x8] sm:$0xff] %vm4121, %v4076
      %4124 = vst.msk [vmem:[#allocation3 + $0x10] sm:$0xff] %vm4121, %v4078
      %4125 = vst.msk [vmem:[#allocation3 + $0x18] sm:$0xff] %vm4121, %v4080
      %4126 = vst.msk [vmem:[#allocation3 + $0x20] sm:$0xff] %vm4121, %v4082
      %4127 = vst.msk [vmem:[#allocation3 + $0x28] sm:$0xff] %vm4121, %v4084
      %4128 = vst.msk [vmem:[#allocation3 + $0x30] sm:$0xff] %vm4121, %v4086
      %4129 = vst.msk [vmem:[#allocation3 + $0x38] sm:$0xff] %vm4121, %v4088
      %4130 = vst.msk [vmem:[#allocation3 + $0x40] sm:$0xff] %vm4121, %v4090
      %4131 = vst.msk [vmem:[#allocation3 + $0x48] sm:$0xff] %vm4121, %v4092
      %4132 = vst.msk [vmem:[#allocation3 + $0x50] sm:$0xff] %vm4121, %v4094
      %4133 = vst.msk [vmem:[#allocation3 + $0x58] sm:$0xff] %vm4121, %v4096
      %4134 = vst.msk [vmem:[#allocation3 + $0x60] sm:$0xff] %vm4121, %v4098
      %4135 = vst.msk [vmem:[#allocation3 + $0x68] sm:$0xff] %vm4121, %v4100
      %4136 = vst.msk [vmem:[#allocation3 + $0x70] sm:$0xff] %vm4121, %v4102
      %4137 = vst.msk [vmem:[#allocation3 + $0x78] sm:$0xff] %vm4121, %v4104
      %v4138 = vld [vmem:[#allocation3] sm:$0xff]
      %v4139 = vld [vmem:[#allocation3 + $0x8] sm:$0xff]
      %v4140 = vld [vmem:[#allocation3 + $0x10] sm:$0xff]
      %v4141 = vld [vmem:[#allocation3 + $0x18] sm:$0xff]
      %v4142 = vld [vmem:[#allocation3 + $0x20] sm:$0xff]
      %v4143 = vld [vmem:[#allocation3 + $0x28] sm:$0xff]
      %v4144 = vld [vmem:[#allocation3 + $0x30] sm:$0xff]
      %v4145 = vld [vmem:[#allocation3 + $0x38] sm:$0xff]
      %v4146 = vld [vmem:[#allocation3 + $0x40] sm:$0xff]
      %v4147 = vld [vmem:[#allocation3 + $0x48] sm:$0xff]
      %v4148 = vld [vmem:[#allocation3 + $0x50] sm:$0xff]
      %v4149 = vld [vmem:[#allocation3 + $0x58] sm:$0xff]
      %v4150 = vld [vmem:[#allocation3 + $0x60] sm:$0xff]
      %v4151 = vld [vmem:[#allocation3 + $0x68] sm:$0xff]
      %v4152 = vld [vmem:[#allocation3 + $0x70] sm:$0xff]
      %v4153 = vld [vmem:[#allocation3 + $0x78] sm:$0xff]
      %v4154 = vld [vmem:[%s1] sm:$0xf]
      %v4155 = vld [vmem:[%s1 + $0x4] sm:$0xf]
      %v4156 = vld [vmem:[%s1 + $0x8] sm:$0xf]
      %v4157 = vld [vmem:[%s1 + $0xc] sm:$0xf]
      %v4158 = vld [vmem:[%s1 + $0x10] sm:$0x3]
      %v4164 = vunpack.c.l.b16 %v4154
      %v4165 = vunpack.c.l.b16 %v4155
      %v4166 = vunpack.c.l.b16 %v4156
      %v4167 = vunpack.c.l.b16 %v4157
      %v4168 = vunpack.c.l.b16 %v4158
      %v4169 = vpack.c.b16 %v4165, %v4164
      %v4170 = vpack.c.b16 %v4167, %v4166
      %v4171 = vpack.c.b16 %v4168, %v4168
      %vm4174 = vcmask 293888
      %v4176 = vsel %vm4174, %v4138, 0
      %v4179 = vsel %vm4174, %v4139, 0
      %v4182 = vsel %vm4174, %v4140, 0
      %v4185 = vsel %vm4174, %v4141, 0
      %v4188 = vsel %vm4174, %v4142, 0
      %v4191 = vsel %vm4174, %v4143, 0
      %v4194 = vsel %vm4174, %v4144, 0
      %v4197 = vsel %vm4174, %v4145, 0
      %v4200 = vsel %vm4174, %v4146, 0
      %v4203 = vsel %vm4174, %v4147, 0
      %v4206 = vsel %vm4174, %v4148, 0
      %v4209 = vsel %vm4174, %v4149, 0
      %v4212 = vsel %vm4174, %v4150, 0
      %v4215 = vsel %vm4174, %v4151, 0
      %v4218 = vsel %vm4174, %v4152, 0
      %v4221 = vsel %vm4174, %v4153, 0
      %vm4223 = vcmask 1041408
      %v4225 = vsel %vm4223, %v4171, 0
      %4227 = vmatprep.subr.bf16.mxu0 0
      %4228 = vmatpush1.bf16.msra.mxu0 %v4169
      %4229 = vmatprep.subr.bf16.mxu0 0
      %4230 = vmatpush1.bf16.msra.mxu0 %v4170
      %4231 = vmatprep.subr.bf16.mxu0 0
      %4232 = vmatpush1.bf16.msra.mxu0 %v4225
      %4233 = vmatprep.subr.bf16.mxu0 0
      %4234 = vmatpush1.bf16.msra.mxu0 0
      %4235 = vmatprep.subr.bf16.mxu0 0
      %4236 = vmatpush1.bf16.msra.mxu0 0
      %4237 = vmatprep.subr.bf16.mxu0 0
      %4238 = vmatpush1.bf16.msra.mxu0 0
      %4239 = vmatprep.subr.bf16.mxu0 0
      %4240 = vmatpush1.bf16.msra.mxu0 0
      %4241 = vmatprep.subr.bf16.mxu0 0
      %4242 = vmatpush1.bf16.msra.mxu0 0
      %4243 = vmatprep.subr.bf16.mxu0 0
      %4244 = vmatpush1.bf16.msra.mxu0 0
      %4245 = vmatprep.subr.bf16.mxu0 0
      %4246 = vmatpush1.bf16.msra.mxu0 0
      %4247 = vmatprep.subr.bf16.mxu0 0
      %4248 = vmatpush1.bf16.msra.mxu0 0
      %4249 = vmatprep.subr.bf16.mxu0 0
      %4250 = vmatpush1.bf16.msra.mxu0 0
      %4251 = vmatprep.subr.bf16.mxu0 0
      %4252 = vmatpush1.bf16.msra.mxu0 0
      %4253 = vmatprep.subr.bf16.mxu0 0
      %4254 = vmatpush1.bf16.msra.mxu0 0
      %4255 = vmatprep.subr.bf16.mxu0 0
      %4256 = vmatpush1.bf16.msra.mxu0 0
      %4257 = vmatprep.subr.bf16.mxu0 0
      %4258 = vmatpush1.bf16.msra.mxu0 0
      %4259 = vmatprep.mubr.bf16.mxu0 0
      %4260 = vmatmul.mubr.bf16.gmra.mrb[0].mxu0 %v4176
      %v4261 = vpop.f32.mrb[0].mxu0
      %v4262 = vadd.f32 0.0, %v4261
      %v4263 = vpop.f32.mrb[0].mxu0
      %v4264 = vpop.f32.mrb[0].mxu0
      %v4265 = vadd.f32 0.0, %v4264
      %v4266 = vpop.f32.mrb[0].mxu0
      %4267 = vmatprep.mubr.bf16.mxu0 0
      %4268 = vmatmul.mubr.bf16.gmra.mrb[0].mxu0 %v4179
      %v4269 = vpop.f32.mrb[0].mxu0
      %v4270 = vadd.f32 0.0, %v4269
      %v4271 = vpop.f32.mrb[0].mxu0
      %v4272 = vpop.f32.mrb[0].mxu0
      %v4273 = vadd.f32 0.0, %v4272
      %v4274 = vpop.f32.mrb[0].mxu0
      %4275 = vmatprep.mubr.bf16.mxu0 0
      %4276 = vmatmul.mubr.bf16.gmra.mrb[0].mxu0 %v4182
      %v4277 = vpop.f32.mrb[0].mxu0
      %v4278 = vadd.f32 0.0, %v4277
      %v4279 = vpop.f32.mrb[0].mxu0
      %v4280 = vpop.f32.mrb[0].mxu0
      %v4281 = vadd.f32 0.0, %v4280
      %v4282 = vpop.f32.mrb[0].mxu0
      %4283 = vmatprep.mubr.bf16.mxu0 0
      %4284 = vmatmul.mubr.bf16.gmra.mrb[0].mxu0 %v4185
      %v4285 = vpop.f32.mrb[0].mxu0
      %v4286 = vadd.f32 0.0, %v4285
      %v4287 = vpop.f32.mrb[0].mxu0
      %v4288 = vpop.f32.mrb[0].mxu0
      %v4289 = vadd.f32 0.0, %v4288
      %v4290 = vpop.f32.mrb[0].mxu0
      %4291 = vmatprep.mubr.bf16.mxu0 0
      %4292 = vmatmul.mubr.bf16.gmra.mrb[0].mxu0 %v4188
      %v4293 = vpop.f32.mrb[0].mxu0
      %v4294 = vadd.f32 0.0, %v4293
      %v4295 = vpop.f32.mrb[0].mxu0
      %v4296 = vpop.f32.mrb[0].mxu0
      %v4297 = vadd.f32 0.0, %v4296
      %v4298 = vpop.f32.mrb[0].mxu0
      %4299 = vmatprep.mubr.bf16.mxu0 0
      %4300 = vmatmul.mubr.bf16.gmra.mrb[0].mxu0 %v4191
      %v4301 = vpop.f32.mrb[0].mxu0
      %v4302 = vadd.f32 0.0, %v4301
      %v4303 = vpop.f32.mrb[0].mxu0
      %v4304 = vpop.f32.mrb[0].mxu0
      %v4305 = vadd.f32 0.0, %v4304
      %v4306 = vpop.f32.mrb[0].mxu0
      %4307 = vmatprep.mubr.bf16.mxu0 0
      %4308 = vmatmul.mubr.bf16.gmra.mrb[0].mxu0 %v4194
      %v4309 = vpop.f32.mrb[0].mxu0
      %v4310 = vadd.f32 0.0, %v4309
      %v4311 = vpop.f32.mrb[0].mxu0
      %v4312 = vpop.f32.mrb[0].mxu0
      %v4313 = vadd.f32 0.0, %v4312
      %v4314 = vpop.f32.mrb[0].mxu0
      %4315 = vmatprep.mubr.bf16.mxu0 0
      %4316 = vmatmul.mubr.bf16.gmra.mrb[0].mxu0 %v4197
      %v4317 = vpop.f32.mrb[0].mxu0
      %v4318 = vadd.f32 0.0, %v4317
      %v4319 = vpop.f32.mrb[0].mxu0
      %v4320 = vpop.f32.mrb[0].mxu0
      %v4321 = vadd.f32 0.0, %v4320
      %v4322 = vpop.f32.mrb[0].mxu0
      %4323 = vmatprep.mubr.bf16.mxu0 0
      %4324 = vmatmul.mubr.bf16.gmra.mrb[0].mxu0 %v4200
      %v4325 = vpop.f32.mrb[0].mxu0
      %v4326 = vadd.f32 0.0, %v4325
      %v4327 = vpop.f32.mrb[0].mxu0
      %v4328 = vpop.f32.mrb[0].mxu0
      %v4329 = vadd.f32 0.0, %v4328
      %v4330 = vpop.f32.mrb[0].mxu0
      %4331 = vmatprep.mubr.bf16.mxu0 0
      %4332 = vmatmul.mubr.bf16.gmra.mrb[0].mxu0 %v4203
      %v4333 = vpop.f32.mrb[0].mxu0
      %v4334 = vadd.f32 0.0, %v4333
      %v4335 = vpop.f32.mrb[0].mxu0
      %v4336 = vpop.f32.mrb[0].mxu0
      %v4337 = vadd.f32 0.0, %v4336
      %v4338 = vpop.f32.mrb[0].mxu0
      %4339 = vmatprep.mubr.bf16.mxu0 0
      %4340 = vmatmul.mubr.bf16.gmra.mrb[0].mxu0 %v4206
      %v4341 = vpop.f32.mrb[0].mxu0
      %v4342 = vadd.f32 0.0, %v4341
      %v4343 = vpop.f32.mrb[0].mxu0
      %v4344 = vpop.f32.mrb[0].mxu0
      %v4345 = vadd.f32 0.0, %v4344
      %v4346 = vpop.f32.mrb[0].mxu0
      %4347 = vmatprep.mubr.bf16.mxu0 0
      %4348 = vmatmul.mubr.bf16.gmra.mrb[0].mxu0 %v4209
      %v4349 = vpop.f32.mrb[0].mxu0
      %v4350 = vadd.f32 0.0, %v4349
      %v4351 = vpop.f32.mrb[0].mxu0
      %v4352 = vpop.f32.mrb[0].mxu0
      %v4353 = vadd.f32 0.0, %v4352
      %v4354 = vpop.f32.mrb[0].mxu0
      %4355 = vmatprep.mubr.bf16.mxu0 0
      %4356 = vmatmul.mubr.bf16.gmra.mrb[0].mxu0 %v4212
      %v4357 = vpop.f32.mrb[0].mxu0
      %v4358 = vadd.f32 0.0, %v4357
      %v4359 = vpop.f32.mrb[0].mxu0
      %v4360 = vpop.f32.mrb[0].mxu0
      %v4361 = vadd.f32 0.0, %v4360
      %v4362 = vpop.f32.mrb[0].mxu0
      %4363 = vmatprep.mubr.bf16.mxu0 0
      %4364 = vmatmul.mubr.bf16.gmra.mrb[0].mxu0 %v4215
      %v4365 = vpop.f32.mrb[0].mxu0
      %v4366 = vadd.f32 0.0, %v4365
      %v4367 = vpop.f32.mrb[0].mxu0
      %v4368 = vpop.f32.mrb[0].mxu0
      %v4369 = vadd.f32 0.0, %v4368
      %v4370 = vpop.f32.mrb[0].mxu0
      %4371 = vmatprep.mubr.bf16.mxu0 0
      %4372 = vmatmul.mubr.bf16.gmra.mrb[0].mxu0 %v4218
      %v4373 = vpop.f32.mrb[0].mxu0
      %v4374 = vadd.f32 0.0, %v4373
      %v4375 = vpop.f32.mrb[0].mxu0
      %v4376 = vpop.f32.mrb[0].mxu0
      %v4377 = vadd.f32 0.0, %v4376
      %v4378 = vpop.f32.mrb[0].mxu0
      %4379 = vmatprep.mubr.bf16.mxu0 0
      %4380 = vmatmul.mubr.bf16.gmra.mrb[0].mxu0 %v4221
      %v4381 = vpop.f32.mrb[0].mxu0
      %v4382 = vadd.f32 0.0, %v4381
      %v4383 = vpop.f32.mrb[0].mxu0
      %v4384 = vpop.f32.mrb[0].mxu0
      %v4385 = vadd.f32 0.0, %v4384
      %v4386 = vpop.f32.mrb[0].mxu0
      %4387 = vdwg.mxu0
      %4388 = vst.msk [vmem:[%s231] sm:$0xff] %vm1162, %v4262
      %4389 = vst.msk [vmem:[%s231 + $0x8] sm:$0xff] %vm1162, %v4265
      %4390 = vst.msk [vmem:[%s231 + $0x10] sm:$0xff] %vm1162, %v4270
      %4391 = vst.msk [vmem:[%s231 + $0x18] sm:$0xff] %vm1162, %v4273
      %4392 = vst.msk [vmem:[%s231 + $0x20] sm:$0xff] %vm1162, %v4278
      %4393 = vst.msk [vmem:[%s231 + $0x28] sm:$0xff] %vm1162, %v4281
      %4394 = vst.msk [vmem:[%s231 + $0x30] sm:$0xff] %vm1162, %v4286
      %4395 = vst.msk [vmem:[%s231 + $0x38] sm:$0xff] %vm1162, %v4289
      %4396 = vst.msk [vmem:[%s231 + $0x40] sm:$0xff] %vm1162, %v4294
      %4397 = vst.msk [vmem:[%s231 + $0x48] sm:$0xff] %vm1162, %v4297
      %4398 = vst.msk [vmem:[%s231 + $0x50] sm:$0xff] %vm1162, %v4302
      %4399 = vst.msk [vmem:[%s231 + $0x58] sm:$0xff] %vm1162, %v4305
      %4400 = vst.msk [vmem:[%s231 + $0x60] sm:$0xff] %vm1162, %v4310
      %4401 = vst.msk [vmem:[%s231 + $0x68] sm:$0xff] %vm1162, %v4313
      %4402 = vst.msk [vmem:[%s231 + $0x70] sm:$0xff] %vm1162, %v4318
      %4403 = vst.msk [vmem:[%s231 + $0x78] sm:$0xff] %vm1162, %v4321
      %4404 = vst.msk [vmem:[%s231 + $0x80] sm:$0xff] %vm1162, %v4326
      %4405 = vst.msk [vmem:[%s231 + $0x88] sm:$0xff] %vm1162, %v4329
      %4406 = vst.msk [vmem:[%s231 + $0x90] sm:$0xff] %vm1162, %v4334
      %4407 = vst.msk [vmem:[%s231 + $0x98] sm:$0xff] %vm1162, %v4337
      %4408 = vst.msk [vmem:[%s231 + $0xa0] sm:$0xff] %vm1162, %v4342
      %4409 = vst.msk [vmem:[%s231 + $0xa8] sm:$0xff] %vm1162, %v4345
      %4410 = vst.msk [vmem:[%s231 + $0xb0] sm:$0xff] %vm1162, %v4350
      %4411 = vst.msk [vmem:[%s231 + $0xb8] sm:$0xff] %vm1162, %v4353
      %4412 = vst.msk [vmem:[%s231 + $0xc0] sm:$0xff] %vm1162, %v4358
      %4413 = vst.msk [vmem:[%s231 + $0xc8] sm:$0xff] %vm1162, %v4361
      %4414 = vst.msk [vmem:[%s231 + $0xd0] sm:$0xff] %vm1162, %v4366
      %4415 = vst.msk [vmem:[%s231 + $0xd8] sm:$0xff] %vm1162, %v4369
      %4416 = vst.msk [vmem:[%s231 + $0xe0] sm:$0xff] %vm1162, %v4374
      %4417 = vst.msk [vmem:[%s231 + $0xe8] sm:$0xff] %vm1162, %v4377
      %4418 = vst.msk [vmem:[%s231 + $0xf0] sm:$0xff] %vm1162, %v4382
      %4419 = vst.msk [vmem:[%s231 + $0xf8] sm:$0xff] %vm1162, %v4385
      %v4420 = vsel %vm1162, %v4262, 0.0
      %v4421 = vsel %vm1162, %v4265, 0.0
      %v4422 = vadd.f32 %v4420, %v4421
      %v4423 = vsel %vm1162, %v4270, 0.0
      %v4424 = vadd.f32 %v4422, %v4423
      %v4425 = vsel %vm1162, %v4273, 0.0
      %v4426 = vadd.f32 %v4424, %v4425
      %v4427 = vsel %vm1162, %v4278, 0.0
      %v4428 = vadd.f32 %v4426, %v4427
      %v4429 = vsel %vm1162, %v4281, 0.0
      %v4430 = vadd.f32 %v4428, %v4429
      %v4431 = vsel %vm1162, %v4286, 0.0
      %v4432 = vadd.f32 %v4430, %v4431
      %v4433 = vsel %vm1162, %v4289, 0.0
      %v4434 = vadd.f32 %v4432, %v4433
      %v4435 = vsel %vm1162, %v4294, 0.0
      %v4436 = vadd.f32 %v4434, %v4435
      %v4437 = vsel %vm1162, %v4297, 0.0
      %v4438 = vadd.f32 %v4436, %v4437
      %v4439 = vsel %vm1162, %v4302, 0.0
      %v4440 = vadd.f32 %v4438, %v4439
      %v4441 = vsel %vm1162, %v4305, 0.0
      %v4442 = vadd.f32 %v4440, %v4441
      %v4443 = vsel %vm1162, %v4310, 0.0
      %v4444 = vadd.f32 %v4442, %v4443
      %v4445 = vsel %vm1162, %v4313, 0.0
      %v4446 = vadd.f32 %v4444, %v4445
      %v4447 = vsel %vm1162, %v4318, 0.0
      %v4448 = vadd.f32 %v4446, %v4447
      %v4449 = vsel %vm1162, %v4321, 0.0
      %v4450 = vadd.f32 %v4448, %v4449
      %v4451 = vsel %vm1162, %v4326, 0.0
      %v4452 = vadd.f32 %v4450, %v4451
      %v4453 = vsel %vm1162, %v4329, 0.0
      %v4454 = vadd.f32 %v4452, %v4453
      %v4455 = vsel %vm1162, %v4334, 0.0
      %v4456 = vadd.f32 %v4454, %v4455
      %v4457 = vsel %vm1162, %v4337, 0.0
      %v4458 = vadd.f32 %v4456, %v4457
      %v4459 = vsel %vm1162, %v4342, 0.0
      %v4460 = vadd.f32 %v4458, %v4459
      %v4461 = vsel %vm1162, %v4345, 0.0
      %v4462 = vadd.f32 %v4460, %v4461
      %v4463 = vsel %vm1162, %v4350, 0.0
      %v4464 = vadd.f32 %v4462, %v4463
      %v4465 = vsel %vm1162, %v4353, 0.0
      %v4466 = vadd.f32 %v4464, %v4465
      %v4467 = vsel %vm1162, %v4358, 0.0
      %v4468 = vadd.f32 %v4466, %v4467
      %v4469 = vsel %vm1162, %v4361, 0.0
      %v4470 = vadd.f32 %v4468, %v4469
      %v4471 = vsel %vm1162, %v4366, 0.0
      %v4472 = vadd.f32 %v4470, %v4471
      %v4473 = vsel %vm1162, %v4369, 0.0
      %v4474 = vadd.f32 %v4472, %v4473
      %v4475 = vsel %vm1162, %v4374, 0.0
      %v4476 = vadd.f32 %v4474, %v4475
      %v4477 = vsel %vm1162, %v4377, 0.0
      %v4478 = vadd.f32 %v4476, %v4477
      %v4479 = vsel %vm1162, %v4382, 0.0
      %v4480 = vadd.f32 %v4478, %v4479
      %v4481 = vsel %vm1162, %v4385, 0.0
      %v4482 = vadd.f32 %v4480, %v4481
      %v4483 = vrot.slane %v4482, 4
      %v4484 = vadd.f32 %v4482, %v4483
      %v4485 = vrot.slane %v4484, 2
      %v4486 = vadd.f32 %v4484, %v4485
      %v4487 = vrot.slane %v4486, 1
      %v4488 = vadd.f32 %v4486, %v4487
      %4489 = vst.msk [vmem:[%s235] sm:$0x1] %vm382, %v4488
      %v4490 = vmul.f32 %v4262, %v4262
      %v4491 = vmul.f32 %v4265, %v4265
      %v4492 = vmul.f32 %v4270, %v4270
      %v4493 = vmul.f32 %v4273, %v4273
      %v4494 = vmul.f32 %v4278, %v4278
      %v4495 = vmul.f32 %v4281, %v4281
      %v4496 = vmul.f32 %v4286, %v4286
      %v4497 = vmul.f32 %v4289, %v4289
      %v4498 = vmul.f32 %v4294, %v4294
      %v4499 = vmul.f32 %v4297, %v4297
      %v4500 = vmul.f32 %v4302, %v4302
      %v4501 = vmul.f32 %v4305, %v4305
      %v4502 = vmul.f32 %v4310, %v4310
      %v4503 = vmul.f32 %v4313, %v4313
      %v4504 = vmul.f32 %v4318, %v4318
      %v4505 = vmul.f32 %v4321, %v4321
      %v4506 = vmul.f32 %v4326, %v4326
      %v4507 = vmul.f32 %v4329, %v4329
      %v4508 = vmul.f32 %v4334, %v4334
      %v4509 = vmul.f32 %v4337, %v4337
      %v4510 = vmul.f32 %v4342, %v4342
      %v4511 = vmul.f32 %v4345, %v4345
      %v4512 = vmul.f32 %v4350, %v4350
      %v4513 = vmul.f32 %v4353, %v4353
      %v4514 = vmul.f32 %v4358, %v4358
      %v4515 = vmul.f32 %v4361, %v4361
      %v4516 = vmul.f32 %v4366, %v4366
      %v4517 = vmul.f32 %v4369, %v4369
      %v4518 = vmul.f32 %v4374, %v4374
      %v4519 = vmul.f32 %v4377, %v4377
      %v4520 = vmul.f32 %v4382, %v4382
      %v4521 = vmul.f32 %v4385, %v4385
      %v4522 = vsel %vm1162, %v4490, 0.0
      %v4523 = vsel %vm1162, %v4491, 0.0
      %v4524 = vadd.f32 %v4522, %v4523
      %v4525 = vsel %vm1162, %v4492, 0.0
      %v4526 = vadd.f32 %v4524, %v4525
      %v4527 = vsel %vm1162, %v4493, 0.0
      %v4528 = vadd.f32 %v4526, %v4527
      %v4529 = vsel %vm1162, %v4494, 0.0
      %v4530 = vadd.f32 %v4528, %v4529
      %v4531 = vsel %vm1162, %v4495, 0.0
      %v4532 = vadd.f32 %v4530, %v4531
      %v4533 = vsel %vm1162, %v4496, 0.0
      %v4534 = vadd.f32 %v4532, %v4533
      %v4535 = vsel %vm1162, %v4497, 0.0
      %v4536 = vadd.f32 %v4534, %v4535
      %v4537 = vsel %vm1162, %v4498, 0.0
      %v4538 = vadd.f32 %v4536, %v4537
      %v4539 = vsel %vm1162, %v4499, 0.0
      %v4540 = vadd.f32 %v4538, %v4539
      %v4541 = vsel %vm1162, %v4500, 0.0
      %v4542 = vadd.f32 %v4540, %v4541
      %v4543 = vsel %vm1162, %v4501, 0.0
      %v4544 = vadd.f32 %v4542, %v4543
      %v4545 = vsel %vm1162, %v4502, 0.0
      %v4546 = vadd.f32 %v4544, %v4545
      %v4547 = vsel %vm1162, %v4503, 0.0
      %v4548 = vadd.f32 %v4546, %v4547
      %v4549 = vsel %vm1162, %v4504, 0.0
      %v4550 = vadd.f32 %v4548, %v4549
      %v4551 = vsel %vm1162, %v4505, 0.0
      %v4552 = vadd.f32 %v4550, %v4551
      %v4553 = vsel %vm1162, %v4506, 0.0
      %v4554 = vadd.f32 %v4552, %v4553
      %v4555 = vsel %vm1162, %v4507, 0.0
      %v4556 = vadd.f32 %v4554, %v4555
      %v4557 = vsel %vm1162, %v4508, 0.0
      %v4558 = vadd.f32 %v4556, %v4557
      %v4559 = vsel %vm1162, %v4509, 0.0
      %v4560 = vadd.f32 %v4558, %v4559
      %v4561 = vsel %vm1162, %v4510, 0.0
      %v4562 = vadd.f32 %v4560, %v4561
      %v4563 = vsel %vm1162, %v4511, 0.0
      %v4564 = vadd.f32 %v4562, %v4563
      %v4565 = vsel %vm1162, %v4512, 0.0
      %v4566 = vadd.f32 %v4564, %v4565
      %v4567 = vsel %vm1162, %v4513, 0.0
      %v4568 = vadd.f32 %v4566, %v4567
      %v4569 = vsel %vm1162, %v4514, 0.0
      %v4570 = vadd.f32 %v4568, %v4569
      %v4571 = vsel %vm1162, %v4515, 0.0
      %v4572 = vadd.f32 %v4570, %v4571
      %v4573 = vsel %vm1162, %v4516, 0.0
      %v4574 = vadd.f32 %v4572, %v4573
      %v4575 = vsel %vm1162, %v4517, 0.0
      %v4576 = vadd.f32 %v4574, %v4575
      %v4577 = vsel %vm1162, %v4518, 0.0
      %v4578 = vadd.f32 %v4576, %v4577
      %v4579 = vsel %vm1162, %v4519, 0.0
      %v4580 = vadd.f32 %v4578, %v4579
      %v4581 = vsel %vm1162, %v4520, 0.0
      %v4582 = vadd.f32 %v4580, %v4581
      %v4583 = vsel %vm1162, %v4521, 0.0
      %v4584 = vadd.f32 %v4582, %v4583
      %v4585 = vrot.slane %v4584, 4
      %v4586 = vadd.f32 %v4584, %v4585
      %v4587 = vrot.slane %v4586, 2
      %v4588 = vadd.f32 %v4586, %v4587
      %v4589 = vrot.slane %v4588, 1
      %v4590 = vadd.f32 %v4588, %v4589
      %4591 = vst.msk [vmem:[%s235 + $0x1] sm:$0x1] %vm382, %v4590
      %p4592 = scmp.lt.s32.totalorder %s17, 1
      %s4593 = scalar_select %p4592, %s17, 1
      %s4594 = smul.addr %s4593, 32
      %s4595 = smul.addr %s4594, 8
      %s4596 = scalar_lea.vmem %s4, %s4595
      %p4597 = scmp.lt.s32.totalorder %s17, 1
      %s4598 = scalar_select %p4597, %s17, 1
      %s4599 = smul.addr %s4598, 2
      %s4600 = scalar_lea.vmem %s5, %s4599
      // Predicated region
      $region37: #{basic_block_forward.4} parent=35 // pred_check
        %p4601 = pneg %p124
      $region38: #{basic_block_forward.4} parent=35 // pred_check_branch
        %4603 = sbr.rel (%p4601) target = $region40
      $region39: #{basic_block_forward.4} parent=35 // pred_region
        _
      $region40: #{basic_block_forward.4} parent=35 // pred_fallthru
        _
      // Predicated region
      $region41: #{basic_block_forward.4} parent=35 // pred_check
        %p4604 = pneg %p150
      $region42: #{basic_block_forward.4} parent=35 // pred_check_branch
        %4606 = sbr.rel (%p4604) target = $region44
      $region43: #{basic_block_forward.4} parent=35 // pred_region
        _
      $region44: #{basic_block_forward.4} parent=35 // pred_fallthru
        _
    $region36: #{basic_block_forward.4} parent=5 // pred_fallthru
      _
    %p4607 = scmp.le.s32.totalorder 2, %s12
    // Predicated region
    $region45: #{basic_block_forward.4} parent=5 // pred_check
      %p4608 = pneg %p4607
    $region46: #{basic_block_forward.4} parent=5 // pred_check_branch
      %4610 = sbr.rel (%p4608) target = $region48
    $region47: #{basic_block_forward.4} parent=5 // pred_region
      %s4611 = ssub.s32 %s12, 2
      // Predicated region
      $region49: #{basic_block_forward.4} parent=47 // pred_check
        %p4612 = pneg %p130
      $region50: #{basic_block_forward.4} parent=47 // pred_check_branch
        %4614 = sbr.rel (%p4612) target = $region52
      $region51: #{basic_block_forward.4} parent=47 // pred_region
        %p4615 = scmp.lt.s32.totalorder %s18, 1
        %s4616 = scalar_select %p4615, %s18, 1
        %s4617 = smul.addr %s4616, 32
        %s4618 = smul.addr %s4617, 8
        %s4619 = scalar_lea.vmem %s4, %s4618
      $region52: #{basic_block_forward.4} parent=47 // pred_fallthru
        _
      // Predicated region
      $region53: #{basic_block_forward.4} parent=47 // pred_check
        %p4620 = pneg %p156
      $region54: #{basic_block_forward.4} parent=47 // pred_check_branch
        %4622 = sbr.rel (%p4620) target = $region56
      $region55: #{basic_block_forward.4} parent=47 // pred_region
        %p4623 = scmp.lt.s32.totalorder %s18, 1
        %s4624 = scalar_select %p4623, %s18, 1
        %s4625 = smul.addr %s4624, 2
        %s4626 = scalar_lea.vmem %s5, %s4625
      $region56: #{basic_block_forward.4} parent=47 // pred_fallthru
        _
    $region48: #{basic_block_forward.4} parent=5 // pred_fallthru
      _
  $region6: #{basic_block_forward.4} parent=0 // loop_footer
    %s16 = sadd.s32 1, %s12
  $region7: #{basic_block_forward.4} parent=0 // loop_footer_branch
    %11 = sbr.rel target = $region3
  $region8: #{basic_block_forward.4} parent=0 // loop_exit
    _

</llo_original>
